<compile_context>
chip_gen: v7x
topology: tpu7x:2x2x1
jax: 0.10.0
libtpu: 0.0.40
codegen_flags: <defaults>
</compile_context>

<pallas_src>
import functools

import jax
import jax.numpy as jnp
from jax.experimental import pallas as pl
from jax.experimental.pallas import tpu as pltpu

PER_LAYER = 16  # ln1_g, ln1_b, wq, bq, wk, bk, wv, bv, wo, bo, ln2_g, ln2_b, w1, b1, w2, b2
LN_EPS = 1e-5
PARAM_KEYS = ("ln1_g", "ln1_b", "wq", "bq", "wk", "bk", "wv", "bv",
              "wo", "bo", "ln2_g", "ln2_b", "w1", "b1", "w2", "b2")


# ----------------------------------------------------------------------------
# Kernel
# ----------------------------------------------------------------------------
def _layernorm(x, gamma, beta, eps=LN_EPS):
    mu = jnp.mean(x, axis=-1, keepdims=True)
    xc = x - mu
    var = jnp.mean(xc * xc, axis=-1, keepdims=True)
    return xc * jax.lax.rsqrt(var + eps) * gamma + beta


def _softmax(x):
    m = jnp.max(x, axis=-1, keepdims=True)
    e = jnp.exp(x - m)
    return e / jnp.sum(e, axis=-1, keepdims=True)


def fused_encoder_kernel(x_ref, *refs, num_heads, num_layers):
    n_params = num_layers * PER_LAYER + 2
    param_refs = refs[:n_params]
    out_refs = refs[n_params:]
    hidden_refs = out_refs[:num_layers]
    final_ref = out_refs[num_layers]

    x = x_ref[0].astype(jnp.float32)              # (S, D) for one batch element
    S, D = x.shape
    hd = D // num_heads
    scale = 2.0 / float(hd)  # == 1 / (head_dim ** 1 / float(2))

    for layer in range(num_layers):
        (ln1_g, ln1_b, wq, bq, wk, bk, wv, bv, wo, bo,
         ln2_g, ln2_b, w1, b1, w2, b2) = param_refs[
            layer * PER_LAYER:(layer + 1) * PER_LAYER]

        # ---- multi-head self-attention branch ----
        xn = _layernorm(x, ln1_g[...], ln1_b[...])                       # (S, D)

        q = (jnp.dot(xn, wq[...], preferred_element_type=jnp.float32)
             + bq[...]) * scale                                          # scale folded into q
        k = jnp.dot(xn, wk[...], preferred_element_type=jnp.float32) + bk[...]
        v = jnp.dot(xn, wv[...], preferred_element_type=jnp.float32) + bv[...]

        # Accumulate each head directly through the matching rows of wo
        # (avoids concatenate of head outputs).
        attn = jnp.zeros((S, D), jnp.float32)
        for h in range(num_heads):
            lo, hi = h * hd, (h + 1) * hd
            qh = q[:, lo:hi]                                             # (S, hd)
            kh = k[:, lo:hi]
            vh = v[:, lo:hi]
            # scores = qh @ kh^T without an explicit transpose:
            scores = jax.lax.dot_general(
                qh, kh, (((1,), (1,)), ((), ())),
                preferred_element_type=jnp.float32)                      # (S, S)
            probs = _softmax(scores)
            ctx = jnp.dot(probs, vh, preferred_element_type=jnp.float32)  # (S, hd)
            attn = attn + jnp.dot(ctx, wo[lo:hi, :],
                                  preferred_element_type=jnp.float32)
        x = x + attn + bo[...]                                           # residual 1

        # ---- feed-forward branch ----
        xn2 = _layernorm(x, ln2_g[...], ln2_b[...])
        h1 = jnp.dot(xn2, w1[...], preferred_element_type=jnp.float32) + b1[...]
        h1 = jnp.maximum(h1, 0.0)                                        # ReLU
        ff = jnp.dot(h1, w2[...], preferred_element_type=jnp.float32) + b2[...]
        x = x + ff                                                       # residual 2

        hidden_refs[layer][0] = x.astype(hidden_refs[layer].dtype)

    norm_g = param_refs[num_layers * PER_LAYER]
    norm_b = param_refs[num_layers * PER_LAYER + 1]
    final_ref[0] = _layernorm(x, norm_g[...], norm_b[...]).astype(final_ref.dtype)


# ----------------------------------------------------------------------------
# Wrapper
# ----------------------------------------------------------------------------
def _weight_spec(w):
    # All weights are 2D; constant block index across the batch grid, so Pallas
    # keeps them resident (no re-fetch between grid steps).
    return pl.BlockSpec(w.shape, lambda b: (0, 0))


def transformer_encoder(x, params, num_heads):
    B, S, D = x.shape
    num_layers = len(params["layers"])

    flat_params = []
    for lp in params["layers"]:
        flat_params += [lp[k] for k in PARAM_KEYS]
    flat_params += [params["norm_g"], params["norm_b"]]

    act_spec = pl.BlockSpec((1, S, D), lambda b: (b, 0, 0))
    in_specs = [act_spec] + [_weight_spec(w) for w in flat_params]
    out_specs = [act_spec for _ in range(num_layers + 1)]
    out_shape = tuple(jax.ShapeDtypeStruct((B, S, D), x.dtype)
                      for _ in range(num_layers + 1))

    kern = functools.partial(fused_encoder_kernel,
                             num_heads=num_heads, num_layers=num_layers)

    outs = pl.pallas_call(
        kern,
        out_shape=out_shape,
        grid=(B,),
        in_specs=in_specs,
        out_specs=out_specs,
        compiler_params=pltpu.CompilerParams(
            dimension_semantics=("parallel",)),
    )(x, *flat_params)

    hidden_states = list(outs[:num_layers])
    final = outs[num_layers]
    return hidden_states, final


# ----------------------------------------------------------------------------
# Deterministic parameter init (shapes from the module __init__)
# ----------------------------------------------------------------------------
def init_params(key, d_model, num_heads, num_layers, ff_size):
    def linear(k, fan_in, fan_out):
        kw, kb = jax.random.split(k)
        bound = 1.0 / jnp.sqrt(fan_in)
        # weights stored pre-transposed as (in, out): kernel does x @ W + b
        w = jax.random.uniform(kw, (fan_in, fan_out), jnp.float32, -bound, bound)
        b = jax.random.uniform(kb, (1, fan_out), jnp.float32, -bound, bound)
        return w, b

    layers = []
    for _ in range(num_layers):
        key, *ks = jax.random.split(key, 7)
        wq, bq = linear(ks[0], d_model, d_model)
        wk, bk = linear(ks[1], d_model, d_model)
        wv, bv = linear(ks[2], d_model, d_model)
        wo, bo = linear(ks[3], d_model, d_model)
        w1, b1 = linear(ks[4], d_model, ff_size)
        w2, b2 = linear(ks[5], ff_size, d_model)
        layers.append(dict(
            ln1_g=jnp.ones((1, d_model), jnp.float32),
            ln1_b=jnp.zeros((1, d_model), jnp.float32),
            wq=wq, bq=bq, wk=wk, bk=bk, wv=wv, bv=bv, wo=wo, bo=bo,
            ln2_g=jnp.ones((1, d_model), jnp.float32),
            ln2_b=jnp.zeros((1, d_model), jnp.float32),
            w1=w1, b1=b1, w2=w2, b2=b2,
        ))
    return dict(
        layers=layers,
        norm_g=jnp.ones((1, d_model), jnp.float32),
        norm_b=jnp.zeros((1, d_model), jnp.float32),
    )


# ----------------------------------------------------------------------------
if __name__ == "__main__":
    B, S, D = 2, 8, 32          # batch, seq, d_model
    NUM_HEADS = 2
    NUM_LAYERS = 2
    FF_SIZE = 2096              # module default

    key = jax.random.PRNGKey(0)
    k_x, k_p = jax.random.split(key)
    x = jax.random.normal(k_x, (B, S, D), dtype=jnp.float32)
    params = init_params(k_p, D, NUM_HEADS, NUM_LAYERS, FF_SIZE)

    hidden_states, final = transformer_encoder(x, params, NUM_HEADS)
    jax.block_until_ready(final)
    for h in hidden_states:
        jax.block_until_ready(h)

    assert final.shape == (B, S, D)
    assert len(hidden_states) == NUM_LAYERS
    assert all(h.shape == (B, S, D) for h in hidden_states)
    assert bool(jnp.all(jnp.isfinite(final)))
    print("KERNEL_OK")
</pallas_src>

<mosaic_0001>
module attributes {stable_mosaic.version = 11 : i64} {
  func.func @fused_encoder_kernel(%arg0: i32, %arg1: memref<1x8x32xf32, #tpu.memory_space<vmem>>, %arg2: memref<1x32xf32, #tpu.memory_space<vmem>>, %arg3: memref<1x32xf32, #tpu.memory_space<vmem>>, %arg4: memref<32x32xf32, #tpu.memory_space<vmem>>, %arg5: memref<1x32xf32, #tpu.memory_space<vmem>>, %arg6: memref<32x32xf32, #tpu.memory_space<vmem>>, %arg7: memref<1x32xf32, #tpu.memory_space<vmem>>, %arg8: memref<32x32xf32, #tpu.memory_space<vmem>>, %arg9: memref<1x32xf32, #tpu.memory_space<vmem>>, %arg10: memref<32x32xf32, #tpu.memory_space<vmem>>, %arg11: memref<1x32xf32, #tpu.memory_space<vmem>>, %arg12: memref<1x32xf32, #tpu.memory_space<vmem>>, %arg13: memref<1x32xf32, #tpu.memory_space<vmem>>, %arg14: memref<32x2096xf32, #tpu.memory_space<vmem>>, %arg15: memref<1x2096xf32, #tpu.memory_space<vmem>>, %arg16: memref<2096x32xf32, #tpu.memory_space<vmem>>, %arg17: memref<1x32xf32, #tpu.memory_space<vmem>>, %arg18: memref<1x32xf32, #tpu.memory_space<vmem>>, %arg19: memref<1x32xf32, #tpu.memory_space<vmem>>, %arg20: memref<32x32xf32, #tpu.memory_space<vmem>>, %arg21: memref<1x32xf32, #tpu.memory_space<vmem>>, %arg22: memref<32x32xf32, #tpu.memory_space<vmem>>, %arg23: memref<1x32xf32, #tpu.memory_space<vmem>>, %arg24: memref<32x32xf32, #tpu.memory_space<vmem>>, %arg25: memref<1x32xf32, #tpu.memory_space<vmem>>, %arg26: memref<32x32xf32, #tpu.memory_space<vmem>>, %arg27: memref<1x32xf32, #tpu.memory_space<vmem>>, %arg28: memref<1x32xf32, #tpu.memory_space<vmem>>, %arg29: memref<1x32xf32, #tpu.memory_space<vmem>>, %arg30: memref<32x2096xf32, #tpu.memory_space<vmem>>, %arg31: memref<1x2096xf32, #tpu.memory_space<vmem>>, %arg32: memref<2096x32xf32, #tpu.memory_space<vmem>>, %arg33: memref<1x32xf32, #tpu.memory_space<vmem>>, %arg34: memref<1x32xf32, #tpu.memory_space<vmem>>, %arg35: memref<1x32xf32, #tpu.memory_space<vmem>>, %arg36: memref<1x8x32xf32, #tpu.memory_space<vmem>>, %arg37: memref<1x8x32xf32, #tpu.memory_space<vmem>>, %arg38: memref<1x8x32xf32, #tpu.memory_space<vmem>>) attributes {dimension_semantics = [#tpu.dimension_semantics<parallel>], iteration_bounds = array<i64: 2>, scalar_prefetch = 0 : i64, scratch_operands = 0 : i64, tpu.core_type = #tpu.core_type<tc>, window_params = [{transform_indices = @transform_0, window_bounds = array<i64: 1, 8, 32>}, {pipeline_mode = #tpu.pipeline_mode<synchronous>, transform_indices = @transform_1, window_bounds = array<i64: 1, 32>}, {pipeline_mode = #tpu.pipeline_mode<synchronous>, transform_indices = @transform_2, window_bounds = array<i64: 1, 32>}, {pipeline_mode = #tpu.pipeline_mode<synchronous>, transform_indices = @transform_3, window_bounds = array<i64: 32, 32>}, {pipeline_mode = #tpu.pipeline_mode<synchronous>, transform_indices = @transform_4, window_bounds = array<i64: 1, 32>}, {pipeline_mode = #tpu.pipeline_mode<synchronous>, transform_indices = @transform_5, window_bounds = array<i64: 32, 32>}, {pipeline_mode = #tpu.pipeline_mode<synchronous>, transform_indices = @transform_6, window_bounds = array<i64: 1, 32>}, {pipeline_mode = #tpu.pipeline_mode<synchronous>, transform_indices = @transform_7, window_bounds = array<i64: 32, 32>}, {pipeline_mode = #tpu.pipeline_mode<synchronous>, transform_indices = @transform_8, window_bounds = array<i64: 1, 32>}, {pipeline_mode = #tpu.pipeline_mode<synchronous>, transform_indices = @transform_9, window_bounds = array<i64: 32, 32>}, {pipeline_mode = #tpu.pipeline_mode<synchronous>, transform_indices = @transform_10, window_bounds = array<i64: 1, 32>}, {pipeline_mode = #tpu.pipeline_mode<synchronous>, transform_indices = @transform_11, window_bounds = array<i64: 1, 32>}, {pipeline_mode = #tpu.pipeline_mode<synchronous>, transform_indices = @transform_12, window_bounds = array<i64: 1, 32>}, {pipeline_mode = #tpu.pipeline_mode<synchronous>, transform_indices = @transform_13, window_bounds = array<i64: 32, 2096>}, {pipeline_mode = #tpu.pipeline_mode<synchronous>, transform_indices = @transform_14, window_bounds = array<i64: 1, 2096>}, {pipeline_mode = #tpu.pipeline_mode<synchronous>, transform_indices = @transform_15, window_bounds = array<i64: 2096, 32>}, {pipeline_mode = #tpu.pipeline_mode<synchronous>, transform_indices = @transform_16, window_bounds = array<i64: 1, 32>}, {pipeline_mode = #tpu.pipeline_mode<synchronous>, transform_indices = @transform_17, window_bounds = array<i64: 1, 32>}, {pipeline_mode = #tpu.pipeline_mode<synchronous>, transform_indices = @transform_18, window_bounds = array<i64: 1, 32>}, {pipeline_mode = #tpu.pipeline_mode<synchronous>, transform_indices = @transform_19, window_bounds = array<i64: 32, 32>}, {pipeline_mode = #tpu.pipeline_mode<synchronous>, transform_indices = @transform_20, window_bounds = array<i64: 1, 32>}, {pipeline_mode = #tpu.pipeline_mode<synchronous>, transform_indices = @transform_21, window_bounds = array<i64: 32, 32>}, {pipeline_mode = #tpu.pipeline_mode<synchronous>, transform_indices = @transform_22, window_bounds = array<i64: 1, 32>}, {pipeline_mode = #tpu.pipeline_mode<synchronous>, transform_indices = @transform_23, window_bounds = array<i64: 32, 32>}, {pipeline_mode = #tpu.pipeline_mode<synchronous>, transform_indices = @transform_24, window_bounds = array<i64: 1, 32>}, {pipeline_mode = #tpu.pipeline_mode<synchronous>, transform_indices = @transform_25, window_bounds = array<i64: 32, 32>}, {pipeline_mode = #tpu.pipeline_mode<synchronous>, transform_indices = @transform_26, window_bounds = array<i64: 1, 32>}, {pipeline_mode = #tpu.pipeline_mode<synchronous>, transform_indices = @transform_27, window_bounds = array<i64: 1, 32>}, {pipeline_mode = #tpu.pipeline_mode<synchronous>, transform_indices = @transform_28, window_bounds = array<i64: 1, 32>}, {pipeline_mode = #tpu.pipeline_mode<synchronous>, transform_indices = @transform_29, window_bounds = array<i64: 32, 2096>}, {pipeline_mode = #tpu.pipeline_mode<synchronous>, transform_indices = @transform_30, window_bounds = array<i64: 1, 2096>}, {pipeline_mode = #tpu.pipeline_mode<synchronous>, transform_indices = @transform_31, window_bounds = array<i64: 2096, 32>}, {pipeline_mode = #tpu.pipeline_mode<synchronous>, transform_indices = @transform_32, window_bounds = array<i64: 1, 32>}, {pipeline_mode = #tpu.pipeline_mode<synchronous>, transform_indices = @transform_33, window_bounds = array<i64: 1, 32>}, {pipeline_mode = #tpu.pipeline_mode<synchronous>, transform_indices = @transform_34, window_bounds = array<i64: 1, 32>}, {transform_indices = @transform_35, window_bounds = array<i64: 1, 8, 32>}, {transform_indices = @transform_36, window_bounds = array<i64: 1, 8, 32>}, {transform_indices = @transform_37, window_bounds = array<i64: 1, 8, 32>}]} {
    %c0 = arith.constant 0 : index
    %c0_0 = arith.constant 0 : index
    %c0_1 = arith.constant 0 : index
    %0 = vector.load %arg1[%c0, %c0_0, %c0_1] : memref<1x8x32xf32, #tpu.memory_space<vmem>>, vector<1x8x32xf32>
    %1 = vector.shape_cast %0 : vector<1x8x32xf32> to vector<8x32xf32>
    %c0_2 = arith.constant 0 : index
    %c0_3 = arith.constant 0 : index
    %2 = vector.load %arg2[%c0_2, %c0_3] : memref<1x32xf32, #tpu.memory_space<vmem>>, vector<1x32xf32>
    %c0_4 = arith.constant 0 : index
    %c0_5 = arith.constant 0 : index
    %3 = vector.load %arg3[%c0_4, %c0_5] : memref<1x32xf32, #tpu.memory_space<vmem>>, vector<1x32xf32>
    %cst = arith.constant dense<0.000000e+00> : vector<8xf32>
    %4 = vector.multi_reduction <add>, %1, %cst [1] : vector<8x32xf32> to vector<8xf32>
    %5 = vector.shape_cast %4 : vector<8xf32> to vector<8x1xf32>
    %cst_6 = arith.constant 3.200000e+01 : f32
    %6 = vector.broadcast %cst_6 : f32 to vector<8x1xf32>
    %7 = arith.divf %5, %6 : vector<8x1xf32>
    %8 = vector.broadcast %7 : vector<8x1xf32> to vector<8x32xf32>
    %9 = arith.subf %1, %8 : vector<8x32xf32>
    %10 = arith.mulf %9, %9 : vector<8x32xf32>
    %cst_7 = arith.constant dense<0.000000e+00> : vector<8xf32>
    %11 = vector.multi_reduction <add>, %10, %cst_7 [1] : vector<8x32xf32> to vector<8xf32>
    %12 = vector.shape_cast %11 : vector<8xf32> to vector<8x1xf32>
    %cst_8 = arith.constant 3.200000e+01 : f32
    %13 = vector.broadcast %cst_8 : f32 to vector<8x1xf32>
    %14 = arith.divf %12, %13 : vector<8x1xf32>
    %cst_9 = arith.constant 9.99999974E-6 : f32
    %15 = vector.broadcast %cst_9 : f32 to vector<8x1xf32>
    %16 = arith.addf %14, %15 : vector<8x1xf32>
    %17 = math.rsqrt %16 : vector<8x1xf32>
    %18 = vector.broadcast %17 : vector<8x1xf32> to vector<8x32xf32>
    %19 = arith.mulf %9, %18 : vector<8x32xf32>
    %20 = vector.broadcast %2 : vector<1x32xf32> to vector<8x32xf32>
    %21 = arith.mulf %19, %20 : vector<8x32xf32>
    %22 = vector.broadcast %3 : vector<1x32xf32> to vector<8x32xf32>
    %23 = arith.addf %21, %22 : vector<8x32xf32>
    %c0_10 = arith.constant 0 : index
    %c0_11 = arith.constant 0 : index
    %24 = vector.load %arg4[%c0_10, %c0_11] : memref<32x32xf32, #tpu.memory_space<vmem>>, vector<32x32xf32>
    %cst_12 = arith.constant dense<0.000000e+00> : vector<8x32xf32>
    %25 = tpu.matmul %23, %24, %cst_12 {dimension_numbers = #tpu.dot_dimension_numbers<[1], [0], [0], [1], [0, 0, 1, 1], [], []>} : vector<8x32xf32>, vector<32x32xf32>, vector<8x32xf32> -> vector<8x32xf32>
    %c0_13 = arith.constant 0 : index
    %c0_14 = arith.constant 0 : index
    %26 = vector.load %arg5[%c0_13, %c0_14] : memref<1x32xf32, #tpu.memory_space<vmem>>, vector<1x32xf32>
    %27 = vector.broadcast %26 : vector<1x32xf32> to vector<8x32xf32>
    %28 = arith.addf %25, %27 : vector<8x32xf32>
    %cst_15 = arith.constant 1.250000e-01 : f32
    %29 = vector.broadcast %cst_15 : f32 to vector<8x32xf32>
    %30 = arith.mulf %28, %29 : vector<8x32xf32>
    %c0_16 = arith.constant 0 : index
    %c0_17 = arith.constant 0 : index
    %31 = vector.load %arg6[%c0_16, %c0_17] : memref<32x32xf32, #tpu.memory_space<vmem>>, vector<32x32xf32>
    %cst_18 = arith.constant dense<0.000000e+00> : vector<8x32xf32>
    %32 = tpu.matmul %23, %31, %cst_18 {dimension_numbers = #tpu.dot_dimension_numbers<[1], [0], [0], [1], [0, 0, 1, 1], [], []>} : vector<8x32xf32>, vector<32x32xf32>, vector<8x32xf32> -> vector<8x32xf32>
    %c0_19 = arith.constant 0 : index
    %c0_20 = arith.constant 0 : index
    %33 = vector.load %arg7[%c0_19, %c0_20] : memref<1x32xf32, #tpu.memory_space<vmem>>, vector<1x32xf32>
    %34 = vector.broadcast %33 : vector<1x32xf32> to vector<8x32xf32>
    %35 = arith.addf %32, %34 : vector<8x32xf32>
    %c0_21 = arith.constant 0 : index
    %c0_22 = arith.constant 0 : index
    %36 = vector.load %arg8[%c0_21, %c0_22] : memref<32x32xf32, #tpu.memory_space<vmem>>, vector<32x32xf32>
    %cst_23 = arith.constant dense<0.000000e+00> : vector<8x32xf32>
    %37 = tpu.matmul %23, %36, %cst_23 {dimension_numbers = #tpu.dot_dimension_numbers<[1], [0], [0], [1], [0, 0, 1, 1], [], []>} : vector<8x32xf32>, vector<32x32xf32>, vector<8x32xf32> -> vector<8x32xf32>
    %c0_24 = arith.constant 0 : index
    %c0_25 = arith.constant 0 : index
    %38 = vector.load %arg9[%c0_24, %c0_25] : memref<1x32xf32, #tpu.memory_space<vmem>>, vector<1x32xf32>
    %39 = vector.broadcast %38 : vector<1x32xf32> to vector<8x32xf32>
    %40 = arith.addf %37, %39 : vector<8x32xf32>
    %cst_26 = arith.constant 0.000000e+00 : f32
    %41 = vector.broadcast %cst_26 : f32 to vector<8x32xf32>
    %42 = vector.extract_strided_slice %30 {offsets = [0, 0], sizes = [8, 16], strides = [1, 1]} : vector<8x32xf32> to vector<8x16xf32>
    %43 = vector.extract_strided_slice %35 {offsets = [0, 0], sizes = [8, 16], strides = [1, 1]} : vector<8x32xf32> to vector<8x16xf32>
    %44 = vector.extract_strided_slice %40 {offsets = [0, 0], sizes = [8, 16], strides = [1, 1]} : vector<8x32xf32> to vector<8x16xf32>
    %cst_27 = arith.constant dense<0.000000e+00> : vector<8x8xf32>
    %45 = tpu.matmul %42, %43, %cst_27 {dimension_numbers = #tpu.dot_dimension_numbers<[1], [1], [0], [0], [0, 0, 1, 0], [], []>} : vector<8x16xf32>, vector<8x16xf32>, vector<8x8xf32> -> vector<8x8xf32>
    %cst_28 = arith.constant dense<0xFF800000> : vector<8xf32>
    %46 = vector.multi_reduction <maximumf>, %45, %cst_28 [1] : vector<8x8xf32> to vector<8xf32>
    %47 = vector.shape_cast %46 : vector<8xf32> to vector<8x1xf32>
    %48 = vector.broadcast %47 : vector<8x1xf32> to vector<8x8xf32>
    %49 = arith.subf %45, %48 : vector<8x8xf32>
    %50 = math.exp %49 : vector<8x8xf32>
    %cst_29 = arith.constant dense<0.000000e+00> : vector<8xf32>
    %51 = vector.multi_reduction <add>, %50, %cst_29 [1] : vector<8x8xf32> to vector<8xf32>
    %52 = vector.shape_cast %51 : vector<8xf32> to vector<8x1xf32>
    %53 = vector.broadcast %52 : vector<8x1xf32> to vector<8x8xf32>
    %54 = arith.divf %50, %53 : vector<8x8xf32>
    %cst_30 = arith.constant dense<0.000000e+00> : vector<8x16xf32>
    %55 = tpu.matmul %54, %44, %cst_30 {dimension_numbers = #tpu.dot_dimension_numbers<[1], [0], [0], [1], [0, 0, 1, 1], [], []>} : vector<8x8xf32>, vector<8x16xf32>, vector<8x16xf32> -> vector<8x16xf32>
    %c0_31 = arith.constant 0 : index
    %c0_32 = arith.constant 0 : index
    %56 = vector.load %arg10[%c0_31, %c0_32] : memref<32x32xf32, #tpu.memory_space<vmem>>, vector<16x32xf32>
    %cst_33 = arith.constant dense<0.000000e+00> : vector<8x32xf32>
    %57 = tpu.matmul %55, %56, %cst_33 {dimension_numbers = #tpu.dot_dimension_numbers<[1], [0], [0], [1], [0, 0, 1, 1], [], []>} : vector<8x16xf32>, vector<16x32xf32>, vector<8x32xf32> -> vector<8x32xf32>
    %58 = arith.addf %41, %57 : vector<8x32xf32>
    %59 = vector.extract_strided_slice %30 {offsets = [0, 16], sizes = [8, 16], strides = [1, 1]} : vector<8x32xf32> to vector<8x16xf32>
    %60 = vector.extract_strided_slice %35 {offsets = [0, 16], sizes = [8, 16], strides = [1, 1]} : vector<8x32xf32> to vector<8x16xf32>
    %61 = vector.extract_strided_slice %40 {offsets = [0, 16], sizes = [8, 16], strides = [1, 1]} : vector<8x32xf32> to vector<8x16xf32>
    %cst_34 = arith.constant dense<0.000000e+00> : vector<8x8xf32>
    %62 = tpu.matmul %59, %60, %cst_34 {dimension_numbers = #tpu.dot_dimension_numbers<[1], [1], [0], [0], [0, 0, 1, 0], [], []>} : vector<8x16xf32>, vector<8x16xf32>, vector<8x8xf32> -> vector<8x8xf32>
    %cst_35 = arith.constant dense<0xFF800000> : vector<8xf32>
    %63 = vector.multi_reduction <maximumf>, %62, %cst_35 [1] : vector<8x8xf32> to vector<8xf32>
    %64 = vector.shape_cast %63 : vector<8xf32> to vector<8x1xf32>
    %65 = vector.broadcast %64 : vector<8x1xf32> to vector<8x8xf32>
    %66 = arith.subf %62, %65 : vector<8x8xf32>
    %67 = math.exp %66 : vector<8x8xf32>
    %cst_36 = arith.constant dense<0.000000e+00> : vector<8xf32>
    %68 = vector.multi_reduction <add>, %67, %cst_36 [1] : vector<8x8xf32> to vector<8xf32>
    %69 = vector.shape_cast %68 : vector<8xf32> to vector<8x1xf32>
    %70 = vector.broadcast %69 : vector<8x1xf32> to vector<8x8xf32>
    %71 = arith.divf %67, %70 : vector<8x8xf32>
    %cst_37 = arith.constant dense<0.000000e+00> : vector<8x16xf32>
    %72 = tpu.matmul %71, %61, %cst_37 {dimension_numbers = #tpu.dot_dimension_numbers<[1], [0], [0], [1], [0, 0, 1, 1], [], []>} : vector<8x8xf32>, vector<8x16xf32>, vector<8x16xf32> -> vector<8x16xf32>
    %c16 = arith.constant 16 : index
    %c0_38 = arith.constant 0 : index
    %73 = vector.load %arg10[%c16, %c0_38] : memref<32x32xf32, #tpu.memory_space<vmem>>, vector<16x32xf32>
    %cst_39 = arith.constant dense<0.000000e+00> : vector<8x32xf32>
    %74 = tpu.matmul %72, %73, %cst_39 {dimension_numbers = #tpu.dot_dimension_numbers<[1], [0], [0], [1], [0, 0, 1, 1], [], []>} : vector<8x16xf32>, vector<16x32xf32>, vector<8x32xf32> -> vector<8x32xf32>
    %75 = arith.addf %58, %74 : vector<8x32xf32>
    %76 = arith.addf %1, %75 : vector<8x32xf32>
    %c0_40 = arith.constant 0 : index
    %c0_41 = arith.constant 0 : index
    %77 = vector.load %arg11[%c0_40, %c0_41] : memref<1x32xf32, #tpu.memory_space<vmem>>, vector<1x32xf32>
    %78 = vector.broadcast %77 : vector<1x32xf32> to vector<8x32xf32>
    %79 = arith.addf %76, %78 : vector<8x32xf32>
    %c0_42 = arith.constant 0 : index
    %c0_43 = arith.constant 0 : index
    %80 = vector.load %arg12[%c0_42, %c0_43] : memref<1x32xf32, #tpu.memory_space<vmem>>, vector<1x32xf32>
    %c0_44 = arith.constant 0 : index
    %c0_45 = arith.constant 0 : index
    %81 = vector.load %arg13[%c0_44, %c0_45] : memref<1x32xf32, #tpu.memory_space<vmem>>, vector<1x32xf32>
    %cst_46 = arith.constant dense<0.000000e+00> : vector<8xf32>
    %82 = vector.multi_reduction <add>, %79, %cst_46 [1] : vector<8x32xf32> to vector<8xf32>
    %83 = vector.shape_cast %82 : vector<8xf32> to vector<8x1xf32>
    %cst_47 = arith.constant 3.200000e+01 : f32
    %84 = vector.broadcast %cst_47 : f32 to vector<8x1xf32>
    %85 = arith.divf %83, %84 : vector<8x1xf32>
    %86 = vector.broadcast %85 : vector<8x1xf32> to vector<8x32xf32>
    %87 = arith.subf %79, %86 : vector<8x32xf32>
    %88 = arith.mulf %87, %87 : vector<8x32xf32>
    %cst_48 = arith.constant dense<0.000000e+00> : vector<8xf32>
    %89 = vector.multi_reduction <add>, %88, %cst_48 [1] : vector<8x32xf32> to vector<8xf32>
    %90 = vector.shape_cast %89 : vector<8xf32> to vector<8x1xf32>
    %cst_49 = arith.constant 3.200000e+01 : f32
    %91 = vector.broadcast %cst_49 : f32 to vector<8x1xf32>
    %92 = arith.divf %90, %91 : vector<8x1xf32>
    %cst_50 = arith.constant 9.99999974E-6 : f32
    %93 = vector.broadcast %cst_50 : f32 to vector<8x1xf32>
    %94 = arith.addf %92, %93 : vector<8x1xf32>
    %95 = math.rsqrt %94 : vector<8x1xf32>
    %96 = vector.broadcast %95 : vector<8x1xf32> to vector<8x32xf32>
    %97 = arith.mulf %87, %96 : vector<8x32xf32>
    %98 = vector.broadcast %80 : vector<1x32xf32> to vector<8x32xf32>
    %99 = arith.mulf %97, %98 : vector<8x32xf32>
    %100 = vector.broadcast %81 : vector<1x32xf32> to vector<8x32xf32>
    %101 = arith.addf %99, %100 : vector<8x32xf32>
    %c0_51 = arith.constant 0 : index
    %c0_52 = arith.constant 0 : index
    %102 = vector.load %arg14[%c0_51, %c0_52] : memref<32x2096xf32, #tpu.memory_space<vmem>>, vector<32x2096xf32>
    %cst_53 = arith.constant dense<0.000000e+00> : vector<8x2096xf32>
    %103 = tpu.matmul %101, %102, %cst_53 {dimension_numbers = #tpu.dot_dimension_numbers<[1], [0], [0], [1], [0, 0, 1, 1], [], []>} : vector<8x32xf32>, vector<32x2096xf32>, vector<8x2096xf32> -> vector<8x2096xf32>
    %c0_54 = arith.constant 0 : index
    %c0_55 = arith.constant 0 : index
    %104 = vector.load %arg15[%c0_54, %c0_55] : memref<1x2096xf32, #tpu.memory_space<vmem>>, vector<1x2096xf32>
    %105 = vector.broadcast %104 : vector<1x2096xf32> to vector<8x2096xf32>
    %106 = arith.addf %103, %105 : vector<8x2096xf32>
    %cst_56 = arith.constant 0.000000e+00 : f32
    %107 = vector.broadcast %cst_56 : f32 to vector<8x2096xf32>
    %108 = arith.maximumf %106, %107 : vector<8x2096xf32>
    %c0_57 = arith.constant 0 : index
    %c0_58 = arith.constant 0 : index
    %109 = vector.load %arg16[%c0_57, %c0_58] : memref<2096x32xf32, #tpu.memory_space<vmem>>, vector<2096x32xf32>
    %cst_59 = arith.constant dense<0.000000e+00> : vector<8x32xf32>
    %110 = tpu.matmul %108, %109, %cst_59 {dimension_numbers = #tpu.dot_dimension_numbers<[1], [0], [0], [1], [0, 0, 1, 1], [], []>} : vector<8x2096xf32>, vector<2096x32xf32>, vector<8x32xf32> -> vector<8x32xf32>
    %c0_60 = arith.constant 0 : index
    %c0_61 = arith.constant 0 : index
    %111 = vector.load %arg17[%c0_60, %c0_61] : memref<1x32xf32, #tpu.memory_space<vmem>>, vector<1x32xf32>
    %112 = vector.broadcast %111 : vector<1x32xf32> to vector<8x32xf32>
    %113 = arith.addf %110, %112 : vector<8x32xf32>
    %114 = arith.addf %79, %113 : vector<8x32xf32>
    %c0_62 = arith.constant 0 : index
    %c0_63 = arith.constant 0 : index
    %c0_64 = arith.constant 0 : index
    %115 = vector.load %arg36[%c0_62, %c0_63, %c0_64] : memref<1x8x32xf32, #tpu.memory_space<vmem>>, vector<1x8x32xf32>
    %116 = vector.shape_cast %115 : vector<1x8x32xf32> to vector<8x32xf32>
    %117 = vector.shape_cast %114 : vector<8x32xf32> to vector<1x8x32xf32>
    tpu.vector_store %arg36[%c0_62, %c0_63, %c0_64], %117 {strides = array<i32>} : memref<1x8x32xf32, #tpu.memory_space<vmem>>, vector<1x8x32xf32>,
    %c0_65 = arith.constant 0 : index
    %c0_66 = arith.constant 0 : index
    %118 = vector.load %arg18[%c0_65, %c0_66] : memref<1x32xf32, #tpu.memory_space<vmem>>, vector<1x32xf32>
    %c0_67 = arith.constant 0 : index
    %c0_68 = arith.constant 0 : index
    %119 = vector.load %arg19[%c0_67, %c0_68] : memref<1x32xf32, #tpu.memory_space<vmem>>, vector<1x32xf32>
    %cst_69 = arith.constant dense<0.000000e+00> : vector<8xf32>
    %120 = vector.multi_reduction <add>, %114, %cst_69 [1] : vector<8x32xf32> to vector<8xf32>
    %121 = vector.shape_cast %120 : vector<8xf32> to vector<8x1xf32>
    %cst_70 = arith.constant 3.200000e+01 : f32
    %122 = vector.broadcast %cst_70 : f32 to vector<8x1xf32>
    %123 = arith.divf %121, %122 : vector<8x1xf32>
    %124 = vector.broadcast %123 : vector<8x1xf32> to vector<8x32xf32>
    %125 = arith.subf %114, %124 : vector<8x32xf32>
    %126 = arith.mulf %125, %125 : vector<8x32xf32>
    %cst_71 = arith.constant dense<0.000000e+00> : vector<8xf32>
    %127 = vector.multi_reduction <add>, %126, %cst_71 [1] : vector<8x32xf32> to vector<8xf32>
    %128 = vector.shape_cast %127 : vector<8xf32> to vector<8x1xf32>
    %cst_72 = arith.constant 3.200000e+01 : f32
    %129 = vector.broadcast %cst_72 : f32 to vector<8x1xf32>
    %130 = arith.divf %128, %129 : vector<8x1xf32>
    %cst_73 = arith.constant 9.99999974E-6 : f32
    %131 = vector.broadcast %cst_73 : f32 to vector<8x1xf32>
    %132 = arith.addf %130, %131 : vector<8x1xf32>
    %133 = math.rsqrt %132 : vector<8x1xf32>
    %134 = vector.broadcast %133 : vector<8x1xf32> to vector<8x32xf32>
    %135 = arith.mulf %125, %134 : vector<8x32xf32>
    %136 = vector.broadcast %118 : vector<1x32xf32> to vector<8x32xf32>
    %137 = arith.mulf %135, %136 : vector<8x32xf32>
    %138 = vector.broadcast %119 : vector<1x32xf32> to vector<8x32xf32>
    %139 = arith.addf %137, %138 : vector<8x32xf32>
    %c0_74 = arith.constant 0 : index
    %c0_75 = arith.constant 0 : index
    %140 = vector.load %arg20[%c0_74, %c0_75] : memref<32x32xf32, #tpu.memory_space<vmem>>, vector<32x32xf32>
    %cst_76 = arith.constant dense<0.000000e+00> : vector<8x32xf32>
    %141 = tpu.matmul %139, %140, %cst_76 {dimension_numbers = #tpu.dot_dimension_numbers<[1], [0], [0], [1], [0, 0, 1, 1], [], []>} : vector<8x32xf32>, vector<32x32xf32>, vector<8x32xf32> -> vector<8x32xf32>
    %c0_77 = arith.constant 0 : index
    %c0_78 = arith.constant 0 : index
    %142 = vector.load %arg21[%c0_77, %c0_78] : memref<1x32xf32, #tpu.memory_space<vmem>>, vector<1x32xf32>
    %143 = vector.broadcast %142 : vector<1x32xf32> to vector<8x32xf32>
    %144 = arith.addf %141, %143 : vector<8x32xf32>
    %cst_79 = arith.constant 1.250000e-01 : f32
    %145 = vector.broadcast %cst_79 : f32 to vector<8x32xf32>
    %146 = arith.mulf %144, %145 : vector<8x32xf32>
    %c0_80 = arith.constant 0 : index
    %c0_81 = arith.constant 0 : index
    %147 = vector.load %arg22[%c0_80, %c0_81] : memref<32x32xf32, #tpu.memory_space<vmem>>, vector<32x32xf32>
    %cst_82 = arith.constant dense<0.000000e+00> : vector<8x32xf32>
    %148 = tpu.matmul %139, %147, %cst_82 {dimension_numbers = #tpu.dot_dimension_numbers<[1], [0], [0], [1], [0, 0, 1, 1], [], []>} : vector<8x32xf32>, vector<32x32xf32>, vector<8x32xf32> -> vector<8x32xf32>
    %c0_83 = arith.constant 0 : index
    %c0_84 = arith.constant 0 : index
    %149 = vector.load %arg23[%c0_83, %c0_84] : memref<1x32xf32, #tpu.memory_space<vmem>>, vector<1x32xf32>
    %150 = vector.broadcast %149 : vector<1x32xf32> to vector<8x32xf32>
    %151 = arith.addf %148, %150 : vector<8x32xf32>
    %c0_85 = arith.constant 0 : index
    %c0_86 = arith.constant 0 : index
    %152 = vector.load %arg24[%c0_85, %c0_86] : memref<32x32xf32, #tpu.memory_space<vmem>>, vector<32x32xf32>
    %cst_87 = arith.constant dense<0.000000e+00> : vector<8x32xf32>
    %153 = tpu.matmul %139, %152, %cst_87 {dimension_numbers = #tpu.dot_dimension_numbers<[1], [0], [0], [1], [0, 0, 1, 1], [], []>} : vector<8x32xf32>, vector<32x32xf32>, vector<8x32xf32> -> vector<8x32xf32>
    %c0_88 = arith.constant 0 : index
    %c0_89 = arith.constant 0 : index
    %154 = vector.load %arg25[%c0_88, %c0_89] : memref<1x32xf32, #tpu.memory_space<vmem>>, vector<1x32xf32>
    %155 = vector.broadcast %154 : vector<1x32xf32> to vector<8x32xf32>
    %156 = arith.addf %153, %155 : vector<8x32xf32>
    %cst_90 = arith.constant 0.000000e+00 : f32
    %157 = vector.broadcast %cst_90 : f32 to vector<8x32xf32>
    %158 = vector.extract_strided_slice %146 {offsets = [0, 0], sizes = [8, 16], strides = [1, 1]} : vector<8x32xf32> to vector<8x16xf32>
    %159 = vector.extract_strided_slice %151 {offsets = [0, 0], sizes = [8, 16], strides = [1, 1]} : vector<8x32xf32> to vector<8x16xf32>
    %160 = vector.extract_strided_slice %156 {offsets = [0, 0], sizes = [8, 16], strides = [1, 1]} : vector<8x32xf32> to vector<8x16xf32>
    %cst_91 = arith.constant dense<0.000000e+00> : vector<8x8xf32>
    %161 = tpu.matmul %158, %159, %cst_91 {dimension_numbers = #tpu.dot_dimension_numbers<[1], [1], [0], [0], [0, 0, 1, 0], [], []>} : vector<8x16xf32>, vector<8x16xf32>, vector<8x8xf32> -> vector<8x8xf32>
    %cst_92 = arith.constant dense<0xFF800000> : vector<8xf32>
    %162 = vector.multi_reduction <maximumf>, %161, %cst_92 [1] : vector<8x8xf32> to vector<8xf32>
    %163 = vector.shape_cast %162 : vector<8xf32> to vector<8x1xf32>
    %164 = vector.broadcast %163 : vector<8x1xf32> to vector<8x8xf32>
    %165 = arith.subf %161, %164 : vector<8x8xf32>
    %166 = math.exp %165 : vector<8x8xf32>
    %cst_93 = arith.constant dense<0.000000e+00> : vector<8xf32>
    %167 = vector.multi_reduction <add>, %166, %cst_93 [1] : vector<8x8xf32> to vector<8xf32>
    %168 = vector.shape_cast %167 : vector<8xf32> to vector<8x1xf32>
    %169 = vector.broadcast %168 : vector<8x1xf32> to vector<8x8xf32>
    %170 = arith.divf %166, %169 : vector<8x8xf32>
    %cst_94 = arith.constant dense<0.000000e+00> : vector<8x16xf32>
    %171 = tpu.matmul %170, %160, %cst_94 {dimension_numbers = #tpu.dot_dimension_numbers<[1], [0], [0], [1], [0, 0, 1, 1], [], []>} : vector<8x8xf32>, vector<8x16xf32>, vector<8x16xf32> -> vector<8x16xf32>
    %c0_95 = arith.constant 0 : index
    %c0_96 = arith.constant 0 : index
    %172 = vector.load %arg26[%c0_95, %c0_96] : memref<32x32xf32, #tpu.memory_space<vmem>>, vector<16x32xf32>
    %cst_97 = arith.constant dense<0.000000e+00> : vector<8x32xf32>
    %173 = tpu.matmul %171, %172, %cst_97 {dimension_numbers = #tpu.dot_dimension_numbers<[1], [0], [0], [1], [0, 0, 1, 1], [], []>} : vector<8x16xf32>, vector<16x32xf32>, vector<8x32xf32> -> vector<8x32xf32>
    %174 = arith.addf %157, %173 : vector<8x32xf32>
    %175 = vector.extract_strided_slice %146 {offsets = [0, 16], sizes = [8, 16], strides = [1, 1]} : vector<8x32xf32> to vector<8x16xf32>
    %176 = vector.extract_strided_slice %151 {offsets = [0, 16], sizes = [8, 16], strides = [1, 1]} : vector<8x32xf32> to vector<8x16xf32>
    %177 = vector.extract_strided_slice %156 {offsets = [0, 16], sizes = [8, 16], strides = [1, 1]} : vector<8x32xf32> to vector<8x16xf32>
    %cst_98 = arith.constant dense<0.000000e+00> : vector<8x8xf32>
    %178 = tpu.matmul %175, %176, %cst_98 {dimension_numbers = #tpu.dot_dimension_numbers<[1], [1], [0], [0], [0, 0, 1, 0], [], []>} : vector<8x16xf32>, vector<8x16xf32>, vector<8x8xf32> -> vector<8x8xf32>
    %cst_99 = arith.constant dense<0xFF800000> : vector<8xf32>
    %179 = vector.multi_reduction <maximumf>, %178, %cst_99 [1] : vector<8x8xf32> to vector<8xf32>
    %180 = vector.shape_cast %179 : vector<8xf32> to vector<8x1xf32>
    %181 = vector.broadcast %180 : vector<8x1xf32> to vector<8x8xf32>
    %182 = arith.subf %178, %181 : vector<8x8xf32>
    %183 = math.exp %182 : vector<8x8xf32>
    %cst_100 = arith.constant dense<0.000000e+00> : vector<8xf32>
    %184 = vector.multi_reduction <add>, %183, %cst_100 [1] : vector<8x8xf32> to vector<8xf32>
    %185 = vector.shape_cast %184 : vector<8xf32> to vector<8x1xf32>
    %186 = vector.broadcast %185 : vector<8x1xf32> to vector<8x8xf32>
    %187 = arith.divf %183, %186 : vector<8x8xf32>
    %cst_101 = arith.constant dense<0.000000e+00> : vector<8x16xf32>
    %188 = tpu.matmul %187, %177, %cst_101 {dimension_numbers = #tpu.dot_dimension_numbers<[1], [0], [0], [1], [0, 0, 1, 1], [], []>} : vector<8x8xf32>, vector<8x16xf32>, vector<8x16xf32> -> vector<8x16xf32>
    %c16_102 = arith.constant 16 : index
    %c0_103 = arith.constant 0 : index
    %189 = vector.load %arg26[%c16_102, %c0_103] : memref<32x32xf32, #tpu.memory_space<vmem>>, vector<16x32xf32>
    %cst_104 = arith.constant dense<0.000000e+00> : vector<8x32xf32>
    %190 = tpu.matmul %188, %189, %cst_104 {dimension_numbers = #tpu.dot_dimension_numbers<[1], [0], [0], [1], [0, 0, 1, 1], [], []>} : vector<8x16xf32>, vector<16x32xf32>, vector<8x32xf32> -> vector<8x32xf32>
    %191 = arith.addf %174, %190 : vector<8x32xf32>
    %192 = arith.addf %114, %191 : vector<8x32xf32>
    %c0_105 = arith.constant 0 : index
    %c0_106 = arith.constant 0 : index
    %193 = vector.load %arg27[%c0_105, %c0_106] : memref<1x32xf32, #tpu.memory_space<vmem>>, vector<1x32xf32>
    %194 = vector.broadcast %193 : vector<1x32xf32> to vector<8x32xf32>
    %195 = arith.addf %192, %194 : vector<8x32xf32>
    %c0_107 = arith.constant 0 : index
    %c0_108 = arith.constant 0 : index
    %196 = vector.load %arg28[%c0_107, %c0_108] : memref<1x32xf32, #tpu.memory_space<vmem>>, vector<1x32xf32>
    %c0_109 = arith.constant 0 : index
    %c0_110 = arith.constant 0 : index
    %197 = vector.load %arg29[%c0_109, %c0_110] : memref<1x32xf32, #tpu.memory_space<vmem>>, vector<1x32xf32>
    %cst_111 = arith.constant dense<0.000000e+00> : vector<8xf32>
    %198 = vector.multi_reduction <add>, %195, %cst_111 [1] : vector<8x32xf32> to vector<8xf32>
    %199 = vector.shape_cast %198 : vector<8xf32> to vector<8x1xf32>
    %cst_112 = arith.constant 3.200000e+01 : f32
    %200 = vector.broadcast %cst_112 : f32 to vector<8x1xf32>
    %201 = arith.divf %199, %200 : vector<8x1xf32>
    %202 = vector.broadcast %201 : vector<8x1xf32> to vector<8x32xf32>
    %203 = arith.subf %195, %202 : vector<8x32xf32>
    %204 = arith.mulf %203, %203 : vector<8x32xf32>
    %cst_113 = arith.constant dense<0.000000e+00> : vector<8xf32>
    %205 = vector.multi_reduction <add>, %204, %cst_113 [1] : vector<8x32xf32> to vector<8xf32>
    %206 = vector.shape_cast %205 : vector<8xf32> to vector<8x1xf32>
    %cst_114 = arith.constant 3.200000e+01 : f32
    %207 = vector.broadcast %cst_114 : f32 to vector<8x1xf32>
    %208 = arith.divf %206, %207 : vector<8x1xf32>
    %cst_115 = arith.constant 9.99999974E-6 : f32
    %209 = vector.broadcast %cst_115 : f32 to vector<8x1xf32>
    %210 = arith.addf %208, %209 : vector<8x1xf32>
    %211 = math.rsqrt %210 : vector<8x1xf32>
    %212 = vector.broadcast %211 : vector<8x1xf32> to vector<8x32xf32>
    %213 = arith.mulf %203, %212 : vector<8x32xf32>
    %214 = vector.broadcast %196 : vector<1x32xf32> to vector<8x32xf32>
    %215 = arith.mulf %213, %214 : vector<8x32xf32>
    %216 = vector.broadcast %197 : vector<1x32xf32> to vector<8x32xf32>
    %217 = arith.addf %215, %216 : vector<8x32xf32>
    %c0_116 = arith.constant 0 : index
    %c0_117 = arith.constant 0 : index
    %218 = vector.load %arg30[%c0_116, %c0_117] : memref<32x2096xf32, #tpu.memory_space<vmem>>, vector<32x2096xf32>
    %cst_118 = arith.constant dense<0.000000e+00> : vector<8x2096xf32>
    %219 = tpu.matmul %217, %218, %cst_118 {dimension_numbers = #tpu.dot_dimension_numbers<[1], [0], [0], [1], [0, 0, 1, 1], [], []>} : vector<8x32xf32>, vector<32x2096xf32>, vector<8x2096xf32> -> vector<8x2096xf32>
    %c0_119 = arith.constant 0 : index
    %c0_120 = arith.constant 0 : index
    %220 = vector.load %arg31[%c0_119, %c0_120] : memref<1x2096xf32, #tpu.memory_space<vmem>>, vector<1x2096xf32>
    %221 = vector.broadcast %220 : vector<1x2096xf32> to vector<8x2096xf32>
    %222 = arith.addf %219, %221 : vector<8x2096xf32>
    %cst_121 = arith.constant 0.000000e+00 : f32
    %223 = vector.broadcast %cst_121 : f32 to vector<8x2096xf32>
    %224 = arith.maximumf %222, %223 : vector<8x2096xf32>
    %c0_122 = arith.constant 0 : index
    %c0_123 = arith.constant 0 : index
    %225 = vector.load %arg32[%c0_122, %c0_123] : memref<2096x32xf32, #tpu.memory_space<vmem>>, vector<2096x32xf32>
    %cst_124 = arith.constant dense<0.000000e+00> : vector<8x32xf32>
    %226 = tpu.matmul %224, %225, %cst_124 {dimension_numbers = #tpu.dot_dimension_numbers<[1], [0], [0], [1], [0, 0, 1, 1], [], []>} : vector<8x2096xf32>, vector<2096x32xf32>, vector<8x32xf32> -> vector<8x32xf32>
    %c0_125 = arith.constant 0 : index
    %c0_126 = arith.constant 0 : index
    %227 = vector.load %arg33[%c0_125, %c0_126] : memref<1x32xf32, #tpu.memory_space<vmem>>, vector<1x32xf32>
    %228 = vector.broadcast %227 : vector<1x32xf32> to vector<8x32xf32>
    %229 = arith.addf %226, %228 : vector<8x32xf32>
    %230 = arith.addf %195, %229 : vector<8x32xf32>
    %c0_127 = arith.constant 0 : index
    %c0_128 = arith.constant 0 : index
    %c0_129 = arith.constant 0 : index
    %231 = vector.load %arg37[%c0_127, %c0_128, %c0_129] : memref<1x8x32xf32, #tpu.memory_space<vmem>>, vector<1x8x32xf32>
    %232 = vector.shape_cast %231 : vector<1x8x32xf32> to vector<8x32xf32>
    %233 = vector.shape_cast %230 : vector<8x32xf32> to vector<1x8x32xf32>
    tpu.vector_store %arg37[%c0_127, %c0_128, %c0_129], %233 {strides = array<i32>} : memref<1x8x32xf32, #tpu.memory_space<vmem>>, vector<1x8x32xf32>,
    %c0_130 = arith.constant 0 : index
    %c0_131 = arith.constant 0 : index
    %234 = vector.load %arg34[%c0_130, %c0_131] : memref<1x32xf32, #tpu.memory_space<vmem>>, vector<1x32xf32>
    %c0_132 = arith.constant 0 : index
    %c0_133 = arith.constant 0 : index
    %235 = vector.load %arg35[%c0_132, %c0_133] : memref<1x32xf32, #tpu.memory_space<vmem>>, vector<1x32xf32>
    %cst_134 = arith.constant dense<0.000000e+00> : vector<8xf32>
    %236 = vector.multi_reduction <add>, %230, %cst_134 [1] : vector<8x32xf32> to vector<8xf32>
    %237 = vector.shape_cast %236 : vector<8xf32> to vector<8x1xf32>
    %cst_135 = arith.constant 3.200000e+01 : f32
    %238 = vector.broadcast %cst_135 : f32 to vector<8x1xf32>
    %239 = arith.divf %237, %238 : vector<8x1xf32>
    %240 = vector.broadcast %239 : vector<8x1xf32> to vector<8x32xf32>
    %241 = arith.subf %230, %240 : vector<8x32xf32>
    %242 = arith.mulf %241, %241 : vector<8x32xf32>
    %cst_136 = arith.constant dense<0.000000e+00> : vector<8xf32>
    %243 = vector.multi_reduction <add>, %242, %cst_136 [1] : vector<8x32xf32> to vector<8xf32>
    %244 = vector.shape_cast %243 : vector<8xf32> to vector<8x1xf32>
    %cst_137 = arith.constant 3.200000e+01 : f32
    %245 = vector.broadcast %cst_137 : f32 to vector<8x1xf32>
    %246 = arith.divf %244, %245 : vector<8x1xf32>
    %cst_138 = arith.constant 9.99999974E-6 : f32
    %247 = vector.broadcast %cst_138 : f32 to vector<8x1xf32>
    %248 = arith.addf %246, %247 : vector<8x1xf32>
    %249 = math.rsqrt %248 : vector<8x1xf32>
    %250 = vector.broadcast %249 : vector<8x1xf32> to vector<8x32xf32>
    %251 = arith.mulf %241, %250 : vector<8x32xf32>
    %252 = vector.broadcast %234 : vector<1x32xf32> to vector<8x32xf32>
    %253 = arith.mulf %251, %252 : vector<8x32xf32>
    %254 = vector.broadcast %235 : vector<1x32xf32> to vector<8x32xf32>
    %255 = arith.addf %253, %254 : vector<8x32xf32>
    %c0_139 = arith.constant 0 : index
    %c0_140 = arith.constant 0 : index
    %c0_141 = arith.constant 0 : index
    %256 = vector.load %arg38[%c0_139, %c0_140, %c0_141] : memref<1x8x32xf32, #tpu.memory_space<vmem>>, vector<1x8x32xf32>
    %257 = vector.shape_cast %256 : vector<1x8x32xf32> to vector<8x32xf32>
    %258 = vector.shape_cast %255 : vector<8x32xf32> to vector<1x8x32xf32>
    tpu.vector_store %arg38[%c0_139, %c0_140, %c0_141], %258 {strides = array<i32>} : memref<1x8x32xf32, #tpu.memory_space<vmem>>, vector<1x8x32xf32>,
    return
  }
  func.func @transform_0(%arg0: i32) -> (i32, i32, i32) {
    %c0_i32 = arith.constant 0 : i32
    %c0_i32_0 = arith.constant 0 : i32
    %c0_i32_1 = arith.constant 0 : i32
    return %arg0, %c0_i32, %c0_i32_0 : i32, i32, i32
  }
  func.func @transform_1(%arg0: i32) -> (i32, i32) {
    %c0_i32 = arith.constant 0 : i32
    %c0_i32_0 = arith.constant 0 : i32
    %c0_i32_1 = arith.constant 0 : i32
    return %c0_i32, %c0_i32_0 : i32, i32
  }
  func.func @transform_2(%arg0: i32) -> (i32, i32) {
    %c0_i32 = arith.constant 0 : i32
    %c0_i32_0 = arith.constant 0 : i32
    %c0_i32_1 = arith.constant 0 : i32
    return %c0_i32, %c0_i32_0 : i32, i32
  }
  func.func @transform_3(%arg0: i32) -> (i32, i32) {
    %c0_i32 = arith.constant 0 : i32
    %c0_i32_0 = arith.constant 0 : i32
    %c0_i32_1 = arith.constant 0 : i32
    return %c0_i32, %c0_i32_0 : i32, i32
  }
  func.func @transform_4(%arg0: i32) -> (i32, i32) {
    %c0_i32 = arith.constant 0 : i32
    %c0_i32_0 = arith.constant 0 : i32
    %c0_i32_1 = arith.constant 0 : i32
    return %c0_i32, %c0_i32_0 : i32, i32
  }
  func.func @transform_5(%arg0: i32) -> (i32, i32) {
    %c0_i32 = arith.constant 0 : i32
    %c0_i32_0 = arith.constant 0 : i32
    %c0_i32_1 = arith.constant 0 : i32
    return %c0_i32, %c0_i32_0 : i32, i32
  }
  func.func @transform_6(%arg0: i32) -> (i32, i32) {
    %c0_i32 = arith.constant 0 : i32
    %c0_i32_0 = arith.constant 0 : i32
    %c0_i32_1 = arith.constant 0 : i32
    return %c0_i32, %c0_i32_0 : i32, i32
  }
  func.func @transform_7(%arg0: i32) -> (i32, i32) {
    %c0_i32 = arith.constant 0 : i32
    %c0_i32_0 = arith.constant 0 : i32
    %c0_i32_1 = arith.constant 0 : i32
    return %c0_i32, %c0_i32_0 : i32, i32
  }
  func.func @transform_8(%arg0: i32) -> (i32, i32) {
    %c0_i32 = arith.constant 0 : i32
    %c0_i32_0 = arith.constant 0 : i32
    %c0_i32_1 = arith.constant 0 : i32
    return %c0_i32, %c0_i32_0 : i32, i32
  }
  func.func @transform_9(%arg0: i32) -> (i32, i32) {
    %c0_i32 = arith.constant 0 : i32
    %c0_i32_0 = arith.constant 0 : i32
    %c0_i32_1 = arith.constant 0 : i32
    return %c0_i32, %c0_i32_0 : i32, i32
  }
  func.func @transform_10(%arg0: i32) -> (i32, i32) {
    %c0_i32 = arith.constant 0 : i32
    %c0_i32_0 = arith.constant 0 : i32
    %c0_i32_1 = arith.constant 0 : i32
    return %c0_i32, %c0_i32_0 : i32, i32
  }
  func.func @transform_11(%arg0: i32) -> (i32, i32) {
    %c0_i32 = arith.constant 0 : i32
    %c0_i32_0 = arith.constant 0 : i32
    %c0_i32_1 = arith.constant 0 : i32
    return %c0_i32, %c0_i32_0 : i32, i32
  }
  func.func @transform_12(%arg0: i32) -> (i32, i32) {
    %c0_i32 = arith.constant 0 : i32
    %c0_i32_0 = arith.constant 0 : i32
    %c0_i32_1 = arith.constant 0 : i32
    return %c0_i32, %c0_i32_0 : i32, i32
  }
  func.func @transform_13(%arg0: i32) -> (i32, i32) {
    %c0_i32 = arith.constant 0 : i32
    %c0_i32_0 = arith.constant 0 : i32
    %c0_i32_1 = arith.constant 0 : i32
    return %c0_i32, %c0_i32_0 : i32, i32
  }
  func.func @transform_14(%arg0: i32) -> (i32, i32) {
    %c0_i32 = arith.constant 0 : i32
    %c0_i32_0 = arith.constant 0 : i32
    %c0_i32_1 = arith.constant 0 : i32
    return %c0_i32, %c0_i32_0 : i32, i32
  }
  func.func @transform_15(%arg0: i32) -> (i32, i32) {
    %c0_i32 = arith.constant 0 : i32
    %c0_i32_0 = arith.constant 0 : i32
    %c0_i32_1 = arith.constant 0 : i32
    return %c0_i32, %c0_i32_0 : i32, i32
  }
  func.func @transform_16(%arg0: i32) -> (i32, i32) {
    %c0_i32 = arith.constant 0 : i32
    %c0_i32_0 = arith.constant 0 : i32
    %c0_i32_1 = arith.constant 0 : i32
    return %c0_i32, %c0_i32_0 : i32, i32
  }
  func.func @transform_17(%arg0: i32) -> (i32, i32) {
    %c0_i32 = arith.constant 0 : i32
    %c0_i32_0 = arith.constant 0 : i32
    %c0_i32_1 = arith.constant 0 : i32
    return %c0_i32, %c0_i32_0 : i32, i32
  }
  func.func @transform_18(%arg0: i32) -> (i32, i32) {
    %c0_i32 = arith.constant 0 : i32
    %c0_i32_0 = arith.constant 0 : i32
    %c0_i32_1 = arith.constant 0 : i32
    return %c0_i32, %c0_i32_0 : i32, i32
  }
  func.func @transform_19(%arg0: i32) -> (i32, i32) {
    %c0_i32 = arith.constant 0 : i32
    %c0_i32_0 = arith.constant 0 : i32
    %c0_i32_1 = arith.constant 0 : i32
    return %c0_i32, %c0_i32_0 : i32, i32
  }
  func.func @transform_20(%arg0: i32) -> (i32, i32) {
    %c0_i32 = arith.constant 0 : i32
    %c0_i32_0 = arith.constant 0 : i32
    %c0_i32_1 = arith.constant 0 : i32
    return %c0_i32, %c0_i32_0 : i32, i32
  }
  func.func @transform_21(%arg0: i32) -> (i32, i32) {
    %c0_i32 = arith.constant 0 : i32
    %c0_i32_0 = arith.constant 0 : i32
    %c0_i32_1 = arith.constant 0 : i32
    return %c0_i32, %c0_i32_0 : i32, i32
  }
  func.func @transform_22(%arg0: i32) -> (i32, i32) {
    %c0_i32 = arith.constant 0 : i32
    %c0_i32_0 = arith.constant 0 : i32
    %c0_i32_1 = arith.constant 0 : i32
    return %c0_i32, %c0_i32_0 : i32, i32
  }
  func.func @transform_23(%arg0: i32) -> (i32, i32) {
    %c0_i32 = arith.constant 0 : i32
    %c0_i32_0 = arith.constant 0 : i32
    %c0_i32_1 = arith.constant 0 : i32
    return %c0_i32, %c0_i32_0 : i32, i32
  }
  func.func @transform_24(%arg0: i32) -> (i32, i32) {
    %c0_i32 = arith.constant 0 : i32
    %c0_i32_0 = arith.constant 0 : i32
    %c0_i32_1 = arith.constant 0 : i32
    return %c0_i32, %c0_i32_0 : i32, i32
  }
  func.func @transform_25(%arg0: i32) -> (i32, i32) {
    %c0_i32 = arith.constant 0 : i32
    %c0_i32_0 = arith.constant 0 : i32
    %c0_i32_1 = arith.constant 0 : i32
    return %c0_i32, %c0_i32_0 : i32, i32
  }
  func.func @transform_26(%arg0: i32) -> (i32, i32) {
    %c0_i32 = arith.constant 0 : i32
    %c0_i32_0 = arith.constant 0 : i32
    %c0_i32_1 = arith.constant 0 : i32
    return %c0_i32, %c0_i32_0 : i32, i32
  }
  func.func @transform_27(%arg0: i32) -> (i32, i32) {
    %c0_i32 = arith.constant 0 : i32
    %c0_i32_0 = arith.constant 0 : i32
    %c0_i32_1 = arith.constant 0 : i32
    return %c0_i32, %c0_i32_0 : i32, i32
  }
  func.func @transform_28(%arg0: i32) -> (i32, i32) {
    %c0_i32 = arith.constant 0 : i32
    %c0_i32_0 = arith.constant 0 : i32
    %c0_i32_1 = arith.constant 0 : i32
    return %c0_i32, %c0_i32_0 : i32, i32
  }
  func.func @transform_29(%arg0: i32) -> (i32, i32) {
    %c0_i32 = arith.constant 0 : i32
    %c0_i32_0 = arith.constant 0 : i32
    %c0_i32_1 = arith.constant 0 : i32
    return %c0_i32, %c0_i32_0 : i32, i32
  }
  func.func @transform_30(%arg0: i32) -> (i32, i32) {
    %c0_i32 = arith.constant 0 : i32
    %c0_i32_0 = arith.constant 0 : i32
    %c0_i32_1 = arith.constant 0 : i32
    return %c0_i32, %c0_i32_0 : i32, i32
  }
  func.func @transform_31(%arg0: i32) -> (i32, i32) {
    %c0_i32 = arith.constant 0 : i32
    %c0_i32_0 = arith.constant 0 : i32
    %c0_i32_1 = arith.constant 0 : i32
    return %c0_i32, %c0_i32_0 : i32, i32
  }
  func.func @transform_32(%arg0: i32) -> (i32, i32) {
    %c0_i32 = arith.constant 0 : i32
    %c0_i32_0 = arith.constant 0 : i32
    %c0_i32_1 = arith.constant 0 : i32
    return %c0_i32, %c0_i32_0 : i32, i32
  }
  func.func @transform_33(%arg0: i32) -> (i32, i32) {
    %c0_i32 = arith.constant 0 : i32
    %c0_i32_0 = arith.constant 0 : i32
    %c0_i32_1 = arith.constant 0 : i32
    return %c0_i32, %c0_i32_0 : i32, i32
  }
  func.func @transform_34(%arg0: i32) -> (i32, i32) {
    %c0_i32 = arith.constant 0 : i32
    %c0_i32_0 = arith.constant 0 : i32
    %c0_i32_1 = arith.constant 0 : i32
    return %c0_i32, %c0_i32_0 : i32, i32
  }
  func.func @transform_35(%arg0: i32) -> (i32, i32, i32) {
    %c0_i32 = arith.constant 0 : i32
    %c0_i32_0 = arith.constant 0 : i32
    %c0_i32_1 = arith.constant 0 : i32
    return %arg0, %c0_i32, %c0_i32_0 : i32, i32, i32
  }
  func.func @transform_36(%arg0: i32) -> (i32, i32, i32) {
    %c0_i32 = arith.constant 0 : i32
    %c0_i32_0 = arith.constant 0 : i32
    %c0_i32_1 = arith.constant 0 : i32
    return %arg0, %c0_i32, %c0_i32_0 : i32, i32, i32
  }
  func.func @transform_37(%arg0: i32) -> (i32, i32, i32) {
    %c0_i32 = arith.constant 0 : i32
    %c0_i32_0 = arith.constant 0 : i32
    %c0_i32_1 = arith.constant 0 : i32
    return %arg0, %c0_i32, %c0_i32_0 : i32, i32, i32
  }
}

</mosaic_0001>

<llo_original>
// kernel: tpu_custom_call.1
$region0: #{tpu_custom_call.1}
  #allocation0 [shape = 'u32[]', space=smem, size = 0x4, offset = 0x4, fixed_abs, tag = 'smem constant byte address 0x4 - core index']
  #allocation1 [shape = 'u32[144,128]{1,0:T(1,128)}', space=vmem, size = 0x12000, scoped, tag = 'internal scratch']
  %s0 = inlined_call_operand.smem [shape: u32[38], index: -1, kind: input, shape index: {}]
  %s1 = sld [smem:[%s0]]
  %s2 = scalar_lea.smem %s0, 1
  %s3 = sld [smem:[%s2]]
  %s4 = scalar_lea.smem %s0, 2
  %s5 = sld [smem:[%s4]]
  %s6 = scalar_lea.smem %s0, 3
  %s7 = sld [smem:[%s6]]
  %s8 = scalar_lea.smem %s0, 4
  %s9 = sld [smem:[%s8]]
  %s10 = scalar_lea.smem %s0, 5
  %s11 = sld [smem:[%s10]]
  %s12 = scalar_lea.smem %s0, 6
  %s13 = sld [smem:[%s12]]
  %s14 = scalar_lea.smem %s0, 7
  %s15 = sld [smem:[%s14]]
  %s16 = scalar_lea.smem %s0, 8
  %s17 = sld [smem:[%s16]]
  %s18 = scalar_lea.smem %s0, 9
  %s19 = sld [smem:[%s18]]
  %s20 = scalar_lea.smem %s0, 10
  %s21 = sld [smem:[%s20]]
  %s22 = scalar_lea.smem %s0, 11
  %s23 = sld [smem:[%s22]]
  %s24 = scalar_lea.smem %s0, 12
  %s25 = sld [smem:[%s24]]
  %s26 = scalar_lea.smem %s0, 13
  %s27 = sld [smem:[%s26]]
  %s28 = scalar_lea.smem %s0, 14
  %s29 = sld [smem:[%s28]]
  %s30 = scalar_lea.smem %s0, 15
  %s31 = sld [smem:[%s30]]
  %s32 = scalar_lea.smem %s0, 16
  %s33 = sld [smem:[%s32]]
  %s34 = scalar_lea.smem %s0, 17
  %s35 = sld [smem:[%s34]]
  %s36 = scalar_lea.smem %s0, 18
  %s37 = sld [smem:[%s36]]
  %s38 = scalar_lea.smem %s0, 19
  %s39 = sld [smem:[%s38]]
  %s40 = scalar_lea.smem %s0, 20
  %s41 = sld [smem:[%s40]]
  %s42 = scalar_lea.smem %s0, 21
  %s43 = sld [smem:[%s42]]
  %s44 = scalar_lea.smem %s0, 22
  %s45 = sld [smem:[%s44]]
  %s46 = scalar_lea.smem %s0, 23
  %s47 = sld [smem:[%s46]]
  %s48 = scalar_lea.smem %s0, 24
  %s49 = sld [smem:[%s48]]
  %s50 = scalar_lea.smem %s0, 25
  %s51 = sld [smem:[%s50]]
  %s52 = scalar_lea.smem %s0, 26
  %s53 = sld [smem:[%s52]]
  %s54 = scalar_lea.smem %s0, 27
  %s55 = sld [smem:[%s54]]
  %s56 = scalar_lea.smem %s0, 28
  %s57 = sld [smem:[%s56]]
  %s58 = scalar_lea.smem %s0, 29
  %s59 = sld [smem:[%s58]]
  %s60 = scalar_lea.smem %s0, 30
  %s61 = sld [smem:[%s60]]
  %s62 = scalar_lea.smem %s0, 31
  %s63 = sld [smem:[%s62]]
  %s64 = scalar_lea.smem %s0, 32
  %s65 = sld [smem:[%s64]]
  %s66 = scalar_lea.smem %s0, 33
  %s67 = sld [smem:[%s66]]
  %s68 = scalar_lea.smem %s0, 34
  %s69 = sld [smem:[%s68]]
  %s70 = scalar_lea.smem %s0, 35
  %s71 = sld [smem:[%s70]]
  %s72 = scalar_lea.smem %s0, 36
  %s73 = sld [smem:[%s72]]
  %s74 = scalar_lea.smem %s0, 37
  %s75 = sld [smem:[%s74]]
  %76 = xla_tuple %s71, %s73, %s75
  %s77 = sld [smem:[#allocation0]]
  $region189: #{tpu_custom_call.1} parent=0
    _
  %s79 = ssub.s32 1, %s77
  %s80 = scalar_select 0, %s79, %s77
  $region1: #{tpu_custom_call.1} parent=0
    #allocation2 [shape = 'u8[8192]{0}', space=vmem, size = 0x2000, scoped, tag = 'output window, operand 0']
    #allocation3 [shape = 's32[2]{0}', space=sflag, size = 0x8, scoped, tag = 'scoped memory for tpu_custom_call.1']
    #allocation4 [shape = 'u8[8192]{0}', space=vmem, size = 0x2000, scoped, tag = 'output window, operand 1']
    #allocation5 [shape = 's32[2]{0}', space=sflag, size = 0x8, scoped, tag = 'scoped memory for tpu_custom_call.1']
    #allocation6 [shape = 'u8[8192]{0}', space=vmem, size = 0x2000, scoped, tag = 'output window, operand 2']
    %81 = vsyncpa [#allocation3], 0
    %s82 = scalar_lea.sflag [#allocation3], 1
    %83 = vsyncpa %s82, 0
    %84 = vsyncpa [#allocation5], 0
    %s85 = scalar_lea.sflag [#allocation5], 1
    %86 = vsyncpa %s85, 0
    loop: start=0, step=1, limit=4
    $region2: #{tpu_custom_call.1} parent=1 // loop_pre_header
      _
    $region3: #{tpu_custom_call.1} parent=1 // loop_header
      %s88 = sphi 0, %s92
      %p89 = scmp.ge.s32.totalorder %s88, 4
      %s98 = sphi 0, %s100
      %s101 = sphi 0, %s98
      %s102 = sphi 0, %s101
      %s118 = sphi 0, %s102
      %s122 = sphi 0, %s122
      %s124 = sphi 0, %s122
      %s125 = sphi 0, %s124
      %s139 = sphi 0, %s125
      %s143 = sphi 0, %s143
      %s145 = sphi 0, %s143
      %s146 = sphi 0, %s145
      %s160 = sphi 0, %s146
      %s164 = sphi 0, %s164
      %s166 = sphi 0, %s164
      %s167 = sphi 0, %s166
      %s181 = sphi 0, %s167
      %s185 = sphi 0, %s185
      %s187 = sphi 0, %s185
      %s188 = sphi 0, %s187
      %s202 = sphi 0, %s188
      %s206 = sphi 0, %s206
      %s208 = sphi 0, %s206
      %s209 = sphi 0, %s208
      %s223 = sphi 0, %s209
      %s227 = sphi 0, %s227
      %s229 = sphi 0, %s227
      %s230 = sphi 0, %s229
      %s244 = sphi 0, %s230
      %s248 = sphi 0, %s248
      %s250 = sphi 0, %s248
      %s251 = sphi 0, %s250
      %s265 = sphi 0, %s251
      %s269 = sphi 0, %s269
      %s271 = sphi 0, %s269
      %s272 = sphi 0, %s271
      %s286 = sphi 0, %s272
      %s290 = sphi 0, %s290
      %s292 = sphi 0, %s290
      %s293 = sphi 0, %s292
      %s307 = sphi 0, %s293
      %s311 = sphi 0, %s311
      %s313 = sphi 0, %s311
      %s314 = sphi 0, %s313
      %s328 = sphi 0, %s314
      %s332 = sphi 0, %s332
      %s334 = sphi 0, %s332
      %s335 = sphi 0, %s334
      %s349 = sphi 0, %s335
      %s353 = sphi 0, %s353
      %s355 = sphi 0, %s353
      %s356 = sphi 0, %s355
      %s370 = sphi 0, %s356
      %s374 = sphi 0, %s374
      %s376 = sphi 0, %s374
      %s377 = sphi 0, %s376
      %s391 = sphi 0, %s377
      %s395 = sphi 0, %s395
      %s397 = sphi 0, %s395
      %s398 = sphi 0, %s397
      %s412 = sphi 0, %s398
      %s416 = sphi 0, %s416
      %s418 = sphi 0, %s416
      %s419 = sphi 0, %s418
      %s433 = sphi 0, %s419
      %s437 = sphi 0, %s437
      %s439 = sphi 0, %s437
      %s440 = sphi 0, %s439
      %s454 = sphi 0, %s440
      %s458 = sphi 0, %s458
      %s460 = sphi 0, %s458
      %s461 = sphi 0, %s460
      %s475 = sphi 0, %s461
      %s479 = sphi 0, %s479
      %s481 = sphi 0, %s479
      %s482 = sphi 0, %s481
      %s496 = sphi 0, %s482
      %s500 = sphi 0, %s500
      %s502 = sphi 0, %s500
      %s503 = sphi 0, %s502
      %s517 = sphi 0, %s503
      %s521 = sphi 0, %s521
      %s523 = sphi 0, %s521
      %s524 = sphi 0, %s523
      %s538 = sphi 0, %s524
      %s542 = sphi 0, %s542
      %s544 = sphi 0, %s542
      %s545 = sphi 0, %s544
      %s559 = sphi 0, %s545
      %s563 = sphi 0, %s563
      %s565 = sphi 0, %s563
      %s566 = sphi 0, %s565
      %s580 = sphi 0, %s566
      %s584 = sphi 0, %s584
      %s586 = sphi 0, %s584
      %s587 = sphi 0, %s586
      %s601 = sphi 0, %s587
      %s605 = sphi 0, %s605
      %s607 = sphi 0, %s605
      %s608 = sphi 0, %s607
      %s622 = sphi 0, %s608
      %s626 = sphi 0, %s626
      %s628 = sphi 0, %s626
      %s629 = sphi 0, %s628
      %s643 = sphi 0, %s629
      %s647 = sphi 0, %s647
      %s649 = sphi 0, %s647
      %s650 = sphi 0, %s649
      %s664 = sphi 0, %s650
      %s668 = sphi 0, %s668
      %s670 = sphi 0, %s668
      %s671 = sphi 0, %s670
      %s685 = sphi 0, %s671
      %s689 = sphi 0, %s689
      %s691 = sphi 0, %s689
      %s692 = sphi 0, %s691
      %s706 = sphi 0, %s692
      %s710 = sphi 0, %s710
      %s712 = sphi 0, %s710
      %s713 = sphi 0, %s712
      %s727 = sphi 0, %s713
      %s731 = sphi 0, %s731
      %s733 = sphi 0, %s731
      %s734 = sphi 0, %s733
      %s748 = sphi 0, %s734
      %s752 = sphi 0, %s752
      %s754 = sphi 0, %s752
      %s755 = sphi 0, %s754
      %s769 = sphi 0, %s755
      %s773 = sphi 0, %s773
      %s775 = sphi 0, %s773
      %s776 = sphi 0, %s775
      %s790 = sphi 0, %s776
      %s794 = sphi 0, %s794
      %s796 = sphi 0, %s794
      %s797 = sphi 0, %s796
      %s811 = sphi 0, %s797
      %s815 = sphi 0, %s815
      %s817 = sphi 0, %s815
      %s818 = sphi 0, %s817
      %s832 = sphi 0, %s818
      %s838 = sphi 0, %s840
      %s841 = sphi 0, %s838
      %s842 = sphi 0, %s841
      %s858 = sphi 0, %s842
      %s864 = sphi 0, %s866
      %s867 = sphi 0, %s864
      %s868 = sphi 0, %s867
      %s884 = sphi 0, %s868
      %s890 = sphi 0, %s892
      %s893 = sphi 0, %s890
      %s894 = sphi 0, %s893
      %s910 = sphi 0, %s894
    $region4: #{tpu_custom_call.1} parent=1 // loop_header_branch
      %91 = sbr.rel (%p89) target = $region8
    $region5: #{tpu_custom_call.1} parent=1 // loop_body
      %s93 = ssub.s32 %s88, 1
      %s94 = ssub.s32 %s88, 2
      %s95 = sadd.s32 %s88, 1
      %s96 = ssub.s32 %s88, %s95
      %p97 = scmp.eq.s32.totalorder %s96, 0
      %s99 = sadd.s32 %s98, 1
      %s100 = scalar_select %p97, %s98, %s99
      %p103 = pneg %p97
      %p104 = scmp.eq.s32.totalorder %s88, 1
      %p105 = por %p103, %p104
      %p106 = scmp.ne.s32.totalorder %s98, %s101
      %p107 = scmp.eq.s32.totalorder %s88, 0
      %p108 = por %p106, %p107
      %p109 = scmp.ne.s32.totalorder %s98, %s101
      %p110 = scmp.eq.s32.totalorder %s93, 1
      %p111 = por %p109, %p110
      %p112 = scmp.ne.s32.totalorder %s101, %s102
      %p113 = scmp.eq.s32.totalorder %s93, 0
      %p114 = por %p112, %p113
      %p115 = scmp.ne.s32.totalorder %s101, %s102
      %p116 = scmp.eq.s32.totalorder %s94, 1
      %p117 = por %p115, %p116
      %p119 = scmp.ne.s32.totalorder %s102, %s118
      %p120 = scmp.eq.s32.totalorder %s94, 0
      %p121 = por %p119, %p120
      %s123 = sadd.s32 %s122, 1
      %p126 = scmp.eq.s32.totalorder %s88, 1
      %p127 = scmp.ne.s32.totalorder %s122, %s124
      %p128 = scmp.eq.s32.totalorder %s88, 0
      %p129 = por %p127, %p128
      %p130 = scmp.ne.s32.totalorder %s122, %s124
      %p131 = scmp.eq.s32.totalorder %s93, 1
      %p132 = por %p130, %p131
      %p133 = scmp.ne.s32.totalorder %s124, %s125
      %p134 = scmp.eq.s32.totalorder %s93, 0
      %p135 = por %p133, %p134
      %p136 = scmp.ne.s32.totalorder %s124, %s125
      %p137 = scmp.eq.s32.totalorder %s94, 1
      %p138 = por %p136, %p137
      %p140 = scmp.ne.s32.totalorder %s125, %s139
      %p141 = scmp.eq.s32.totalorder %s94, 0
      %p142 = por %p140, %p141
      %s144 = sadd.s32 %s143, 1
      %p147 = scmp.eq.s32.totalorder %s88, 1
      %p148 = scmp.ne.s32.totalorder %s143, %s145
      %p149 = scmp.eq.s32.totalorder %s88, 0
      %p150 = por %p148, %p149
      %p151 = scmp.ne.s32.totalorder %s143, %s145
      %p152 = scmp.eq.s32.totalorder %s93, 1
      %p153 = por %p151, %p152
      %p154 = scmp.ne.s32.totalorder %s145, %s146
      %p155 = scmp.eq.s32.totalorder %s93, 0
      %p156 = por %p154, %p155
      %p157 = scmp.ne.s32.totalorder %s145, %s146
      %p158 = scmp.eq.s32.totalorder %s94, 1
      %p159 = por %p157, %p158
      %p161 = scmp.ne.s32.totalorder %s146, %s160
      %p162 = scmp.eq.s32.totalorder %s94, 0
      %p163 = por %p161, %p162
      %s165 = sadd.s32 %s164, 1
      %p168 = scmp.eq.s32.totalorder %s88, 1
      %p169 = scmp.ne.s32.totalorder %s164, %s166
      %p170 = scmp.eq.s32.totalorder %s88, 0
      %p171 = por %p169, %p170
      %p172 = scmp.ne.s32.totalorder %s164, %s166
      %p173 = scmp.eq.s32.totalorder %s93, 1
      %p174 = por %p172, %p173
      %p175 = scmp.ne.s32.totalorder %s166, %s167
      %p176 = scmp.eq.s32.totalorder %s93, 0
      %p177 = por %p175, %p176
      %p178 = scmp.ne.s32.totalorder %s166, %s167
      %p179 = scmp.eq.s32.totalorder %s94, 1
      %p180 = por %p178, %p179
      %p182 = scmp.ne.s32.totalorder %s167, %s181
      %p183 = scmp.eq.s32.totalorder %s94, 0
      %p184 = por %p182, %p183
      %s186 = sadd.s32 %s185, 1
      %p189 = scmp.eq.s32.totalorder %s88, 1
      %p190 = scmp.ne.s32.totalorder %s185, %s187
      %p191 = scmp.eq.s32.totalorder %s88, 0
      %p192 = por %p190, %p191
      %p193 = scmp.ne.s32.totalorder %s185, %s187
      %p194 = scmp.eq.s32.totalorder %s93, 1
      %p195 = por %p193, %p194
      %p196 = scmp.ne.s32.totalorder %s187, %s188
      %p197 = scmp.eq.s32.totalorder %s93, 0
      %p198 = por %p196, %p197
      %p199 = scmp.ne.s32.totalorder %s187, %s188
      %p200 = scmp.eq.s32.totalorder %s94, 1
      %p201 = por %p199, %p200
      %p203 = scmp.ne.s32.totalorder %s188, %s202
      %p204 = scmp.eq.s32.totalorder %s94, 0
      %p205 = por %p203, %p204
      %s207 = sadd.s32 %s206, 1
      %p210 = scmp.eq.s32.totalorder %s88, 1
      %p211 = scmp.ne.s32.totalorder %s206, %s208
      %p212 = scmp.eq.s32.totalorder %s88, 0
      %p213 = por %p211, %p212
      %p214 = scmp.ne.s32.totalorder %s206, %s208
      %p215 = scmp.eq.s32.totalorder %s93, 1
      %p216 = por %p214, %p215
      %p217 = scmp.ne.s32.totalorder %s208, %s209
      %p218 = scmp.eq.s32.totalorder %s93, 0
      %p219 = por %p217, %p218
      %p220 = scmp.ne.s32.totalorder %s208, %s209
      %p221 = scmp.eq.s32.totalorder %s94, 1
      %p222 = por %p220, %p221
      %p224 = scmp.ne.s32.totalorder %s209, %s223
      %p225 = scmp.eq.s32.totalorder %s94, 0
      %p226 = por %p224, %p225
      %s228 = sadd.s32 %s227, 1
      %p231 = scmp.eq.s32.totalorder %s88, 1
      %p232 = scmp.ne.s32.totalorder %s227, %s229
      %p233 = scmp.eq.s32.totalorder %s88, 0
      %p234 = por %p232, %p233
      %p235 = scmp.ne.s32.totalorder %s227, %s229
      %p236 = scmp.eq.s32.totalorder %s93, 1
      %p237 = por %p235, %p236
      %p238 = scmp.ne.s32.totalorder %s229, %s230
      %p239 = scmp.eq.s32.totalorder %s93, 0
      %p240 = por %p238, %p239
      %p241 = scmp.ne.s32.totalorder %s229, %s230
      %p242 = scmp.eq.s32.totalorder %s94, 1
      %p243 = por %p241, %p242
      %p245 = scmp.ne.s32.totalorder %s230, %s244
      %p246 = scmp.eq.s32.totalorder %s94, 0
      %p247 = por %p245, %p246
      %s249 = sadd.s32 %s248, 1
      %p252 = scmp.eq.s32.totalorder %s88, 1
      %p253 = scmp.ne.s32.totalorder %s248, %s250
      %p254 = scmp.eq.s32.totalorder %s88, 0
      %p255 = por %p253, %p254
      %p256 = scmp.ne.s32.totalorder %s248, %s250
      %p257 = scmp.eq.s32.totalorder %s93, 1
      %p258 = por %p256, %p257
      %p259 = scmp.ne.s32.totalorder %s250, %s251
      %p260 = scmp.eq.s32.totalorder %s93, 0
      %p261 = por %p259, %p260
      %p262 = scmp.ne.s32.totalorder %s250, %s251
      %p263 = scmp.eq.s32.totalorder %s94, 1
      %p264 = por %p262, %p263
      %p266 = scmp.ne.s32.totalorder %s251, %s265
      %p267 = scmp.eq.s32.totalorder %s94, 0
      %p268 = por %p266, %p267
      %s270 = sadd.s32 %s269, 1
      %p273 = scmp.eq.s32.totalorder %s88, 1
      %p274 = scmp.ne.s32.totalorder %s269, %s271
      %p275 = scmp.eq.s32.totalorder %s88, 0
      %p276 = por %p274, %p275
      %p277 = scmp.ne.s32.totalorder %s269, %s271
      %p278 = scmp.eq.s32.totalorder %s93, 1
      %p279 = por %p277, %p278
      %p280 = scmp.ne.s32.totalorder %s271, %s272
      %p281 = scmp.eq.s32.totalorder %s93, 0
      %p282 = por %p280, %p281
      %p283 = scmp.ne.s32.totalorder %s271, %s272
      %p284 = scmp.eq.s32.totalorder %s94, 1
      %p285 = por %p283, %p284
      %p287 = scmp.ne.s32.totalorder %s272, %s286
      %p288 = scmp.eq.s32.totalorder %s94, 0
      %p289 = por %p287, %p288
      %s291 = sadd.s32 %s290, 1
      %p294 = scmp.eq.s32.totalorder %s88, 1
      %p295 = scmp.ne.s32.totalorder %s290, %s292
      %p296 = scmp.eq.s32.totalorder %s88, 0
      %p297 = por %p295, %p296
      %p298 = scmp.ne.s32.totalorder %s290, %s292
      %p299 = scmp.eq.s32.totalorder %s93, 1
      %p300 = por %p298, %p299
      %p301 = scmp.ne.s32.totalorder %s292, %s293
      %p302 = scmp.eq.s32.totalorder %s93, 0
      %p303 = por %p301, %p302
      %p304 = scmp.ne.s32.totalorder %s292, %s293
      %p305 = scmp.eq.s32.totalorder %s94, 1
      %p306 = por %p304, %p305
      %p308 = scmp.ne.s32.totalorder %s293, %s307
      %p309 = scmp.eq.s32.totalorder %s94, 0
      %p310 = por %p308, %p309
      %s312 = sadd.s32 %s311, 1
      %p315 = scmp.eq.s32.totalorder %s88, 1
      %p316 = scmp.ne.s32.totalorder %s311, %s313
      %p317 = scmp.eq.s32.totalorder %s88, 0
      %p318 = por %p316, %p317
      %p319 = scmp.ne.s32.totalorder %s311, %s313
      %p320 = scmp.eq.s32.totalorder %s93, 1
      %p321 = por %p319, %p320
      %p322 = scmp.ne.s32.totalorder %s313, %s314
      %p323 = scmp.eq.s32.totalorder %s93, 0
      %p324 = por %p322, %p323
      %p325 = scmp.ne.s32.totalorder %s313, %s314
      %p326 = scmp.eq.s32.totalorder %s94, 1
      %p327 = por %p325, %p326
      %p329 = scmp.ne.s32.totalorder %s314, %s328
      %p330 = scmp.eq.s32.totalorder %s94, 0
      %p331 = por %p329, %p330
      %s333 = sadd.s32 %s332, 1
      %p336 = scmp.eq.s32.totalorder %s88, 1
      %p337 = scmp.ne.s32.totalorder %s332, %s334
      %p338 = scmp.eq.s32.totalorder %s88, 0
      %p339 = por %p337, %p338
      %p340 = scmp.ne.s32.totalorder %s332, %s334
      %p341 = scmp.eq.s32.totalorder %s93, 1
      %p342 = por %p340, %p341
      %p343 = scmp.ne.s32.totalorder %s334, %s335
      %p344 = scmp.eq.s32.totalorder %s93, 0
      %p345 = por %p343, %p344
      %p346 = scmp.ne.s32.totalorder %s334, %s335
      %p347 = scmp.eq.s32.totalorder %s94, 1
      %p348 = por %p346, %p347
      %p350 = scmp.ne.s32.totalorder %s335, %s349
      %p351 = scmp.eq.s32.totalorder %s94, 0
      %p352 = por %p350, %p351
      %s354 = sadd.s32 %s353, 1
      %p357 = scmp.eq.s32.totalorder %s88, 1
      %p358 = scmp.ne.s32.totalorder %s353, %s355
      %p359 = scmp.eq.s32.totalorder %s88, 0
      %p360 = por %p358, %p359
      %p361 = scmp.ne.s32.totalorder %s353, %s355
      %p362 = scmp.eq.s32.totalorder %s93, 1
      %p363 = por %p361, %p362
      %p364 = scmp.ne.s32.totalorder %s355, %s356
      %p365 = scmp.eq.s32.totalorder %s93, 0
      %p366 = por %p364, %p365
      %p367 = scmp.ne.s32.totalorder %s355, %s356
      %p368 = scmp.eq.s32.totalorder %s94, 1
      %p369 = por %p367, %p368
      %p371 = scmp.ne.s32.totalorder %s356, %s370
      %p372 = scmp.eq.s32.totalorder %s94, 0
      %p373 = por %p371, %p372
      %s375 = sadd.s32 %s374, 1
      %p378 = scmp.eq.s32.totalorder %s88, 1
      %p379 = scmp.ne.s32.totalorder %s374, %s376
      %p380 = scmp.eq.s32.totalorder %s88, 0
      %p381 = por %p379, %p380
      %p382 = scmp.ne.s32.totalorder %s374, %s376
      %p383 = scmp.eq.s32.totalorder %s93, 1
      %p384 = por %p382, %p383
      %p385 = scmp.ne.s32.totalorder %s376, %s377
      %p386 = scmp.eq.s32.totalorder %s93, 0
      %p387 = por %p385, %p386
      %p388 = scmp.ne.s32.totalorder %s376, %s377
      %p389 = scmp.eq.s32.totalorder %s94, 1
      %p390 = por %p388, %p389
      %p392 = scmp.ne.s32.totalorder %s377, %s391
      %p393 = scmp.eq.s32.totalorder %s94, 0
      %p394 = por %p392, %p393
      %s396 = sadd.s32 %s395, 1
      %p399 = scmp.eq.s32.totalorder %s88, 1
      %p400 = scmp.ne.s32.totalorder %s395, %s397
      %p401 = scmp.eq.s32.totalorder %s88, 0
      %p402 = por %p400, %p401
      %p403 = scmp.ne.s32.totalorder %s395, %s397
      %p404 = scmp.eq.s32.totalorder %s93, 1
      %p405 = por %p403, %p404
      %p406 = scmp.ne.s32.totalorder %s397, %s398
      %p407 = scmp.eq.s32.totalorder %s93, 0
      %p408 = por %p406, %p407
      %p409 = scmp.ne.s32.totalorder %s397, %s398
      %p410 = scmp.eq.s32.totalorder %s94, 1
      %p411 = por %p409, %p410
      %p413 = scmp.ne.s32.totalorder %s398, %s412
      %p414 = scmp.eq.s32.totalorder %s94, 0
      %p415 = por %p413, %p414
      %s417 = sadd.s32 %s416, 1
      %p420 = scmp.eq.s32.totalorder %s88, 1
      %p421 = scmp.ne.s32.totalorder %s416, %s418
      %p422 = scmp.eq.s32.totalorder %s88, 0
      %p423 = por %p421, %p422
      %p424 = scmp.ne.s32.totalorder %s416, %s418
      %p425 = scmp.eq.s32.totalorder %s93, 1
      %p426 = por %p424, %p425
      %p427 = scmp.ne.s32.totalorder %s418, %s419
      %p428 = scmp.eq.s32.totalorder %s93, 0
      %p429 = por %p427, %p428
      %p430 = scmp.ne.s32.totalorder %s418, %s419
      %p431 = scmp.eq.s32.totalorder %s94, 1
      %p432 = por %p430, %p431
      %p434 = scmp.ne.s32.totalorder %s419, %s433
      %p435 = scmp.eq.s32.totalorder %s94, 0
      %p436 = por %p434, %p435
      %s438 = sadd.s32 %s437, 1
      %p441 = scmp.eq.s32.totalorder %s88, 1
      %p442 = scmp.ne.s32.totalorder %s437, %s439
      %p443 = scmp.eq.s32.totalorder %s88, 0
      %p444 = por %p442, %p443
      %p445 = scmp.ne.s32.totalorder %s437, %s439
      %p446 = scmp.eq.s32.totalorder %s93, 1
      %p447 = por %p445, %p446
      %p448 = scmp.ne.s32.totalorder %s439, %s440
      %p449 = scmp.eq.s32.totalorder %s93, 0
      %p450 = por %p448, %p449
      %p451 = scmp.ne.s32.totalorder %s439, %s440
      %p452 = scmp.eq.s32.totalorder %s94, 1
      %p453 = por %p451, %p452
      %p455 = scmp.ne.s32.totalorder %s440, %s454
      %p456 = scmp.eq.s32.totalorder %s94, 0
      %p457 = por %p455, %p456
      %s459 = sadd.s32 %s458, 1
      %p462 = scmp.eq.s32.totalorder %s88, 1
      %p463 = scmp.ne.s32.totalorder %s458, %s460
      %p464 = scmp.eq.s32.totalorder %s88, 0
      %p465 = por %p463, %p464
      %p466 = scmp.ne.s32.totalorder %s458, %s460
      %p467 = scmp.eq.s32.totalorder %s93, 1
      %p468 = por %p466, %p467
      %p469 = scmp.ne.s32.totalorder %s460, %s461
      %p470 = scmp.eq.s32.totalorder %s93, 0
      %p471 = por %p469, %p470
      %p472 = scmp.ne.s32.totalorder %s460, %s461
      %p473 = scmp.eq.s32.totalorder %s94, 1
      %p474 = por %p472, %p473
      %p476 = scmp.ne.s32.totalorder %s461, %s475
      %p477 = scmp.eq.s32.totalorder %s94, 0
      %p478 = por %p476, %p477
      %s480 = sadd.s32 %s479, 1
      %p483 = scmp.eq.s32.totalorder %s88, 1
      %p484 = scmp.ne.s32.totalorder %s479, %s481
      %p485 = scmp.eq.s32.totalorder %s88, 0
      %p486 = por %p484, %p485
      %p487 = scmp.ne.s32.totalorder %s479, %s481
      %p488 = scmp.eq.s32.totalorder %s93, 1
      %p489 = por %p487, %p488
      %p490 = scmp.ne.s32.totalorder %s481, %s482
      %p491 = scmp.eq.s32.totalorder %s93, 0
      %p492 = por %p490, %p491
      %p493 = scmp.ne.s32.totalorder %s481, %s482
      %p494 = scmp.eq.s32.totalorder %s94, 1
      %p495 = por %p493, %p494
      %p497 = scmp.ne.s32.totalorder %s482, %s496
      %p498 = scmp.eq.s32.totalorder %s94, 0
      %p499 = por %p497, %p498
      %s501 = sadd.s32 %s500, 1
      %p504 = scmp.eq.s32.totalorder %s88, 1
      %p505 = scmp.ne.s32.totalorder %s500, %s502
      %p506 = scmp.eq.s32.totalorder %s88, 0
      %p507 = por %p505, %p506
      %p508 = scmp.ne.s32.totalorder %s500, %s502
      %p509 = scmp.eq.s32.totalorder %s93, 1
      %p510 = por %p508, %p509
      %p511 = scmp.ne.s32.totalorder %s502, %s503
      %p512 = scmp.eq.s32.totalorder %s93, 0
      %p513 = por %p511, %p512
      %p514 = scmp.ne.s32.totalorder %s502, %s503
      %p515 = scmp.eq.s32.totalorder %s94, 1
      %p516 = por %p514, %p515
      %p518 = scmp.ne.s32.totalorder %s503, %s517
      %p519 = scmp.eq.s32.totalorder %s94, 0
      %p520 = por %p518, %p519
      %s522 = sadd.s32 %s521, 1
      %p525 = scmp.eq.s32.totalorder %s88, 1
      %p526 = scmp.ne.s32.totalorder %s521, %s523
      %p527 = scmp.eq.s32.totalorder %s88, 0
      %p528 = por %p526, %p527
      %p529 = scmp.ne.s32.totalorder %s521, %s523
      %p530 = scmp.eq.s32.totalorder %s93, 1
      %p531 = por %p529, %p530
      %p532 = scmp.ne.s32.totalorder %s523, %s524
      %p533 = scmp.eq.s32.totalorder %s93, 0
      %p534 = por %p532, %p533
      %p535 = scmp.ne.s32.totalorder %s523, %s524
      %p536 = scmp.eq.s32.totalorder %s94, 1
      %p537 = por %p535, %p536
      %p539 = scmp.ne.s32.totalorder %s524, %s538
      %p540 = scmp.eq.s32.totalorder %s94, 0
      %p541 = por %p539, %p540
      %s543 = sadd.s32 %s542, 1
      %p546 = scmp.eq.s32.totalorder %s88, 1
      %p547 = scmp.ne.s32.totalorder %s542, %s544
      %p548 = scmp.eq.s32.totalorder %s88, 0
      %p549 = por %p547, %p548
      %p550 = scmp.ne.s32.totalorder %s542, %s544
      %p551 = scmp.eq.s32.totalorder %s93, 1
      %p552 = por %p550, %p551
      %p553 = scmp.ne.s32.totalorder %s544, %s545
      %p554 = scmp.eq.s32.totalorder %s93, 0
      %p555 = por %p553, %p554
      %p556 = scmp.ne.s32.totalorder %s544, %s545
      %p557 = scmp.eq.s32.totalorder %s94, 1
      %p558 = por %p556, %p557
      %p560 = scmp.ne.s32.totalorder %s545, %s559
      %p561 = scmp.eq.s32.totalorder %s94, 0
      %p562 = por %p560, %p561
      %s564 = sadd.s32 %s563, 1
      %p567 = scmp.eq.s32.totalorder %s88, 1
      %p568 = scmp.ne.s32.totalorder %s563, %s565
      %p569 = scmp.eq.s32.totalorder %s88, 0
      %p570 = por %p568, %p569
      %p571 = scmp.ne.s32.totalorder %s563, %s565
      %p572 = scmp.eq.s32.totalorder %s93, 1
      %p573 = por %p571, %p572
      %p574 = scmp.ne.s32.totalorder %s565, %s566
      %p575 = scmp.eq.s32.totalorder %s93, 0
      %p576 = por %p574, %p575
      %p577 = scmp.ne.s32.totalorder %s565, %s566
      %p578 = scmp.eq.s32.totalorder %s94, 1
      %p579 = por %p577, %p578
      %p581 = scmp.ne.s32.totalorder %s566, %s580
      %p582 = scmp.eq.s32.totalorder %s94, 0
      %p583 = por %p581, %p582
      %s585 = sadd.s32 %s584, 1
      %p588 = scmp.eq.s32.totalorder %s88, 1
      %p589 = scmp.ne.s32.totalorder %s584, %s586
      %p590 = scmp.eq.s32.totalorder %s88, 0
      %p591 = por %p589, %p590
      %p592 = scmp.ne.s32.totalorder %s584, %s586
      %p593 = scmp.eq.s32.totalorder %s93, 1
      %p594 = por %p592, %p593
      %p595 = scmp.ne.s32.totalorder %s586, %s587
      %p596 = scmp.eq.s32.totalorder %s93, 0
      %p597 = por %p595, %p596
      %p598 = scmp.ne.s32.totalorder %s586, %s587
      %p599 = scmp.eq.s32.totalorder %s94, 1
      %p600 = por %p598, %p599
      %p602 = scmp.ne.s32.totalorder %s587, %s601
      %p603 = scmp.eq.s32.totalorder %s94, 0
      %p604 = por %p602, %p603
      %s606 = sadd.s32 %s605, 1
      %p609 = scmp.eq.s32.totalorder %s88, 1
      %p610 = scmp.ne.s32.totalorder %s605, %s607
      %p611 = scmp.eq.s32.totalorder %s88, 0
      %p612 = por %p610, %p611
      %p613 = scmp.ne.s32.totalorder %s605, %s607
      %p614 = scmp.eq.s32.totalorder %s93, 1
      %p615 = por %p613, %p614
      %p616 = scmp.ne.s32.totalorder %s607, %s608
      %p617 = scmp.eq.s32.totalorder %s93, 0
      %p618 = por %p616, %p617
      %p619 = scmp.ne.s32.totalorder %s607, %s608
      %p620 = scmp.eq.s32.totalorder %s94, 1
      %p621 = por %p619, %p620
      %p623 = scmp.ne.s32.totalorder %s608, %s622
      %p624 = scmp.eq.s32.totalorder %s94, 0
      %p625 = por %p623, %p624
      %s627 = sadd.s32 %s626, 1
      %p630 = scmp.eq.s32.totalorder %s88, 1
      %p631 = scmp.ne.s32.totalorder %s626, %s628
      %p632 = scmp.eq.s32.totalorder %s88, 0
      %p633 = por %p631, %p632
      %p634 = scmp.ne.s32.totalorder %s626, %s628
      %p635 = scmp.eq.s32.totalorder %s93, 1
      %p636 = por %p634, %p635
      %p637 = scmp.ne.s32.totalorder %s628, %s629
      %p638 = scmp.eq.s32.totalorder %s93, 0
      %p639 = por %p637, %p638
      %p640 = scmp.ne.s32.totalorder %s628, %s629
      %p641 = scmp.eq.s32.totalorder %s94, 1
      %p642 = por %p640, %p641
      %p644 = scmp.ne.s32.totalorder %s629, %s643
      %p645 = scmp.eq.s32.totalorder %s94, 0
      %p646 = por %p644, %p645
      %s648 = sadd.s32 %s647, 1
      %p651 = scmp.eq.s32.totalorder %s88, 1
      %p652 = scmp.ne.s32.totalorder %s647, %s649
      %p653 = scmp.eq.s32.totalorder %s88, 0
      %p654 = por %p652, %p653
      %p655 = scmp.ne.s32.totalorder %s647, %s649
      %p656 = scmp.eq.s32.totalorder %s93, 1
      %p657 = por %p655, %p656
      %p658 = scmp.ne.s32.totalorder %s649, %s650
      %p659 = scmp.eq.s32.totalorder %s93, 0
      %p660 = por %p658, %p659
      %p661 = scmp.ne.s32.totalorder %s649, %s650
      %p662 = scmp.eq.s32.totalorder %s94, 1
      %p663 = por %p661, %p662
      %p665 = scmp.ne.s32.totalorder %s650, %s664
      %p666 = scmp.eq.s32.totalorder %s94, 0
      %p667 = por %p665, %p666
      %s669 = sadd.s32 %s668, 1
      %p672 = scmp.eq.s32.totalorder %s88, 1
      %p673 = scmp.ne.s32.totalorder %s668, %s670
      %p674 = scmp.eq.s32.totalorder %s88, 0
      %p675 = por %p673, %p674
      %p676 = scmp.ne.s32.totalorder %s668, %s670
      %p677 = scmp.eq.s32.totalorder %s93, 1
      %p678 = por %p676, %p677
      %p679 = scmp.ne.s32.totalorder %s670, %s671
      %p680 = scmp.eq.s32.totalorder %s93, 0
      %p681 = por %p679, %p680
      %p682 = scmp.ne.s32.totalorder %s670, %s671
      %p683 = scmp.eq.s32.totalorder %s94, 1
      %p684 = por %p682, %p683
      %p686 = scmp.ne.s32.totalorder %s671, %s685
      %p687 = scmp.eq.s32.totalorder %s94, 0
      %p688 = por %p686, %p687
      %s690 = sadd.s32 %s689, 1
      %p693 = scmp.eq.s32.totalorder %s88, 1
      %p694 = scmp.ne.s32.totalorder %s689, %s691
      %p695 = scmp.eq.s32.totalorder %s88, 0
      %p696 = por %p694, %p695
      %p697 = scmp.ne.s32.totalorder %s689, %s691
      %p698 = scmp.eq.s32.totalorder %s93, 1
      %p699 = por %p697, %p698
      %p700 = scmp.ne.s32.totalorder %s691, %s692
      %p701 = scmp.eq.s32.totalorder %s93, 0
      %p702 = por %p700, %p701
      %p703 = scmp.ne.s32.totalorder %s691, %s692
      %p704 = scmp.eq.s32.totalorder %s94, 1
      %p705 = por %p703, %p704
      %p707 = scmp.ne.s32.totalorder %s692, %s706
      %p708 = scmp.eq.s32.totalorder %s94, 0
      %p709 = por %p707, %p708
      %s711 = sadd.s32 %s710, 1
      %p714 = scmp.eq.s32.totalorder %s88, 1
      %p715 = scmp.ne.s32.totalorder %s710, %s712
      %p716 = scmp.eq.s32.totalorder %s88, 0
      %p717 = por %p715, %p716
      %p718 = scmp.ne.s32.totalorder %s710, %s712
      %p719 = scmp.eq.s32.totalorder %s93, 1
      %p720 = por %p718, %p719
      %p721 = scmp.ne.s32.totalorder %s712, %s713
      %p722 = scmp.eq.s32.totalorder %s93, 0
      %p723 = por %p721, %p722
      %p724 = scmp.ne.s32.totalorder %s712, %s713
      %p725 = scmp.eq.s32.totalorder %s94, 1
      %p726 = por %p724, %p725
      %p728 = scmp.ne.s32.totalorder %s713, %s727
      %p729 = scmp.eq.s32.totalorder %s94, 0
      %p730 = por %p728, %p729
      %s732 = sadd.s32 %s731, 1
      %p735 = scmp.eq.s32.totalorder %s88, 1
      %p736 = scmp.ne.s32.totalorder %s731, %s733
      %p737 = scmp.eq.s32.totalorder %s88, 0
      %p738 = por %p736, %p737
      %p739 = scmp.ne.s32.totalorder %s731, %s733
      %p740 = scmp.eq.s32.totalorder %s93, 1
      %p741 = por %p739, %p740
      %p742 = scmp.ne.s32.totalorder %s733, %s734
      %p743 = scmp.eq.s32.totalorder %s93, 0
      %p744 = por %p742, %p743
      %p745 = scmp.ne.s32.totalorder %s733, %s734
      %p746 = scmp.eq.s32.totalorder %s94, 1
      %p747 = por %p745, %p746
      %p749 = scmp.ne.s32.totalorder %s734, %s748
      %p750 = scmp.eq.s32.totalorder %s94, 0
      %p751 = por %p749, %p750
      %s753 = sadd.s32 %s752, 1
      %p756 = scmp.eq.s32.totalorder %s88, 1
      %p757 = scmp.ne.s32.totalorder %s752, %s754
      %p758 = scmp.eq.s32.totalorder %s88, 0
      %p759 = por %p757, %p758
      %p760 = scmp.ne.s32.totalorder %s752, %s754
      %p761 = scmp.eq.s32.totalorder %s93, 1
      %p762 = por %p760, %p761
      %p763 = scmp.ne.s32.totalorder %s754, %s755
      %p764 = scmp.eq.s32.totalorder %s93, 0
      %p765 = por %p763, %p764
      %p766 = scmp.ne.s32.totalorder %s754, %s755
      %p767 = scmp.eq.s32.totalorder %s94, 1
      %p768 = por %p766, %p767
      %p770 = scmp.ne.s32.totalorder %s755, %s769
      %p771 = scmp.eq.s32.totalorder %s94, 0
      %p772 = por %p770, %p771
      %s774 = sadd.s32 %s773, 1
      %p777 = scmp.eq.s32.totalorder %s88, 1
      %p778 = scmp.ne.s32.totalorder %s773, %s775
      %p779 = scmp.eq.s32.totalorder %s88, 0
      %p780 = por %p778, %p779
      %p781 = scmp.ne.s32.totalorder %s773, %s775
      %p782 = scmp.eq.s32.totalorder %s93, 1
      %p783 = por %p781, %p782
      %p784 = scmp.ne.s32.totalorder %s775, %s776
      %p785 = scmp.eq.s32.totalorder %s93, 0
      %p786 = por %p784, %p785
      %p787 = scmp.ne.s32.totalorder %s775, %s776
      %p788 = scmp.eq.s32.totalorder %s94, 1
      %p789 = por %p787, %p788
      %p791 = scmp.ne.s32.totalorder %s776, %s790
      %p792 = scmp.eq.s32.totalorder %s94, 0
      %p793 = por %p791, %p792
      %s795 = sadd.s32 %s794, 1
      %p798 = scmp.eq.s32.totalorder %s88, 1
      %p799 = scmp.ne.s32.totalorder %s794, %s796
      %p800 = scmp.eq.s32.totalorder %s88, 0
      %p801 = por %p799, %p800
      %p802 = scmp.ne.s32.totalorder %s794, %s796
      %p803 = scmp.eq.s32.totalorder %s93, 1
      %p804 = por %p802, %p803
      %p805 = scmp.ne.s32.totalorder %s796, %s797
      %p806 = scmp.eq.s32.totalorder %s93, 0
      %p807 = por %p805, %p806
      %p808 = scmp.ne.s32.totalorder %s796, %s797
      %p809 = scmp.eq.s32.totalorder %s94, 1
      %p810 = por %p808, %p809
      %p812 = scmp.ne.s32.totalorder %s797, %s811
      %p813 = scmp.eq.s32.totalorder %s94, 0
      %p814 = por %p812, %p813
      %s816 = sadd.s32 %s815, 1
      %p819 = scmp.eq.s32.totalorder %s88, 1
      %p820 = scmp.ne.s32.totalorder %s815, %s817
      %p821 = scmp.eq.s32.totalorder %s88, 0
      %p822 = por %p820, %p821
      %p823 = scmp.ne.s32.totalorder %s815, %s817
      %p824 = scmp.eq.s32.totalorder %s93, 1
      %p825 = por %p823, %p824
      %p826 = scmp.ne.s32.totalorder %s817, %s818
      %p827 = scmp.eq.s32.totalorder %s93, 0
      %p828 = por %p826, %p827
      %p829 = scmp.ne.s32.totalorder %s817, %s818
      %p830 = scmp.eq.s32.totalorder %s94, 1
      %p831 = por %p829, %p830
      %p833 = scmp.ne.s32.totalorder %s818, %s832
      %p834 = scmp.eq.s32.totalorder %s94, 0
      %p835 = por %p833, %p834
      %s836 = ssub.s32 %s88, %s95
      %p837 = scmp.eq.s32.totalorder %s836, 0
      %s839 = sadd.s32 %s838, 1
      %s840 = scalar_select %p837, %s838, %s839
      %p843 = pneg %p837
      %p844 = scmp.eq.s32.totalorder %s88, 1
      %p845 = por %p843, %p844
      %p846 = scmp.ne.s32.totalorder %s838, %s841
      %p847 = scmp.eq.s32.totalorder %s88, 0
      %p848 = por %p846, %p847
      %p849 = scmp.ne.s32.totalorder %s838, %s841
      %p850 = scmp.eq.s32.totalorder %s93, 1
      %p851 = por %p849, %p850
      %p852 = scmp.ne.s32.totalorder %s841, %s842
      %p853 = scmp.eq.s32.totalorder %s93, 0
      %p854 = por %p852, %p853
      %p855 = scmp.ne.s32.totalorder %s841, %s842
      %p856 = scmp.eq.s32.totalorder %s94, 1
      %p857 = por %p855, %p856
      %p859 = scmp.ne.s32.totalorder %s842, %s858
      %p860 = scmp.eq.s32.totalorder %s94, 0
      %p861 = por %p859, %p860
      %s862 = ssub.s32 %s88, %s95
      %p863 = scmp.eq.s32.totalorder %s862, 0
      %s865 = sadd.s32 %s864, 1
      %s866 = scalar_select %p863, %s864, %s865
      %p869 = pneg %p863
      %p870 = scmp.eq.s32.totalorder %s88, 1
      %p871 = por %p869, %p870
      %p872 = scmp.ne.s32.totalorder %s864, %s867
      %p873 = scmp.eq.s32.totalorder %s88, 0
      %p874 = por %p872, %p873
      %p875 = scmp.ne.s32.totalorder %s864, %s867
      %p876 = scmp.eq.s32.totalorder %s93, 1
      %p877 = por %p875, %p876
      %p878 = scmp.ne.s32.totalorder %s867, %s868
      %p879 = scmp.eq.s32.totalorder %s93, 0
      %p880 = por %p878, %p879
      %p881 = scmp.ne.s32.totalorder %s867, %s868
      %p882 = scmp.eq.s32.totalorder %s94, 1
      %p883 = por %p881, %p882
      %p885 = scmp.ne.s32.totalorder %s868, %s884
      %p886 = scmp.eq.s32.totalorder %s94, 0
      %p887 = por %p885, %p886
      %s888 = ssub.s32 %s88, %s95
      %p889 = scmp.eq.s32.totalorder %s888, 0
      %s891 = sadd.s32 %s890, 1
      %s892 = scalar_select %p889, %s890, %s891
      %p895 = pneg %p889
      %p896 = scmp.eq.s32.totalorder %s88, 1
      %p897 = por %p895, %p896
      %p898 = scmp.ne.s32.totalorder %s890, %s893
      %p899 = scmp.eq.s32.totalorder %s88, 0
      %p900 = por %p898, %p899
      %p901 = scmp.ne.s32.totalorder %s890, %s893
      %p902 = scmp.eq.s32.totalorder %s93, 1
      %p903 = por %p901, %p902
      %p904 = scmp.ne.s32.totalorder %s893, %s894
      %p905 = scmp.eq.s32.totalorder %s93, 0
      %p906 = por %p904, %p905
      %p907 = scmp.ne.s32.totalorder %s893, %s894
      %p908 = scmp.eq.s32.totalorder %s94, 1
      %p909 = por %p907, %p908
      %p911 = scmp.ne.s32.totalorder %s894, %s910
      %p912 = scmp.eq.s32.totalorder %s94, 0
      %p913 = por %p911, %p912
      %p914 = scmp.le.s32.totalorder 1, %s88
      %p915 = scmp.lt.s32.totalorder %s88, 3
      %p916 = pnand %p914, %p915
      %p917 = pneg %p916
      // Predicated region
      $region9: #{tpu_custom_call.1} parent=5 // pred_check
        _
      $region10: #{tpu_custom_call.1} parent=5 // pred_check_branch
        %919 = sbr.rel (%p916) target = $region12
      $region11: #{tpu_custom_call.1} parent=5 // pred_region
        %s920 = ssub.s32 %s88, 1
        // Predicated region
        $region13: #{tpu_custom_call.1} parent=11 // pred_check
          %p921 = pneg %p135
        $region14: #{tpu_custom_call.1} parent=11 // pred_check_branch
          %923 = sbr.rel (%p921) target = $region16
        $region15: #{tpu_custom_call.1} parent=11 // pred_region
          _
        $region16: #{tpu_custom_call.1} parent=11 // pred_fallthru
          _
        // Predicated region
        $region17: #{tpu_custom_call.1} parent=11 // pred_check
          %p924 = pneg %p156
        $region18: #{tpu_custom_call.1} parent=11 // pred_check_branch
          %926 = sbr.rel (%p924) target = $region20
        $region19: #{tpu_custom_call.1} parent=11 // pred_region
          _
        $region20: #{tpu_custom_call.1} parent=11 // pred_fallthru
          _
        // Predicated region
        $region21: #{tpu_custom_call.1} parent=11 // pred_check
          %p927 = pneg %p177
        $region22: #{tpu_custom_call.1} parent=11 // pred_check_branch
          %929 = sbr.rel (%p927) target = $region24
        $region23: #{tpu_custom_call.1} parent=11 // pred_region
          _
        $region24: #{tpu_custom_call.1} parent=11 // pred_fallthru
          _
        // Predicated region
        $region25: #{tpu_custom_call.1} parent=11 // pred_check
          %p930 = pneg %p198
        $region26: #{tpu_custom_call.1} parent=11 // pred_check_branch
          %932 = sbr.rel (%p930) target = $region28
        $region27: #{tpu_custom_call.1} parent=11 // pred_region
          _
        $region28: #{tpu_custom_call.1} parent=11 // pred_fallthru
          _
        // Predicated region
        $region29: #{tpu_custom_call.1} parent=11 // pred_check
          %p933 = pneg %p219
        $region30: #{tpu_custom_call.1} parent=11 // pred_check_branch
          %935 = sbr.rel (%p933) target = $region32
        $region31: #{tpu_custom_call.1} parent=11 // pred_region
          _
        $region32: #{tpu_custom_call.1} parent=11 // pred_fallthru
          _
        // Predicated region
        $region33: #{tpu_custom_call.1} parent=11 // pred_check
          %p936 = pneg %p240
        $region34: #{tpu_custom_call.1} parent=11 // pred_check_branch
          %938 = sbr.rel (%p936) target = $region36
        $region35: #{tpu_custom_call.1} parent=11 // pred_region
          _
        $region36: #{tpu_custom_call.1} parent=11 // pred_fallthru
          _
        // Predicated region
        $region37: #{tpu_custom_call.1} parent=11 // pred_check
          %p939 = pneg %p261
        $region38: #{tpu_custom_call.1} parent=11 // pred_check_branch
          %941 = sbr.rel (%p939) target = $region40
        $region39: #{tpu_custom_call.1} parent=11 // pred_region
          _
        $region40: #{tpu_custom_call.1} parent=11 // pred_fallthru
          _
        // Predicated region
        $region41: #{tpu_custom_call.1} parent=11 // pred_check
          %p942 = pneg %p282
        $region42: #{tpu_custom_call.1} parent=11 // pred_check_branch
          %944 = sbr.rel (%p942) target = $region44
        $region43: #{tpu_custom_call.1} parent=11 // pred_region
          _
        $region44: #{tpu_custom_call.1} parent=11 // pred_fallthru
          _
        // Predicated region
        $region45: #{tpu_custom_call.1} parent=11 // pred_check
          %p945 = pneg %p303
        $region46: #{tpu_custom_call.1} parent=11 // pred_check_branch
          %947 = sbr.rel (%p945) target = $region48
        $region47: #{tpu_custom_call.1} parent=11 // pred_region
          _
        $region48: #{tpu_custom_call.1} parent=11 // pred_fallthru
          _
        // Predicated region
        $region49: #{tpu_custom_call.1} parent=11 // pred_check
          %p948 = pneg %p324
        $region50: #{tpu_custom_call.1} parent=11 // pred_check_branch
          %950 = sbr.rel (%p948) target = $region52
        $region51: #{tpu_custom_call.1} parent=11 // pred_region
          _
        $region52: #{tpu_custom_call.1} parent=11 // pred_fallthru
          _
        // Predicated region
        $region53: #{tpu_custom_call.1} parent=11 // pred_check
          %p951 = pneg %p345
        $region54: #{tpu_custom_call.1} parent=11 // pred_check_branch
          %953 = sbr.rel (%p951) target = $region56
        $region55: #{tpu_custom_call.1} parent=11 // pred_region
          _
        $region56: #{tpu_custom_call.1} parent=11 // pred_fallthru
          _
        // Predicated region
        $region57: #{tpu_custom_call.1} parent=11 // pred_check
          %p954 = pneg %p366
        $region58: #{tpu_custom_call.1} parent=11 // pred_check_branch
          %956 = sbr.rel (%p954) target = $region60
        $region59: #{tpu_custom_call.1} parent=11 // pred_region
          _
        $region60: #{tpu_custom_call.1} parent=11 // pred_fallthru
          _
        // Predicated region
        $region61: #{tpu_custom_call.1} parent=11 // pred_check
          %p957 = pneg %p387
        $region62: #{tpu_custom_call.1} parent=11 // pred_check_branch
          %959 = sbr.rel (%p957) target = $region64
        $region63: #{tpu_custom_call.1} parent=11 // pred_region
          _
        $region64: #{tpu_custom_call.1} parent=11 // pred_fallthru
          _
        // Predicated region
        $region65: #{tpu_custom_call.1} parent=11 // pred_check
          %p960 = pneg %p408
        $region66: #{tpu_custom_call.1} parent=11 // pred_check_branch
          %962 = sbr.rel (%p960) target = $region68
        $region67: #{tpu_custom_call.1} parent=11 // pred_region
          _
        $region68: #{tpu_custom_call.1} parent=11 // pred_fallthru
          _
        // Predicated region
        $region69: #{tpu_custom_call.1} parent=11 // pred_check
          %p963 = pneg %p429
        $region70: #{tpu_custom_call.1} parent=11 // pred_check_branch
          %965 = sbr.rel (%p963) target = $region72
        $region71: #{tpu_custom_call.1} parent=11 // pred_region
          _
        $region72: #{tpu_custom_call.1} parent=11 // pred_fallthru
          _
        // Predicated region
        $region73: #{tpu_custom_call.1} parent=11 // pred_check
          %p966 = pneg %p450
        $region74: #{tpu_custom_call.1} parent=11 // pred_check_branch
          %968 = sbr.rel (%p966) target = $region76
        $region75: #{tpu_custom_call.1} parent=11 // pred_region
          _
        $region76: #{tpu_custom_call.1} parent=11 // pred_fallthru
          _
        // Predicated region
        $region77: #{tpu_custom_call.1} parent=11 // pred_check
          %p969 = pneg %p471
        $region78: #{tpu_custom_call.1} parent=11 // pred_check_branch
          %971 = sbr.rel (%p969) target = $region80
        $region79: #{tpu_custom_call.1} parent=11 // pred_region
          _
        $region80: #{tpu_custom_call.1} parent=11 // pred_fallthru
          _
        // Predicated region
        $region81: #{tpu_custom_call.1} parent=11 // pred_check
          %p972 = pneg %p492
        $region82: #{tpu_custom_call.1} parent=11 // pred_check_branch
          %974 = sbr.rel (%p972) target = $region84
        $region83: #{tpu_custom_call.1} parent=11 // pred_region
          _
        $region84: #{tpu_custom_call.1} parent=11 // pred_fallthru
          _
        // Predicated region
        $region85: #{tpu_custom_call.1} parent=11 // pred_check
          %p975 = pneg %p513
        $region86: #{tpu_custom_call.1} parent=11 // pred_check_branch
          %977 = sbr.rel (%p975) target = $region88
        $region87: #{tpu_custom_call.1} parent=11 // pred_region
          _
        $region88: #{tpu_custom_call.1} parent=11 // pred_fallthru
          _
        // Predicated region
        $region89: #{tpu_custom_call.1} parent=11 // pred_check
          %p978 = pneg %p534
        $region90: #{tpu_custom_call.1} parent=11 // pred_check_branch
          %980 = sbr.rel (%p978) target = $region92
        $region91: #{tpu_custom_call.1} parent=11 // pred_region
          _
        $region92: #{tpu_custom_call.1} parent=11 // pred_fallthru
          _
        // Predicated region
        $region93: #{tpu_custom_call.1} parent=11 // pred_check
          %p981 = pneg %p555
        $region94: #{tpu_custom_call.1} parent=11 // pred_check_branch
          %983 = sbr.rel (%p981) target = $region96
        $region95: #{tpu_custom_call.1} parent=11 // pred_region
          _
        $region96: #{tpu_custom_call.1} parent=11 // pred_fallthru
          _
        // Predicated region
        $region97: #{tpu_custom_call.1} parent=11 // pred_check
          %p984 = pneg %p576
        $region98: #{tpu_custom_call.1} parent=11 // pred_check_branch
          %986 = sbr.rel (%p984) target = $region100
        $region99: #{tpu_custom_call.1} parent=11 // pred_region
          _
        $region100: #{tpu_custom_call.1} parent=11 // pred_fallthru
          _
        // Predicated region
        $region101: #{tpu_custom_call.1} parent=11 // pred_check
          %p987 = pneg %p597
        $region102: #{tpu_custom_call.1} parent=11 // pred_check_branch
          %989 = sbr.rel (%p987) target = $region104
        $region103: #{tpu_custom_call.1} parent=11 // pred_region
          _
        $region104: #{tpu_custom_call.1} parent=11 // pred_fallthru
          _
        // Predicated region
        $region105: #{tpu_custom_call.1} parent=11 // pred_check
          %p990 = pneg %p618
        $region106: #{tpu_custom_call.1} parent=11 // pred_check_branch
          %992 = sbr.rel (%p990) target = $region108
        $region107: #{tpu_custom_call.1} parent=11 // pred_region
          _
        $region108: #{tpu_custom_call.1} parent=11 // pred_fallthru
          _
        // Predicated region
        $region109: #{tpu_custom_call.1} parent=11 // pred_check
          %p993 = pneg %p639
        $region110: #{tpu_custom_call.1} parent=11 // pred_check_branch
          %995 = sbr.rel (%p993) target = $region112
        $region111: #{tpu_custom_call.1} parent=11 // pred_region
          _
        $region112: #{tpu_custom_call.1} parent=11 // pred_fallthru
          _
        // Predicated region
        $region113: #{tpu_custom_call.1} parent=11 // pred_check
          %p996 = pneg %p660
        $region114: #{tpu_custom_call.1} parent=11 // pred_check_branch
          %998 = sbr.rel (%p996) target = $region116
        $region115: #{tpu_custom_call.1} parent=11 // pred_region
          _
        $region116: #{tpu_custom_call.1} parent=11 // pred_fallthru
          _
        // Predicated region
        $region117: #{tpu_custom_call.1} parent=11 // pred_check
          %p999 = pneg %p681
        $region118: #{tpu_custom_call.1} parent=11 // pred_check_branch
          %1001 = sbr.rel (%p999) target = $region120
        $region119: #{tpu_custom_call.1} parent=11 // pred_region
          _
        $region120: #{tpu_custom_call.1} parent=11 // pred_fallthru
          _
        // Predicated region
        $region121: #{tpu_custom_call.1} parent=11 // pred_check
          %p1002 = pneg %p702
        $region122: #{tpu_custom_call.1} parent=11 // pred_check_branch
          %1004 = sbr.rel (%p1002) target = $region124
        $region123: #{tpu_custom_call.1} parent=11 // pred_region
          _
        $region124: #{tpu_custom_call.1} parent=11 // pred_fallthru
          _
        // Predicated region
        $region125: #{tpu_custom_call.1} parent=11 // pred_check
          %p1005 = pneg %p723
        $region126: #{tpu_custom_call.1} parent=11 // pred_check_branch
          %1007 = sbr.rel (%p1005) target = $region128
        $region127: #{tpu_custom_call.1} parent=11 // pred_region
          _
        $region128: #{tpu_custom_call.1} parent=11 // pred_fallthru
          _
        // Predicated region
        $region129: #{tpu_custom_call.1} parent=11 // pred_check
          %p1008 = pneg %p744
        $region130: #{tpu_custom_call.1} parent=11 // pred_check_branch
          %1010 = sbr.rel (%p1008) target = $region132
        $region131: #{tpu_custom_call.1} parent=11 // pred_region
          _
        $region132: #{tpu_custom_call.1} parent=11 // pred_fallthru
          _
        // Predicated region
        $region133: #{tpu_custom_call.1} parent=11 // pred_check
          %p1011 = pneg %p765
        $region134: #{tpu_custom_call.1} parent=11 // pred_check_branch
          %1013 = sbr.rel (%p1011) target = $region136
        $region135: #{tpu_custom_call.1} parent=11 // pred_region
          _
        $region136: #{tpu_custom_call.1} parent=11 // pred_fallthru
          _
        // Predicated region
        $region137: #{tpu_custom_call.1} parent=11 // pred_check
          %p1014 = pneg %p786
        $region138: #{tpu_custom_call.1} parent=11 // pred_check_branch
          %1016 = sbr.rel (%p1014) target = $region140
        $region139: #{tpu_custom_call.1} parent=11 // pred_region
          _
        $region140: #{tpu_custom_call.1} parent=11 // pred_fallthru
          _
        // Predicated region
        $region141: #{tpu_custom_call.1} parent=11 // pred_check
          %p1017 = pneg %p807
        $region142: #{tpu_custom_call.1} parent=11 // pred_check_branch
          %1019 = sbr.rel (%p1017) target = $region144
        $region143: #{tpu_custom_call.1} parent=11 // pred_region
          _
        $region144: #{tpu_custom_call.1} parent=11 // pred_fallthru
          _
        // Predicated region
        $region145: #{tpu_custom_call.1} parent=11 // pred_check
          %p1020 = pneg %p828
        $region146: #{tpu_custom_call.1} parent=11 // pred_check_branch
          %1022 = sbr.rel (%p1020) target = $region148
        $region147: #{tpu_custom_call.1} parent=11 // pred_region
          _
        $region148: #{tpu_custom_call.1} parent=11 // pred_fallthru
          _
      $region12: #{tpu_custom_call.1} parent=5 // pred_fallthru
        _
      %p1023 = scmp.lt.s32.totalorder %s88, 2
      // Predicated region
      $region149: #{tpu_custom_call.1} parent=5 // pred_check
        %p1024 = pneg %p1023
      $region150: #{tpu_custom_call.1} parent=5 // pred_check_branch
        %1026 = sbr.rel (%p1024) target = $region152
      $region151: #{tpu_custom_call.1} parent=5 // pred_region
        // Predicated region
        $region153: #{tpu_custom_call.1} parent=151 // pred_check
          %p1027 = pneg %p108
        $region154: #{tpu_custom_call.1} parent=151 // pred_check_branch
          %1029 = sbr.rel (%p1027) target = $region156
        $region155: #{tpu_custom_call.1} parent=151 // pred_region
          %p1030 = scmp.lt.s32.totalorder %s88, 1
          %s1031 = scalar_select %p1030, %s88, 1
          %s1032 = smul.addr %s1031, 8
          %s1033 = scalar_lea.vmem %s1, %s1032
        $region156: #{tpu_custom_call.1} parent=151 // pred_fallthru
          _
      $region152: #{tpu_custom_call.1} parent=5 // pred_fallthru
        _
      %p1034 = scmp.le.s32.totalorder 1, %s88
      %p1035 = scmp.lt.s32.totalorder %s88, 3
      %p1036 = pnand %p1034, %p1035
      %p1037 = pneg %p1036
      // Predicated region
      $region157: #{tpu_custom_call.1} parent=5 // pred_check
        _
      $region158: #{tpu_custom_call.1} parent=5 // pred_check_branch
        %1039 = sbr.rel (%p1036) target = $region160
      $region159: #{tpu_custom_call.1} parent=5 // pred_region
        %s1040 = ssub.s32 %s88, 1
        %p1041 = scmp.lt.s32.totalorder %s93, 1
        %s1042 = scalar_select %p1041, %s93, 1
        %s1043 = smul.addr %s1042, 8
        %s1044 = scalar_lea.vmem %s1, %s1043
        %p1045 = pneg %p114
        %p1046 = pneg %p111
        %p1047 = pneg %p135
        %p1048 = pneg %p132
        %p1049 = pneg %p156
        %p1050 = pneg %p153
        %p1051 = pneg %p177
        %p1052 = pneg %p174
        %p1053 = pneg %p198
        %p1054 = pneg %p195
        %p1055 = pneg %p219
        %p1056 = pneg %p216
        %p1057 = pneg %p240
        %p1058 = pneg %p237
        %p1059 = pneg %p261
        %p1060 = pneg %p258
        %p1061 = pneg %p282
        %p1062 = pneg %p279
        %p1063 = pneg %p303
        %p1064 = pneg %p300
        %p1065 = pneg %p324
        %p1066 = pneg %p321
        %p1067 = pneg %p345
        %p1068 = pneg %p342
        %p1069 = pneg %p366
        %p1070 = pneg %p363
        %p1071 = pneg %p387
        %p1072 = pneg %p384
        %p1073 = pneg %p408
        %p1074 = pneg %p405
        %p1075 = pneg %p429
        %p1076 = pneg %p426
        %p1077 = pneg %p450
        %p1078 = pneg %p447
        %p1079 = pneg %p471
        %p1080 = pneg %p468
        %p1081 = pneg %p492
        %p1082 = pneg %p489
        %p1083 = pneg %p513
        %p1084 = pneg %p510
        %p1085 = pneg %p534
        %p1086 = pneg %p531
        %p1087 = pneg %p555
        %p1088 = pneg %p552
        %p1089 = pneg %p576
        %p1090 = pneg %p573
        %p1091 = pneg %p597
        %p1092 = pneg %p594
        %p1093 = pneg %p618
        %p1094 = pneg %p615
        %p1095 = pneg %p639
        %p1096 = pneg %p636
        %p1097 = pneg %p660
        %p1098 = pneg %p657
        %p1099 = pneg %p681
        %p1100 = pneg %p678
        %p1101 = pneg %p702
        %p1102 = pneg %p699
        %p1103 = pneg %p723
        %p1104 = pneg %p720
        %p1105 = pneg %p744
        %p1106 = pneg %p741
        %p1107 = pneg %p765
        %p1108 = pneg %p762
        %p1109 = pneg %p786
        %p1110 = pneg %p783
        %p1111 = pneg %p807
        %p1112 = pneg %p804
        %p1113 = pneg %p828
        %p1114 = pneg %p825
        %p1115 = pneg %p854
        %p1116 = pneg %p851
        %s1117 = sand.u32 %s841, 1
        %s1118 = scalar_lea.sflag [#allocation3], %s1117
        %s1119 = sand.u32 %s841, 1
        %s1120 = smul.addr %s1119, 8
        %s1121 = scalar_lea.vmem [#allocation2], %s1120
        %p1122 = pneg %p880
        %p1123 = pneg %p877
        %s1124 = sand.u32 %s93, 1
        %s1125 = scalar_lea.sflag [#allocation5], %s1124
        %s1126 = sand.u32 %s867, 1
        %s1127 = smul.addr %s1126, 8
        %s1128 = scalar_lea.vmem [#allocation4], %s1127
        %p1129 = pneg %p906
        %p1130 = pneg %p903
        %s1131 = sand.u32 %s93, 1
        %s1132 = scalar_lea.sflag [#allocation5], %s1131
        %s1133 = sand.u32 %s893, 1
        %s1134 = smul.addr %s1133, 8
        %s1135 = scalar_lea.vmem [#allocation6], %s1134
        %p1136 = scmp.lt.s32.totalorder %s93, 1
        %s1137 = scalar_select %p1136, %s93, 1
        %s1138 = smul.addr %s1137, 8
        %s1139 = scalar_lea.vmem %s1, %s1138
        %v1140 = vld [vmem:[%s1139] sm:$0xff]
        %v1141 = vld [vmem:[%s3] sm:$0x1]
        %v1142 = vld [vmem:[%s5] sm:$0x1]
        %vm1143 = vcmask 261120
        %v1144 = vsel %vm1143, %v1140, 0.0
        %1145 = vadd.xlane.f32.xlu0 %v1144
        %v1146 = vpop.xlane.xlu0 %1145
        %v1147 = vrcp.pop 32.0
        %v1148 = vmul.f32 %v1146, %v1147
        %v1149 = vsub.f32 %v1140, %v1148
        %v1150 = vmul.f32 %v1149, %v1149
        %v1151 = vsel %vm1143, %v1150, 0.0
        %1152 = vadd.xlane.f32.xlu0 %v1151
        %v1153 = vpop.xlane.xlu0 %1152
        %v1154 = vmul.f32 %v1153, %v1147
        %v1155 = vadd.f32 %v1154, 1e-05
        %v1156 = vrsqrt.pop %v1155
        %v1157 = vmul.f32 %v1149, %v1156
        %v1159 = vlaneseq
        %v1160 = vshrl.u32 %v1159, 7
        %v1161 = vsub.s32 0, %v1160
        %v1162 = vrot.slane %v1141, %v1161
        %v1164 = vmul.f32 %v1157, %v1162
        %v1166 = vlaneseq
        %v1167 = vshrl.u32 %v1166, 7
        %v1168 = vsub.s32 0, %v1167
        %v1169 = vrot.slane %v1142, %v1168
        %v1171 = vadd.f32 %v1164, %v1169
        %v1172 = vld [vmem:[%s7] sm:$0xff]
        %v1173 = vld [vmem:[%s7 + $0x8] sm:$0xff]
        %v1174 = vld [vmem:[%s7 + $0x10] sm:$0xff]
        %v1175 = vld [vmem:[%s7 + $0x18] sm:$0xff]
        %v1176 = vld [vmem:[%s9] sm:$0x1]
        %v1178 = vlaneseq
        %v1179 = vshrl.u32 %v1178, 7
        %v1180 = vsub.s32 0, %v1179
        %v1181 = vrot.slane %v1176, %v1180
        %v1184 = vsel %vm1143, %v1171, 0
        %1186 = vmatprep.subr.mxu0 0.0
        %1187 = vmatpush1.msra.mxu0 %v1172
        %1188 = vmatprep.subr.mxu0 0.0
        %1189 = vmatpush1.msra.mxu0 %v1173
        %1190 = vmatprep.subr.mxu0 0.0
        %1191 = vmatpush1.msra.mxu0 %v1174
        %1192 = vmatprep.subr.mxu0 0.0
        %1193 = vmatpush1.msra.mxu0 %v1175
        %1194 = vmatprep.subr.mxu0 0.0
        %1195 = vmatpush1.msra.mxu0 0.0
        %1196 = vmatprep.subr.mxu0 0.0
        %1197 = vmatpush1.msra.mxu0 0.0
        %1198 = vmatprep.subr.mxu0 0.0
        %1199 = vmatpush1.msra.mxu0 0.0
        %1200 = vmatprep.subr.mxu0 0.0
        %1201 = vmatpush1.msra.mxu0 0.0
        %1202 = vmatprep.subr.mxu0 0.0
        %1203 = vmatpush1.msra.mxu0 0.0
        %1204 = vmatprep.subr.mxu0 0.0
        %1205 = vmatpush1.msra.mxu0 0.0
        %1206 = vmatprep.subr.mxu0 0.0
        %1207 = vmatpush1.msra.mxu0 0.0
        %1208 = vmatprep.subr.mxu0 0.0
        %1209 = vmatpush1.msra.mxu0 0.0
        %1210 = vmatprep.subr.mxu0 0.0
        %1211 = vmatpush1.msra.mxu0 0.0
        %1212 = vmatprep.subr.mxu0 0.0
        %1213 = vmatpush1.msra.mxu0 0.0
        %1214 = vmatprep.subr.mxu0 0.0
        %1215 = vmatpush1.msra.mxu0 0.0
        %1216 = vmatprep.subr.mxu0 0.0
        %1217 = vmatpush1.msra.mxu0 0.0
        %1218 = vmatprep.subr.mxu0 0.0
        %1219 = vmatpush1.msra.mxu0 0.0
        %1220 = vmatprep.subr.mxu0 0.0
        %1221 = vmatpush1.msra.mxu0 0.0
        %1222 = vmatprep.subr.mxu0 0.0
        %1223 = vmatpush1.msra.mxu0 0.0
        %1224 = vmatprep.subr.mxu0 0.0
        %1225 = vmatpush1.msra.mxu0 0.0
        %1226 = vmatprep.subr.mxu0 0.0
        %1227 = vmatpush1.msra.mxu0 0.0
        %1228 = vmatprep.subr.mxu0 0.0
        %1229 = vmatpush1.msra.mxu0 0.0
        %1230 = vmatprep.subr.mxu0 0.0
        %1231 = vmatpush1.msra.mxu0 0.0
        %1232 = vmatprep.subr.mxu0 0.0
        %1233 = vmatpush1.msra.mxu0 0.0
        %1234 = vmatprep.subr.mxu0 0.0
        %1235 = vmatpush1.msra.mxu0 0.0
        %1236 = vmatprep.subr.mxu0 0.0
        %1237 = vmatpush1.msra.mxu0 0.0
        %1238 = vmatprep.subr.mxu0 0.0
        %1239 = vmatpush1.msra.mxu0 0.0
        %1240 = vmatprep.subr.mxu0 0.0
        %1241 = vmatpush1.msra.mxu0 0.0
        %1242 = vmatprep.subr.mxu0 0.0
        %1243 = vmatpush1.msra.mxu0 0.0
        %1244 = vmatprep.subr.mxu0 0.0
        %1245 = vmatpush1.msra.mxu0 0.0
        %1246 = vmatprep.subr.mxu0 0.0
        %1247 = vmatpush1.msra.mxu0 0.0
        %1248 = vmatprep.subr.mxu0 0.0
        %1249 = vmatpush1.msra.mxu0 0.0
        %1250 = vmatprep.mubr.f32.mxu0 0.0
        %1251 = vmatmul.mubr.f32.gmra.mrb[0].mxu0 %v1184
        %v1252 = vpop.f32.mrb[0].mxu0
        %v1253 = vadd.f32 %v1181, %v1252
        %v1254 = vpop.f32.mrb[0].mxu0
        %1255 = vdwg.mxu0
        %v1256 = vmul.f32 %v1253, 0.125
        %v1257 = vld [vmem:[%s11] sm:$0xff]
        %v1258 = vld [vmem:[%s11 + $0x8] sm:$0xff]
        %v1259 = vld [vmem:[%s11 + $0x10] sm:$0xff]
        %v1260 = vld [vmem:[%s11 + $0x18] sm:$0xff]
        %v1261 = vld [vmem:[%s13] sm:$0x1]
        %v1263 = vlaneseq
        %v1264 = vshrl.u32 %v1263, 7
        %v1265 = vsub.s32 0, %v1264
        %v1266 = vrot.slane %v1261, %v1265
        %1268 = vmatprep.subr.mxu0 0.0
        %1269 = vmatpush1.msra.mxu0 %v1257
        %1270 = vmatprep.subr.mxu0 0.0
        %1271 = vmatpush1.msra.mxu0 %v1258
        %1272 = vmatprep.subr.mxu0 0.0
        %1273 = vmatpush1.msra.mxu0 %v1259
        %1274 = vmatprep.subr.mxu0 0.0
        %1275 = vmatpush1.msra.mxu0 %v1260
        %1276 = vmatprep.subr.mxu0 0.0
        %1277 = vmatpush1.msra.mxu0 0.0
        %1278 = vmatprep.subr.mxu0 0.0
        %1279 = vmatpush1.msra.mxu0 0.0
        %1280 = vmatprep.subr.mxu0 0.0
        %1281 = vmatpush1.msra.mxu0 0.0
        %1282 = vmatprep.subr.mxu0 0.0
        %1283 = vmatpush1.msra.mxu0 0.0
        %1284 = vmatprep.subr.mxu0 0.0
        %1285 = vmatpush1.msra.mxu0 0.0
        %1286 = vmatprep.subr.mxu0 0.0
        %1287 = vmatpush1.msra.mxu0 0.0
        %1288 = vmatprep.subr.mxu0 0.0
        %1289 = vmatpush1.msra.mxu0 0.0
        %1290 = vmatprep.subr.mxu0 0.0
        %1291 = vmatpush1.msra.mxu0 0.0
        %1292 = vmatprep.subr.mxu0 0.0
        %1293 = vmatpush1.msra.mxu0 0.0
        %1294 = vmatprep.subr.mxu0 0.0
        %1295 = vmatpush1.msra.mxu0 0.0
        %1296 = vmatprep.subr.mxu0 0.0
        %1297 = vmatpush1.msra.mxu0 0.0
        %1298 = vmatprep.subr.mxu0 0.0
        %1299 = vmatpush1.msra.mxu0 0.0
        %1300 = vmatprep.subr.mxu0 0.0
        %1301 = vmatpush1.msra.mxu0 0.0
        %1302 = vmatprep.subr.mxu0 0.0
        %1303 = vmatpush1.msra.mxu0 0.0
        %1304 = vmatprep.subr.mxu0 0.0
        %1305 = vmatpush1.msra.mxu0 0.0
        %1306 = vmatprep.subr.mxu0 0.0
        %1307 = vmatpush1.msra.mxu0 0.0
        %1308 = vmatprep.subr.mxu0 0.0
        %1309 = vmatpush1.msra.mxu0 0.0
        %1310 = vmatprep.subr.mxu0 0.0
        %1311 = vmatpush1.msra.mxu0 0.0
        %1312 = vmatprep.subr.mxu0 0.0
        %1313 = vmatpush1.msra.mxu0 0.0
        %1314 = vmatprep.subr.mxu0 0.0
        %1315 = vmatpush1.msra.mxu0 0.0
        %1316 = vmatprep.subr.mxu0 0.0
        %1317 = vmatpush1.msra.mxu0 0.0
        %1318 = vmatprep.subr.mxu0 0.0
        %1319 = vmatpush1.msra.mxu0 0.0
        %1320 = vmatprep.subr.mxu0 0.0
        %1321 = vmatpush1.msra.mxu0 0.0
        %1322 = vmatprep.subr.mxu0 0.0
        %1323 = vmatpush1.msra.mxu0 0.0
        %1324 = vmatprep.subr.mxu0 0.0
        %1325 = vmatpush1.msra.mxu0 0.0
        %1326 = vmatprep.subr.mxu0 0.0
        %1327 = vmatpush1.msra.mxu0 0.0
        %1328 = vmatprep.subr.mxu0 0.0
        %1329 = vmatpush1.msra.mxu0 0.0
        %1330 = vmatprep.subr.mxu0 0.0
        %1331 = vmatpush1.msra.mxu0 0.0
        %1332 = vmatprep.mubr.f32.mxu0 0.0
        %1333 = vmatmul.mubr.f32.gmra.mrb[0].mxu0 %v1184
        %v1334 = vpop.f32.mrb[0].mxu0
        %v1335 = vadd.f32 %v1266, %v1334
        %v1336 = vpop.f32.mrb[0].mxu0
        %1337 = vdwg.mxu0
        %v1338 = vld [vmem:[%s15] sm:$0xff]
        %v1339 = vld [vmem:[%s15 + $0x8] sm:$0xff]
        %v1340 = vld [vmem:[%s15 + $0x10] sm:$0xff]
        %v1341 = vld [vmem:[%s15 + $0x18] sm:$0xff]
        %v1342 = vld [vmem:[%s17] sm:$0x1]
        %v1344 = vlaneseq
        %v1345 = vshrl.u32 %v1344, 7
        %v1346 = vsub.s32 0, %v1345
        %v1347 = vrot.slane %v1342, %v1346
        %1349 = vmatprep.subr.mxu0 0.0
        %1350 = vmatpush1.msra.mxu0 %v1338
        %1351 = vmatprep.subr.mxu0 0.0
        %1352 = vmatpush1.msra.mxu0 %v1339
        %1353 = vmatprep.subr.mxu0 0.0
        %1354 = vmatpush1.msra.mxu0 %v1340
        %1355 = vmatprep.subr.mxu0 0.0
        %1356 = vmatpush1.msra.mxu0 %v1341
        %1357 = vmatprep.subr.mxu0 0.0
        %1358 = vmatpush1.msra.mxu0 0.0
        %1359 = vmatprep.subr.mxu0 0.0
        %1360 = vmatpush1.msra.mxu0 0.0
        %1361 = vmatprep.subr.mxu0 0.0
        %1362 = vmatpush1.msra.mxu0 0.0
        %1363 = vmatprep.subr.mxu0 0.0
        %1364 = vmatpush1.msra.mxu0 0.0
        %1365 = vmatprep.subr.mxu0 0.0
        %1366 = vmatpush1.msra.mxu0 0.0
        %1367 = vmatprep.subr.mxu0 0.0
        %1368 = vmatpush1.msra.mxu0 0.0
        %1369 = vmatprep.subr.mxu0 0.0
        %1370 = vmatpush1.msra.mxu0 0.0
        %1371 = vmatprep.subr.mxu0 0.0
        %1372 = vmatpush1.msra.mxu0 0.0
        %1373 = vmatprep.subr.mxu0 0.0
        %1374 = vmatpush1.msra.mxu0 0.0
        %1375 = vmatprep.subr.mxu0 0.0
        %1376 = vmatpush1.msra.mxu0 0.0
        %1377 = vmatprep.subr.mxu0 0.0
        %1378 = vmatpush1.msra.mxu0 0.0
        %1379 = vmatprep.subr.mxu0 0.0
        %1380 = vmatpush1.msra.mxu0 0.0
        %1381 = vmatprep.subr.mxu0 0.0
        %1382 = vmatpush1.msra.mxu0 0.0
        %1383 = vmatprep.subr.mxu0 0.0
        %1384 = vmatpush1.msra.mxu0 0.0
        %1385 = vmatprep.subr.mxu0 0.0
        %1386 = vmatpush1.msra.mxu0 0.0
        %1387 = vmatprep.subr.mxu0 0.0
        %1388 = vmatpush1.msra.mxu0 0.0
        %1389 = vmatprep.subr.mxu0 0.0
        %1390 = vmatpush1.msra.mxu0 0.0
        %1391 = vmatprep.subr.mxu0 0.0
        %1392 = vmatpush1.msra.mxu0 0.0
        %1393 = vmatprep.subr.mxu0 0.0
        %1394 = vmatpush1.msra.mxu0 0.0
        %1395 = vmatprep.subr.mxu0 0.0
        %1396 = vmatpush1.msra.mxu0 0.0
        %1397 = vmatprep.subr.mxu0 0.0
        %1398 = vmatpush1.msra.mxu0 0.0
        %1399 = vmatprep.subr.mxu0 0.0
        %1400 = vmatpush1.msra.mxu0 0.0
        %1401 = vmatprep.subr.mxu0 0.0
        %1402 = vmatpush1.msra.mxu0 0.0
        %1403 = vmatprep.subr.mxu0 0.0
        %1404 = vmatpush1.msra.mxu0 0.0
        %1405 = vmatprep.subr.mxu0 0.0
        %1406 = vmatpush1.msra.mxu0 0.0
        %1407 = vmatprep.subr.mxu0 0.0
        %1408 = vmatpush1.msra.mxu0 0.0
        %1409 = vmatprep.subr.mxu0 0.0
        %1410 = vmatpush1.msra.mxu0 0.0
        %1411 = vmatprep.subr.mxu0 0.0
        %1412 = vmatpush1.msra.mxu0 0.0
        %1413 = vmatprep.mubr.f32.mxu0 0.0
        %1414 = vmatmul.mubr.f32.gmra.mrb[0].mxu0 %v1184
        %v1415 = vpop.f32.mrb[0].mxu0
        %v1416 = vadd.f32 %v1347, %v1415
        %v1417 = vpop.f32.mrb[0].mxu0
        %1418 = vdwg.mxu0
        %vm1419 = vcmask 130048
        %v1421 = vsel %vm1419, %v1256, 0
        %v1424 = vsel %vm1419, %v1335, 0
        %1426 = vmatprep.subr.mxu0 0.0
        %1427 = vmatpush1.xpose.msra.mxu0 %v1424
        %1428 = vmatprep.subr.mxu0 0.0
        %1429 = vmatpush1.xpose.msra.mxu0 0.0
        %1430 = vmatprep.subr.mxu0 0.0
        %1431 = vmatpush1.xpose.msra.mxu0 0.0
        %1432 = vmatprep.subr.mxu0 0.0
        %1433 = vmatpush1.xpose.msra.mxu0 0.0
        %1434 = vmatprep.subr.mxu0 0.0
        %1435 = vmatpush1.xpose.msra.mxu0 0.0
        %1436 = vmatprep.subr.mxu0 0.0
        %1437 = vmatpush1.xpose.msra.mxu0 0.0
        %1438 = vmatprep.subr.mxu0 0.0
        %1439 = vmatpush1.xpose.msra.mxu0 0.0
        %1440 = vmatprep.subr.mxu0 0.0
        %1441 = vmatpush1.xpose.msra.mxu0 0.0
        %1442 = vmatprep.subr.mxu0 0.0
        %1443 = vmatpush1.xpose.msra.mxu0 0.0
        %1444 = vmatprep.subr.mxu0 0.0
        %1445 = vmatpush1.xpose.msra.mxu0 0.0
        %1446 = vmatprep.subr.mxu0 0.0
        %1447 = vmatpush1.xpose.msra.mxu0 0.0
        %1448 = vmatprep.subr.mxu0 0.0
        %1449 = vmatpush1.xpose.msra.mxu0 0.0
        %1450 = vmatprep.subr.mxu0 0.0
        %1451 = vmatpush1.xpose.msra.mxu0 0.0
        %1452 = vmatprep.subr.mxu0 0.0
        %1453 = vmatpush1.xpose.msra.mxu0 0.0
        %1454 = vmatprep.subr.mxu0 0.0
        %1455 = vmatpush1.xpose.msra.mxu0 0.0
        %1456 = vmatprep.subr.mxu0 0.0
        %1457 = vmatpush1.xpose.msra.mxu0 0.0
        %1458 = vmatprep.subr.mxu0 0.0
        %1459 = vmatpush1.xpose.msra.mxu0 0.0
        %1460 = vmatprep.subr.mxu0 0.0
        %1461 = vmatpush1.xpose.msra.mxu0 0.0
        %1462 = vmatprep.subr.mxu0 0.0
        %1463 = vmatpush1.xpose.msra.mxu0 0.0
        %1464 = vmatprep.subr.mxu0 0.0
        %1465 = vmatpush1.xpose.msra.mxu0 0.0
        %1466 = vmatprep.subr.mxu0 0.0
        %1467 = vmatpush1.xpose.msra.mxu0 0.0
        %1468 = vmatprep.subr.mxu0 0.0
        %1469 = vmatpush1.xpose.msra.mxu0 0.0
        %1470 = vmatprep.subr.mxu0 0.0
        %1471 = vmatpush1.xpose.msra.mxu0 0.0
        %1472 = vmatprep.subr.mxu0 0.0
        %1473 = vmatpush1.xpose.msra.mxu0 0.0
        %1474 = vmatprep.subr.mxu0 0.0
        %1475 = vmatpush1.xpose.msra.mxu0 0.0
        %1476 = vmatprep.subr.mxu0 0.0
        %1477 = vmatpush1.xpose.msra.mxu0 0.0
        %1478 = vmatprep.subr.mxu0 0.0
        %1479 = vmatpush1.xpose.msra.mxu0 0.0
        %1480 = vmatprep.subr.mxu0 0.0
        %1481 = vmatpush1.xpose.msra.mxu0 0.0
        %1482 = vmatprep.subr.mxu0 0.0
        %1483 = vmatpush1.xpose.msra.mxu0 0.0
        %1484 = vmatprep.subr.mxu0 0.0
        %1485 = vmatpush1.xpose.msra.mxu0 0.0
        %1486 = vmatprep.subr.mxu0 0.0
        %1487 = vmatpush1.xpose.msra.mxu0 0.0
        %1488 = vmatprep.subr.mxu0 0.0
        %1489 = vmatpush1.xpose.msra.mxu0 0.0
        %1490 = vmatprep.mubr.f32.mxu0 0.0
        %1491 = vmatmul.mubr.f32.gmra.mrb[0].mxu0 %v1421
        %v1492 = vpop.f32.mrb[0].mxu0
        %v1493 = vadd.f32 0.0, %v1492
        %v1494 = vpop.f32.mrb[0].mxu0
        %1495 = vdwg.mxu0
        %vm1496 = vcmask 64512
        %v1497 = vsel %vm1496, %v1493, -inf
        %1498 = vmax.xlane.f32.xlu0 %v1497
        %v1499 = vpop.xlane.xlu0 %1498
        %v1500 = vsub.f32 %v1493, %v1499
        %v1501 = vmul.f32 %v1500, 1.442695
        %v1502 = vpow.pop %v1501
        %v1503 = vsel %vm1496, %v1502, 0.0
        %1504 = vadd.xlane.f32.xlu0 %v1503
        %v1505 = vpop.xlane.xlu0 %1504
        %v1506 = vrcp.pop %v1505
        %v1507 = vmul.f32 %v1502, %v1506
        %v1509 = vsel %vm1496, %v1507, 0
        %1511 = vmatprep.subr.mxu0 0.0
        %1512 = vmatpush1.msra.mxu0 %v1416
        %1513 = vmatprep.subr.mxu0 0.0
        %1514 = vmatpush1.msra.mxu0 0.0
        %1515 = vmatprep.subr.mxu0 0.0
        %1516 = vmatpush1.msra.mxu0 0.0
        %1517 = vmatprep.subr.mxu0 0.0
        %1518 = vmatpush1.msra.mxu0 0.0
        %1519 = vmatprep.subr.mxu0 0.0
        %1520 = vmatpush1.msra.mxu0 0.0
        %1521 = vmatprep.subr.mxu0 0.0
        %1522 = vmatpush1.msra.mxu0 0.0
        %1523 = vmatprep.subr.mxu0 0.0
        %1524 = vmatpush1.msra.mxu0 0.0
        %1525 = vmatprep.subr.mxu0 0.0
        %1526 = vmatpush1.msra.mxu0 0.0
        %1527 = vmatprep.subr.mxu0 0.0
        %1528 = vmatpush1.msra.mxu0 0.0
        %1529 = vmatprep.subr.mxu0 0.0
        %1530 = vmatpush1.msra.mxu0 0.0
        %1531 = vmatprep.subr.mxu0 0.0
        %1532 = vmatpush1.msra.mxu0 0.0
        %1533 = vmatprep.subr.mxu0 0.0
        %1534 = vmatpush1.msra.mxu0 0.0
        %1535 = vmatprep.subr.mxu0 0.0
        %1536 = vmatpush1.msra.mxu0 0.0
        %1537 = vmatprep.subr.mxu0 0.0
        %1538 = vmatpush1.msra.mxu0 0.0
        %1539 = vmatprep.subr.mxu0 0.0
        %1540 = vmatpush1.msra.mxu0 0.0
        %1541 = vmatprep.subr.mxu0 0.0
        %1542 = vmatpush1.msra.mxu0 0.0
        %1543 = vmatprep.subr.mxu0 0.0
        %1544 = vmatpush1.msra.mxu0 0.0
        %1545 = vmatprep.subr.mxu0 0.0
        %1546 = vmatpush1.msra.mxu0 0.0
        %1547 = vmatprep.subr.mxu0 0.0
        %1548 = vmatpush1.msra.mxu0 0.0
        %1549 = vmatprep.subr.mxu0 0.0
        %1550 = vmatpush1.msra.mxu0 0.0
        %1551 = vmatprep.subr.mxu0 0.0
        %1552 = vmatpush1.msra.mxu0 0.0
        %1553 = vmatprep.subr.mxu0 0.0
        %1554 = vmatpush1.msra.mxu0 0.0
        %1555 = vmatprep.subr.mxu0 0.0
        %1556 = vmatpush1.msra.mxu0 0.0
        %1557 = vmatprep.subr.mxu0 0.0
        %1558 = vmatpush1.msra.mxu0 0.0
        %1559 = vmatprep.subr.mxu0 0.0
        %1560 = vmatpush1.msra.mxu0 0.0
        %1561 = vmatprep.subr.mxu0 0.0
        %1562 = vmatpush1.msra.mxu0 0.0
        %1563 = vmatprep.subr.mxu0 0.0
        %1564 = vmatpush1.msra.mxu0 0.0
        %1565 = vmatprep.subr.mxu0 0.0
        %1566 = vmatpush1.msra.mxu0 0.0
        %1567 = vmatprep.subr.mxu0 0.0
        %1568 = vmatpush1.msra.mxu0 0.0
        %1569 = vmatprep.subr.mxu0 0.0
        %1570 = vmatpush1.msra.mxu0 0.0
        %1571 = vmatprep.subr.mxu0 0.0
        %1572 = vmatpush1.msra.mxu0 0.0
        %1573 = vmatprep.subr.mxu0 0.0
        %1574 = vmatpush1.msra.mxu0 0.0
        %1575 = vmatprep.mubr.f32.mxu0 0.0
        %1576 = vmatmul.mubr.f32.gmra.mrb[0].mxu0 %v1509
        %v1577 = vpop.f32.mrb[0].mxu0
        %v1578 = vadd.f32 0.0, %v1577
        %v1579 = vpop.f32.mrb[0].mxu0
        %1580 = vdwg.mxu0
        %v1581 = vld [vmem:[%s19] sm:$0xff]
        %v1582 = vld [vmem:[%s19 + $0x8] sm:$0xff]
        %1583 = vrot.lane.b32.xlu0 %v1256, 112
        %v1584 = vpop.permute.xlu0 %1583
        %1585 = vrot.lane.b32.xlu0 %v1335, 112
        %v1586 = vpop.permute.xlu0 %1585
        %v1587 = vsel %vm1419, %v1584, 0
        %v1589 = vsel %vm1419, %v1586, 0
        %1591 = vmatprep.subr.mxu0 0.0
        %1592 = vmatpush1.xpose.msra.mxu0 %v1589
        %1593 = vmatprep.subr.mxu0 0.0
        %1594 = vmatpush1.xpose.msra.mxu0 0.0
        %1595 = vmatprep.subr.mxu0 0.0
        %1596 = vmatpush1.xpose.msra.mxu0 0.0
        %1597 = vmatprep.subr.mxu0 0.0
        %1598 = vmatpush1.xpose.msra.mxu0 0.0
        %1599 = vmatprep.subr.mxu0 0.0
        %1600 = vmatpush1.xpose.msra.mxu0 0.0
        %1601 = vmatprep.subr.mxu0 0.0
        %1602 = vmatpush1.xpose.msra.mxu0 0.0
        %1603 = vmatprep.subr.mxu0 0.0
        %1604 = vmatpush1.xpose.msra.mxu0 0.0
        %1605 = vmatprep.subr.mxu0 0.0
        %1606 = vmatpush1.xpose.msra.mxu0 0.0
        %1607 = vmatprep.subr.mxu0 0.0
        %1608 = vmatpush1.xpose.msra.mxu0 0.0
        %1609 = vmatprep.subr.mxu0 0.0
        %1610 = vmatpush1.xpose.msra.mxu0 0.0
        %1611 = vmatprep.subr.mxu0 0.0
        %1612 = vmatpush1.xpose.msra.mxu0 0.0
        %1613 = vmatprep.subr.mxu0 0.0
        %1614 = vmatpush1.xpose.msra.mxu0 0.0
        %1615 = vmatprep.subr.mxu0 0.0
        %1616 = vmatpush1.xpose.msra.mxu0 0.0
        %1617 = vmatprep.subr.mxu0 0.0
        %1618 = vmatpush1.xpose.msra.mxu0 0.0
        %1619 = vmatprep.subr.mxu0 0.0
        %1620 = vmatpush1.xpose.msra.mxu0 0.0
        %1621 = vmatprep.subr.mxu0 0.0
        %1622 = vmatpush1.xpose.msra.mxu0 0.0
        %1623 = vmatprep.subr.mxu0 0.0
        %1624 = vmatpush1.xpose.msra.mxu0 0.0
        %1625 = vmatprep.subr.mxu0 0.0
        %1626 = vmatpush1.xpose.msra.mxu0 0.0
        %1627 = vmatprep.subr.mxu0 0.0
        %1628 = vmatpush1.xpose.msra.mxu0 0.0
        %1629 = vmatprep.subr.mxu0 0.0
        %1630 = vmatpush1.xpose.msra.mxu0 0.0
        %1631 = vmatprep.subr.mxu0 0.0
        %1632 = vmatpush1.xpose.msra.mxu0 0.0
        %1633 = vmatprep.subr.mxu0 0.0
        %1634 = vmatpush1.xpose.msra.mxu0 0.0
        %1635 = vmatprep.subr.mxu0 0.0
        %1636 = vmatpush1.xpose.msra.mxu0 0.0
        %1637 = vmatprep.subr.mxu0 0.0
        %1638 = vmatpush1.xpose.msra.mxu0 0.0
        %1639 = vmatprep.subr.mxu0 0.0
        %1640 = vmatpush1.xpose.msra.mxu0 0.0
        %1641 = vmatprep.subr.mxu0 0.0
        %1642 = vmatpush1.xpose.msra.mxu0 0.0
        %1643 = vmatprep.subr.mxu0 0.0
        %1644 = vmatpush1.xpose.msra.mxu0 0.0
        %1645 = vmatprep.subr.mxu0 0.0
        %1646 = vmatpush1.xpose.msra.mxu0 0.0
        %1647 = vmatprep.subr.mxu0 0.0
        %1648 = vmatpush1.xpose.msra.mxu0 0.0
        %1649 = vmatprep.subr.mxu0 0.0
        %1650 = vmatpush1.xpose.msra.mxu0 0.0
        %1651 = vmatprep.subr.mxu0 0.0
        %1652 = vmatpush1.xpose.msra.mxu0 0.0
        %1653 = vmatprep.subr.mxu0 0.0
        %1654 = vmatpush1.xpose.msra.mxu0 0.0
        %1655 = vmatprep.mubr.f32.mxu0 0.0
        %1656 = vmatmul.mubr.f32.gmra.mrb[0].mxu0 %v1587
        %v1657 = vpop.f32.mrb[0].mxu0
        %v1658 = vadd.f32 0.0, %v1657
        %v1659 = vpop.f32.mrb[0].mxu0
        %1660 = vdwg.mxu0
        %v1661 = vsel %vm1496, %v1658, -inf
        %1662 = vmax.xlane.f32.xlu0 %v1661
        %v1663 = vpop.xlane.xlu0 %1662
        %v1664 = vsub.f32 %v1658, %v1663
        %v1665 = vmul.f32 %v1664, 1.442695
        %v1666 = vpow.pop %v1665
        %v1667 = vsel %vm1496, %v1666, 0.0
        %1668 = vadd.xlane.f32.xlu0 %v1667
        %v1669 = vpop.xlane.xlu0 %1668
        %v1670 = vrcp.pop %v1669
        %v1671 = vmul.f32 %v1666, %v1670
        %1673 = vrot.lane.b32.xlu0 %v1416, 112
        %v1674 = vpop.permute.xlu0 %1673
        %v1677 = vsel %vm1496, %v1671, 0
        %1679 = vmatprep.subr.mxu0 0.0
        %1680 = vmatpush1.msra.mxu0 %v1674
        %1681 = vmatprep.subr.mxu0 0.0
        %1682 = vmatpush1.msra.mxu0 0.0
        %1683 = vmatprep.subr.mxu0 0.0
        %1684 = vmatpush1.msra.mxu0 0.0
        %1685 = vmatprep.subr.mxu0 0.0
        %1686 = vmatpush1.msra.mxu0 0.0
        %1687 = vmatprep.subr.mxu0 0.0
        %1688 = vmatpush1.msra.mxu0 0.0
        %1689 = vmatprep.subr.mxu0 0.0
        %1690 = vmatpush1.msra.mxu0 0.0
        %1691 = vmatprep.subr.mxu0 0.0
        %1692 = vmatpush1.msra.mxu0 0.0
        %1693 = vmatprep.subr.mxu0 0.0
        %1694 = vmatpush1.msra.mxu0 0.0
        %1695 = vmatprep.subr.mxu0 0.0
        %1696 = vmatpush1.msra.mxu0 0.0
        %1697 = vmatprep.subr.mxu0 0.0
        %1698 = vmatpush1.msra.mxu0 0.0
        %1699 = vmatprep.subr.mxu0 0.0
        %1700 = vmatpush1.msra.mxu0 0.0
        %1701 = vmatprep.subr.mxu0 0.0
        %1702 = vmatpush1.msra.mxu0 0.0
        %1703 = vmatprep.subr.mxu0 0.0
        %1704 = vmatpush1.msra.mxu0 0.0
        %1705 = vmatprep.subr.mxu0 0.0
        %1706 = vmatpush1.msra.mxu0 0.0
        %1707 = vmatprep.subr.mxu0 0.0
        %1708 = vmatpush1.msra.mxu0 0.0
        %1709 = vmatprep.subr.mxu0 0.0
        %1710 = vmatpush1.msra.mxu0 0.0
        %1711 = vmatprep.subr.mxu0 0.0
        %1712 = vmatpush1.msra.mxu0 0.0
        %1713 = vmatprep.subr.mxu0 0.0
        %1714 = vmatpush1.msra.mxu0 0.0
        %1715 = vmatprep.subr.mxu0 0.0
        %1716 = vmatpush1.msra.mxu0 0.0
        %1717 = vmatprep.subr.mxu0 0.0
        %1718 = vmatpush1.msra.mxu0 0.0
        %1719 = vmatprep.subr.mxu0 0.0
        %1720 = vmatpush1.msra.mxu0 0.0
        %1721 = vmatprep.subr.mxu0 0.0
        %1722 = vmatpush1.msra.mxu0 0.0
        %1723 = vmatprep.subr.mxu0 0.0
        %1724 = vmatpush1.msra.mxu0 0.0
        %1725 = vmatprep.subr.mxu0 0.0
        %1726 = vmatpush1.msra.mxu0 0.0
        %1727 = vmatprep.subr.mxu0 0.0
        %1728 = vmatpush1.msra.mxu0 0.0
        %1729 = vmatprep.subr.mxu0 0.0
        %1730 = vmatpush1.msra.mxu0 0.0
        %1731 = vmatprep.subr.mxu0 0.0
        %1732 = vmatpush1.msra.mxu0 0.0
        %1733 = vmatprep.subr.mxu0 0.0
        %1734 = vmatpush1.msra.mxu0 0.0
        %1735 = vmatprep.subr.mxu0 0.0
        %1736 = vmatpush1.msra.mxu0 0.0
        %1737 = vmatprep.subr.mxu0 0.0
        %1738 = vmatpush1.msra.mxu0 0.0
        %1739 = vmatprep.subr.mxu0 0.0
        %1740 = vmatpush1.msra.mxu0 0.0
        %1741 = vmatprep.subr.mxu0 0.0
        %1742 = vmatpush1.msra.mxu0 0.0
        %1743 = vmatprep.mubr.f32.mxu0 0.0
        %1744 = vmatmul.mubr.f32.gmra.mrb[0].mxu0 %v1677
        %v1745 = vpop.f32.mrb[0].mxu0
        %v1746 = vadd.f32 0.0, %v1745
        %v1747 = vpop.f32.mrb[0].mxu0
        %1748 = vdwg.mxu0
        %v1749 = vld [vmem:[%s19 + $0x10] sm:$0xff]
        %v1750 = vld [vmem:[%s19 + $0x18] sm:$0xff]
        %v1752 = vsel %vm1419, %v1746, 0
        %1754 = vmatprep.subr.mxu0 0.0
        %1755 = vmatpush1.msra.mxu0 %v1749
        %1756 = vmatprep.subr.mxu0 0.0
        %1757 = vmatpush1.msra.mxu0 %v1750
        %1758 = vmatprep.subr.mxu0 0.0
        %1759 = vmatpush1.msra.mxu0 0.0
        %1760 = vmatprep.subr.mxu0 0.0
        %1761 = vmatpush1.msra.mxu0 0.0
        %1762 = vmatprep.subr.mxu0 0.0
        %1763 = vmatpush1.msra.mxu0 0.0
        %1764 = vmatprep.subr.mxu0 0.0
        %1765 = vmatpush1.msra.mxu0 0.0
        %1766 = vmatprep.subr.mxu0 0.0
        %1767 = vmatpush1.msra.mxu0 0.0
        %1768 = vmatprep.subr.mxu0 0.0
        %1769 = vmatpush1.msra.mxu0 0.0
        %1770 = vmatprep.subr.mxu0 0.0
        %1771 = vmatpush1.msra.mxu0 0.0
        %1772 = vmatprep.subr.mxu0 0.0
        %1773 = vmatpush1.msra.mxu0 0.0
        %1774 = vmatprep.subr.mxu0 0.0
        %1775 = vmatpush1.msra.mxu0 0.0
        %1776 = vmatprep.subr.mxu0 0.0
        %1777 = vmatpush1.msra.mxu0 0.0
        %1778 = vmatprep.subr.mxu0 0.0
        %1779 = vmatpush1.msra.mxu0 0.0
        %1780 = vmatprep.subr.mxu0 0.0
        %1781 = vmatpush1.msra.mxu0 0.0
        %1782 = vmatprep.subr.mxu0 0.0
        %1783 = vmatpush1.msra.mxu0 0.0
        %1784 = vmatprep.subr.mxu0 0.0
        %1785 = vmatpush1.msra.mxu0 0.0
        %1786 = vmatprep.subr.mxu0 0.0
        %1787 = vmatpush1.msra.mxu0 0.0
        %1788 = vmatprep.subr.mxu0 0.0
        %1789 = vmatpush1.msra.mxu0 0.0
        %1790 = vmatprep.subr.mxu0 0.0
        %1791 = vmatpush1.msra.mxu0 0.0
        %1792 = vmatprep.subr.mxu0 0.0
        %1793 = vmatpush1.msra.mxu0 0.0
        %1794 = vmatprep.subr.mxu0 0.0
        %1795 = vmatpush1.msra.mxu0 0.0
        %1796 = vmatprep.subr.mxu0 0.0
        %1797 = vmatpush1.msra.mxu0 0.0
        %1798 = vmatprep.subr.mxu0 0.0
        %1799 = vmatpush1.msra.mxu0 0.0
        %1800 = vmatprep.subr.mxu0 0.0
        %1801 = vmatpush1.msra.mxu0 0.0
        %1802 = vmatprep.subr.mxu0 0.0
        %1803 = vmatpush1.msra.mxu0 0.0
        %1804 = vmatprep.subr.mxu0 0.0
        %1805 = vmatpush1.msra.mxu0 0.0
        %1806 = vmatprep.subr.mxu0 0.0
        %1807 = vmatpush1.msra.mxu0 0.0
        %1808 = vmatprep.subr.mxu0 0.0
        %1809 = vmatpush1.msra.mxu0 0.0
        %1810 = vmatprep.subr.mxu0 0.0
        %1811 = vmatpush1.msra.mxu0 0.0
        %1812 = vmatprep.subr.mxu0 0.0
        %1813 = vmatpush1.msra.mxu0 0.0
        %1814 = vmatprep.subr.mxu0 0.0
        %1815 = vmatpush1.msra.mxu0 0.0
        %1816 = vmatprep.subr.mxu0 0.0
        %1817 = vmatpush1.msra.mxu0 0.0
        %1818 = vmatprep.mubr.f32.mxu0 0.0
        %1819 = vmatmul.mubr.f32.gmra.mrb[0].mxu0 %v1752
        %v1820 = vpop.f32.mrb[0].mxu0
        %v1821 = vadd.f32 0.0, %v1820
        %v1822 = vpop.f32.mrb[0].mxu0
        %1823 = vdwg.mxu0
        %v1825 = vsel %vm1419, %v1578, 0
        %1827 = vmatprep.subr.mxu0 0.0
        %1828 = vmatpush1.msra.mxu0 %v1581
        %1829 = vmatprep.subr.mxu0 0.0
        %1830 = vmatpush1.msra.mxu0 %v1582
        %1831 = vmatprep.subr.mxu0 0.0
        %1832 = vmatpush1.msra.mxu0 0.0
        %1833 = vmatprep.subr.mxu0 0.0
        %1834 = vmatpush1.msra.mxu0 0.0
        %1835 = vmatprep.subr.mxu0 0.0
        %1836 = vmatpush1.msra.mxu0 0.0
        %1837 = vmatprep.subr.mxu0 0.0
        %1838 = vmatpush1.msra.mxu0 0.0
        %1839 = vmatprep.subr.mxu0 0.0
        %1840 = vmatpush1.msra.mxu0 0.0
        %1841 = vmatprep.subr.mxu0 0.0
        %1842 = vmatpush1.msra.mxu0 0.0
        %1843 = vmatprep.subr.mxu0 0.0
        %1844 = vmatpush1.msra.mxu0 0.0
        %1845 = vmatprep.subr.mxu0 0.0
        %1846 = vmatpush1.msra.mxu0 0.0
        %1847 = vmatprep.subr.mxu0 0.0
        %1848 = vmatpush1.msra.mxu0 0.0
        %1849 = vmatprep.subr.mxu0 0.0
        %1850 = vmatpush1.msra.mxu0 0.0
        %1851 = vmatprep.subr.mxu0 0.0
        %1852 = vmatpush1.msra.mxu0 0.0
        %1853 = vmatprep.subr.mxu0 0.0
        %1854 = vmatpush1.msra.mxu0 0.0
        %1855 = vmatprep.subr.mxu0 0.0
        %1856 = vmatpush1.msra.mxu0 0.0
        %1857 = vmatprep.subr.mxu0 0.0
        %1858 = vmatpush1.msra.mxu0 0.0
        %1859 = vmatprep.subr.mxu0 0.0
        %1860 = vmatpush1.msra.mxu0 0.0
        %1861 = vmatprep.subr.mxu0 0.0
        %1862 = vmatpush1.msra.mxu0 0.0
        %1863 = vmatprep.subr.mxu0 0.0
        %1864 = vmatpush1.msra.mxu0 0.0
        %1865 = vmatprep.subr.mxu0 0.0
        %1866 = vmatpush1.msra.mxu0 0.0
        %1867 = vmatprep.subr.mxu0 0.0
        %1868 = vmatpush1.msra.mxu0 0.0
        %1869 = vmatprep.subr.mxu0 0.0
        %1870 = vmatpush1.msra.mxu0 0.0
        %1871 = vmatprep.subr.mxu0 0.0
        %1872 = vmatpush1.msra.mxu0 0.0
        %1873 = vmatprep.subr.mxu0 0.0
        %1874 = vmatpush1.msra.mxu0 0.0
        %1875 = vmatprep.subr.mxu0 0.0
        %1876 = vmatpush1.msra.mxu0 0.0
        %1877 = vmatprep.subr.mxu0 0.0
        %1878 = vmatpush1.msra.mxu0 0.0
        %1879 = vmatprep.subr.mxu0 0.0
        %1880 = vmatpush1.msra.mxu0 0.0
        %1881 = vmatprep.subr.mxu0 0.0
        %1882 = vmatpush1.msra.mxu0 0.0
        %1883 = vmatprep.subr.mxu0 0.0
        %1884 = vmatpush1.msra.mxu0 0.0
        %1885 = vmatprep.subr.mxu0 0.0
        %1886 = vmatpush1.msra.mxu0 0.0
        %1887 = vmatprep.subr.mxu0 0.0
        %1888 = vmatpush1.msra.mxu0 0.0
        %1889 = vmatprep.subr.mxu0 0.0
        %1890 = vmatpush1.msra.mxu0 0.0
        %1891 = vmatprep.mubr.f32.mxu0 0.0
        %1892 = vmatmul.mubr.f32.gmra.mrb[0].mxu0 %v1825
        %v1893 = vpop.f32.mrb[0].mxu0
        %v1894 = vadd.f32 %v1821, %v1893
        %v1895 = vpop.f32.mrb[0].mxu0
        %1896 = vdwg.mxu0
        %v1897 = vadd.f32 %v1140, %v1894
        %v1898 = vld [vmem:[%s21] sm:$0x1]
        %v1900 = vlaneseq
        %v1901 = vshrl.u32 %v1900, 7
        %v1902 = vsub.s32 0, %v1901
        %v1903 = vrot.slane %v1898, %v1902
        %v1905 = vadd.f32 %v1897, %v1903
        %v1906 = vld [vmem:[%s23] sm:$0x1]
        %v1907 = vld [vmem:[%s25] sm:$0x1]
        %v1908 = vsel %vm1143, %v1905, 0.0
        %1909 = vadd.xlane.f32.xlu0 %v1908
        %v1910 = vpop.xlane.xlu0 %1909
        %v1911 = vmul.f32 %v1910, %v1147
        %v1912 = vsub.f32 %v1905, %v1911
        %v1913 = vmul.f32 %v1912, %v1912
        %v1914 = vsel %vm1143, %v1913, 0.0
        %1915 = vadd.xlane.f32.xlu0 %v1914
        %v1916 = vpop.xlane.xlu0 %1915
        %v1917 = vmul.f32 %v1916, %v1147
        %v1918 = vadd.f32 %v1917, 1e-05
        %v1919 = vrsqrt.pop %v1918
        %v1920 = vmul.f32 %v1912, %v1919
        %v1922 = vlaneseq
        %v1923 = vshrl.u32 %v1922, 7
        %v1924 = vsub.s32 0, %v1923
        %v1925 = vrot.slane %v1906, %v1924
        %v1927 = vmul.f32 %v1920, %v1925
        %v1929 = vlaneseq
        %v1930 = vshrl.u32 %v1929, 7
        %v1931 = vsub.s32 0, %v1930
        %v1932 = vrot.slane %v1907, %v1931
        %v1934 = vadd.f32 %v1927, %v1932
        %v1935 = vld [vmem:[%s27] sm:$0xff]
        %v1936 = vld [vmem:[%s27 + $0x8] sm:$0xff]
        %v1937 = vld [vmem:[%s27 + $0x10] sm:$0xff]
        %v1938 = vld [vmem:[%s27 + $0x18] sm:$0xff]
        %v1939 = vld [vmem:[%s27 + $0x20] sm:$0xff]
        %v1940 = vld [vmem:[%s27 + $0x28] sm:$0xff]
        %v1941 = vld [vmem:[%s27 + $0x30] sm:$0xff]
        %v1942 = vld [vmem:[%s27 + $0x38] sm:$0xff]
        %v1943 = vld [vmem:[%s27 + $0x40] sm:$0xff]
        %v1944 = vld [vmem:[%s27 + $0x48] sm:$0xff]
        %v1945 = vld [vmem:[%s27 + $0x50] sm:$0xff]
        %v1946 = vld [vmem:[%s27 + $0x58] sm:$0xff]
        %v1947 = vld [vmem:[%s27 + $0x60] sm:$0xff]
        %v1948 = vld [vmem:[%s27 + $0x68] sm:$0xff]
        %v1949 = vld [vmem:[%s27 + $0x70] sm:$0xff]
        %v1950 = vld [vmem:[%s27 + $0x78] sm:$0xff]
        %v1951 = vld [vmem:[%s27 + $0x80] sm:$0xff]
        %v1952 = vld [vmem:[%s27 + $0x88] sm:$0xff]
        %v1953 = vld [vmem:[%s27 + $0x90] sm:$0xff]
        %v1954 = vld [vmem:[%s27 + $0x98] sm:$0xff]
        %v1955 = vld [vmem:[%s27 + $0xa0] sm:$0xff]
        %v1956 = vld [vmem:[%s27 + $0xa8] sm:$0xff]
        %v1957 = vld [vmem:[%s27 + $0xb0] sm:$0xff]
        %v1958 = vld [vmem:[%s27 + $0xb8] sm:$0xff]
        %v1959 = vld [vmem:[%s27 + $0xc0] sm:$0xff]
        %v1960 = vld [vmem:[%s27 + $0xc8] sm:$0xff]
        %v1961 = vld [vmem:[%s27 + $0xd0] sm:$0xff]
        %v1962 = vld [vmem:[%s27 + $0xd8] sm:$0xff]
        %v1963 = vld [vmem:[%s27 + $0xe0] sm:$0xff]
        %v1964 = vld [vmem:[%s27 + $0xe8] sm:$0xff]
        %v1965 = vld [vmem:[%s27 + $0xf0] sm:$0xff]
        %v1966 = vld [vmem:[%s27 + $0xf8] sm:$0xff]
        %v1967 = vld [vmem:[%s27 + $0x100] sm:$0xff]
        %v1968 = vld [vmem:[%s27 + $0x108] sm:$0xff]
        %v1969 = vld [vmem:[%s27 + $0x110] sm:$0xff]
        %v1970 = vld [vmem:[%s27 + $0x118] sm:$0xff]
        %v1971 = vld [vmem:[%s27 + $0x120] sm:$0xff]
        %v1972 = vld [vmem:[%s27 + $0x128] sm:$0xff]
        %v1973 = vld [vmem:[%s27 + $0x130] sm:$0xff]
        %v1974 = vld [vmem:[%s27 + $0x138] sm:$0xff]
        %v1975 = vld [vmem:[%s27 + $0x140] sm:$0xff]
        %v1976 = vld [vmem:[%s27 + $0x148] sm:$0xff]
        %v1977 = vld [vmem:[%s27 + $0x150] sm:$0xff]
        %v1978 = vld [vmem:[%s27 + $0x158] sm:$0xff]
        %v1979 = vld [vmem:[%s27 + $0x160] sm:$0xff]
        %v1980 = vld [vmem:[%s27 + $0x168] sm:$0xff]
        %v1981 = vld [vmem:[%s27 + $0x170] sm:$0xff]
        %v1982 = vld [vmem:[%s27 + $0x178] sm:$0xff]
        %v1983 = vld [vmem:[%s27 + $0x180] sm:$0xff]
        %v1984 = vld [vmem:[%s27 + $0x188] sm:$0xff]
        %v1985 = vld [vmem:[%s27 + $0x190] sm:$0xff]
        %v1986 = vld [vmem:[%s27 + $0x198] sm:$0xff]
        %v1987 = vld [vmem:[%s27 + $0x1a0] sm:$0xff]
        %v1988 = vld [vmem:[%s27 + $0x1a8] sm:$0xff]
        %v1989 = vld [vmem:[%s27 + $0x1b0] sm:$0xff]
        %v1990 = vld [vmem:[%s27 + $0x1b8] sm:$0xff]
        %v1991 = vld [vmem:[%s27 + $0x1c0] sm:$0xff]
        %v1992 = vld [vmem:[%s27 + $0x1c8] sm:$0xff]
        %v1993 = vld [vmem:[%s27 + $0x1d0] sm:$0xff]
        %v1994 = vld [vmem:[%s27 + $0x1d8] sm:$0xff]
        %v1995 = vld [vmem:[%s27 + $0x1e0] sm:$0xff]
        %v1996 = vld [vmem:[%s27 + $0x1e8] sm:$0xff]
        %v1997 = vld [vmem:[%s27 + $0x1f0] sm:$0xff]
        %v1998 = vld [vmem:[%s27 + $0x1f8] sm:$0xff]
        %v1999 = vld [vmem:[%s27 + $0x200] sm:$0xff]
        %v2000 = vld [vmem:[%s27 + $0x208] sm:$0xff]
        %v2001 = vld [vmem:[%s27 + $0x210] sm:$0xff]
        %v2002 = vld [vmem:[%s27 + $0x218] sm:$0xff]
        %v2003 = vld [vmem:[%s29] sm:$0xff]
        %v2004 = vld [vmem:[%s29 + $0x8] sm:$0xff]
        %v2005 = vld [vmem:[%s29 + $0x10] sm:$0x1]
        %v2009 = vlaneseq
        %v2010 = vshrl.u32 %v2009, 7
        %v2011 = vsub.s32 0, %v2010
        %v2012 = vrot.slane %v2003, %v2011
        %v2013 = vlaneseq
        %v2014 = vshrl.u32 %v2013, 7
        %v2015 = vsub.s32 1, %v2014
        %v2016 = vrot.slane %v2003, %v2015
        %v2017 = vlaneseq
        %v2018 = vshrl.u32 %v2017, 7
        %v2019 = vsub.s32 2, %v2018
        %v2020 = vrot.slane %v2003, %v2019
        %v2021 = vlaneseq
        %v2022 = vshrl.u32 %v2021, 7
        %v2023 = vsub.s32 3, %v2022
        %v2024 = vrot.slane %v2003, %v2023
        %v2025 = vlaneseq
        %v2026 = vshrl.u32 %v2025, 7
        %v2027 = vsub.s32 4, %v2026
        %v2028 = vrot.slane %v2003, %v2027
        %v2029 = vlaneseq
        %v2030 = vshrl.u32 %v2029, 7
        %v2031 = vsub.s32 5, %v2030
        %v2032 = vrot.slane %v2003, %v2031
        %v2033 = vlaneseq
        %v2034 = vshrl.u32 %v2033, 7
        %v2035 = vsub.s32 6, %v2034
        %v2036 = vrot.slane %v2003, %v2035
        %v2037 = vlaneseq
        %v2038 = vshrl.u32 %v2037, 7
        %v2039 = vsub.s32 7, %v2038
        %v2040 = vrot.slane %v2003, %v2039
        %v2041 = vlaneseq
        %v2042 = vshrl.u32 %v2041, 7
        %v2043 = vsub.s32 0, %v2042
        %v2044 = vrot.slane %v2004, %v2043
        %v2045 = vlaneseq
        %v2046 = vshrl.u32 %v2045, 7
        %v2047 = vsub.s32 1, %v2046
        %v2048 = vrot.slane %v2004, %v2047
        %v2049 = vlaneseq
        %v2050 = vshrl.u32 %v2049, 7
        %v2051 = vsub.s32 2, %v2050
        %v2052 = vrot.slane %v2004, %v2051
        %v2053 = vlaneseq
        %v2054 = vshrl.u32 %v2053, 7
        %v2055 = vsub.s32 3, %v2054
        %v2056 = vrot.slane %v2004, %v2055
        %v2057 = vlaneseq
        %v2058 = vshrl.u32 %v2057, 7
        %v2059 = vsub.s32 4, %v2058
        %v2060 = vrot.slane %v2004, %v2059
        %v2061 = vlaneseq
        %v2062 = vshrl.u32 %v2061, 7
        %v2063 = vsub.s32 5, %v2062
        %v2064 = vrot.slane %v2004, %v2063
        %v2065 = vlaneseq
        %v2066 = vshrl.u32 %v2065, 7
        %v2067 = vsub.s32 6, %v2066
        %v2068 = vrot.slane %v2004, %v2067
        %v2069 = vlaneseq
        %v2070 = vshrl.u32 %v2069, 7
        %v2071 = vsub.s32 7, %v2070
        %v2072 = vrot.slane %v2004, %v2071
        %v2073 = vlaneseq
        %v2074 = vshrl.u32 %v2073, 7
        %v2075 = vsub.s32 0, %v2074
        %v2076 = vrot.slane %v2005, %v2075
        %v2095 = vsel %vm1143, %v1934, 0
        %2097 = vmatprep.subr.mxu0 %v1936
        %2098 = vmatpush1.msra.mxu0 %v1935
        %2099 = vmatprep.subr.mxu0 %v1953
        %2100 = vmatpush1.msra.mxu0 %v1952
        %2101 = vmatprep.subr.mxu0 %v1970
        %2102 = vmatpush1.msra.mxu0 %v1969
        %2103 = vmatprep.subr.mxu0 %v1987
        %2104 = vmatpush1.msra.mxu0 %v1986
        %2105 = vmatprep.subr.mxu0 0.0
        %2106 = vmatpush1.msra.mxu0 0.0
        %2107 = vmatprep.subr.mxu0 0.0
        %2108 = vmatpush1.msra.mxu0 0.0
        %2109 = vmatprep.subr.mxu0 0.0
        %2110 = vmatpush1.msra.mxu0 0.0
        %2111 = vmatprep.subr.mxu0 0.0
        %2112 = vmatpush1.msra.mxu0 0.0
        %2113 = vmatprep.subr.mxu0 0.0
        %2114 = vmatpush1.msra.mxu0 0.0
        %2115 = vmatprep.subr.mxu0 0.0
        %2116 = vmatpush1.msra.mxu0 0.0
        %2117 = vmatprep.subr.mxu0 0.0
        %2118 = vmatpush1.msra.mxu0 0.0
        %2119 = vmatprep.subr.mxu0 0.0
        %2120 = vmatpush1.msra.mxu0 0.0
        %2121 = vmatprep.subr.mxu0 0.0
        %2122 = vmatpush1.msra.mxu0 0.0
        %2123 = vmatprep.subr.mxu0 0.0
        %2124 = vmatpush1.msra.mxu0 0.0
        %2125 = vmatprep.subr.mxu0 0.0
        %2126 = vmatpush1.msra.mxu0 0.0
        %2127 = vmatprep.subr.mxu0 0.0
        %2128 = vmatpush1.msra.mxu0 0.0
        %2129 = vmatprep.subr.mxu0 0.0
        %2130 = vmatpush1.msra.mxu0 0.0
        %2131 = vmatprep.subr.mxu0 0.0
        %2132 = vmatpush1.msra.mxu0 0.0
        %2133 = vmatprep.subr.mxu0 0.0
        %2134 = vmatpush1.msra.mxu0 0.0
        %2135 = vmatprep.subr.mxu0 0.0
        %2136 = vmatpush1.msra.mxu0 0.0
        %2137 = vmatprep.subr.mxu0 0.0
        %2138 = vmatpush1.msra.mxu0 0.0
        %2139 = vmatprep.subr.mxu0 0.0
        %2140 = vmatpush1.msra.mxu0 0.0
        %2141 = vmatprep.subr.mxu0 0.0
        %2142 = vmatpush1.msra.mxu0 0.0
        %2143 = vmatprep.subr.mxu0 0.0
        %2144 = vmatpush1.msra.mxu0 0.0
        %2145 = vmatprep.subr.mxu0 0.0
        %2146 = vmatpush1.msra.mxu0 0.0
        %2147 = vmatprep.subr.mxu0 0.0
        %2148 = vmatpush1.msra.mxu0 0.0
        %2149 = vmatprep.subr.mxu0 0.0
        %2150 = vmatpush1.msra.mxu0 0.0
        %2151 = vmatprep.subr.mxu0 0.0
        %2152 = vmatpush1.msra.mxu0 0.0
        %2153 = vmatprep.subr.mxu0 0.0
        %2154 = vmatpush1.msra.mxu0 0.0
        %2155 = vmatprep.subr.mxu0 0.0
        %2156 = vmatpush1.msra.mxu0 0.0
        %2157 = vmatprep.subr.mxu0 0.0
        %2158 = vmatpush1.msra.mxu0 0.0
        %2159 = vmatprep.subr.mxu0 0.0
        %2160 = vmatpush1.msra.mxu0 0.0
        %2161 = vmatprep.mubr.f32.mxu0 0.0
        %2162 = vmatmul.mubr.f32.gmra.mrb[0].mxu0 %v2095
        %v2163 = vpop.f32.mrb[0].mxu0
        %v2164 = vadd.f32 %v2012, %v2163
        %v2165 = vpop.f32.mrb[0].mxu0
        %v2166 = vadd.f32 %v2016, %v2165
        %2167 = vdwg.mxu0
        %2168 = vmatprep.subr.mxu0 %v1938
        %2169 = vmatpush1.msra.mxu0 %v1937
        %2170 = vmatprep.subr.mxu0 %v1955
        %2171 = vmatpush1.msra.mxu0 %v1954
        %2172 = vmatprep.subr.mxu0 %v1972
        %2173 = vmatpush1.msra.mxu0 %v1971
        %2174 = vmatprep.subr.mxu0 %v1989
        %2175 = vmatpush1.msra.mxu0 %v1988
        %2176 = vmatprep.subr.mxu0 0.0
        %2177 = vmatpush1.msra.mxu0 0.0
        %2178 = vmatprep.subr.mxu0 0.0
        %2179 = vmatpush1.msra.mxu0 0.0
        %2180 = vmatprep.subr.mxu0 0.0
        %2181 = vmatpush1.msra.mxu0 0.0
        %2182 = vmatprep.subr.mxu0 0.0
        %2183 = vmatpush1.msra.mxu0 0.0
        %2184 = vmatprep.subr.mxu0 0.0
        %2185 = vmatpush1.msra.mxu0 0.0
        %2186 = vmatprep.subr.mxu0 0.0
        %2187 = vmatpush1.msra.mxu0 0.0
        %2188 = vmatprep.subr.mxu0 0.0
        %2189 = vmatpush1.msra.mxu0 0.0
        %2190 = vmatprep.subr.mxu0 0.0
        %2191 = vmatpush1.msra.mxu0 0.0
        %2192 = vmatprep.subr.mxu0 0.0
        %2193 = vmatpush1.msra.mxu0 0.0
        %2194 = vmatprep.subr.mxu0 0.0
        %2195 = vmatpush1.msra.mxu0 0.0
        %2196 = vmatprep.subr.mxu0 0.0
        %2197 = vmatpush1.msra.mxu0 0.0
        %2198 = vmatprep.subr.mxu0 0.0
        %2199 = vmatpush1.msra.mxu0 0.0
        %2200 = vmatprep.subr.mxu0 0.0
        %2201 = vmatpush1.msra.mxu0 0.0
        %2202 = vmatprep.subr.mxu0 0.0
        %2203 = vmatpush1.msra.mxu0 0.0
        %2204 = vmatprep.subr.mxu0 0.0
        %2205 = vmatpush1.msra.mxu0 0.0
        %2206 = vmatprep.subr.mxu0 0.0
        %2207 = vmatpush1.msra.mxu0 0.0
        %2208 = vmatprep.subr.mxu0 0.0
        %2209 = vmatpush1.msra.mxu0 0.0
        %2210 = vmatprep.subr.mxu0 0.0
        %2211 = vmatpush1.msra.mxu0 0.0
        %2212 = vmatprep.subr.mxu0 0.0
        %2213 = vmatpush1.msra.mxu0 0.0
        %2214 = vmatprep.subr.mxu0 0.0
        %2215 = vmatpush1.msra.mxu0 0.0
        %2216 = vmatprep.subr.mxu0 0.0
        %2217 = vmatpush1.msra.mxu0 0.0
        %2218 = vmatprep.subr.mxu0 0.0
        %2219 = vmatpush1.msra.mxu0 0.0
        %2220 = vmatprep.subr.mxu0 0.0
        %2221 = vmatpush1.msra.mxu0 0.0
        %2222 = vmatprep.subr.mxu0 0.0
        %2223 = vmatpush1.msra.mxu0 0.0
        %2224 = vmatprep.subr.mxu0 0.0
        %2225 = vmatpush1.msra.mxu0 0.0
        %2226 = vmatprep.subr.mxu0 0.0
        %2227 = vmatpush1.msra.mxu0 0.0
        %2228 = vmatprep.subr.mxu0 0.0
        %2229 = vmatpush1.msra.mxu0 0.0
        %2230 = vmatprep.subr.mxu0 0.0
        %2231 = vmatpush1.msra.mxu0 0.0
        %2232 = vmatprep.mubr.f32.mxu0 0.0
        %2233 = vmatmul.mubr.f32.gmra.mrb[0].mxu0 %v2095
        %v2234 = vpop.f32.mrb[0].mxu0
        %v2235 = vadd.f32 %v2020, %v2234
        %v2236 = vpop.f32.mrb[0].mxu0
        %v2237 = vadd.f32 %v2024, %v2236
        %2238 = vdwg.mxu0
        %2239 = vmatprep.subr.mxu0 %v1940
        %2240 = vmatpush1.msra.mxu0 %v1939
        %2241 = vmatprep.subr.mxu0 %v1957
        %2242 = vmatpush1.msra.mxu0 %v1956
        %2243 = vmatprep.subr.mxu0 %v1974
        %2244 = vmatpush1.msra.mxu0 %v1973
        %2245 = vmatprep.subr.mxu0 %v1991
        %2246 = vmatpush1.msra.mxu0 %v1990
        %2247 = vmatprep.subr.mxu0 0.0
        %2248 = vmatpush1.msra.mxu0 0.0
        %2249 = vmatprep.subr.mxu0 0.0
        %2250 = vmatpush1.msra.mxu0 0.0
        %2251 = vmatprep.subr.mxu0 0.0
        %2252 = vmatpush1.msra.mxu0 0.0
        %2253 = vmatprep.subr.mxu0 0.0
        %2254 = vmatpush1.msra.mxu0 0.0
        %2255 = vmatprep.subr.mxu0 0.0
        %2256 = vmatpush1.msra.mxu0 0.0
        %2257 = vmatprep.subr.mxu0 0.0
        %2258 = vmatpush1.msra.mxu0 0.0
        %2259 = vmatprep.subr.mxu0 0.0
        %2260 = vmatpush1.msra.mxu0 0.0
        %2261 = vmatprep.subr.mxu0 0.0
        %2262 = vmatpush1.msra.mxu0 0.0
        %2263 = vmatprep.subr.mxu0 0.0
        %2264 = vmatpush1.msra.mxu0 0.0
        %2265 = vmatprep.subr.mxu0 0.0
        %2266 = vmatpush1.msra.mxu0 0.0
        %2267 = vmatprep.subr.mxu0 0.0
        %2268 = vmatpush1.msra.mxu0 0.0
        %2269 = vmatprep.subr.mxu0 0.0
        %2270 = vmatpush1.msra.mxu0 0.0
        %2271 = vmatprep.subr.mxu0 0.0
        %2272 = vmatpush1.msra.mxu0 0.0
        %2273 = vmatprep.subr.mxu0 0.0
        %2274 = vmatpush1.msra.mxu0 0.0
        %2275 = vmatprep.subr.mxu0 0.0
        %2276 = vmatpush1.msra.mxu0 0.0
        %2277 = vmatprep.subr.mxu0 0.0
        %2278 = vmatpush1.msra.mxu0 0.0
        %2279 = vmatprep.subr.mxu0 0.0
        %2280 = vmatpush1.msra.mxu0 0.0
        %2281 = vmatprep.subr.mxu0 0.0
        %2282 = vmatpush1.msra.mxu0 0.0
        %2283 = vmatprep.subr.mxu0 0.0
        %2284 = vmatpush1.msra.mxu0 0.0
        %2285 = vmatprep.subr.mxu0 0.0
        %2286 = vmatpush1.msra.mxu0 0.0
        %2287 = vmatprep.subr.mxu0 0.0
        %2288 = vmatpush1.msra.mxu0 0.0
        %2289 = vmatprep.subr.mxu0 0.0
        %2290 = vmatpush1.msra.mxu0 0.0
        %2291 = vmatprep.subr.mxu0 0.0
        %2292 = vmatpush1.msra.mxu0 0.0
        %2293 = vmatprep.subr.mxu0 0.0
        %2294 = vmatpush1.msra.mxu0 0.0
        %2295 = vmatprep.subr.mxu0 0.0
        %2296 = vmatpush1.msra.mxu0 0.0
        %2297 = vmatprep.subr.mxu0 0.0
        %2298 = vmatpush1.msra.mxu0 0.0
        %2299 = vmatprep.subr.mxu0 0.0
        %2300 = vmatpush1.msra.mxu0 0.0
        %2301 = vmatprep.subr.mxu0 0.0
        %2302 = vmatpush1.msra.mxu0 0.0
        %2303 = vmatprep.mubr.f32.mxu0 0.0
        %2304 = vmatmul.mubr.f32.gmra.mrb[0].mxu0 %v2095
        %v2305 = vpop.f32.mrb[0].mxu0
        %v2306 = vadd.f32 %v2028, %v2305
        %v2307 = vpop.f32.mrb[0].mxu0
        %v2308 = vadd.f32 %v2032, %v2307
        %2309 = vdwg.mxu0
        %2310 = vmatprep.subr.mxu0 %v1942
        %2311 = vmatpush1.msra.mxu0 %v1941
        %2312 = vmatprep.subr.mxu0 %v1959
        %2313 = vmatpush1.msra.mxu0 %v1958
        %2314 = vmatprep.subr.mxu0 %v1976
        %2315 = vmatpush1.msra.mxu0 %v1975
        %2316 = vmatprep.subr.mxu0 %v1993
        %2317 = vmatpush1.msra.mxu0 %v1992
        %2318 = vmatprep.subr.mxu0 0.0
        %2319 = vmatpush1.msra.mxu0 0.0
        %2320 = vmatprep.subr.mxu0 0.0
        %2321 = vmatpush1.msra.mxu0 0.0
        %2322 = vmatprep.subr.mxu0 0.0
        %2323 = vmatpush1.msra.mxu0 0.0
        %2324 = vmatprep.subr.mxu0 0.0
        %2325 = vmatpush1.msra.mxu0 0.0
        %2326 = vmatprep.subr.mxu0 0.0
        %2327 = vmatpush1.msra.mxu0 0.0
        %2328 = vmatprep.subr.mxu0 0.0
        %2329 = vmatpush1.msra.mxu0 0.0
        %2330 = vmatprep.subr.mxu0 0.0
        %2331 = vmatpush1.msra.mxu0 0.0
        %2332 = vmatprep.subr.mxu0 0.0
        %2333 = vmatpush1.msra.mxu0 0.0
        %2334 = vmatprep.subr.mxu0 0.0
        %2335 = vmatpush1.msra.mxu0 0.0
        %2336 = vmatprep.subr.mxu0 0.0
        %2337 = vmatpush1.msra.mxu0 0.0
        %2338 = vmatprep.subr.mxu0 0.0
        %2339 = vmatpush1.msra.mxu0 0.0
        %2340 = vmatprep.subr.mxu0 0.0
        %2341 = vmatpush1.msra.mxu0 0.0
        %2342 = vmatprep.subr.mxu0 0.0
        %2343 = vmatpush1.msra.mxu0 0.0
        %2344 = vmatprep.subr.mxu0 0.0
        %2345 = vmatpush1.msra.mxu0 0.0
        %2346 = vmatprep.subr.mxu0 0.0
        %2347 = vmatpush1.msra.mxu0 0.0
        %2348 = vmatprep.subr.mxu0 0.0
        %2349 = vmatpush1.msra.mxu0 0.0
        %2350 = vmatprep.subr.mxu0 0.0
        %2351 = vmatpush1.msra.mxu0 0.0
        %2352 = vmatprep.subr.mxu0 0.0
        %2353 = vmatpush1.msra.mxu0 0.0
        %2354 = vmatprep.subr.mxu0 0.0
        %2355 = vmatpush1.msra.mxu0 0.0
        %2356 = vmatprep.subr.mxu0 0.0
        %2357 = vmatpush1.msra.mxu0 0.0
        %2358 = vmatprep.subr.mxu0 0.0
        %2359 = vmatpush1.msra.mxu0 0.0
        %2360 = vmatprep.subr.mxu0 0.0
        %2361 = vmatpush1.msra.mxu0 0.0
        %2362 = vmatprep.subr.mxu0 0.0
        %2363 = vmatpush1.msra.mxu0 0.0
        %2364 = vmatprep.subr.mxu0 0.0
        %2365 = vmatpush1.msra.mxu0 0.0
        %2366 = vmatprep.subr.mxu0 0.0
        %2367 = vmatpush1.msra.mxu0 0.0
        %2368 = vmatprep.subr.mxu0 0.0
        %2369 = vmatpush1.msra.mxu0 0.0
        %2370 = vmatprep.subr.mxu0 0.0
        %2371 = vmatpush1.msra.mxu0 0.0
        %2372 = vmatprep.subr.mxu0 0.0
        %2373 = vmatpush1.msra.mxu0 0.0
        %2374 = vmatprep.mubr.f32.mxu0 0.0
        %2375 = vmatmul.mubr.f32.gmra.mrb[0].mxu0 %v2095
        %v2376 = vpop.f32.mrb[0].mxu0
        %v2377 = vadd.f32 %v2036, %v2376
        %v2378 = vpop.f32.mrb[0].mxu0
        %v2379 = vadd.f32 %v2040, %v2378
        %2380 = vdwg.mxu0
        %2381 = vmatprep.subr.mxu0 %v1944
        %2382 = vmatpush1.msra.mxu0 %v1943
        %2383 = vmatprep.subr.mxu0 %v1961
        %2384 = vmatpush1.msra.mxu0 %v1960
        %2385 = vmatprep.subr.mxu0 %v1978
        %2386 = vmatpush1.msra.mxu0 %v1977
        %2387 = vmatprep.subr.mxu0 %v1995
        %2388 = vmatpush1.msra.mxu0 %v1994
        %2389 = vmatprep.subr.mxu0 0.0
        %2390 = vmatpush1.msra.mxu0 0.0
        %2391 = vmatprep.subr.mxu0 0.0
        %2392 = vmatpush1.msra.mxu0 0.0
        %2393 = vmatprep.subr.mxu0 0.0
        %2394 = vmatpush1.msra.mxu0 0.0
        %2395 = vmatprep.subr.mxu0 0.0
        %2396 = vmatpush1.msra.mxu0 0.0
        %2397 = vmatprep.subr.mxu0 0.0
        %2398 = vmatpush1.msra.mxu0 0.0
        %2399 = vmatprep.subr.mxu0 0.0
        %2400 = vmatpush1.msra.mxu0 0.0
        %2401 = vmatprep.subr.mxu0 0.0
        %2402 = vmatpush1.msra.mxu0 0.0
        %2403 = vmatprep.subr.mxu0 0.0
        %2404 = vmatpush1.msra.mxu0 0.0
        %2405 = vmatprep.subr.mxu0 0.0
        %2406 = vmatpush1.msra.mxu0 0.0
        %2407 = vmatprep.subr.mxu0 0.0
        %2408 = vmatpush1.msra.mxu0 0.0
        %2409 = vmatprep.subr.mxu0 0.0
        %2410 = vmatpush1.msra.mxu0 0.0
        %2411 = vmatprep.subr.mxu0 0.0
        %2412 = vmatpush1.msra.mxu0 0.0
        %2413 = vmatprep.subr.mxu0 0.0
        %2414 = vmatpush1.msra.mxu0 0.0
        %2415 = vmatprep.subr.mxu0 0.0
        %2416 = vmatpush1.msra.mxu0 0.0
        %2417 = vmatprep.subr.mxu0 0.0
        %2418 = vmatpush1.msra.mxu0 0.0
        %2419 = vmatprep.subr.mxu0 0.0
        %2420 = vmatpush1.msra.mxu0 0.0
        %2421 = vmatprep.subr.mxu0 0.0
        %2422 = vmatpush1.msra.mxu0 0.0
        %2423 = vmatprep.subr.mxu0 0.0
        %2424 = vmatpush1.msra.mxu0 0.0
        %2425 = vmatprep.subr.mxu0 0.0
        %2426 = vmatpush1.msra.mxu0 0.0
        %2427 = vmatprep.subr.mxu0 0.0
        %2428 = vmatpush1.msra.mxu0 0.0
        %2429 = vmatprep.subr.mxu0 0.0
        %2430 = vmatpush1.msra.mxu0 0.0
        %2431 = vmatprep.subr.mxu0 0.0
        %2432 = vmatpush1.msra.mxu0 0.0
        %2433 = vmatprep.subr.mxu0 0.0
        %2434 = vmatpush1.msra.mxu0 0.0
        %2435 = vmatprep.subr.mxu0 0.0
        %2436 = vmatpush1.msra.mxu0 0.0
        %2437 = vmatprep.subr.mxu0 0.0
        %2438 = vmatpush1.msra.mxu0 0.0
        %2439 = vmatprep.subr.mxu0 0.0
        %2440 = vmatpush1.msra.mxu0 0.0
        %2441 = vmatprep.subr.mxu0 0.0
        %2442 = vmatpush1.msra.mxu0 0.0
        %2443 = vmatprep.subr.mxu0 0.0
        %2444 = vmatpush1.msra.mxu0 0.0
        %2445 = vmatprep.mubr.f32.mxu0 0.0
        %2446 = vmatmul.mubr.f32.gmra.mrb[0].mxu0 %v2095
        %v2447 = vpop.f32.mrb[0].mxu0
        %v2448 = vadd.f32 %v2044, %v2447
        %v2449 = vpop.f32.mrb[0].mxu0
        %v2450 = vadd.f32 %v2048, %v2449
        %2451 = vdwg.mxu0
        %2452 = vmatprep.subr.mxu0 %v1946
        %2453 = vmatpush1.msra.mxu0 %v1945
        %2454 = vmatprep.subr.mxu0 %v1963
        %2455 = vmatpush1.msra.mxu0 %v1962
        %2456 = vmatprep.subr.mxu0 %v1980
        %2457 = vmatpush1.msra.mxu0 %v1979
        %2458 = vmatprep.subr.mxu0 %v1997
        %2459 = vmatpush1.msra.mxu0 %v1996
        %2460 = vmatprep.subr.mxu0 0.0
        %2461 = vmatpush1.msra.mxu0 0.0
        %2462 = vmatprep.subr.mxu0 0.0
        %2463 = vmatpush1.msra.mxu0 0.0
        %2464 = vmatprep.subr.mxu0 0.0
        %2465 = vmatpush1.msra.mxu0 0.0
        %2466 = vmatprep.subr.mxu0 0.0
        %2467 = vmatpush1.msra.mxu0 0.0
        %2468 = vmatprep.subr.mxu0 0.0
        %2469 = vmatpush1.msra.mxu0 0.0
        %2470 = vmatprep.subr.mxu0 0.0
        %2471 = vmatpush1.msra.mxu0 0.0
        %2472 = vmatprep.subr.mxu0 0.0
        %2473 = vmatpush1.msra.mxu0 0.0
        %2474 = vmatprep.subr.mxu0 0.0
        %2475 = vmatpush1.msra.mxu0 0.0
        %2476 = vmatprep.subr.mxu0 0.0
        %2477 = vmatpush1.msra.mxu0 0.0
        %2478 = vmatprep.subr.mxu0 0.0
        %2479 = vmatpush1.msra.mxu0 0.0
        %2480 = vmatprep.subr.mxu0 0.0
        %2481 = vmatpush1.msra.mxu0 0.0
        %2482 = vmatprep.subr.mxu0 0.0
        %2483 = vmatpush1.msra.mxu0 0.0
        %2484 = vmatprep.subr.mxu0 0.0
        %2485 = vmatpush1.msra.mxu0 0.0
        %2486 = vmatprep.subr.mxu0 0.0
        %2487 = vmatpush1.msra.mxu0 0.0
        %2488 = vmatprep.subr.mxu0 0.0
        %2489 = vmatpush1.msra.mxu0 0.0
        %2490 = vmatprep.subr.mxu0 0.0
        %2491 = vmatpush1.msra.mxu0 0.0
        %2492 = vmatprep.subr.mxu0 0.0
        %2493 = vmatpush1.msra.mxu0 0.0
        %2494 = vmatprep.subr.mxu0 0.0
        %2495 = vmatpush1.msra.mxu0 0.0
        %2496 = vmatprep.subr.mxu0 0.0
        %2497 = vmatpush1.msra.mxu0 0.0
        %2498 = vmatprep.subr.mxu0 0.0
        %2499 = vmatpush1.msra.mxu0 0.0
        %2500 = vmatprep.subr.mxu0 0.0
        %2501 = vmatpush1.msra.mxu0 0.0
        %2502 = vmatprep.subr.mxu0 0.0
        %2503 = vmatpush1.msra.mxu0 0.0
        %2504 = vmatprep.subr.mxu0 0.0
        %2505 = vmatpush1.msra.mxu0 0.0
        %2506 = vmatprep.subr.mxu0 0.0
        %2507 = vmatpush1.msra.mxu0 0.0
        %2508 = vmatprep.subr.mxu0 0.0
        %2509 = vmatpush1.msra.mxu0 0.0
        %2510 = vmatprep.subr.mxu0 0.0
        %2511 = vmatpush1.msra.mxu0 0.0
        %2512 = vmatprep.subr.mxu0 0.0
        %2513 = vmatpush1.msra.mxu0 0.0
        %2514 = vmatprep.subr.mxu0 0.0
        %2515 = vmatpush1.msra.mxu0 0.0
        %2516 = vmatprep.mubr.f32.mxu0 0.0
        %2517 = vmatmul.mubr.f32.gmra.mrb[0].mxu0 %v2095
        %v2518 = vpop.f32.mrb[0].mxu0
        %v2519 = vadd.f32 %v2052, %v2518
        %v2520 = vpop.f32.mrb[0].mxu0
        %v2521 = vadd.f32 %v2056, %v2520
        %2522 = vdwg.mxu0
        %2523 = vmatprep.subr.mxu0 %v1948
        %2524 = vmatpush1.msra.mxu0 %v1947
        %2525 = vmatprep.subr.mxu0 %v1965
        %2526 = vmatpush1.msra.mxu0 %v1964
        %2527 = vmatprep.subr.mxu0 %v1982
        %2528 = vmatpush1.msra.mxu0 %v1981
        %2529 = vmatprep.subr.mxu0 %v1999
        %2530 = vmatpush1.msra.mxu0 %v1998
        %2531 = vmatprep.subr.mxu0 0.0
        %2532 = vmatpush1.msra.mxu0 0.0
        %2533 = vmatprep.subr.mxu0 0.0
        %2534 = vmatpush1.msra.mxu0 0.0
        %2535 = vmatprep.subr.mxu0 0.0
        %2536 = vmatpush1.msra.mxu0 0.0
        %2537 = vmatprep.subr.mxu0 0.0
        %2538 = vmatpush1.msra.mxu0 0.0
        %2539 = vmatprep.subr.mxu0 0.0
        %2540 = vmatpush1.msra.mxu0 0.0
        %2541 = vmatprep.subr.mxu0 0.0
        %2542 = vmatpush1.msra.mxu0 0.0
        %2543 = vmatprep.subr.mxu0 0.0
        %2544 = vmatpush1.msra.mxu0 0.0
        %2545 = vmatprep.subr.mxu0 0.0
        %2546 = vmatpush1.msra.mxu0 0.0
        %2547 = vmatprep.subr.mxu0 0.0
        %2548 = vmatpush1.msra.mxu0 0.0
        %2549 = vmatprep.subr.mxu0 0.0
        %2550 = vmatpush1.msra.mxu0 0.0
        %2551 = vmatprep.subr.mxu0 0.0
        %2552 = vmatpush1.msra.mxu0 0.0
        %2553 = vmatprep.subr.mxu0 0.0
        %2554 = vmatpush1.msra.mxu0 0.0
        %2555 = vmatprep.subr.mxu0 0.0
        %2556 = vmatpush1.msra.mxu0 0.0
        %2557 = vmatprep.subr.mxu0 0.0
        %2558 = vmatpush1.msra.mxu0 0.0
        %2559 = vmatprep.subr.mxu0 0.0
        %2560 = vmatpush1.msra.mxu0 0.0
        %2561 = vmatprep.subr.mxu0 0.0
        %2562 = vmatpush1.msra.mxu0 0.0
        %2563 = vmatprep.subr.mxu0 0.0
        %2564 = vmatpush1.msra.mxu0 0.0
        %2565 = vmatprep.subr.mxu0 0.0
        %2566 = vmatpush1.msra.mxu0 0.0
        %2567 = vmatprep.subr.mxu0 0.0
        %2568 = vmatpush1.msra.mxu0 0.0
        %2569 = vmatprep.subr.mxu0 0.0
        %2570 = vmatpush1.msra.mxu0 0.0
        %2571 = vmatprep.subr.mxu0 0.0
        %2572 = vmatpush1.msra.mxu0 0.0
        %2573 = vmatprep.subr.mxu0 0.0
        %2574 = vmatpush1.msra.mxu0 0.0
        %2575 = vmatprep.subr.mxu0 0.0
        %2576 = vmatpush1.msra.mxu0 0.0
        %2577 = vmatprep.subr.mxu0 0.0
        %2578 = vmatpush1.msra.mxu0 0.0
        %2579 = vmatprep.subr.mxu0 0.0
        %2580 = vmatpush1.msra.mxu0 0.0
        %2581 = vmatprep.subr.mxu0 0.0
        %2582 = vmatpush1.msra.mxu0 0.0
        %2583 = vmatprep.subr.mxu0 0.0
        %2584 = vmatpush1.msra.mxu0 0.0
        %2585 = vmatprep.subr.mxu0 0.0
        %2586 = vmatpush1.msra.mxu0 0.0
        %2587 = vmatprep.mubr.f32.mxu0 0.0
        %2588 = vmatmul.mubr.f32.gmra.mrb[0].mxu0 %v2095
        %v2589 = vpop.f32.mrb[0].mxu0
        %v2590 = vadd.f32 %v2060, %v2589
        %v2591 = vpop.f32.mrb[0].mxu0
        %v2592 = vadd.f32 %v2064, %v2591
        %2593 = vdwg.mxu0
        %2594 = vmatprep.subr.mxu0 %v1950
        %2595 = vmatpush1.msra.mxu0 %v1949
        %2596 = vmatprep.subr.mxu0 %v1967
        %2597 = vmatpush1.msra.mxu0 %v1966
        %2598 = vmatprep.subr.mxu0 %v1984
        %2599 = vmatpush1.msra.mxu0 %v1983
        %2600 = vmatprep.subr.mxu0 %v2001
        %2601 = vmatpush1.msra.mxu0 %v2000
        %2602 = vmatprep.subr.mxu0 0.0
        %2603 = vmatpush1.msra.mxu0 0.0
        %2604 = vmatprep.subr.mxu0 0.0
        %2605 = vmatpush1.msra.mxu0 0.0
        %2606 = vmatprep.subr.mxu0 0.0
        %2607 = vmatpush1.msra.mxu0 0.0
        %2608 = vmatprep.subr.mxu0 0.0
        %2609 = vmatpush1.msra.mxu0 0.0
        %2610 = vmatprep.subr.mxu0 0.0
        %2611 = vmatpush1.msra.mxu0 0.0
        %2612 = vmatprep.subr.mxu0 0.0
        %2613 = vmatpush1.msra.mxu0 0.0
        %2614 = vmatprep.subr.mxu0 0.0
        %2615 = vmatpush1.msra.mxu0 0.0
        %2616 = vmatprep.subr.mxu0 0.0
        %2617 = vmatpush1.msra.mxu0 0.0
        %2618 = vmatprep.subr.mxu0 0.0
        %2619 = vmatpush1.msra.mxu0 0.0
        %2620 = vmatprep.subr.mxu0 0.0
        %2621 = vmatpush1.msra.mxu0 0.0
        %2622 = vmatprep.subr.mxu0 0.0
        %2623 = vmatpush1.msra.mxu0 0.0
        %2624 = vmatprep.subr.mxu0 0.0
        %2625 = vmatpush1.msra.mxu0 0.0
        %2626 = vmatprep.subr.mxu0 0.0
        %2627 = vmatpush1.msra.mxu0 0.0
        %2628 = vmatprep.subr.mxu0 0.0
        %2629 = vmatpush1.msra.mxu0 0.0
        %2630 = vmatprep.subr.mxu0 0.0
        %2631 = vmatpush1.msra.mxu0 0.0
        %2632 = vmatprep.subr.mxu0 0.0
        %2633 = vmatpush1.msra.mxu0 0.0
        %2634 = vmatprep.subr.mxu0 0.0
        %2635 = vmatpush1.msra.mxu0 0.0
        %2636 = vmatprep.subr.mxu0 0.0
        %2637 = vmatpush1.msra.mxu0 0.0
        %2638 = vmatprep.subr.mxu0 0.0
        %2639 = vmatpush1.msra.mxu0 0.0
        %2640 = vmatprep.subr.mxu0 0.0
        %2641 = vmatpush1.msra.mxu0 0.0
        %2642 = vmatprep.subr.mxu0 0.0
        %2643 = vmatpush1.msra.mxu0 0.0
        %2644 = vmatprep.subr.mxu0 0.0
        %2645 = vmatpush1.msra.mxu0 0.0
        %2646 = vmatprep.subr.mxu0 0.0
        %2647 = vmatpush1.msra.mxu0 0.0
        %2648 = vmatprep.subr.mxu0 0.0
        %2649 = vmatpush1.msra.mxu0 0.0
        %2650 = vmatprep.subr.mxu0 0.0
        %2651 = vmatpush1.msra.mxu0 0.0
        %2652 = vmatprep.subr.mxu0 0.0
        %2653 = vmatpush1.msra.mxu0 0.0
        %2654 = vmatprep.subr.mxu0 0.0
        %2655 = vmatpush1.msra.mxu0 0.0
        %2656 = vmatprep.subr.mxu0 0.0
        %2657 = vmatpush1.msra.mxu0 0.0
        %2658 = vmatprep.mubr.f32.mxu0 0.0
        %2659 = vmatmul.mubr.f32.gmra.mrb[0].mxu0 %v2095
        %v2660 = vpop.f32.mrb[0].mxu0
        %v2661 = vadd.f32 %v2068, %v2660
        %v2662 = vpop.f32.mrb[0].mxu0
        %v2663 = vadd.f32 %v2072, %v2662
        %2664 = vdwg.mxu0
        %2665 = vmatprep.subr.mxu0 0.0
        %2666 = vmatpush1.msra.mxu0 %v1951
        %2667 = vmatprep.subr.mxu0 0.0
        %2668 = vmatpush1.msra.mxu0 %v1968
        %2669 = vmatprep.subr.mxu0 0.0
        %2670 = vmatpush1.msra.mxu0 %v1985
        %2671 = vmatprep.subr.mxu0 0.0
        %2672 = vmatpush1.msra.mxu0 %v2002
        %2673 = vmatprep.subr.mxu0 0.0
        %2674 = vmatpush1.msra.mxu0 0.0
        %2675 = vmatprep.subr.mxu0 0.0
        %2676 = vmatpush1.msra.mxu0 0.0
        %2677 = vmatprep.subr.mxu0 0.0
        %2678 = vmatpush1.msra.mxu0 0.0
        %2679 = vmatprep.subr.mxu0 0.0
        %2680 = vmatpush1.msra.mxu0 0.0
        %2681 = vmatprep.subr.mxu0 0.0
        %2682 = vmatpush1.msra.mxu0 0.0
        %2683 = vmatprep.subr.mxu0 0.0
        %2684 = vmatpush1.msra.mxu0 0.0
        %2685 = vmatprep.subr.mxu0 0.0
        %2686 = vmatpush1.msra.mxu0 0.0
        %2687 = vmatprep.subr.mxu0 0.0
        %2688 = vmatpush1.msra.mxu0 0.0
        %2689 = vmatprep.subr.mxu0 0.0
        %2690 = vmatpush1.msra.mxu0 0.0
        %2691 = vmatprep.subr.mxu0 0.0
        %2692 = vmatpush1.msra.mxu0 0.0
        %2693 = vmatprep.subr.mxu0 0.0
        %2694 = vmatpush1.msra.mxu0 0.0
        %2695 = vmatprep.subr.mxu0 0.0
        %2696 = vmatpush1.msra.mxu0 0.0
        %2697 = vmatprep.subr.mxu0 0.0
        %2698 = vmatpush1.msra.mxu0 0.0
        %2699 = vmatprep.subr.mxu0 0.0
        %2700 = vmatpush1.msra.mxu0 0.0
        %2701 = vmatprep.subr.mxu0 0.0
        %2702 = vmatpush1.msra.mxu0 0.0
        %2703 = vmatprep.subr.mxu0 0.0
        %2704 = vmatpush1.msra.mxu0 0.0
        %2705 = vmatprep.subr.mxu0 0.0
        %2706 = vmatpush1.msra.mxu0 0.0
        %2707 = vmatprep.subr.mxu0 0.0
        %2708 = vmatpush1.msra.mxu0 0.0
        %2709 = vmatprep.subr.mxu0 0.0
        %2710 = vmatpush1.msra.mxu0 0.0
        %2711 = vmatprep.subr.mxu0 0.0
        %2712 = vmatpush1.msra.mxu0 0.0
        %2713 = vmatprep.subr.mxu0 0.0
        %2714 = vmatpush1.msra.mxu0 0.0
        %2715 = vmatprep.subr.mxu0 0.0
        %2716 = vmatpush1.msra.mxu0 0.0
        %2717 = vmatprep.subr.mxu0 0.0
        %2718 = vmatpush1.msra.mxu0 0.0
        %2719 = vmatprep.subr.mxu0 0.0
        %2720 = vmatpush1.msra.mxu0 0.0
        %2721 = vmatprep.subr.mxu0 0.0
        %2722 = vmatpush1.msra.mxu0 0.0
        %2723 = vmatprep.subr.mxu0 0.0
        %2724 = vmatpush1.msra.mxu0 0.0
        %2725 = vmatprep.subr.mxu0 0.0
        %2726 = vmatpush1.msra.mxu0 0.0
        %2727 = vmatprep.subr.mxu0 0.0
        %2728 = vmatpush1.msra.mxu0 0.0
        %2729 = vmatprep.mubr.f32.mxu0 0.0
        %2730 = vmatmul.mubr.f32.gmra.mrb[0].mxu0 %v2095
        %v2731 = vpop.f32.mrb[0].mxu0
        %v2732 = vadd.f32 %v2076, %v2731
        %v2733 = vpop.f32.mrb[0].mxu0
        %2734 = vdwg.mxu0
        %v2735 = vmax.f32 %v2164, 0.0
        %v2736 = vmax.f32 %v2166, 0.0
        %v2737 = vmax.f32 %v2235, 0.0
        %v2738 = vmax.f32 %v2237, 0.0
        %v2739 = vmax.f32 %v2306, 0.0
        %v2740 = vmax.f32 %v2308, 0.0
        %v2741 = vmax.f32 %v2377, 0.0
        %v2742 = vmax.f32 %v2379, 0.0
        %v2743 = vmax.f32 %v2448, 0.0
        %v2744 = vmax.f32 %v2450, 0.0
        %v2745 = vmax.f32 %v2519, 0.0
        %v2746 = vmax.f32 %v2521, 0.0
        %v2747 = vmax.f32 %v2590, 0.0
        %v2748 = vmax.f32 %v2592, 0.0
        %v2749 = vmax.f32 %v2661, 0.0
        %v2750 = vmax.f32 %v2663, 0.0
        %v2751 = vmax.f32 %v2732, 0.0
        %v2752 = vld [vmem:[%s31] sm:$0xff]
        %v2753 = vld [vmem:[%s31 + $0x8] sm:$0xff]
        %v2754 = vld [vmem:[%s31 + $0x10] sm:$0xff]
        %v2755 = vld [vmem:[%s31 + $0x18] sm:$0xff]
        %v2756 = vld [vmem:[%s31 + $0x20] sm:$0xff]
        %v2757 = vld [vmem:[%s31 + $0x28] sm:$0xff]
        %v2758 = vld [vmem:[%s31 + $0x30] sm:$0xff]
        %v2759 = vld [vmem:[%s31 + $0x38] sm:$0xff]
        %v2760 = vld [vmem:[%s31 + $0x40] sm:$0xff]
        %v2761 = vld [vmem:[%s31 + $0x48] sm:$0xff]
        %v2762 = vld [vmem:[%s31 + $0x50] sm:$0xff]
        %v2763 = vld [vmem:[%s31 + $0x58] sm:$0xff]
        %v2764 = vld [vmem:[%s31 + $0x60] sm:$0xff]
        %v2765 = vld [vmem:[%s31 + $0x68] sm:$0xff]
        %v2766 = vld [vmem:[%s31 + $0x70] sm:$0xff]
        %v2767 = vld [vmem:[%s31 + $0x78] sm:$0xff]
        %v2768 = vld [vmem:[%s31 + $0x80] sm:$0xff]
        %v2769 = vld [vmem:[%s31 + $0x88] sm:$0xff]
        %v2770 = vld [vmem:[%s31 + $0x90] sm:$0xff]
        %v2771 = vld [vmem:[%s31 + $0x98] sm:$0xff]
        %v2772 = vld [vmem:[%s31 + $0xa0] sm:$0xff]
        %v2773 = vld [vmem:[%s31 + $0xa8] sm:$0xff]
        %v2774 = vld [vmem:[%s31 + $0xb0] sm:$0xff]
        %v2775 = vld [vmem:[%s31 + $0xb8] sm:$0xff]
        %v2776 = vld [vmem:[%s31 + $0xc0] sm:$0xff]
        %v2777 = vld [vmem:[%s31 + $0xc8] sm:$0xff]
        %v2778 = vld [vmem:[%s31 + $0xd0] sm:$0xff]
        %v2779 = vld [vmem:[%s31 + $0xd8] sm:$0xff]
        %v2780 = vld [vmem:[%s31 + $0xe0] sm:$0xff]
        %v2781 = vld [vmem:[%s31 + $0xe8] sm:$0xff]
        %v2782 = vld [vmem:[%s31 + $0xf0] sm:$0xff]
        %v2783 = vld [vmem:[%s31 + $0xf8] sm:$0xff]
        %v2784 = vld [vmem:[%s31 + $0x100] sm:$0xff]
        %v2785 = vld [vmem:[%s31 + $0x108] sm:$0xff]
        %v2786 = vld [vmem:[%s31 + $0x110] sm:$0xff]
        %v2787 = vld [vmem:[%s31 + $0x118] sm:$0xff]
        %v2788 = vld [vmem:[%s31 + $0x120] sm:$0xff]
        %v2789 = vld [vmem:[%s31 + $0x128] sm:$0xff]
        %v2790 = vld [vmem:[%s31 + $0x130] sm:$0xff]
        %v2791 = vld [vmem:[%s31 + $0x138] sm:$0xff]
        %v2792 = vld [vmem:[%s31 + $0x140] sm:$0xff]
        %v2793 = vld [vmem:[%s31 + $0x148] sm:$0xff]
        %v2794 = vld [vmem:[%s31 + $0x150] sm:$0xff]
        %v2795 = vld [vmem:[%s31 + $0x158] sm:$0xff]
        %v2796 = vld [vmem:[%s31 + $0x160] sm:$0xff]
        %v2797 = vld [vmem:[%s31 + $0x168] sm:$0xff]
        %v2798 = vld [vmem:[%s31 + $0x170] sm:$0xff]
        %v2799 = vld [vmem:[%s31 + $0x178] sm:$0xff]
        %v2800 = vld [vmem:[%s31 + $0x180] sm:$0xff]
        %v2801 = vld [vmem:[%s31 + $0x188] sm:$0xff]
        %v2802 = vld [vmem:[%s31 + $0x190] sm:$0xff]
        %v2803 = vld [vmem:[%s31 + $0x198] sm:$0xff]
        %v2804 = vld [vmem:[%s31 + $0x1a0] sm:$0xff]
        %v2805 = vld [vmem:[%s31 + $0x1a8] sm:$0xff]
        %v2806 = vld [vmem:[%s31 + $0x1b0] sm:$0xff]
        %v2807 = vld [vmem:[%s31 + $0x1b8] sm:$0xff]
        %v2808 = vld [vmem:[%s31 + $0x1c0] sm:$0xff]
        %v2809 = vld [vmem:[%s31 + $0x1c8] sm:$0xff]
        %v2810 = vld [vmem:[%s31 + $0x1d0] sm:$0xff]
        %v2811 = vld [vmem:[%s31 + $0x1d8] sm:$0xff]
        %v2812 = vld [vmem:[%s31 + $0x1e0] sm:$0xff]
        %v2813 = vld [vmem:[%s31 + $0x1e8] sm:$0xff]
        %v2814 = vld [vmem:[%s31 + $0x1f0] sm:$0xff]
        %v2815 = vld [vmem:[%s31 + $0x1f8] sm:$0xff]
        %v2816 = vld [vmem:[%s31 + $0x200] sm:$0xff]
        %v2817 = vld [vmem:[%s31 + $0x208] sm:$0xff]
        %v2818 = vld [vmem:[%s31 + $0x210] sm:$0xff]
        %v2819 = vld [vmem:[%s31 + $0x218] sm:$0xff]
        %v2820 = vld [vmem:[%s31 + $0x220] sm:$0xff]
        %v2821 = vld [vmem:[%s31 + $0x228] sm:$0xff]
        %v2822 = vld [vmem:[%s31 + $0x230] sm:$0xff]
        %v2823 = vld [vmem:[%s31 + $0x238] sm:$0xff]
        %v2824 = vld [vmem:[%s31 + $0x240] sm:$0xff]
        %v2825 = vld [vmem:[%s31 + $0x248] sm:$0xff]
        %v2826 = vld [vmem:[%s31 + $0x250] sm:$0xff]
        %v2827 = vld [vmem:[%s31 + $0x258] sm:$0xff]
        %v2828 = vld [vmem:[%s31 + $0x260] sm:$0xff]
        %v2829 = vld [vmem:[%s31 + $0x268] sm:$0xff]
        %v2830 = vld [vmem:[%s31 + $0x270] sm:$0xff]
        %v2831 = vld [vmem:[%s31 + $0x278] sm:$0xff]
        %v2832 = vld [vmem:[%s31 + $0x280] sm:$0xff]
        %v2833 = vld [vmem:[%s31 + $0x288] sm:$0xff]
        %v2834 = vld [vmem:[%s31 + $0x290] sm:$0xff]
        %v2835 = vld [vmem:[%s31 + $0x298] sm:$0xff]
        %v2836 = vld [vmem:[%s31 + $0x2a0] sm:$0xff]
        %v2837 = vld [vmem:[%s31 + $0x2a8] sm:$0xff]
        %v2838 = vld [vmem:[%s31 + $0x2b0] sm:$0xff]
        %v2839 = vld [vmem:[%s31 + $0x2b8] sm:$0xff]
        %v2840 = vld [vmem:[%s31 + $0x2c0] sm:$0xff]
        %v2841 = vld [vmem:[%s31 + $0x2c8] sm:$0xff]
        %v2842 = vld [vmem:[%s31 + $0x2d0] sm:$0xff]
        %v2843 = vld [vmem:[%s31 + $0x2d8] sm:$0xff]
        %v2844 = vld [vmem:[%s31 + $0x2e0] sm:$0xff]
        %v2845 = vld [vmem:[%s31 + $0x2e8] sm:$0xff]
        %v2846 = vld [vmem:[%s31 + $0x2f0] sm:$0xff]
        %v2847 = vld [vmem:[%s31 + $0x2f8] sm:$0xff]
        %v2848 = vld [vmem:[%s31 + $0x300] sm:$0xff]
        %v2849 = vld [vmem:[%s31 + $0x308] sm:$0xff]
        %v2850 = vld [vmem:[%s31 + $0x310] sm:$0xff]
        %v2851 = vld [vmem:[%s31 + $0x318] sm:$0xff]
        %v2852 = vld [vmem:[%s31 + $0x320] sm:$0xff]
        %v2853 = vld [vmem:[%s31 + $0x328] sm:$0xff]
        %v2854 = vld [vmem:[%s31 + $0x330] sm:$0xff]
        %v2855 = vld [vmem:[%s31 + $0x338] sm:$0xff]
        %v2856 = vld [vmem:[%s31 + $0x340] sm:$0xff]
        %v2857 = vld [vmem:[%s31 + $0x348] sm:$0xff]
        %v2858 = vld [vmem:[%s31 + $0x350] sm:$0xff]
        %v2859 = vld [vmem:[%s31 + $0x358] sm:$0xff]
        %v2860 = vld [vmem:[%s31 + $0x360] sm:$0xff]
        %v2861 = vld [vmem:[%s31 + $0x368] sm:$0xff]
        %v2862 = vld [vmem:[%s31 + $0x370] sm:$0xff]
        %v2863 = vld [vmem:[%s31 + $0x378] sm:$0xff]
        %v2864 = vld [vmem:[%s31 + $0x380] sm:$0xff]
        %v2865 = vld [vmem:[%s31 + $0x388] sm:$0xff]
        %v2866 = vld [vmem:[%s31 + $0x390] sm:$0xff]
        %v2867 = vld [vmem:[%s31 + $0x398] sm:$0xff]
        %v2868 = vld [vmem:[%s31 + $0x3a0] sm:$0xff]
        %v2869 = vld [vmem:[%s31 + $0x3a8] sm:$0xff]
        %v2870 = vld [vmem:[%s31 + $0x3b0] sm:$0xff]
        %v2871 = vld [vmem:[%s31 + $0x3b8] sm:$0xff]
        %v2872 = vld [vmem:[%s31 + $0x3c0] sm:$0xff]
        %v2873 = vld [vmem:[%s31 + $0x3c8] sm:$0xff]
        %v2874 = vld [vmem:[%s31 + $0x3d0] sm:$0xff]
        %v2875 = vld [vmem:[%s31 + $0x3d8] sm:$0xff]
        %v2876 = vld [vmem:[%s31 + $0x3e0] sm:$0xff]
        %v2877 = vld [vmem:[%s31 + $0x3e8] sm:$0xff]
        %v2878 = vld [vmem:[%s31 + $0x3f0] sm:$0xff]
        %v2879 = vld [vmem:[%s31 + $0x3f8] sm:$0xff]
        %v2880 = vld [vmem:[%s31 + $0x400] sm:$0xff]
        %v2881 = vld [vmem:[%s31 + $0x408] sm:$0xff]
        %v2882 = vld [vmem:[%s31 + $0x410] sm:$0xff]
        %v2883 = vld [vmem:[%s31 + $0x418] sm:$0xff]
        %v2884 = vld [vmem:[%s31 + $0x420] sm:$0xff]
        %v2885 = vld [vmem:[%s31 + $0x428] sm:$0xff]
        %v2886 = vld [vmem:[%s31 + $0x430] sm:$0xff]
        %v2887 = vld [vmem:[%s31 + $0x438] sm:$0xff]
        %v2888 = vld [vmem:[%s31 + $0x440] sm:$0xff]
        %v2889 = vld [vmem:[%s31 + $0x448] sm:$0xff]
        %v2890 = vld [vmem:[%s31 + $0x450] sm:$0xff]
        %v2891 = vld [vmem:[%s31 + $0x458] sm:$0xff]
        %v2892 = vld [vmem:[%s31 + $0x460] sm:$0xff]
        %v2893 = vld [vmem:[%s31 + $0x468] sm:$0xff]
        %v2894 = vld [vmem:[%s31 + $0x470] sm:$0xff]
        %v2895 = vld [vmem:[%s31 + $0x478] sm:$0xff]
        %v2896 = vld [vmem:[%s31 + $0x480] sm:$0xff]
        %v2897 = vld [vmem:[%s31 + $0x488] sm:$0xff]
        %v2898 = vld [vmem:[%s31 + $0x490] sm:$0xff]
        %v2899 = vld [vmem:[%s31 + $0x498] sm:$0xff]
        %v2900 = vld [vmem:[%s31 + $0x4a0] sm:$0xff]
        %v2901 = vld [vmem:[%s31 + $0x4a8] sm:$0xff]
        %v2902 = vld [vmem:[%s31 + $0x4b0] sm:$0xff]
        %v2903 = vld [vmem:[%s31 + $0x4b8] sm:$0xff]
        %v2904 = vld [vmem:[%s31 + $0x4c0] sm:$0xff]
        %v2905 = vld [vmem:[%s31 + $0x4c8] sm:$0xff]
        %v2906 = vld [vmem:[%s31 + $0x4d0] sm:$0xff]
        %v2907 = vld [vmem:[%s31 + $0x4d8] sm:$0xff]
        %v2908 = vld [vmem:[%s31 + $0x4e0] sm:$0xff]
        %v2909 = vld [vmem:[%s31 + $0x4e8] sm:$0xff]
        %v2910 = vld [vmem:[%s31 + $0x4f0] sm:$0xff]
        %v2911 = vld [vmem:[%s31 + $0x4f8] sm:$0xff]
        %v2912 = vld [vmem:[%s31 + $0x500] sm:$0xff]
        %v2913 = vld [vmem:[%s31 + $0x508] sm:$0xff]
        %v2914 = vld [vmem:[%s31 + $0x510] sm:$0xff]
        %v2915 = vld [vmem:[%s31 + $0x518] sm:$0xff]
        %v2916 = vld [vmem:[%s31 + $0x520] sm:$0xff]
        %v2917 = vld [vmem:[%s31 + $0x528] sm:$0xff]
        %v2918 = vld [vmem:[%s31 + $0x530] sm:$0xff]
        %v2919 = vld [vmem:[%s31 + $0x538] sm:$0xff]
        %v2920 = vld [vmem:[%s31 + $0x540] sm:$0xff]
        %v2921 = vld [vmem:[%s31 + $0x548] sm:$0xff]
        %v2922 = vld [vmem:[%s31 + $0x550] sm:$0xff]
        %v2923 = vld [vmem:[%s31 + $0x558] sm:$0xff]
        %v2924 = vld [vmem:[%s31 + $0x560] sm:$0xff]
        %v2925 = vld [vmem:[%s31 + $0x568] sm:$0xff]
        %v2926 = vld [vmem:[%s31 + $0x570] sm:$0xff]
        %v2927 = vld [vmem:[%s31 + $0x578] sm:$0xff]
        %v2928 = vld [vmem:[%s31 + $0x580] sm:$0xff]
        %v2929 = vld [vmem:[%s31 + $0x588] sm:$0xff]
        %v2930 = vld [vmem:[%s31 + $0x590] sm:$0xff]
        %v2931 = vld [vmem:[%s31 + $0x598] sm:$0xff]
        %v2932 = vld [vmem:[%s31 + $0x5a0] sm:$0xff]
        %v2933 = vld [vmem:[%s31 + $0x5a8] sm:$0xff]
        %v2934 = vld [vmem:[%s31 + $0x5b0] sm:$0xff]
        %v2935 = vld [vmem:[%s31 + $0x5b8] sm:$0xff]
        %v2936 = vld [vmem:[%s31 + $0x5c0] sm:$0xff]
        %v2937 = vld [vmem:[%s31 + $0x5c8] sm:$0xff]
        %v2938 = vld [vmem:[%s31 + $0x5d0] sm:$0xff]
        %v2939 = vld [vmem:[%s31 + $0x5d8] sm:$0xff]
        %v2940 = vld [vmem:[%s31 + $0x5e0] sm:$0xff]
        %v2941 = vld [vmem:[%s31 + $0x5e8] sm:$0xff]
        %v2942 = vld [vmem:[%s31 + $0x5f0] sm:$0xff]
        %v2943 = vld [vmem:[%s31 + $0x5f8] sm:$0xff]
        %v2944 = vld [vmem:[%s31 + $0x600] sm:$0xff]
        %v2945 = vld [vmem:[%s31 + $0x608] sm:$0xff]
        %v2946 = vld [vmem:[%s31 + $0x610] sm:$0xff]
        %v2947 = vld [vmem:[%s31 + $0x618] sm:$0xff]
        %v2948 = vld [vmem:[%s31 + $0x620] sm:$0xff]
        %v2949 = vld [vmem:[%s31 + $0x628] sm:$0xff]
        %v2950 = vld [vmem:[%s31 + $0x630] sm:$0xff]
        %v2951 = vld [vmem:[%s31 + $0x638] sm:$0xff]
        %v2952 = vld [vmem:[%s31 + $0x640] sm:$0xff]
        %v2953 = vld [vmem:[%s31 + $0x648] sm:$0xff]
        %v2954 = vld [vmem:[%s31 + $0x650] sm:$0xff]
        %v2955 = vld [vmem:[%s31 + $0x658] sm:$0xff]
        %v2956 = vld [vmem:[%s31 + $0x660] sm:$0xff]
        %v2957 = vld [vmem:[%s31 + $0x668] sm:$0xff]
        %v2958 = vld [vmem:[%s31 + $0x670] sm:$0xff]
        %v2959 = vld [vmem:[%s31 + $0x678] sm:$0xff]
        %v2960 = vld [vmem:[%s31 + $0x680] sm:$0xff]
        %v2961 = vld [vmem:[%s31 + $0x688] sm:$0xff]
        %v2962 = vld [vmem:[%s31 + $0x690] sm:$0xff]
        %v2963 = vld [vmem:[%s31 + $0x698] sm:$0xff]
        %v2964 = vld [vmem:[%s31 + $0x6a0] sm:$0xff]
        %v2965 = vld [vmem:[%s31 + $0x6a8] sm:$0xff]
        %v2966 = vld [vmem:[%s31 + $0x6b0] sm:$0xff]
        %v2967 = vld [vmem:[%s31 + $0x6b8] sm:$0xff]
        %v2968 = vld [vmem:[%s31 + $0x6c0] sm:$0xff]
        %v2969 = vld [vmem:[%s31 + $0x6c8] sm:$0xff]
        %v2970 = vld [vmem:[%s31 + $0x6d0] sm:$0xff]
        %v2971 = vld [vmem:[%s31 + $0x6d8] sm:$0xff]
        %v2972 = vld [vmem:[%s31 + $0x6e0] sm:$0xff]
        %v2973 = vld [vmem:[%s31 + $0x6e8] sm:$0xff]
        %v2974 = vld [vmem:[%s31 + $0x6f0] sm:$0xff]
        %v2975 = vld [vmem:[%s31 + $0x6f8] sm:$0xff]
        %v2976 = vld [vmem:[%s31 + $0x700] sm:$0xff]
        %v2977 = vld [vmem:[%s31 + $0x708] sm:$0xff]
        %v2978 = vld [vmem:[%s31 + $0x710] sm:$0xff]
        %v2979 = vld [vmem:[%s31 + $0x718] sm:$0xff]
        %v2980 = vld [vmem:[%s31 + $0x720] sm:$0xff]
        %v2981 = vld [vmem:[%s31 + $0x728] sm:$0xff]
        %v2982 = vld [vmem:[%s31 + $0x730] sm:$0xff]
        %v2983 = vld [vmem:[%s31 + $0x738] sm:$0xff]
        %v2984 = vld [vmem:[%s31 + $0x740] sm:$0xff]
        %v2985 = vld [vmem:[%s31 + $0x748] sm:$0xff]
        %v2986 = vld [vmem:[%s31 + $0x750] sm:$0xff]
        %v2987 = vld [vmem:[%s31 + $0x758] sm:$0xff]
        %v2988 = vld [vmem:[%s31 + $0x760] sm:$0xff]
        %v2989 = vld [vmem:[%s31 + $0x768] sm:$0xff]
        %v2990 = vld [vmem:[%s31 + $0x770] sm:$0xff]
        %v2991 = vld [vmem:[%s31 + $0x778] sm:$0xff]
        %v2992 = vld [vmem:[%s31 + $0x780] sm:$0xff]
        %v2993 = vld [vmem:[%s31 + $0x788] sm:$0xff]
        %v2994 = vld [vmem:[%s31 + $0x790] sm:$0xff]
        %v2995 = vld [vmem:[%s31 + $0x798] sm:$0xff]
        %v2996 = vld [vmem:[%s31 + $0x7a0] sm:$0xff]
        %v2997 = vld [vmem:[%s31 + $0x7a8] sm:$0xff]
        %v2998 = vld [vmem:[%s31 + $0x7b0] sm:$0xff]
        %v2999 = vld [vmem:[%s31 + $0x7b8] sm:$0xff]
        %v3000 = vld [vmem:[%s31 + $0x7c0] sm:$0xff]
        %v3001 = vld [vmem:[%s31 + $0x7c8] sm:$0xff]
        %v3002 = vld [vmem:[%s31 + $0x7d0] sm:$0xff]
        %v3003 = vld [vmem:[%s31 + $0x7d8] sm:$0xff]
        %v3004 = vld [vmem:[%s31 + $0x7e0] sm:$0xff]
        %v3005 = vld [vmem:[%s31 + $0x7e8] sm:$0xff]
        %v3006 = vld [vmem:[%s31 + $0x7f0] sm:$0xff]
        %v3007 = vld [vmem:[%s31 + $0x7f8] sm:$0xff]
        %v3008 = vld [vmem:[%s31 + $0x800] sm:$0xff]
        %v3009 = vld [vmem:[%s31 + $0x808] sm:$0xff]
        %v3010 = vld [vmem:[%s31 + $0x810] sm:$0xff]
        %v3011 = vld [vmem:[%s31 + $0x818] sm:$0xff]
        %v3012 = vld [vmem:[%s31 + $0x820] sm:$0xff]
        %v3013 = vld [vmem:[%s31 + $0x828] sm:$0xff]
        %v3014 = vld [vmem:[%s33] sm:$0x1]
        %v3016 = vlaneseq
        %v3017 = vshrl.u32 %v3016, 7
        %v3018 = vsub.s32 0, %v3017
        %v3019 = vrot.slane %v3014, %v3018
        %vm3021 = vcmask 392192
        %v3023 = vsel %vm3021, %v2751, 0
        %3025 = vmatprep.subr.mxu0 0.0
        %3026 = vmatpush1.msra.mxu0 %v2752
        %3027 = vmatprep.subr.mxu0 0.0
        %3028 = vmatpush1.msra.mxu0 %v2753
        %3029 = vmatprep.subr.mxu0 0.0
        %3030 = vmatpush1.msra.mxu0 %v2754
        %3031 = vmatprep.subr.mxu0 0.0
        %3032 = vmatpush1.msra.mxu0 %v2755
        %3033 = vmatprep.subr.mxu0 0.0
        %3034 = vmatpush1.msra.mxu0 %v2756
        %3035 = vmatprep.subr.mxu0 0.0
        %3036 = vmatpush1.msra.mxu0 %v2757
        %3037 = vmatprep.subr.mxu0 0.0
        %3038 = vmatpush1.msra.mxu0 %v2758
        %3039 = vmatprep.subr.mxu0 0.0
        %3040 = vmatpush1.msra.mxu0 %v2759
        %3041 = vmatprep.subr.mxu0 0.0
        %3042 = vmatpush1.msra.mxu0 %v2760
        %3043 = vmatprep.subr.mxu0 0.0
        %3044 = vmatpush1.msra.mxu0 %v2761
        %3045 = vmatprep.subr.mxu0 0.0
        %3046 = vmatpush1.msra.mxu0 %v2762
        %3047 = vmatprep.subr.mxu0 0.0
        %3048 = vmatpush1.msra.mxu0 %v2763
        %3049 = vmatprep.subr.mxu0 0.0
        %3050 = vmatpush1.msra.mxu0 %v2764
        %3051 = vmatprep.subr.mxu0 0.0
        %3052 = vmatpush1.msra.mxu0 %v2765
        %3053 = vmatprep.subr.mxu0 0.0
        %3054 = vmatpush1.msra.mxu0 %v2766
        %3055 = vmatprep.subr.mxu0 0.0
        %3056 = vmatpush1.msra.mxu0 %v2767
        %3057 = vmatprep.subr.mxu0 0.0
        %3058 = vmatpush1.msra.mxu0 %v2768
        %3059 = vmatprep.subr.mxu0 0.0
        %3060 = vmatpush1.msra.mxu0 %v2769
        %3061 = vmatprep.subr.mxu0 0.0
        %3062 = vmatpush1.msra.mxu0 %v2770
        %3063 = vmatprep.subr.mxu0 0.0
        %3064 = vmatpush1.msra.mxu0 %v2771
        %3065 = vmatprep.subr.mxu0 0.0
        %3066 = vmatpush1.msra.mxu0 %v2772
        %3067 = vmatprep.subr.mxu0 0.0
        %3068 = vmatpush1.msra.mxu0 %v2773
        %3069 = vmatprep.subr.mxu0 0.0
        %3070 = vmatpush1.msra.mxu0 %v2774
        %3071 = vmatprep.subr.mxu0 0.0
        %3072 = vmatpush1.msra.mxu0 %v2775
        %3073 = vmatprep.subr.mxu0 0.0
        %3074 = vmatpush1.msra.mxu0 %v2776
        %3075 = vmatprep.subr.mxu0 0.0
        %3076 = vmatpush1.msra.mxu0 %v2777
        %3077 = vmatprep.subr.mxu0 0.0
        %3078 = vmatpush1.msra.mxu0 %v2778
        %3079 = vmatprep.subr.mxu0 0.0
        %3080 = vmatpush1.msra.mxu0 %v2779
        %3081 = vmatprep.subr.mxu0 0.0
        %3082 = vmatpush1.msra.mxu0 %v2780
        %3083 = vmatprep.subr.mxu0 0.0
        %3084 = vmatpush1.msra.mxu0 %v2781
        %3085 = vmatprep.subr.mxu0 0.0
        %3086 = vmatpush1.msra.mxu0 %v2782
        %3087 = vmatprep.subr.mxu0 0.0
        %3088 = vmatpush1.msra.mxu0 %v2783
        %3089 = vmatprep.mubr.f32.mxu0 %v2736
        %3090 = vmatmul.mubr.f32.gmra.mrb[0].mxu0 %v2735
        %v3091 = vpop.f32.mrb[0].mxu0
        %v3092 = vadd.f32 %v3019, %v3091
        %v3093 = vpop.f32.mrb[0].mxu0
        %3094 = vdwg.mxu0
        %3095 = vmatprep.subr.mxu0 0.0
        %3096 = vmatpush1.msra.mxu0 %v2784
        %3097 = vmatprep.subr.mxu0 0.0
        %3098 = vmatpush1.msra.mxu0 %v2785
        %3099 = vmatprep.subr.mxu0 0.0
        %3100 = vmatpush1.msra.mxu0 %v2786
        %3101 = vmatprep.subr.mxu0 0.0
        %3102 = vmatpush1.msra.mxu0 %v2787
        %3103 = vmatprep.subr.mxu0 0.0
        %3104 = vmatpush1.msra.mxu0 %v2788
        %3105 = vmatprep.subr.mxu0 0.0
        %3106 = vmatpush1.msra.mxu0 %v2789
        %3107 = vmatprep.subr.mxu0 0.0
        %3108 = vmatpush1.msra.mxu0 %v2790
        %3109 = vmatprep.subr.mxu0 0.0
        %3110 = vmatpush1.msra.mxu0 %v2791
        %3111 = vmatprep.subr.mxu0 0.0
        %3112 = vmatpush1.msra.mxu0 %v2792
        %3113 = vmatprep.subr.mxu0 0.0
        %3114 = vmatpush1.msra.mxu0 %v2793
        %3115 = vmatprep.subr.mxu0 0.0
        %3116 = vmatpush1.msra.mxu0 %v2794
        %3117 = vmatprep.subr.mxu0 0.0
        %3118 = vmatpush1.msra.mxu0 %v2795
        %3119 = vmatprep.subr.mxu0 0.0
        %3120 = vmatpush1.msra.mxu0 %v2796
        %3121 = vmatprep.subr.mxu0 0.0
        %3122 = vmatpush1.msra.mxu0 %v2797
        %3123 = vmatprep.subr.mxu0 0.0
        %3124 = vmatpush1.msra.mxu0 %v2798
        %3125 = vmatprep.subr.mxu0 0.0
        %3126 = vmatpush1.msra.mxu0 %v2799
        %3127 = vmatprep.subr.mxu0 0.0
        %3128 = vmatpush1.msra.mxu0 %v2800
        %3129 = vmatprep.subr.mxu0 0.0
        %3130 = vmatpush1.msra.mxu0 %v2801
        %3131 = vmatprep.subr.mxu0 0.0
        %3132 = vmatpush1.msra.mxu0 %v2802
        %3133 = vmatprep.subr.mxu0 0.0
        %3134 = vmatpush1.msra.mxu0 %v2803
        %3135 = vmatprep.subr.mxu0 0.0
        %3136 = vmatpush1.msra.mxu0 %v2804
        %3137 = vmatprep.subr.mxu0 0.0
        %3138 = vmatpush1.msra.mxu0 %v2805
        %3139 = vmatprep.subr.mxu0 0.0
        %3140 = vmatpush1.msra.mxu0 %v2806
        %3141 = vmatprep.subr.mxu0 0.0
        %3142 = vmatpush1.msra.mxu0 %v2807
        %3143 = vmatprep.subr.mxu0 0.0
        %3144 = vmatpush1.msra.mxu0 %v2808
        %3145 = vmatprep.subr.mxu0 0.0
        %3146 = vmatpush1.msra.mxu0 %v2809
        %3147 = vmatprep.subr.mxu0 0.0
        %3148 = vmatpush1.msra.mxu0 %v2810
        %3149 = vmatprep.subr.mxu0 0.0
        %3150 = vmatpush1.msra.mxu0 %v2811
        %3151 = vmatprep.subr.mxu0 0.0
        %3152 = vmatpush1.msra.mxu0 %v2812
        %3153 = vmatprep.subr.mxu0 0.0
        %3154 = vmatpush1.msra.mxu0 %v2813
        %3155 = vmatprep.subr.mxu0 0.0
        %3156 = vmatpush1.msra.mxu0 %v2814
        %3157 = vmatprep.subr.mxu0 0.0
        %3158 = vmatpush1.msra.mxu0 %v2815
        %3159 = vmatprep.mubr.f32.mxu0 %v2738
        %3160 = vmatmul.mubr.f32.gmra.mrb[0].mxu0 %v2737
        %v3161 = vpop.f32.mrb[0].mxu0
        %v3162 = vadd.f32 %v3092, %v3161
        %v3163 = vpop.f32.mrb[0].mxu0
        %3164 = vdwg.mxu0
        %3165 = vmatprep.subr.mxu0 0.0
        %3166 = vmatpush1.msra.mxu0 %v2816
        %3167 = vmatprep.subr.mxu0 0.0
        %3168 = vmatpush1.msra.mxu0 %v2817
        %3169 = vmatprep.subr.mxu0 0.0
        %3170 = vmatpush1.msra.mxu0 %v2818
        %3171 = vmatprep.subr.mxu0 0.0
        %3172 = vmatpush1.msra.mxu0 %v2819
        %3173 = vmatprep.subr.mxu0 0.0
        %3174 = vmatpush1.msra.mxu0 %v2820
        %3175 = vmatprep.subr.mxu0 0.0
        %3176 = vmatpush1.msra.mxu0 %v2821
        %3177 = vmatprep.subr.mxu0 0.0
        %3178 = vmatpush1.msra.mxu0 %v2822
        %3179 = vmatprep.subr.mxu0 0.0
        %3180 = vmatpush1.msra.mxu0 %v2823
        %3181 = vmatprep.subr.mxu0 0.0
        %3182 = vmatpush1.msra.mxu0 %v2824
        %3183 = vmatprep.subr.mxu0 0.0
        %3184 = vmatpush1.msra.mxu0 %v2825
        %3185 = vmatprep.subr.mxu0 0.0
        %3186 = vmatpush1.msra.mxu0 %v2826
        %3187 = vmatprep.subr.mxu0 0.0
        %3188 = vmatpush1.msra.mxu0 %v2827
        %3189 = vmatprep.subr.mxu0 0.0
        %3190 = vmatpush1.msra.mxu0 %v2828
        %3191 = vmatprep.subr.mxu0 0.0
        %3192 = vmatpush1.msra.mxu0 %v2829
        %3193 = vmatprep.subr.mxu0 0.0
        %3194 = vmatpush1.msra.mxu0 %v2830
        %3195 = vmatprep.subr.mxu0 0.0
        %3196 = vmatpush1.msra.mxu0 %v2831
        %3197 = vmatprep.subr.mxu0 0.0
        %3198 = vmatpush1.msra.mxu0 %v2832
        %3199 = vmatprep.subr.mxu0 0.0
        %3200 = vmatpush1.msra.mxu0 %v2833
        %3201 = vmatprep.subr.mxu0 0.0
        %3202 = vmatpush1.msra.mxu0 %v2834
        %3203 = vmatprep.subr.mxu0 0.0
        %3204 = vmatpush1.msra.mxu0 %v2835
        %3205 = vmatprep.subr.mxu0 0.0
        %3206 = vmatpush1.msra.mxu0 %v2836
        %3207 = vmatprep.subr.mxu0 0.0
        %3208 = vmatpush1.msra.mxu0 %v2837
        %3209 = vmatprep.subr.mxu0 0.0
        %3210 = vmatpush1.msra.mxu0 %v2838
        %3211 = vmatprep.subr.mxu0 0.0
        %3212 = vmatpush1.msra.mxu0 %v2839
        %3213 = vmatprep.subr.mxu0 0.0
        %3214 = vmatpush1.msra.mxu0 %v2840
        %3215 = vmatprep.subr.mxu0 0.0
        %3216 = vmatpush1.msra.mxu0 %v2841
        %3217 = vmatprep.subr.mxu0 0.0
        %3218 = vmatpush1.msra.mxu0 %v2842
        %3219 = vmatprep.subr.mxu0 0.0
        %3220 = vmatpush1.msra.mxu0 %v2843
        %3221 = vmatprep.subr.mxu0 0.0
        %3222 = vmatpush1.msra.mxu0 %v2844
        %3223 = vmatprep.subr.mxu0 0.0
        %3224 = vmatpush1.msra.mxu0 %v2845
        %3225 = vmatprep.subr.mxu0 0.0
        %3226 = vmatpush1.msra.mxu0 %v2846
        %3227 = vmatprep.subr.mxu0 0.0
        %3228 = vmatpush1.msra.mxu0 %v2847
        %3229 = vmatprep.mubr.f32.mxu0 %v2740
        %3230 = vmatmul.mubr.f32.gmra.mrb[0].mxu0 %v2739
        %v3231 = vpop.f32.mrb[0].mxu0
        %v3232 = vadd.f32 %v3162, %v3231
        %v3233 = vpop.f32.mrb[0].mxu0
        %3234 = vdwg.mxu0
        %3235 = vmatprep.subr.mxu0 0.0
        %3236 = vmatpush1.msra.mxu0 %v2848
        %3237 = vmatprep.subr.mxu0 0.0
        %3238 = vmatpush1.msra.mxu0 %v2849
        %3239 = vmatprep.subr.mxu0 0.0
        %3240 = vmatpush1.msra.mxu0 %v2850
        %3241 = vmatprep.subr.mxu0 0.0
        %3242 = vmatpush1.msra.mxu0 %v2851
        %3243 = vmatprep.subr.mxu0 0.0
        %3244 = vmatpush1.msra.mxu0 %v2852
        %3245 = vmatprep.subr.mxu0 0.0
        %3246 = vmatpush1.msra.mxu0 %v2853
        %3247 = vmatprep.subr.mxu0 0.0
        %3248 = vmatpush1.msra.mxu0 %v2854
        %3249 = vmatprep.subr.mxu0 0.0
        %3250 = vmatpush1.msra.mxu0 %v2855
        %3251 = vmatprep.subr.mxu0 0.0
        %3252 = vmatpush1.msra.mxu0 %v2856
        %3253 = vmatprep.subr.mxu0 0.0
        %3254 = vmatpush1.msra.mxu0 %v2857
        %3255 = vmatprep.subr.mxu0 0.0
        %3256 = vmatpush1.msra.mxu0 %v2858
        %3257 = vmatprep.subr.mxu0 0.0
        %3258 = vmatpush1.msra.mxu0 %v2859
        %3259 = vmatprep.subr.mxu0 0.0
        %3260 = vmatpush1.msra.mxu0 %v2860
        %3261 = vmatprep.subr.mxu0 0.0
        %3262 = vmatpush1.msra.mxu0 %v2861
        %3263 = vmatprep.subr.mxu0 0.0
        %3264 = vmatpush1.msra.mxu0 %v2862
        %3265 = vmatprep.subr.mxu0 0.0
        %3266 = vmatpush1.msra.mxu0 %v2863
        %3267 = vmatprep.subr.mxu0 0.0
        %3268 = vmatpush1.msra.mxu0 %v2864
        %3269 = vmatprep.subr.mxu0 0.0
        %3270 = vmatpush1.msra.mxu0 %v2865
        %3271 = vmatprep.subr.mxu0 0.0
        %3272 = vmatpush1.msra.mxu0 %v2866
        %3273 = vmatprep.subr.mxu0 0.0
        %3274 = vmatpush1.msra.mxu0 %v2867
        %3275 = vmatprep.subr.mxu0 0.0
        %3276 = vmatpush1.msra.mxu0 %v2868
        %3277 = vmatprep.subr.mxu0 0.0
        %3278 = vmatpush1.msra.mxu0 %v2869
        %3279 = vmatprep.subr.mxu0 0.0
        %3280 = vmatpush1.msra.mxu0 %v2870
        %3281 = vmatprep.subr.mxu0 0.0
        %3282 = vmatpush1.msra.mxu0 %v2871
        %3283 = vmatprep.subr.mxu0 0.0
        %3284 = vmatpush1.msra.mxu0 %v2872
        %3285 = vmatprep.subr.mxu0 0.0
        %3286 = vmatpush1.msra.mxu0 %v2873
        %3287 = vmatprep.subr.mxu0 0.0
        %3288 = vmatpush1.msra.mxu0 %v2874
        %3289 = vmatprep.subr.mxu0 0.0
        %3290 = vmatpush1.msra.mxu0 %v2875
        %3291 = vmatprep.subr.mxu0 0.0
        %3292 = vmatpush1.msra.mxu0 %v2876
        %3293 = vmatprep.subr.mxu0 0.0
        %3294 = vmatpush1.msra.mxu0 %v2877
        %3295 = vmatprep.subr.mxu0 0.0
        %3296 = vmatpush1.msra.mxu0 %v2878
        %3297 = vmatprep.subr.mxu0 0.0
        %3298 = vmatpush1.msra.mxu0 %v2879
        %3299 = vmatprep.mubr.f32.mxu0 %v2742
        %3300 = vmatmul.mubr.f32.gmra.mrb[0].mxu0 %v2741
        %v3301 = vpop.f32.mrb[0].mxu0
        %v3302 = vadd.f32 %v3232, %v3301
        %v3303 = vpop.f32.mrb[0].mxu0
        %3304 = vdwg.mxu0
        %3305 = vmatprep.subr.mxu0 0.0
        %3306 = vmatpush1.msra.mxu0 %v2880
        %3307 = vmatprep.subr.mxu0 0.0
        %3308 = vmatpush1.msra.mxu0 %v2881
        %3309 = vmatprep.subr.mxu0 0.0
        %3310 = vmatpush1.msra.mxu0 %v2882
        %3311 = vmatprep.subr.mxu0 0.0
        %3312 = vmatpush1.msra.mxu0 %v2883
        %3313 = vmatprep.subr.mxu0 0.0
        %3314 = vmatpush1.msra.mxu0 %v2884
        %3315 = vmatprep.subr.mxu0 0.0
        %3316 = vmatpush1.msra.mxu0 %v2885
        %3317 = vmatprep.subr.mxu0 0.0
        %3318 = vmatpush1.msra.mxu0 %v2886
        %3319 = vmatprep.subr.mxu0 0.0
        %3320 = vmatpush1.msra.mxu0 %v2887
        %3321 = vmatprep.subr.mxu0 0.0
        %3322 = vmatpush1.msra.mxu0 %v2888
        %3323 = vmatprep.subr.mxu0 0.0
        %3324 = vmatpush1.msra.mxu0 %v2889
        %3325 = vmatprep.subr.mxu0 0.0
        %3326 = vmatpush1.msra.mxu0 %v2890
        %3327 = vmatprep.subr.mxu0 0.0
        %3328 = vmatpush1.msra.mxu0 %v2891
        %3329 = vmatprep.subr.mxu0 0.0
        %3330 = vmatpush1.msra.mxu0 %v2892
        %3331 = vmatprep.subr.mxu0 0.0
        %3332 = vmatpush1.msra.mxu0 %v2893
        %3333 = vmatprep.subr.mxu0 0.0
        %3334 = vmatpush1.msra.mxu0 %v2894
        %3335 = vmatprep.subr.mxu0 0.0
        %3336 = vmatpush1.msra.mxu0 %v2895
        %3337 = vmatprep.subr.mxu0 0.0
        %3338 = vmatpush1.msra.mxu0 %v2896
        %3339 = vmatprep.subr.mxu0 0.0
        %3340 = vmatpush1.msra.mxu0 %v2897
        %3341 = vmatprep.subr.mxu0 0.0
        %3342 = vmatpush1.msra.mxu0 %v2898
        %3343 = vmatprep.subr.mxu0 0.0
        %3344 = vmatpush1.msra.mxu0 %v2899
        %3345 = vmatprep.subr.mxu0 0.0
        %3346 = vmatpush1.msra.mxu0 %v2900
        %3347 = vmatprep.subr.mxu0 0.0
        %3348 = vmatpush1.msra.mxu0 %v2901
        %3349 = vmatprep.subr.mxu0 0.0
        %3350 = vmatpush1.msra.mxu0 %v2902
        %3351 = vmatprep.subr.mxu0 0.0
        %3352 = vmatpush1.msra.mxu0 %v2903
        %3353 = vmatprep.subr.mxu0 0.0
        %3354 = vmatpush1.msra.mxu0 %v2904
        %3355 = vmatprep.subr.mxu0 0.0
        %3356 = vmatpush1.msra.mxu0 %v2905
        %3357 = vmatprep.subr.mxu0 0.0
        %3358 = vmatpush1.msra.mxu0 %v2906
        %3359 = vmatprep.subr.mxu0 0.0
        %3360 = vmatpush1.msra.mxu0 %v2907
        %3361 = vmatprep.subr.mxu0 0.0
        %3362 = vmatpush1.msra.mxu0 %v2908
        %3363 = vmatprep.subr.mxu0 0.0
        %3364 = vmatpush1.msra.mxu0 %v2909
        %3365 = vmatprep.subr.mxu0 0.0
        %3366 = vmatpush1.msra.mxu0 %v2910
        %3367 = vmatprep.subr.mxu0 0.0
        %3368 = vmatpush1.msra.mxu0 %v2911
        %3369 = vmatprep.mubr.f32.mxu0 %v2744
        %3370 = vmatmul.mubr.f32.gmra.mrb[0].mxu0 %v2743
        %v3371 = vpop.f32.mrb[0].mxu0
        %v3372 = vadd.f32 %v3302, %v3371
        %v3373 = vpop.f32.mrb[0].mxu0
        %3374 = vdwg.mxu0
        %3375 = vmatprep.subr.mxu0 0.0
        %3376 = vmatpush1.msra.mxu0 %v2912
        %3377 = vmatprep.subr.mxu0 0.0
        %3378 = vmatpush1.msra.mxu0 %v2913
        %3379 = vmatprep.subr.mxu0 0.0
        %3380 = vmatpush1.msra.mxu0 %v2914
        %3381 = vmatprep.subr.mxu0 0.0
        %3382 = vmatpush1.msra.mxu0 %v2915
        %3383 = vmatprep.subr.mxu0 0.0
        %3384 = vmatpush1.msra.mxu0 %v2916
        %3385 = vmatprep.subr.mxu0 0.0
        %3386 = vmatpush1.msra.mxu0 %v2917
        %3387 = vmatprep.subr.mxu0 0.0
        %3388 = vmatpush1.msra.mxu0 %v2918
        %3389 = vmatprep.subr.mxu0 0.0
        %3390 = vmatpush1.msra.mxu0 %v2919
        %3391 = vmatprep.subr.mxu0 0.0
        %3392 = vmatpush1.msra.mxu0 %v2920
        %3393 = vmatprep.subr.mxu0 0.0
        %3394 = vmatpush1.msra.mxu0 %v2921
        %3395 = vmatprep.subr.mxu0 0.0
        %3396 = vmatpush1.msra.mxu0 %v2922
        %3397 = vmatprep.subr.mxu0 0.0
        %3398 = vmatpush1.msra.mxu0 %v2923
        %3399 = vmatprep.subr.mxu0 0.0
        %3400 = vmatpush1.msra.mxu0 %v2924
        %3401 = vmatprep.subr.mxu0 0.0
        %3402 = vmatpush1.msra.mxu0 %v2925
        %3403 = vmatprep.subr.mxu0 0.0
        %3404 = vmatpush1.msra.mxu0 %v2926
        %3405 = vmatprep.subr.mxu0 0.0
        %3406 = vmatpush1.msra.mxu0 %v2927
        %3407 = vmatprep.subr.mxu0 0.0
        %3408 = vmatpush1.msra.mxu0 %v2928
        %3409 = vmatprep.subr.mxu0 0.0
        %3410 = vmatpush1.msra.mxu0 %v2929
        %3411 = vmatprep.subr.mxu0 0.0
        %3412 = vmatpush1.msra.mxu0 %v2930
        %3413 = vmatprep.subr.mxu0 0.0
        %3414 = vmatpush1.msra.mxu0 %v2931
        %3415 = vmatprep.subr.mxu0 0.0
        %3416 = vmatpush1.msra.mxu0 %v2932
        %3417 = vmatprep.subr.mxu0 0.0
        %3418 = vmatpush1.msra.mxu0 %v2933
        %3419 = vmatprep.subr.mxu0 0.0
        %3420 = vmatpush1.msra.mxu0 %v2934
        %3421 = vmatprep.subr.mxu0 0.0
        %3422 = vmatpush1.msra.mxu0 %v2935
        %3423 = vmatprep.subr.mxu0 0.0
        %3424 = vmatpush1.msra.mxu0 %v2936
        %3425 = vmatprep.subr.mxu0 0.0
        %3426 = vmatpush1.msra.mxu0 %v2937
        %3427 = vmatprep.subr.mxu0 0.0
        %3428 = vmatpush1.msra.mxu0 %v2938
        %3429 = vmatprep.subr.mxu0 0.0
        %3430 = vmatpush1.msra.mxu0 %v2939
        %3431 = vmatprep.subr.mxu0 0.0
        %3432 = vmatpush1.msra.mxu0 %v2940
        %3433 = vmatprep.subr.mxu0 0.0
        %3434 = vmatpush1.msra.mxu0 %v2941
        %3435 = vmatprep.subr.mxu0 0.0
        %3436 = vmatpush1.msra.mxu0 %v2942
        %3437 = vmatprep.subr.mxu0 0.0
        %3438 = vmatpush1.msra.mxu0 %v2943
        %3439 = vmatprep.mubr.f32.mxu0 %v2746
        %3440 = vmatmul.mubr.f32.gmra.mrb[0].mxu0 %v2745
        %v3441 = vpop.f32.mrb[0].mxu0
        %v3442 = vadd.f32 %v3372, %v3441
        %v3443 = vpop.f32.mrb[0].mxu0
        %3444 = vdwg.mxu0
        %3445 = vmatprep.subr.mxu0 0.0
        %3446 = vmatpush1.msra.mxu0 %v2944
        %3447 = vmatprep.subr.mxu0 0.0
        %3448 = vmatpush1.msra.mxu0 %v2945
        %3449 = vmatprep.subr.mxu0 0.0
        %3450 = vmatpush1.msra.mxu0 %v2946
        %3451 = vmatprep.subr.mxu0 0.0
        %3452 = vmatpush1.msra.mxu0 %v2947
        %3453 = vmatprep.subr.mxu0 0.0
        %3454 = vmatpush1.msra.mxu0 %v2948
        %3455 = vmatprep.subr.mxu0 0.0
        %3456 = vmatpush1.msra.mxu0 %v2949
        %3457 = vmatprep.subr.mxu0 0.0
        %3458 = vmatpush1.msra.mxu0 %v2950
        %3459 = vmatprep.subr.mxu0 0.0
        %3460 = vmatpush1.msra.mxu0 %v2951
        %3461 = vmatprep.subr.mxu0 0.0
        %3462 = vmatpush1.msra.mxu0 %v2952
        %3463 = vmatprep.subr.mxu0 0.0
        %3464 = vmatpush1.msra.mxu0 %v2953
        %3465 = vmatprep.subr.mxu0 0.0
        %3466 = vmatpush1.msra.mxu0 %v2954
        %3467 = vmatprep.subr.mxu0 0.0
        %3468 = vmatpush1.msra.mxu0 %v2955
        %3469 = vmatprep.subr.mxu0 0.0
        %3470 = vmatpush1.msra.mxu0 %v2956
        %3471 = vmatprep.subr.mxu0 0.0
        %3472 = vmatpush1.msra.mxu0 %v2957
        %3473 = vmatprep.subr.mxu0 0.0
        %3474 = vmatpush1.msra.mxu0 %v2958
        %3475 = vmatprep.subr.mxu0 0.0
        %3476 = vmatpush1.msra.mxu0 %v2959
        %3477 = vmatprep.subr.mxu0 0.0
        %3478 = vmatpush1.msra.mxu0 %v2960
        %3479 = vmatprep.subr.mxu0 0.0
        %3480 = vmatpush1.msra.mxu0 %v2961
        %3481 = vmatprep.subr.mxu0 0.0
        %3482 = vmatpush1.msra.mxu0 %v2962
        %3483 = vmatprep.subr.mxu0 0.0
        %3484 = vmatpush1.msra.mxu0 %v2963
        %3485 = vmatprep.subr.mxu0 0.0
        %3486 = vmatpush1.msra.mxu0 %v2964
        %3487 = vmatprep.subr.mxu0 0.0
        %3488 = vmatpush1.msra.mxu0 %v2965
        %3489 = vmatprep.subr.mxu0 0.0
        %3490 = vmatpush1.msra.mxu0 %v2966
        %3491 = vmatprep.subr.mxu0 0.0
        %3492 = vmatpush1.msra.mxu0 %v2967
        %3493 = vmatprep.subr.mxu0 0.0
        %3494 = vmatpush1.msra.mxu0 %v2968
        %3495 = vmatprep.subr.mxu0 0.0
        %3496 = vmatpush1.msra.mxu0 %v2969
        %3497 = vmatprep.subr.mxu0 0.0
        %3498 = vmatpush1.msra.mxu0 %v2970
        %3499 = vmatprep.subr.mxu0 0.0
        %3500 = vmatpush1.msra.mxu0 %v2971
        %3501 = vmatprep.subr.mxu0 0.0
        %3502 = vmatpush1.msra.mxu0 %v2972
        %3503 = vmatprep.subr.mxu0 0.0
        %3504 = vmatpush1.msra.mxu0 %v2973
        %3505 = vmatprep.subr.mxu0 0.0
        %3506 = vmatpush1.msra.mxu0 %v2974
        %3507 = vmatprep.subr.mxu0 0.0
        %3508 = vmatpush1.msra.mxu0 %v2975
        %3509 = vmatprep.mubr.f32.mxu0 %v2748
        %3510 = vmatmul.mubr.f32.gmra.mrb[0].mxu0 %v2747
        %v3511 = vpop.f32.mrb[0].mxu0
        %v3512 = vadd.f32 %v3442, %v3511
        %v3513 = vpop.f32.mrb[0].mxu0
        %3514 = vdwg.mxu0
        %3515 = vmatprep.subr.mxu0 0.0
        %3516 = vmatpush1.msra.mxu0 %v2976
        %3517 = vmatprep.subr.mxu0 0.0
        %3518 = vmatpush1.msra.mxu0 %v2977
        %3519 = vmatprep.subr.mxu0 0.0
        %3520 = vmatpush1.msra.mxu0 %v2978
        %3521 = vmatprep.subr.mxu0 0.0
        %3522 = vmatpush1.msra.mxu0 %v2979
        %3523 = vmatprep.subr.mxu0 0.0
        %3524 = vmatpush1.msra.mxu0 %v2980
        %3525 = vmatprep.subr.mxu0 0.0
        %3526 = vmatpush1.msra.mxu0 %v2981
        %3527 = vmatprep.subr.mxu0 0.0
        %3528 = vmatpush1.msra.mxu0 %v2982
        %3529 = vmatprep.subr.mxu0 0.0
        %3530 = vmatpush1.msra.mxu0 %v2983
        %3531 = vmatprep.subr.mxu0 0.0
        %3532 = vmatpush1.msra.mxu0 %v2984
        %3533 = vmatprep.subr.mxu0 0.0
        %3534 = vmatpush1.msra.mxu0 %v2985
        %3535 = vmatprep.subr.mxu0 0.0
        %3536 = vmatpush1.msra.mxu0 %v2986
        %3537 = vmatprep.subr.mxu0 0.0
        %3538 = vmatpush1.msra.mxu0 %v2987
        %3539 = vmatprep.subr.mxu0 0.0
        %3540 = vmatpush1.msra.mxu0 %v2988
        %3541 = vmatprep.subr.mxu0 0.0
        %3542 = vmatpush1.msra.mxu0 %v2989
        %3543 = vmatprep.subr.mxu0 0.0
        %3544 = vmatpush1.msra.mxu0 %v2990
        %3545 = vmatprep.subr.mxu0 0.0
        %3546 = vmatpush1.msra.mxu0 %v2991
        %3547 = vmatprep.subr.mxu0 0.0
        %3548 = vmatpush1.msra.mxu0 %v2992
        %3549 = vmatprep.subr.mxu0 0.0
        %3550 = vmatpush1.msra.mxu0 %v2993
        %3551 = vmatprep.subr.mxu0 0.0
        %3552 = vmatpush1.msra.mxu0 %v2994
        %3553 = vmatprep.subr.mxu0 0.0
        %3554 = vmatpush1.msra.mxu0 %v2995
        %3555 = vmatprep.subr.mxu0 0.0
        %3556 = vmatpush1.msra.mxu0 %v2996
        %3557 = vmatprep.subr.mxu0 0.0
        %3558 = vmatpush1.msra.mxu0 %v2997
        %3559 = vmatprep.subr.mxu0 0.0
        %3560 = vmatpush1.msra.mxu0 %v2998
        %3561 = vmatprep.subr.mxu0 0.0
        %3562 = vmatpush1.msra.mxu0 %v2999
        %3563 = vmatprep.subr.mxu0 0.0
        %3564 = vmatpush1.msra.mxu0 %v3000
        %3565 = vmatprep.subr.mxu0 0.0
        %3566 = vmatpush1.msra.mxu0 %v3001
        %3567 = vmatprep.subr.mxu0 0.0
        %3568 = vmatpush1.msra.mxu0 %v3002
        %3569 = vmatprep.subr.mxu0 0.0
        %3570 = vmatpush1.msra.mxu0 %v3003
        %3571 = vmatprep.subr.mxu0 0.0
        %3572 = vmatpush1.msra.mxu0 %v3004
        %3573 = vmatprep.subr.mxu0 0.0
        %3574 = vmatpush1.msra.mxu0 %v3005
        %3575 = vmatprep.subr.mxu0 0.0
        %3576 = vmatpush1.msra.mxu0 %v3006
        %3577 = vmatprep.subr.mxu0 0.0
        %3578 = vmatpush1.msra.mxu0 %v3007
        %3579 = vmatprep.mubr.f32.mxu0 %v2750
        %3580 = vmatmul.mubr.f32.gmra.mrb[0].mxu0 %v2749
        %v3581 = vpop.f32.mrb[0].mxu0
        %v3582 = vadd.f32 %v3512, %v3581
        %v3583 = vpop.f32.mrb[0].mxu0
        %3584 = vdwg.mxu0
        %3585 = vmatprep.subr.mxu0 0.0
        %3586 = vmatpush1.msra.mxu0 %v3008
        %3587 = vmatprep.subr.mxu0 0.0
        %3588 = vmatpush1.msra.mxu0 %v3009
        %3589 = vmatprep.subr.mxu0 0.0
        %3590 = vmatpush1.msra.mxu0 %v3010
        %3591 = vmatprep.subr.mxu0 0.0
        %3592 = vmatpush1.msra.mxu0 %v3011
        %3593 = vmatprep.subr.mxu0 0.0
        %3594 = vmatpush1.msra.mxu0 %v3012
        %3595 = vmatprep.subr.mxu0 0.0
        %3596 = vmatpush1.msra.mxu0 %v3013
        %3597 = vmatprep.subr.mxu0 0.0
        %3598 = vmatpush1.msra.mxu0 0.0
        %3599 = vmatprep.subr.mxu0 0.0
        %3600 = vmatpush1.msra.mxu0 0.0
        %3601 = vmatprep.subr.mxu0 0.0
        %3602 = vmatpush1.msra.mxu0 0.0
        %3603 = vmatprep.subr.mxu0 0.0
        %3604 = vmatpush1.msra.mxu0 0.0
        %3605 = vmatprep.subr.mxu0 0.0
        %3606 = vmatpush1.msra.mxu0 0.0
        %3607 = vmatprep.subr.mxu0 0.0
        %3608 = vmatpush1.msra.mxu0 0.0
        %3609 = vmatprep.subr.mxu0 0.0
        %3610 = vmatpush1.msra.mxu0 0.0
        %3611 = vmatprep.subr.mxu0 0.0
        %3612 = vmatpush1.msra.mxu0 0.0
        %3613 = vmatprep.subr.mxu0 0.0
        %3614 = vmatpush1.msra.mxu0 0.0
        %3615 = vmatprep.subr.mxu0 0.0
        %3616 = vmatpush1.msra.mxu0 0.0
        %3617 = vmatprep.subr.mxu0 0.0
        %3618 = vmatpush1.msra.mxu0 0.0
        %3619 = vmatprep.subr.mxu0 0.0
        %3620 = vmatpush1.msra.mxu0 0.0
        %3621 = vmatprep.subr.mxu0 0.0
        %3622 = vmatpush1.msra.mxu0 0.0
        %3623 = vmatprep.subr.mxu0 0.0
        %3624 = vmatpush1.msra.mxu0 0.0
        %3625 = vmatprep.subr.mxu0 0.0
        %3626 = vmatpush1.msra.mxu0 0.0
        %3627 = vmatprep.subr.mxu0 0.0
        %3628 = vmatpush1.msra.mxu0 0.0
        %3629 = vmatprep.subr.mxu0 0.0
        %3630 = vmatpush1.msra.mxu0 0.0
        %3631 = vmatprep.subr.mxu0 0.0
        %3632 = vmatpush1.msra.mxu0 0.0
        %3633 = vmatprep.subr.mxu0 0.0
        %3634 = vmatpush1.msra.mxu0 0.0
        %3635 = vmatprep.subr.mxu0 0.0
        %3636 = vmatpush1.msra.mxu0 0.0
        %3637 = vmatprep.subr.mxu0 0.0
        %3638 = vmatpush1.msra.mxu0 0.0
        %3639 = vmatprep.subr.mxu0 0.0
        %3640 = vmatpush1.msra.mxu0 0.0
        %3641 = vmatprep.subr.mxu0 0.0
        %3642 = vmatpush1.msra.mxu0 0.0
        %3643 = vmatprep.subr.mxu0 0.0
        %3644 = vmatpush1.msra.mxu0 0.0
        %3645 = vmatprep.subr.mxu0 0.0
        %3646 = vmatpush1.msra.mxu0 0.0
        %3647 = vmatprep.subr.mxu0 0.0
        %3648 = vmatpush1.msra.mxu0 0.0
        %3649 = vmatprep.mubr.f32.mxu0 0.0
        %3650 = vmatmul.mubr.f32.gmra.mrb[0].mxu0 %v3023
        %v3651 = vpop.f32.mrb[0].mxu0
        %v3652 = vadd.f32 %v3582, %v3651
        %v3653 = vpop.f32.mrb[0].mxu0
        %3654 = vdwg.mxu0
        %v3655 = vadd.f32 %v1905, %v3652
        %3656 = vst.msk [vmem:[%s1121] sm:$0xff] %vm1143, %v3655
        %v3657 = vld [vmem:[%s35] sm:$0x1]
        %v3658 = vld [vmem:[%s37] sm:$0x1]
        %v3659 = vsel %vm1143, %v3655, 0.0
        %3660 = vadd.xlane.f32.xlu0 %v3659
        %v3661 = vpop.xlane.xlu0 %3660
        %v3662 = vmul.f32 %v3661, %v1147
        %v3663 = vsub.f32 %v3655, %v3662
        %v3664 = vmul.f32 %v3663, %v3663
        %v3665 = vsel %vm1143, %v3664, 0.0
        %3666 = vadd.xlane.f32.xlu0 %v3665
        %v3667 = vpop.xlane.xlu0 %3666
        %v3668 = vmul.f32 %v3667, %v1147
        %v3669 = vadd.f32 %v3668, 1e-05
        %v3670 = vrsqrt.pop %v3669
        %v3671 = vmul.f32 %v3663, %v3670
        %v3673 = vlaneseq
        %v3674 = vshrl.u32 %v3673, 7
        %v3675 = vsub.s32 0, %v3674
        %v3676 = vrot.slane %v3657, %v3675
        %v3678 = vmul.f32 %v3671, %v3676
        %v3680 = vlaneseq
        %v3681 = vshrl.u32 %v3680, 7
        %v3682 = vsub.s32 0, %v3681
        %v3683 = vrot.slane %v3658, %v3682
        %v3685 = vadd.f32 %v3678, %v3683
        %v3686 = vld [vmem:[%s39] sm:$0xff]
        %v3687 = vld [vmem:[%s39 + $0x8] sm:$0xff]
        %v3688 = vld [vmem:[%s39 + $0x10] sm:$0xff]
        %v3689 = vld [vmem:[%s39 + $0x18] sm:$0xff]
        %v3690 = vld [vmem:[%s41] sm:$0x1]
        %v3692 = vlaneseq
        %v3693 = vshrl.u32 %v3692, 7
        %v3694 = vsub.s32 0, %v3693
        %v3695 = vrot.slane %v3690, %v3694
        %v3698 = vsel %vm1143, %v3685, 0
        %3700 = vmatprep.subr.mxu0 0.0
        %3701 = vmatpush1.msra.mxu0 %v3686
        %3702 = vmatprep.subr.mxu0 0.0
        %3703 = vmatpush1.msra.mxu0 %v3687
        %3704 = vmatprep.subr.mxu0 0.0
        %3705 = vmatpush1.msra.mxu0 %v3688
        %3706 = vmatprep.subr.mxu0 0.0
        %3707 = vmatpush1.msra.mxu0 %v3689
        %3708 = vmatprep.subr.mxu0 0.0
        %3709 = vmatpush1.msra.mxu0 0.0
        %3710 = vmatprep.subr.mxu0 0.0
        %3711 = vmatpush1.msra.mxu0 0.0
        %3712 = vmatprep.subr.mxu0 0.0
        %3713 = vmatpush1.msra.mxu0 0.0
        %3714 = vmatprep.subr.mxu0 0.0
        %3715 = vmatpush1.msra.mxu0 0.0
        %3716 = vmatprep.subr.mxu0 0.0
        %3717 = vmatpush1.msra.mxu0 0.0
        %3718 = vmatprep.subr.mxu0 0.0
        %3719 = vmatpush1.msra.mxu0 0.0
        %3720 = vmatprep.subr.mxu0 0.0
        %3721 = vmatpush1.msra.mxu0 0.0
        %3722 = vmatprep.subr.mxu0 0.0
        %3723 = vmatpush1.msra.mxu0 0.0
        %3724 = vmatprep.subr.mxu0 0.0
        %3725 = vmatpush1.msra.mxu0 0.0
        %3726 = vmatprep.subr.mxu0 0.0
        %3727 = vmatpush1.msra.mxu0 0.0
        %3728 = vmatprep.subr.mxu0 0.0
        %3729 = vmatpush1.msra.mxu0 0.0
        %3730 = vmatprep.subr.mxu0 0.0
        %3731 = vmatpush1.msra.mxu0 0.0
        %3732 = vmatprep.subr.mxu0 0.0
        %3733 = vmatpush1.msra.mxu0 0.0
        %3734 = vmatprep.subr.mxu0 0.0
        %3735 = vmatpush1.msra.mxu0 0.0
        %3736 = vmatprep.subr.mxu0 0.0
        %3737 = vmatpush1.msra.mxu0 0.0
        %3738 = vmatprep.subr.mxu0 0.0
        %3739 = vmatpush1.msra.mxu0 0.0
        %3740 = vmatprep.subr.mxu0 0.0
        %3741 = vmatpush1.msra.mxu0 0.0
        %3742 = vmatprep.subr.mxu0 0.0
        %3743 = vmatpush1.msra.mxu0 0.0
        %3744 = vmatprep.subr.mxu0 0.0
        %3745 = vmatpush1.msra.mxu0 0.0
        %3746 = vmatprep.subr.mxu0 0.0
        %3747 = vmatpush1.msra.mxu0 0.0
        %3748 = vmatprep.subr.mxu0 0.0
        %3749 = vmatpush1.msra.mxu0 0.0
        %3750 = vmatprep.subr.mxu0 0.0
        %3751 = vmatpush1.msra.mxu0 0.0
        %3752 = vmatprep.subr.mxu0 0.0
        %3753 = vmatpush1.msra.mxu0 0.0
        %3754 = vmatprep.subr.mxu0 0.0
        %3755 = vmatpush1.msra.mxu0 0.0
        %3756 = vmatprep.subr.mxu0 0.0
        %3757 = vmatpush1.msra.mxu0 0.0
        %3758 = vmatprep.subr.mxu0 0.0
        %3759 = vmatpush1.msra.mxu0 0.0
        %3760 = vmatprep.subr.mxu0 0.0
        %3761 = vmatpush1.msra.mxu0 0.0
        %3762 = vmatprep.subr.mxu0 0.0
        %3763 = vmatpush1.msra.mxu0 0.0
        %3764 = vmatprep.mubr.f32.mxu0 0.0
        %3765 = vmatmul.mubr.f32.gmra.mrb[0].mxu0 %v3698
        %v3766 = vpop.f32.mrb[0].mxu0
        %v3767 = vadd.f32 %v3695, %v3766
        %v3768 = vpop.f32.mrb[0].mxu0
        %3769 = vdwg.mxu0
        %v3770 = vmul.f32 %v3767, 0.125
        %v3771 = vld [vmem:[%s43] sm:$0xff]
        %v3772 = vld [vmem:[%s43 + $0x8] sm:$0xff]
        %v3773 = vld [vmem:[%s43 + $0x10] sm:$0xff]
        %v3774 = vld [vmem:[%s43 + $0x18] sm:$0xff]
        %v3775 = vld [vmem:[%s45] sm:$0x1]
        %v3777 = vlaneseq
        %v3778 = vshrl.u32 %v3777, 7
        %v3779 = vsub.s32 0, %v3778
        %v3780 = vrot.slane %v3775, %v3779
        %3782 = vmatprep.subr.mxu0 0.0
        %3783 = vmatpush1.msra.mxu0 %v3771
        %3784 = vmatprep.subr.mxu0 0.0
        %3785 = vmatpush1.msra.mxu0 %v3772
        %3786 = vmatprep.subr.mxu0 0.0
        %3787 = vmatpush1.msra.mxu0 %v3773
        %3788 = vmatprep.subr.mxu0 0.0
        %3789 = vmatpush1.msra.mxu0 %v3774
        %3790 = vmatprep.subr.mxu0 0.0
        %3791 = vmatpush1.msra.mxu0 0.0
        %3792 = vmatprep.subr.mxu0 0.0
        %3793 = vmatpush1.msra.mxu0 0.0
        %3794 = vmatprep.subr.mxu0 0.0
        %3795 = vmatpush1.msra.mxu0 0.0
        %3796 = vmatprep.subr.mxu0 0.0
        %3797 = vmatpush1.msra.mxu0 0.0
        %3798 = vmatprep.subr.mxu0 0.0
        %3799 = vmatpush1.msra.mxu0 0.0
        %3800 = vmatprep.subr.mxu0 0.0
        %3801 = vmatpush1.msra.mxu0 0.0
        %3802 = vmatprep.subr.mxu0 0.0
        %3803 = vmatpush1.msra.mxu0 0.0
        %3804 = vmatprep.subr.mxu0 0.0
        %3805 = vmatpush1.msra.mxu0 0.0
        %3806 = vmatprep.subr.mxu0 0.0
        %3807 = vmatpush1.msra.mxu0 0.0
        %3808 = vmatprep.subr.mxu0 0.0
        %3809 = vmatpush1.msra.mxu0 0.0
        %3810 = vmatprep.subr.mxu0 0.0
        %3811 = vmatpush1.msra.mxu0 0.0
        %3812 = vmatprep.subr.mxu0 0.0
        %3813 = vmatpush1.msra.mxu0 0.0
        %3814 = vmatprep.subr.mxu0 0.0
        %3815 = vmatpush1.msra.mxu0 0.0
        %3816 = vmatprep.subr.mxu0 0.0
        %3817 = vmatpush1.msra.mxu0 0.0
        %3818 = vmatprep.subr.mxu0 0.0
        %3819 = vmatpush1.msra.mxu0 0.0
        %3820 = vmatprep.subr.mxu0 0.0
        %3821 = vmatpush1.msra.mxu0 0.0
        %3822 = vmatprep.subr.mxu0 0.0
        %3823 = vmatpush1.msra.mxu0 0.0
        %3824 = vmatprep.subr.mxu0 0.0
        %3825 = vmatpush1.msra.mxu0 0.0
        %3826 = vmatprep.subr.mxu0 0.0
        %3827 = vmatpush1.msra.mxu0 0.0
        %3828 = vmatprep.subr.mxu0 0.0
        %3829 = vmatpush1.msra.mxu0 0.0
        %3830 = vmatprep.subr.mxu0 0.0
        %3831 = vmatpush1.msra.mxu0 0.0
        %3832 = vmatprep.subr.mxu0 0.0
        %3833 = vmatpush1.msra.mxu0 0.0
        %3834 = vmatprep.subr.mxu0 0.0
        %3835 = vmatpush1.msra.mxu0 0.0
        %3836 = vmatprep.subr.mxu0 0.0
        %3837 = vmatpush1.msra.mxu0 0.0
        %3838 = vmatprep.subr.mxu0 0.0
        %3839 = vmatpush1.msra.mxu0 0.0
        %3840 = vmatprep.subr.mxu0 0.0
        %3841 = vmatpush1.msra.mxu0 0.0
        %3842 = vmatprep.subr.mxu0 0.0
        %3843 = vmatpush1.msra.mxu0 0.0
        %3844 = vmatprep.subr.mxu0 0.0
        %3845 = vmatpush1.msra.mxu0 0.0
        %3846 = vmatprep.mubr.f32.mxu0 0.0
        %3847 = vmatmul.mubr.f32.gmra.mrb[0].mxu0 %v3698
        %v3848 = vpop.f32.mrb[0].mxu0
        %v3849 = vadd.f32 %v3780, %v3848
        %v3850 = vpop.f32.mrb[0].mxu0
        %3851 = vdwg.mxu0
        %v3852 = vld [vmem:[%s47] sm:$0xff]
        %v3853 = vld [vmem:[%s47 + $0x8] sm:$0xff]
        %v3854 = vld [vmem:[%s47 + $0x10] sm:$0xff]
        %v3855 = vld [vmem:[%s47 + $0x18] sm:$0xff]
        %v3856 = vld [vmem:[%s49] sm:$0x1]
        %v3858 = vlaneseq
        %v3859 = vshrl.u32 %v3858, 7
        %v3860 = vsub.s32 0, %v3859
        %v3861 = vrot.slane %v3856, %v3860
        %3863 = vmatprep.subr.mxu0 0.0
        %3864 = vmatpush1.msra.mxu0 %v3852
        %3865 = vmatprep.subr.mxu0 0.0
        %3866 = vmatpush1.msra.mxu0 %v3853
        %3867 = vmatprep.subr.mxu0 0.0
        %3868 = vmatpush1.msra.mxu0 %v3854
        %3869 = vmatprep.subr.mxu0 0.0
        %3870 = vmatpush1.msra.mxu0 %v3855
        %3871 = vmatprep.subr.mxu0 0.0
        %3872 = vmatpush1.msra.mxu0 0.0
        %3873 = vmatprep.subr.mxu0 0.0
        %3874 = vmatpush1.msra.mxu0 0.0
        %3875 = vmatprep.subr.mxu0 0.0
        %3876 = vmatpush1.msra.mxu0 0.0
        %3877 = vmatprep.subr.mxu0 0.0
        %3878 = vmatpush1.msra.mxu0 0.0
        %3879 = vmatprep.subr.mxu0 0.0
        %3880 = vmatpush1.msra.mxu0 0.0
        %3881 = vmatprep.subr.mxu0 0.0
        %3882 = vmatpush1.msra.mxu0 0.0
        %3883 = vmatprep.subr.mxu0 0.0
        %3884 = vmatpush1.msra.mxu0 0.0
        %3885 = vmatprep.subr.mxu0 0.0
        %3886 = vmatpush1.msra.mxu0 0.0
        %3887 = vmatprep.subr.mxu0 0.0
        %3888 = vmatpush1.msra.mxu0 0.0
        %3889 = vmatprep.subr.mxu0 0.0
        %3890 = vmatpush1.msra.mxu0 0.0
        %3891 = vmatprep.subr.mxu0 0.0
        %3892 = vmatpush1.msra.mxu0 0.0
        %3893 = vmatprep.subr.mxu0 0.0
        %3894 = vmatpush1.msra.mxu0 0.0
        %3895 = vmatprep.subr.mxu0 0.0
        %3896 = vmatpush1.msra.mxu0 0.0
        %3897 = vmatprep.subr.mxu0 0.0
        %3898 = vmatpush1.msra.mxu0 0.0
        %3899 = vmatprep.subr.mxu0 0.0
        %3900 = vmatpush1.msra.mxu0 0.0
        %3901 = vmatprep.subr.mxu0 0.0
        %3902 = vmatpush1.msra.mxu0 0.0
        %3903 = vmatprep.subr.mxu0 0.0
        %3904 = vmatpush1.msra.mxu0 0.0
        %3905 = vmatprep.subr.mxu0 0.0
        %3906 = vmatpush1.msra.mxu0 0.0
        %3907 = vmatprep.subr.mxu0 0.0
        %3908 = vmatpush1.msra.mxu0 0.0
        %3909 = vmatprep.subr.mxu0 0.0
        %3910 = vmatpush1.msra.mxu0 0.0
        %3911 = vmatprep.subr.mxu0 0.0
        %3912 = vmatpush1.msra.mxu0 0.0
        %3913 = vmatprep.subr.mxu0 0.0
        %3914 = vmatpush1.msra.mxu0 0.0
        %3915 = vmatprep.subr.mxu0 0.0
        %3916 = vmatpush1.msra.mxu0 0.0
        %3917 = vmatprep.subr.mxu0 0.0
        %3918 = vmatpush1.msra.mxu0 0.0
        %3919 = vmatprep.subr.mxu0 0.0
        %3920 = vmatpush1.msra.mxu0 0.0
        %3921 = vmatprep.subr.mxu0 0.0
        %3922 = vmatpush1.msra.mxu0 0.0
        %3923 = vmatprep.subr.mxu0 0.0
        %3924 = vmatpush1.msra.mxu0 0.0
        %3925 = vmatprep.subr.mxu0 0.0
        %3926 = vmatpush1.msra.mxu0 0.0
        %3927 = vmatprep.mubr.f32.mxu0 0.0
        %3928 = vmatmul.mubr.f32.gmra.mrb[0].mxu0 %v3698
        %v3929 = vpop.f32.mrb[0].mxu0
        %v3930 = vadd.f32 %v3861, %v3929
        %v3931 = vpop.f32.mrb[0].mxu0
        %3932 = vdwg.mxu0
        %v3934 = vsel %vm1419, %v3770, 0
        %v3937 = vsel %vm1419, %v3849, 0
        %3939 = vmatprep.subr.mxu0 0.0
        %3940 = vmatpush1.xpose.msra.mxu0 %v3937
        %3941 = vmatprep.subr.mxu0 0.0
        %3942 = vmatpush1.xpose.msra.mxu0 0.0
        %3943 = vmatprep.subr.mxu0 0.0
        %3944 = vmatpush1.xpose.msra.mxu0 0.0
        %3945 = vmatprep.subr.mxu0 0.0
        %3946 = vmatpush1.xpose.msra.mxu0 0.0
        %3947 = vmatprep.subr.mxu0 0.0
        %3948 = vmatpush1.xpose.msra.mxu0 0.0
        %3949 = vmatprep.subr.mxu0 0.0
        %3950 = vmatpush1.xpose.msra.mxu0 0.0
        %3951 = vmatprep.subr.mxu0 0.0
        %3952 = vmatpush1.xpose.msra.mxu0 0.0
        %3953 = vmatprep.subr.mxu0 0.0
        %3954 = vmatpush1.xpose.msra.mxu0 0.0
        %3955 = vmatprep.subr.mxu0 0.0
        %3956 = vmatpush1.xpose.msra.mxu0 0.0
        %3957 = vmatprep.subr.mxu0 0.0
        %3958 = vmatpush1.xpose.msra.mxu0 0.0
        %3959 = vmatprep.subr.mxu0 0.0
        %3960 = vmatpush1.xpose.msra.mxu0 0.0
        %3961 = vmatprep.subr.mxu0 0.0
        %3962 = vmatpush1.xpose.msra.mxu0 0.0
        %3963 = vmatprep.subr.mxu0 0.0
        %3964 = vmatpush1.xpose.msra.mxu0 0.0
        %3965 = vmatprep.subr.mxu0 0.0
        %3966 = vmatpush1.xpose.msra.mxu0 0.0
        %3967 = vmatprep.subr.mxu0 0.0
        %3968 = vmatpush1.xpose.msra.mxu0 0.0
        %3969 = vmatprep.subr.mxu0 0.0
        %3970 = vmatpush1.xpose.msra.mxu0 0.0
        %3971 = vmatprep.subr.mxu0 0.0
        %3972 = vmatpush1.xpose.msra.mxu0 0.0
        %3973 = vmatprep.subr.mxu0 0.0
        %3974 = vmatpush1.xpose.msra.mxu0 0.0
        %3975 = vmatprep.subr.mxu0 0.0
        %3976 = vmatpush1.xpose.msra.mxu0 0.0
        %3977 = vmatprep.subr.mxu0 0.0
        %3978 = vmatpush1.xpose.msra.mxu0 0.0
        %3979 = vmatprep.subr.mxu0 0.0
        %3980 = vmatpush1.xpose.msra.mxu0 0.0
        %3981 = vmatprep.subr.mxu0 0.0
        %3982 = vmatpush1.xpose.msra.mxu0 0.0
        %3983 = vmatprep.subr.mxu0 0.0
        %3984 = vmatpush1.xpose.msra.mxu0 0.0
        %3985 = vmatprep.subr.mxu0 0.0
        %3986 = vmatpush1.xpose.msra.mxu0 0.0
        %3987 = vmatprep.subr.mxu0 0.0
        %3988 = vmatpush1.xpose.msra.mxu0 0.0
        %3989 = vmatprep.subr.mxu0 0.0
        %3990 = vmatpush1.xpose.msra.mxu0 0.0
        %3991 = vmatprep.subr.mxu0 0.0
        %3992 = vmatpush1.xpose.msra.mxu0 0.0
        %3993 = vmatprep.subr.mxu0 0.0
        %3994 = vmatpush1.xpose.msra.mxu0 0.0
        %3995 = vmatprep.subr.mxu0 0.0
        %3996 = vmatpush1.xpose.msra.mxu0 0.0
        %3997 = vmatprep.subr.mxu0 0.0
        %3998 = vmatpush1.xpose.msra.mxu0 0.0
        %3999 = vmatprep.subr.mxu0 0.0
        %4000 = vmatpush1.xpose.msra.mxu0 0.0
        %4001 = vmatprep.subr.mxu0 0.0
        %4002 = vmatpush1.xpose.msra.mxu0 0.0
        %4003 = vmatprep.mubr.f32.mxu0 0.0
        %4004 = vmatmul.mubr.f32.gmra.mrb[0].mxu0 %v3934
        %v4005 = vpop.f32.mrb[0].mxu0
        %v4006 = vadd.f32 0.0, %v4005
        %v4007 = vpop.f32.mrb[0].mxu0
        %4008 = vdwg.mxu0
        %v4009 = vsel %vm1496, %v4006, -inf
        %4010 = vmax.xlane.f32.xlu0 %v4009
        %v4011 = vpop.xlane.xlu0 %4010
        %v4012 = vsub.f32 %v4006, %v4011
        %v4013 = vmul.f32 %v4012, 1.442695
        %v4014 = vpow.pop %v4013
        %v4015 = vsel %vm1496, %v4014, 0.0
        %4016 = vadd.xlane.f32.xlu0 %v4015
        %v4017 = vpop.xlane.xlu0 %4016
        %v4018 = vrcp.pop %v4017
        %v4019 = vmul.f32 %v4014, %v4018
        %v4021 = vsel %vm1496, %v4019, 0
        %4023 = vmatprep.subr.mxu0 0.0
        %4024 = vmatpush1.msra.mxu0 %v3930
        %4025 = vmatprep.subr.mxu0 0.0
        %4026 = vmatpush1.msra.mxu0 0.0
        %4027 = vmatprep.subr.mxu0 0.0
        %4028 = vmatpush1.msra.mxu0 0.0
        %4029 = vmatprep.subr.mxu0 0.0
        %4030 = vmatpush1.msra.mxu0 0.0
        %4031 = vmatprep.subr.mxu0 0.0
        %4032 = vmatpush1.msra.mxu0 0.0
        %4033 = vmatprep.subr.mxu0 0.0
        %4034 = vmatpush1.msra.mxu0 0.0
        %4035 = vmatprep.subr.mxu0 0.0
        %4036 = vmatpush1.msra.mxu0 0.0
        %4037 = vmatprep.subr.mxu0 0.0
        %4038 = vmatpush1.msra.mxu0 0.0
        %4039 = vmatprep.subr.mxu0 0.0
        %4040 = vmatpush1.msra.mxu0 0.0
        %4041 = vmatprep.subr.mxu0 0.0
        %4042 = vmatpush1.msra.mxu0 0.0
        %4043 = vmatprep.subr.mxu0 0.0
        %4044 = vmatpush1.msra.mxu0 0.0
        %4045 = vmatprep.subr.mxu0 0.0
        %4046 = vmatpush1.msra.mxu0 0.0
        %4047 = vmatprep.subr.mxu0 0.0
        %4048 = vmatpush1.msra.mxu0 0.0
        %4049 = vmatprep.subr.mxu0 0.0
        %4050 = vmatpush1.msra.mxu0 0.0
        %4051 = vmatprep.subr.mxu0 0.0
        %4052 = vmatpush1.msra.mxu0 0.0
        %4053 = vmatprep.subr.mxu0 0.0
        %4054 = vmatpush1.msra.mxu0 0.0
        %4055 = vmatprep.subr.mxu0 0.0
        %4056 = vmatpush1.msra.mxu0 0.0
        %4057 = vmatprep.subr.mxu0 0.0
        %4058 = vmatpush1.msra.mxu0 0.0
        %4059 = vmatprep.subr.mxu0 0.0
        %4060 = vmatpush1.msra.mxu0 0.0
        %4061 = vmatprep.subr.mxu0 0.0
        %4062 = vmatpush1.msra.mxu0 0.0
        %4063 = vmatprep.subr.mxu0 0.0
        %4064 = vmatpush1.msra.mxu0 0.0
        %4065 = vmatprep.subr.mxu0 0.0
        %4066 = vmatpush1.msra.mxu0 0.0
        %4067 = vmatprep.subr.mxu0 0.0
        %4068 = vmatpush1.msra.mxu0 0.0
        %4069 = vmatprep.subr.mxu0 0.0
        %4070 = vmatpush1.msra.mxu0 0.0
        %4071 = vmatprep.subr.mxu0 0.0
        %4072 = vmatpush1.msra.mxu0 0.0
        %4073 = vmatprep.subr.mxu0 0.0
        %4074 = vmatpush1.msra.mxu0 0.0
        %4075 = vmatprep.subr.mxu0 0.0
        %4076 = vmatpush1.msra.mxu0 0.0
        %4077 = vmatprep.subr.mxu0 0.0
        %4078 = vmatpush1.msra.mxu0 0.0
        %4079 = vmatprep.subr.mxu0 0.0
        %4080 = vmatpush1.msra.mxu0 0.0
        %4081 = vmatprep.subr.mxu0 0.0
        %4082 = vmatpush1.msra.mxu0 0.0
        %4083 = vmatprep.subr.mxu0 0.0
        %4084 = vmatpush1.msra.mxu0 0.0
        %4085 = vmatprep.subr.mxu0 0.0
        %4086 = vmatpush1.msra.mxu0 0.0
        %4087 = vmatprep.mubr.f32.mxu0 0.0
        %4088 = vmatmul.mubr.f32.gmra.mrb[0].mxu0 %v4021
        %v4089 = vpop.f32.mrb[0].mxu0
        %v4090 = vadd.f32 0.0, %v4089
        %v4091 = vpop.f32.mrb[0].mxu0
        %4092 = vdwg.mxu0
        %v4093 = vld [vmem:[%s51] sm:$0xff]
        %v4094 = vld [vmem:[%s51 + $0x8] sm:$0xff]
        %4095 = vrot.lane.b32.xlu0 %v3770, 112
        %v4096 = vpop.permute.xlu0 %4095
        %4097 = vrot.lane.b32.xlu0 %v3849, 112
        %v4098 = vpop.permute.xlu0 %4097
        %v4099 = vsel %vm1419, %v4096, 0
        %v4101 = vsel %vm1419, %v4098, 0
        %4103 = vmatprep.subr.mxu0 0.0
        %4104 = vmatpush1.xpose.msra.mxu0 %v4101
        %4105 = vmatprep.subr.mxu0 0.0
        %4106 = vmatpush1.xpose.msra.mxu0 0.0
        %4107 = vmatprep.subr.mxu0 0.0
        %4108 = vmatpush1.xpose.msra.mxu0 0.0
        %4109 = vmatprep.subr.mxu0 0.0
        %4110 = vmatpush1.xpose.msra.mxu0 0.0
        %4111 = vmatprep.subr.mxu0 0.0
        %4112 = vmatpush1.xpose.msra.mxu0 0.0
        %4113 = vmatprep.subr.mxu0 0.0
        %4114 = vmatpush1.xpose.msra.mxu0 0.0
        %4115 = vmatprep.subr.mxu0 0.0
        %4116 = vmatpush1.xpose.msra.mxu0 0.0
        %4117 = vmatprep.subr.mxu0 0.0
        %4118 = vmatpush1.xpose.msra.mxu0 0.0
        %4119 = vmatprep.subr.mxu0 0.0
        %4120 = vmatpush1.xpose.msra.mxu0 0.0
        %4121 = vmatprep.subr.mxu0 0.0
        %4122 = vmatpush1.xpose.msra.mxu0 0.0
        %4123 = vmatprep.subr.mxu0 0.0
        %4124 = vmatpush1.xpose.msra.mxu0 0.0
        %4125 = vmatprep.subr.mxu0 0.0
        %4126 = vmatpush1.xpose.msra.mxu0 0.0
        %4127 = vmatprep.subr.mxu0 0.0
        %4128 = vmatpush1.xpose.msra.mxu0 0.0
        %4129 = vmatprep.subr.mxu0 0.0
        %4130 = vmatpush1.xpose.msra.mxu0 0.0
        %4131 = vmatprep.subr.mxu0 0.0
        %4132 = vmatpush1.xpose.msra.mxu0 0.0
        %4133 = vmatprep.subr.mxu0 0.0
        %4134 = vmatpush1.xpose.msra.mxu0 0.0
        %4135 = vmatprep.subr.mxu0 0.0
        %4136 = vmatpush1.xpose.msra.mxu0 0.0
        %4137 = vmatprep.subr.mxu0 0.0
        %4138 = vmatpush1.xpose.msra.mxu0 0.0
        %4139 = vmatprep.subr.mxu0 0.0
        %4140 = vmatpush1.xpose.msra.mxu0 0.0
        %4141 = vmatprep.subr.mxu0 0.0
        %4142 = vmatpush1.xpose.msra.mxu0 0.0
        %4143 = vmatprep.subr.mxu0 0.0
        %4144 = vmatpush1.xpose.msra.mxu0 0.0
        %4145 = vmatprep.subr.mxu0 0.0
        %4146 = vmatpush1.xpose.msra.mxu0 0.0
        %4147 = vmatprep.subr.mxu0 0.0
        %4148 = vmatpush1.xpose.msra.mxu0 0.0
        %4149 = vmatprep.subr.mxu0 0.0
        %4150 = vmatpush1.xpose.msra.mxu0 0.0
        %4151 = vmatprep.subr.mxu0 0.0
        %4152 = vmatpush1.xpose.msra.mxu0 0.0
        %4153 = vmatprep.subr.mxu0 0.0
        %4154 = vmatpush1.xpose.msra.mxu0 0.0
        %4155 = vmatprep.subr.mxu0 0.0
        %4156 = vmatpush1.xpose.msra.mxu0 0.0
        %4157 = vmatprep.subr.mxu0 0.0
        %4158 = vmatpush1.xpose.msra.mxu0 0.0
        %4159 = vmatprep.subr.mxu0 0.0
        %4160 = vmatpush1.xpose.msra.mxu0 0.0
        %4161 = vmatprep.subr.mxu0 0.0
        %4162 = vmatpush1.xpose.msra.mxu0 0.0
        %4163 = vmatprep.subr.mxu0 0.0
        %4164 = vmatpush1.xpose.msra.mxu0 0.0
        %4165 = vmatprep.subr.mxu0 0.0
        %4166 = vmatpush1.xpose.msra.mxu0 0.0
        %4167 = vmatprep.mubr.f32.mxu0 0.0
        %4168 = vmatmul.mubr.f32.gmra.mrb[0].mxu0 %v4099
        %v4169 = vpop.f32.mrb[0].mxu0
        %v4170 = vadd.f32 0.0, %v4169
        %v4171 = vpop.f32.mrb[0].mxu0
        %4172 = vdwg.mxu0
        %v4173 = vsel %vm1496, %v4170, -inf
        %4174 = vmax.xlane.f32.xlu0 %v4173
        %v4175 = vpop.xlane.xlu0 %4174
        %v4176 = vsub.f32 %v4170, %v4175
        %v4177 = vmul.f32 %v4176, 1.442695
        %v4178 = vpow.pop %v4177
        %v4179 = vsel %vm1496, %v4178, 0.0
        %4180 = vadd.xlane.f32.xlu0 %v4179
        %v4181 = vpop.xlane.xlu0 %4180
        %v4182 = vrcp.pop %v4181
        %v4183 = vmul.f32 %v4178, %v4182
        %4185 = vrot.lane.b32.xlu0 %v3930, 112
        %v4186 = vpop.permute.xlu0 %4185
        %v4189 = vsel %vm1496, %v4183, 0
        %4191 = vmatprep.subr.mxu0 0.0
        %4192 = vmatpush1.msra.mxu0 %v4186
        %4193 = vmatprep.subr.mxu0 0.0
        %4194 = vmatpush1.msra.mxu0 0.0
        %4195 = vmatprep.subr.mxu0 0.0
        %4196 = vmatpush1.msra.mxu0 0.0
        %4197 = vmatprep.subr.mxu0 0.0
        %4198 = vmatpush1.msra.mxu0 0.0
        %4199 = vmatprep.subr.mxu0 0.0
        %4200 = vmatpush1.msra.mxu0 0.0
        %4201 = vmatprep.subr.mxu0 0.0
        %4202 = vmatpush1.msra.mxu0 0.0
        %4203 = vmatprep.subr.mxu0 0.0
        %4204 = vmatpush1.msra.mxu0 0.0
        %4205 = vmatprep.subr.mxu0 0.0
        %4206 = vmatpush1.msra.mxu0 0.0
        %4207 = vmatprep.subr.mxu0 0.0
        %4208 = vmatpush1.msra.mxu0 0.0
        %4209 = vmatprep.subr.mxu0 0.0
        %4210 = vmatpush1.msra.mxu0 0.0
        %4211 = vmatprep.subr.mxu0 0.0
        %4212 = vmatpush1.msra.mxu0 0.0
        %4213 = vmatprep.subr.mxu0 0.0
        %4214 = vmatpush1.msra.mxu0 0.0
        %4215 = vmatprep.subr.mxu0 0.0
        %4216 = vmatpush1.msra.mxu0 0.0
        %4217 = vmatprep.subr.mxu0 0.0
        %4218 = vmatpush1.msra.mxu0 0.0
        %4219 = vmatprep.subr.mxu0 0.0
        %4220 = vmatpush1.msra.mxu0 0.0
        %4221 = vmatprep.subr.mxu0 0.0
        %4222 = vmatpush1.msra.mxu0 0.0
        %4223 = vmatprep.subr.mxu0 0.0
        %4224 = vmatpush1.msra.mxu0 0.0
        %4225 = vmatprep.subr.mxu0 0.0
        %4226 = vmatpush1.msra.mxu0 0.0
        %4227 = vmatprep.subr.mxu0 0.0
        %4228 = vmatpush1.msra.mxu0 0.0
        %4229 = vmatprep.subr.mxu0 0.0
        %4230 = vmatpush1.msra.mxu0 0.0
        %4231 = vmatprep.subr.mxu0 0.0
        %4232 = vmatpush1.msra.mxu0 0.0
        %4233 = vmatprep.subr.mxu0 0.0
        %4234 = vmatpush1.msra.mxu0 0.0
        %4235 = vmatprep.subr.mxu0 0.0
        %4236 = vmatpush1.msra.mxu0 0.0
        %4237 = vmatprep.subr.mxu0 0.0
        %4238 = vmatpush1.msra.mxu0 0.0
        %4239 = vmatprep.subr.mxu0 0.0
        %4240 = vmatpush1.msra.mxu0 0.0
        %4241 = vmatprep.subr.mxu0 0.0
        %4242 = vmatpush1.msra.mxu0 0.0
        %4243 = vmatprep.subr.mxu0 0.0
        %4244 = vmatpush1.msra.mxu0 0.0
        %4245 = vmatprep.subr.mxu0 0.0
        %4246 = vmatpush1.msra.mxu0 0.0
        %4247 = vmatprep.subr.mxu0 0.0
        %4248 = vmatpush1.msra.mxu0 0.0
        %4249 = vmatprep.subr.mxu0 0.0
        %4250 = vmatpush1.msra.mxu0 0.0
        %4251 = vmatprep.subr.mxu0 0.0
        %4252 = vmatpush1.msra.mxu0 0.0
        %4253 = vmatprep.subr.mxu0 0.0
        %4254 = vmatpush1.msra.mxu0 0.0
        %4255 = vmatprep.mubr.f32.mxu0 0.0
        %4256 = vmatmul.mubr.f32.gmra.mrb[0].mxu0 %v4189
        %v4257 = vpop.f32.mrb[0].mxu0
        %v4258 = vadd.f32 0.0, %v4257
        %v4259 = vpop.f32.mrb[0].mxu0
        %4260 = vdwg.mxu0
        %v4261 = vld [vmem:[%s51 + $0x10] sm:$0xff]
        %v4262 = vld [vmem:[%s51 + $0x18] sm:$0xff]
        %v4264 = vsel %vm1419, %v4258, 0
        %4266 = vmatprep.subr.mxu0 0.0
        %4267 = vmatpush1.msra.mxu0 %v4261
        %4268 = vmatprep.subr.mxu0 0.0
        %4269 = vmatpush1.msra.mxu0 %v4262
        %4270 = vmatprep.subr.mxu0 0.0
        %4271 = vmatpush1.msra.mxu0 0.0
        %4272 = vmatprep.subr.mxu0 0.0
        %4273 = vmatpush1.msra.mxu0 0.0
        %4274 = vmatprep.subr.mxu0 0.0
        %4275 = vmatpush1.msra.mxu0 0.0
        %4276 = vmatprep.subr.mxu0 0.0
        %4277 = vmatpush1.msra.mxu0 0.0
        %4278 = vmatprep.subr.mxu0 0.0
        %4279 = vmatpush1.msra.mxu0 0.0
        %4280 = vmatprep.subr.mxu0 0.0
        %4281 = vmatpush1.msra.mxu0 0.0
        %4282 = vmatprep.subr.mxu0 0.0
        %4283 = vmatpush1.msra.mxu0 0.0
        %4284 = vmatprep.subr.mxu0 0.0
        %4285 = vmatpush1.msra.mxu0 0.0
        %4286 = vmatprep.subr.mxu0 0.0
        %4287 = vmatpush1.msra.mxu0 0.0
        %4288 = vmatprep.subr.mxu0 0.0
        %4289 = vmatpush1.msra.mxu0 0.0
        %4290 = vmatprep.subr.mxu0 0.0
        %4291 = vmatpush1.msra.mxu0 0.0
        %4292 = vmatprep.subr.mxu0 0.0
        %4293 = vmatpush1.msra.mxu0 0.0
        %4294 = vmatprep.subr.mxu0 0.0
        %4295 = vmatpush1.msra.mxu0 0.0
        %4296 = vmatprep.subr.mxu0 0.0
        %4297 = vmatpush1.msra.mxu0 0.0
        %4298 = vmatprep.subr.mxu0 0.0
        %4299 = vmatpush1.msra.mxu0 0.0
        %4300 = vmatprep.subr.mxu0 0.0
        %4301 = vmatpush1.msra.mxu0 0.0
        %4302 = vmatprep.subr.mxu0 0.0
        %4303 = vmatpush1.msra.mxu0 0.0
        %4304 = vmatprep.subr.mxu0 0.0
        %4305 = vmatpush1.msra.mxu0 0.0
        %4306 = vmatprep.subr.mxu0 0.0
        %4307 = vmatpush1.msra.mxu0 0.0
        %4308 = vmatprep.subr.mxu0 0.0
        %4309 = vmatpush1.msra.mxu0 0.0
        %4310 = vmatprep.subr.mxu0 0.0
        %4311 = vmatpush1.msra.mxu0 0.0
        %4312 = vmatprep.subr.mxu0 0.0
        %4313 = vmatpush1.msra.mxu0 0.0
        %4314 = vmatprep.subr.mxu0 0.0
        %4315 = vmatpush1.msra.mxu0 0.0
        %4316 = vmatprep.subr.mxu0 0.0
        %4317 = vmatpush1.msra.mxu0 0.0
        %4318 = vmatprep.subr.mxu0 0.0
        %4319 = vmatpush1.msra.mxu0 0.0
        %4320 = vmatprep.subr.mxu0 0.0
        %4321 = vmatpush1.msra.mxu0 0.0
        %4322 = vmatprep.subr.mxu0 0.0
        %4323 = vmatpush1.msra.mxu0 0.0
        %4324 = vmatprep.subr.mxu0 0.0
        %4325 = vmatpush1.msra.mxu0 0.0
        %4326 = vmatprep.subr.mxu0 0.0
        %4327 = vmatpush1.msra.mxu0 0.0
        %4328 = vmatprep.subr.mxu0 0.0
        %4329 = vmatpush1.msra.mxu0 0.0
        %4330 = vmatprep.mubr.f32.mxu0 0.0
        %4331 = vmatmul.mubr.f32.gmra.mrb[0].mxu0 %v4264
        %v4332 = vpop.f32.mrb[0].mxu0
        %v4333 = vadd.f32 0.0, %v4332
        %v4334 = vpop.f32.mrb[0].mxu0
        %4335 = vdwg.mxu0
        %v4337 = vsel %vm1419, %v4090, 0
        %4339 = vmatprep.subr.mxu0 0.0
        %4340 = vmatpush1.msra.mxu0 %v4093
        %4341 = vmatprep.subr.mxu0 0.0
        %4342 = vmatpush1.msra.mxu0 %v4094
        %4343 = vmatprep.subr.mxu0 0.0
        %4344 = vmatpush1.msra.mxu0 0.0
        %4345 = vmatprep.subr.mxu0 0.0
        %4346 = vmatpush1.msra.mxu0 0.0
        %4347 = vmatprep.subr.mxu0 0.0
        %4348 = vmatpush1.msra.mxu0 0.0
        %4349 = vmatprep.subr.mxu0 0.0
        %4350 = vmatpush1.msra.mxu0 0.0
        %4351 = vmatprep.subr.mxu0 0.0
        %4352 = vmatpush1.msra.mxu0 0.0
        %4353 = vmatprep.subr.mxu0 0.0
        %4354 = vmatpush1.msra.mxu0 0.0
        %4355 = vmatprep.subr.mxu0 0.0
        %4356 = vmatpush1.msra.mxu0 0.0
        %4357 = vmatprep.subr.mxu0 0.0
        %4358 = vmatpush1.msra.mxu0 0.0
        %4359 = vmatprep.subr.mxu0 0.0
        %4360 = vmatpush1.msra.mxu0 0.0
        %4361 = vmatprep.subr.mxu0 0.0
        %4362 = vmatpush1.msra.mxu0 0.0
        %4363 = vmatprep.subr.mxu0 0.0
        %4364 = vmatpush1.msra.mxu0 0.0
        %4365 = vmatprep.subr.mxu0 0.0
        %4366 = vmatpush1.msra.mxu0 0.0
        %4367 = vmatprep.subr.mxu0 0.0
        %4368 = vmatpush1.msra.mxu0 0.0
        %4369 = vmatprep.subr.mxu0 0.0
        %4370 = vmatpush1.msra.mxu0 0.0
        %4371 = vmatprep.subr.mxu0 0.0
        %4372 = vmatpush1.msra.mxu0 0.0
        %4373 = vmatprep.subr.mxu0 0.0
        %4374 = vmatpush1.msra.mxu0 0.0
        %4375 = vmatprep.subr.mxu0 0.0
        %4376 = vmatpush1.msra.mxu0 0.0
        %4377 = vmatprep.subr.mxu0 0.0
        %4378 = vmatpush1.msra.mxu0 0.0
        %4379 = vmatprep.subr.mxu0 0.0
        %4380 = vmatpush1.msra.mxu0 0.0
        %4381 = vmatprep.subr.mxu0 0.0
        %4382 = vmatpush1.msra.mxu0 0.0
        %4383 = vmatprep.subr.mxu0 0.0
        %4384 = vmatpush1.msra.mxu0 0.0
        %4385 = vmatprep.subr.mxu0 0.0
        %4386 = vmatpush1.msra.mxu0 0.0
        %4387 = vmatprep.subr.mxu0 0.0
        %4388 = vmatpush1.msra.mxu0 0.0
        %4389 = vmatprep.subr.mxu0 0.0
        %4390 = vmatpush1.msra.mxu0 0.0
        %4391 = vmatprep.subr.mxu0 0.0
        %4392 = vmatpush1.msra.mxu0 0.0
        %4393 = vmatprep.subr.mxu0 0.0
        %4394 = vmatpush1.msra.mxu0 0.0
        %4395 = vmatprep.subr.mxu0 0.0
        %4396 = vmatpush1.msra.mxu0 0.0
        %4397 = vmatprep.subr.mxu0 0.0
        %4398 = vmatpush1.msra.mxu0 0.0
        %4399 = vmatprep.subr.mxu0 0.0
        %4400 = vmatpush1.msra.mxu0 0.0
        %4401 = vmatprep.subr.mxu0 0.0
        %4402 = vmatpush1.msra.mxu0 0.0
        %4403 = vmatprep.mubr.f32.mxu0 0.0
        %4404 = vmatmul.mubr.f32.gmra.mrb[0].mxu0 %v4337
        %v4405 = vpop.f32.mrb[0].mxu0
        %v4406 = vadd.f32 %v4333, %v4405
        %v4407 = vpop.f32.mrb[0].mxu0
        %4408 = vdwg.mxu0
        %v4409 = vadd.f32 %v3655, %v4406
        %v4410 = vld [vmem:[%s53] sm:$0x1]
        %v4412 = vlaneseq
        %v4413 = vshrl.u32 %v4412, 7
        %v4414 = vsub.s32 0, %v4413
        %v4415 = vrot.slane %v4410, %v4414
        %v4417 = vadd.f32 %v4409, %v4415
        %v4418 = vld [vmem:[%s55] sm:$0x1]
        %v4419 = vld [vmem:[%s57] sm:$0x1]
        %v4420 = vsel %vm1143, %v4417, 0.0
        %4421 = vadd.xlane.f32.xlu0 %v4420
        %v4422 = vpop.xlane.xlu0 %4421
        %v4423 = vmul.f32 %v4422, %v1147
        %v4424 = vsub.f32 %v4417, %v4423
        %v4425 = vmul.f32 %v4424, %v4424
        %v4426 = vsel %vm1143, %v4425, 0.0
        %4427 = vadd.xlane.f32.xlu0 %v4426
        %v4428 = vpop.xlane.xlu0 %4427
        %v4429 = vmul.f32 %v4428, %v1147
        %v4430 = vadd.f32 %v4429, 1e-05
        %v4431 = vrsqrt.pop %v4430
        %v4432 = vmul.f32 %v4424, %v4431
        %v4434 = vlaneseq
        %v4435 = vshrl.u32 %v4434, 7
        %v4436 = vsub.s32 0, %v4435
        %v4437 = vrot.slane %v4418, %v4436
        %v4439 = vmul.f32 %v4432, %v4437
        %v4441 = vlaneseq
        %v4442 = vshrl.u32 %v4441, 7
        %v4443 = vsub.s32 0, %v4442
        %v4444 = vrot.slane %v4419, %v4443
        %v4446 = vadd.f32 %v4439, %v4444
        %v4447 = vld [vmem:[%s59] sm:$0xff]
        %v4448 = vld [vmem:[%s59 + $0x8] sm:$0xff]
        %v4449 = vld [vmem:[%s59 + $0x10] sm:$0xff]
        %v4450 = vld [vmem:[%s59 + $0x18] sm:$0xff]
        %v4451 = vld [vmem:[%s59 + $0x20] sm:$0xff]
        %v4452 = vld [vmem:[%s59 + $0x28] sm:$0xff]
        %v4453 = vld [vmem:[%s59 + $0x30] sm:$0xff]
        %v4454 = vld [vmem:[%s59 + $0x38] sm:$0xff]
        %v4455 = vld [vmem:[%s59 + $0x40] sm:$0xff]
        %v4456 = vld [vmem:[%s59 + $0x48] sm:$0xff]
        %v4457 = vld [vmem:[%s59 + $0x50] sm:$0xff]
        %v4458 = vld [vmem:[%s59 + $0x58] sm:$0xff]
        %v4459 = vld [vmem:[%s59 + $0x60] sm:$0xff]
        %v4460 = vld [vmem:[%s59 + $0x68] sm:$0xff]
        %v4461 = vld [vmem:[%s59 + $0x70] sm:$0xff]
        %v4462 = vld [vmem:[%s59 + $0x78] sm:$0xff]
        %v4463 = vld [vmem:[%s59 + $0x80] sm:$0xff]
        %v4464 = vld [vmem:[%s59 + $0x88] sm:$0xff]
        %v4465 = vld [vmem:[%s59 + $0x90] sm:$0xff]
        %v4466 = vld [vmem:[%s59 + $0x98] sm:$0xff]
        %v4467 = vld [vmem:[%s59 + $0xa0] sm:$0xff]
        %v4468 = vld [vmem:[%s59 + $0xa8] sm:$0xff]
        %v4469 = vld [vmem:[%s59 + $0xb0] sm:$0xff]
        %v4470 = vld [vmem:[%s59 + $0xb8] sm:$0xff]
        %v4471 = vld [vmem:[%s59 + $0xc0] sm:$0xff]
        %v4472 = vld [vmem:[%s59 + $0xc8] sm:$0xff]
        %v4473 = vld [vmem:[%s59 + $0xd0] sm:$0xff]
        %v4474 = vld [vmem:[%s59 + $0xd8] sm:$0xff]
        %v4475 = vld [vmem:[%s59 + $0xe0] sm:$0xff]
        %v4476 = vld [vmem:[%s59 + $0xe8] sm:$0xff]
        %v4477 = vld [vmem:[%s59 + $0xf0] sm:$0xff]
        %v4478 = vld [vmem:[%s59 + $0xf8] sm:$0xff]
        %v4479 = vld [vmem:[%s59 + $0x100] sm:$0xff]
        %v4480 = vld [vmem:[%s59 + $0x108] sm:$0xff]
        %v4481 = vld [vmem:[%s59 + $0x110] sm:$0xff]
        %v4482 = vld [vmem:[%s59 + $0x118] sm:$0xff]
        %v4483 = vld [vmem:[%s59 + $0x120] sm:$0xff]
        %v4484 = vld [vmem:[%s59 + $0x128] sm:$0xff]
        %v4485 = vld [vmem:[%s59 + $0x130] sm:$0xff]
        %v4486 = vld [vmem:[%s59 + $0x138] sm:$0xff]
        %v4487 = vld [vmem:[%s59 + $0x140] sm:$0xff]
        %v4488 = vld [vmem:[%s59 + $0x148] sm:$0xff]
        %v4489 = vld [vmem:[%s59 + $0x150] sm:$0xff]
        %v4490 = vld [vmem:[%s59 + $0x158] sm:$0xff]
        %v4491 = vld [vmem:[%s59 + $0x160] sm:$0xff]
        %v4492 = vld [vmem:[%s59 + $0x168] sm:$0xff]
        %v4493 = vld [vmem:[%s59 + $0x170] sm:$0xff]
        %v4494 = vld [vmem:[%s59 + $0x178] sm:$0xff]
        %v4495 = vld [vmem:[%s59 + $0x180] sm:$0xff]
        %v4496 = vld [vmem:[%s59 + $0x188] sm:$0xff]
        %v4497 = vld [vmem:[%s59 + $0x190] sm:$0xff]
        %v4498 = vld [vmem:[%s59 + $0x198] sm:$0xff]
        %v4499 = vld [vmem:[%s59 + $0x1a0] sm:$0xff]
        %v4500 = vld [vmem:[%s59 + $0x1a8] sm:$0xff]
        %v4501 = vld [vmem:[%s59 + $0x1b0] sm:$0xff]
        %v4502 = vld [vmem:[%s59 + $0x1b8] sm:$0xff]
        %v4503 = vld [vmem:[%s59 + $0x1c0] sm:$0xff]
        %v4504 = vld [vmem:[%s59 + $0x1c8] sm:$0xff]
        %v4505 = vld [vmem:[%s59 + $0x1d0] sm:$0xff]
        %v4506 = vld [vmem:[%s59 + $0x1d8] sm:$0xff]
        %v4507 = vld [vmem:[%s59 + $0x1e0] sm:$0xff]
        %v4508 = vld [vmem:[%s59 + $0x1e8] sm:$0xff]
        %v4509 = vld [vmem:[%s59 + $0x1f0] sm:$0xff]
        %v4510 = vld [vmem:[%s59 + $0x1f8] sm:$0xff]
        %v4511 = vld [vmem:[%s59 + $0x200] sm:$0xff]
        %v4512 = vld [vmem:[%s59 + $0x208] sm:$0xff]
        %v4513 = vld [vmem:[%s59 + $0x210] sm:$0xff]
        %v4514 = vld [vmem:[%s59 + $0x218] sm:$0xff]
        %v4515 = vld [vmem:[%s61] sm:$0xff]
        %v4516 = vld [vmem:[%s61 + $0x8] sm:$0xff]
        %v4517 = vld [vmem:[%s61 + $0x10] sm:$0x1]
        %v4521 = vlaneseq
        %v4522 = vshrl.u32 %v4521, 7
        %v4523 = vsub.s32 0, %v4522
        %v4524 = vrot.slane %v4515, %v4523
        %v4525 = vlaneseq
        %v4526 = vshrl.u32 %v4525, 7
        %v4527 = vsub.s32 1, %v4526
        %v4528 = vrot.slane %v4515, %v4527
        %v4529 = vlaneseq
        %v4530 = vshrl.u32 %v4529, 7
        %v4531 = vsub.s32 2, %v4530
        %v4532 = vrot.slane %v4515, %v4531
        %v4533 = vlaneseq
        %v4534 = vshrl.u32 %v4533, 7
        %v4535 = vsub.s32 3, %v4534
        %v4536 = vrot.slane %v4515, %v4535
        %v4537 = vlaneseq
        %v4538 = vshrl.u32 %v4537, 7
        %v4539 = vsub.s32 4, %v4538
        %v4540 = vrot.slane %v4515, %v4539
        %v4541 = vlaneseq
        %v4542 = vshrl.u32 %v4541, 7
        %v4543 = vsub.s32 5, %v4542
        %v4544 = vrot.slane %v4515, %v4543
        %v4545 = vlaneseq
        %v4546 = vshrl.u32 %v4545, 7
        %v4547 = vsub.s32 6, %v4546
        %v4548 = vrot.slane %v4515, %v4547
        %v4549 = vlaneseq
        %v4550 = vshrl.u32 %v4549, 7
        %v4551 = vsub.s32 7, %v4550
        %v4552 = vrot.slane %v4515, %v4551
        %v4553 = vlaneseq
        %v4554 = vshrl.u32 %v4553, 7
        %v4555 = vsub.s32 0, %v4554
        %v4556 = vrot.slane %v4516, %v4555
        %v4557 = vlaneseq
        %v4558 = vshrl.u32 %v4557, 7
        %v4559 = vsub.s32 1, %v4558
        %v4560 = vrot.slane %v4516, %v4559
        %v4561 = vlaneseq
        %v4562 = vshrl.u32 %v4561, 7
        %v4563 = vsub.s32 2, %v4562
        %v4564 = vrot.slane %v4516, %v4563
        %v4565 = vlaneseq
        %v4566 = vshrl.u32 %v4565, 7
        %v4567 = vsub.s32 3, %v4566
        %v4568 = vrot.slane %v4516, %v4567
        %v4569 = vlaneseq
        %v4570 = vshrl.u32 %v4569, 7
        %v4571 = vsub.s32 4, %v4570
        %v4572 = vrot.slane %v4516, %v4571
        %v4573 = vlaneseq
        %v4574 = vshrl.u32 %v4573, 7
        %v4575 = vsub.s32 5, %v4574
        %v4576 = vrot.slane %v4516, %v4575
        %v4577 = vlaneseq
        %v4578 = vshrl.u32 %v4577, 7
        %v4579 = vsub.s32 6, %v4578
        %v4580 = vrot.slane %v4516, %v4579
        %v4581 = vlaneseq
        %v4582 = vshrl.u32 %v4581, 7
        %v4583 = vsub.s32 7, %v4582
        %v4584 = vrot.slane %v4516, %v4583
        %v4585 = vlaneseq
        %v4586 = vshrl.u32 %v4585, 7
        %v4587 = vsub.s32 0, %v4586
        %v4588 = vrot.slane %v4517, %v4587
        %v4607 = vsel %vm1143, %v4446, 0
        %4609 = vmatprep.subr.mxu0 %v4448
        %4610 = vmatpush1.msra.mxu0 %v4447
        %4611 = vmatprep.subr.mxu0 %v4465
        %4612 = vmatpush1.msra.mxu0 %v4464
        %4613 = vmatprep.subr.mxu0 %v4482
        %4614 = vmatpush1.msra.mxu0 %v4481
        %4615 = vmatprep.subr.mxu0 %v4499
        %4616 = vmatpush1.msra.mxu0 %v4498
        %4617 = vmatprep.subr.mxu0 0.0
        %4618 = vmatpush1.msra.mxu0 0.0
        %4619 = vmatprep.subr.mxu0 0.0
        %4620 = vmatpush1.msra.mxu0 0.0
        %4621 = vmatprep.subr.mxu0 0.0
        %4622 = vmatpush1.msra.mxu0 0.0
        %4623 = vmatprep.subr.mxu0 0.0
        %4624 = vmatpush1.msra.mxu0 0.0
        %4625 = vmatprep.subr.mxu0 0.0
        %4626 = vmatpush1.msra.mxu0 0.0
        %4627 = vmatprep.subr.mxu0 0.0
        %4628 = vmatpush1.msra.mxu0 0.0
        %4629 = vmatprep.subr.mxu0 0.0
        %4630 = vmatpush1.msra.mxu0 0.0
        %4631 = vmatprep.subr.mxu0 0.0
        %4632 = vmatpush1.msra.mxu0 0.0
        %4633 = vmatprep.subr.mxu0 0.0
        %4634 = vmatpush1.msra.mxu0 0.0
        %4635 = vmatprep.subr.mxu0 0.0
        %4636 = vmatpush1.msra.mxu0 0.0
        %4637 = vmatprep.subr.mxu0 0.0
        %4638 = vmatpush1.msra.mxu0 0.0
        %4639 = vmatprep.subr.mxu0 0.0
        %4640 = vmatpush1.msra.mxu0 0.0
        %4641 = vmatprep.subr.mxu0 0.0
        %4642 = vmatpush1.msra.mxu0 0.0
        %4643 = vmatprep.subr.mxu0 0.0
        %4644 = vmatpush1.msra.mxu0 0.0
        %4645 = vmatprep.subr.mxu0 0.0
        %4646 = vmatpush1.msra.mxu0 0.0
        %4647 = vmatprep.subr.mxu0 0.0
        %4648 = vmatpush1.msra.mxu0 0.0
        %4649 = vmatprep.subr.mxu0 0.0
        %4650 = vmatpush1.msra.mxu0 0.0
        %4651 = vmatprep.subr.mxu0 0.0
        %4652 = vmatpush1.msra.mxu0 0.0
        %4653 = vmatprep.subr.mxu0 0.0
        %4654 = vmatpush1.msra.mxu0 0.0
        %4655 = vmatprep.subr.mxu0 0.0
        %4656 = vmatpush1.msra.mxu0 0.0
        %4657 = vmatprep.subr.mxu0 0.0
        %4658 = vmatpush1.msra.mxu0 0.0
        %4659 = vmatprep.subr.mxu0 0.0
        %4660 = vmatpush1.msra.mxu0 0.0
        %4661 = vmatprep.subr.mxu0 0.0
        %4662 = vmatpush1.msra.mxu0 0.0
        %4663 = vmatprep.subr.mxu0 0.0
        %4664 = vmatpush1.msra.mxu0 0.0
        %4665 = vmatprep.subr.mxu0 0.0
        %4666 = vmatpush1.msra.mxu0 0.0
        %4667 = vmatprep.subr.mxu0 0.0
        %4668 = vmatpush1.msra.mxu0 0.0
        %4669 = vmatprep.subr.mxu0 0.0
        %4670 = vmatpush1.msra.mxu0 0.0
        %4671 = vmatprep.subr.mxu0 0.0
        %4672 = vmatpush1.msra.mxu0 0.0
        %4673 = vmatprep.mubr.f32.mxu0 0.0
        %4674 = vmatmul.mubr.f32.gmra.mrb[0].mxu0 %v4607
        %v4675 = vpop.f32.mrb[0].mxu0
        %v4676 = vadd.f32 %v4524, %v4675
        %v4677 = vpop.f32.mrb[0].mxu0
        %v4678 = vadd.f32 %v4528, %v4677
        %4679 = vdwg.mxu0
        %4680 = vmatprep.subr.mxu0 %v4450
        %4681 = vmatpush1.msra.mxu0 %v4449
        %4682 = vmatprep.subr.mxu0 %v4467
        %4683 = vmatpush1.msra.mxu0 %v4466
        %4684 = vmatprep.subr.mxu0 %v4484
        %4685 = vmatpush1.msra.mxu0 %v4483
        %4686 = vmatprep.subr.mxu0 %v4501
        %4687 = vmatpush1.msra.mxu0 %v4500
        %4688 = vmatprep.subr.mxu0 0.0
        %4689 = vmatpush1.msra.mxu0 0.0
        %4690 = vmatprep.subr.mxu0 0.0
        %4691 = vmatpush1.msra.mxu0 0.0
        %4692 = vmatprep.subr.mxu0 0.0
        %4693 = vmatpush1.msra.mxu0 0.0
        %4694 = vmatprep.subr.mxu0 0.0
        %4695 = vmatpush1.msra.mxu0 0.0
        %4696 = vmatprep.subr.mxu0 0.0
        %4697 = vmatpush1.msra.mxu0 0.0
        %4698 = vmatprep.subr.mxu0 0.0
        %4699 = vmatpush1.msra.mxu0 0.0
        %4700 = vmatprep.subr.mxu0 0.0
        %4701 = vmatpush1.msra.mxu0 0.0
        %4702 = vmatprep.subr.mxu0 0.0
        %4703 = vmatpush1.msra.mxu0 0.0
        %4704 = vmatprep.subr.mxu0 0.0
        %4705 = vmatpush1.msra.mxu0 0.0
        %4706 = vmatprep.subr.mxu0 0.0
        %4707 = vmatpush1.msra.mxu0 0.0
        %4708 = vmatprep.subr.mxu0 0.0
        %4709 = vmatpush1.msra.mxu0 0.0
        %4710 = vmatprep.subr.mxu0 0.0
        %4711 = vmatpush1.msra.mxu0 0.0
        %4712 = vmatprep.subr.mxu0 0.0
        %4713 = vmatpush1.msra.mxu0 0.0
        %4714 = vmatprep.subr.mxu0 0.0
        %4715 = vmatpush1.msra.mxu0 0.0
        %4716 = vmatprep.subr.mxu0 0.0
        %4717 = vmatpush1.msra.mxu0 0.0
        %4718 = vmatprep.subr.mxu0 0.0
        %4719 = vmatpush1.msra.mxu0 0.0
        %4720 = vmatprep.subr.mxu0 0.0
        %4721 = vmatpush1.msra.mxu0 0.0
        %4722 = vmatprep.subr.mxu0 0.0
        %4723 = vmatpush1.msra.mxu0 0.0
        %4724 = vmatprep.subr.mxu0 0.0
        %4725 = vmatpush1.msra.mxu0 0.0
        %4726 = vmatprep.subr.mxu0 0.0
        %4727 = vmatpush1.msra.mxu0 0.0
        %4728 = vmatprep.subr.mxu0 0.0
        %4729 = vmatpush1.msra.mxu0 0.0
        %4730 = vmatprep.subr.mxu0 0.0
        %4731 = vmatpush1.msra.mxu0 0.0
        %4732 = vmatprep.subr.mxu0 0.0
        %4733 = vmatpush1.msra.mxu0 0.0
        %4734 = vmatprep.subr.mxu0 0.0
        %4735 = vmatpush1.msra.mxu0 0.0
        %4736 = vmatprep.subr.mxu0 0.0
        %4737 = vmatpush1.msra.mxu0 0.0
        %4738 = vmatprep.subr.mxu0 0.0
        %4739 = vmatpush1.msra.mxu0 0.0
        %4740 = vmatprep.subr.mxu0 0.0
        %4741 = vmatpush1.msra.mxu0 0.0
        %4742 = vmatprep.subr.mxu0 0.0
        %4743 = vmatpush1.msra.mxu0 0.0
        %4744 = vmatprep.mubr.f32.mxu0 0.0
        %4745 = vmatmul.mubr.f32.gmra.mrb[0].mxu0 %v4607
        %v4746 = vpop.f32.mrb[0].mxu0
        %v4747 = vadd.f32 %v4532, %v4746
        %v4748 = vpop.f32.mrb[0].mxu0
        %v4749 = vadd.f32 %v4536, %v4748
        %4750 = vdwg.mxu0
        %4751 = vmatprep.subr.mxu0 %v4452
        %4752 = vmatpush1.msra.mxu0 %v4451
        %4753 = vmatprep.subr.mxu0 %v4469
        %4754 = vmatpush1.msra.mxu0 %v4468
        %4755 = vmatprep.subr.mxu0 %v4486
        %4756 = vmatpush1.msra.mxu0 %v4485
        %4757 = vmatprep.subr.mxu0 %v4503
        %4758 = vmatpush1.msra.mxu0 %v4502
        %4759 = vmatprep.subr.mxu0 0.0
        %4760 = vmatpush1.msra.mxu0 0.0
        %4761 = vmatprep.subr.mxu0 0.0
        %4762 = vmatpush1.msra.mxu0 0.0
        %4763 = vmatprep.subr.mxu0 0.0
        %4764 = vmatpush1.msra.mxu0 0.0
        %4765 = vmatprep.subr.mxu0 0.0
        %4766 = vmatpush1.msra.mxu0 0.0
        %4767 = vmatprep.subr.mxu0 0.0
        %4768 = vmatpush1.msra.mxu0 0.0
        %4769 = vmatprep.subr.mxu0 0.0
        %4770 = vmatpush1.msra.mxu0 0.0
        %4771 = vmatprep.subr.mxu0 0.0
        %4772 = vmatpush1.msra.mxu0 0.0
        %4773 = vmatprep.subr.mxu0 0.0
        %4774 = vmatpush1.msra.mxu0 0.0
        %4775 = vmatprep.subr.mxu0 0.0
        %4776 = vmatpush1.msra.mxu0 0.0
        %4777 = vmatprep.subr.mxu0 0.0
        %4778 = vmatpush1.msra.mxu0 0.0
        %4779 = vmatprep.subr.mxu0 0.0
        %4780 = vmatpush1.msra.mxu0 0.0
        %4781 = vmatprep.subr.mxu0 0.0
        %4782 = vmatpush1.msra.mxu0 0.0
        %4783 = vmatprep.subr.mxu0 0.0
        %4784 = vmatpush1.msra.mxu0 0.0
        %4785 = vmatprep.subr.mxu0 0.0
        %4786 = vmatpush1.msra.mxu0 0.0
        %4787 = vmatprep.subr.mxu0 0.0
        %4788 = vmatpush1.msra.mxu0 0.0
        %4789 = vmatprep.subr.mxu0 0.0
        %4790 = vmatpush1.msra.mxu0 0.0
        %4791 = vmatprep.subr.mxu0 0.0
        %4792 = vmatpush1.msra.mxu0 0.0
        %4793 = vmatprep.subr.mxu0 0.0
        %4794 = vmatpush1.msra.mxu0 0.0
        %4795 = vmatprep.subr.mxu0 0.0
        %4796 = vmatpush1.msra.mxu0 0.0
        %4797 = vmatprep.subr.mxu0 0.0
        %4798 = vmatpush1.msra.mxu0 0.0
        %4799 = vmatprep.subr.mxu0 0.0
        %4800 = vmatpush1.msra.mxu0 0.0
        %4801 = vmatprep.subr.mxu0 0.0
        %4802 = vmatpush1.msra.mxu0 0.0
        %4803 = vmatprep.subr.mxu0 0.0
        %4804 = vmatpush1.msra.mxu0 0.0
        %4805 = vmatprep.subr.mxu0 0.0
        %4806 = vmatpush1.msra.mxu0 0.0
        %4807 = vmatprep.subr.mxu0 0.0
        %4808 = vmatpush1.msra.mxu0 0.0
        %4809 = vmatprep.subr.mxu0 0.0
        %4810 = vmatpush1.msra.mxu0 0.0
        %4811 = vmatprep.subr.mxu0 0.0
        %4812 = vmatpush1.msra.mxu0 0.0
        %4813 = vmatprep.subr.mxu0 0.0
        %4814 = vmatpush1.msra.mxu0 0.0
        %4815 = vmatprep.mubr.f32.mxu0 0.0
        %4816 = vmatmul.mubr.f32.gmra.mrb[0].mxu0 %v4607
        %v4817 = vpop.f32.mrb[0].mxu0
        %v4818 = vadd.f32 %v4540, %v4817
        %v4819 = vpop.f32.mrb[0].mxu0
        %v4820 = vadd.f32 %v4544, %v4819
        %4821 = vdwg.mxu0
        %4822 = vmatprep.subr.mxu0 %v4454
        %4823 = vmatpush1.msra.mxu0 %v4453
        %4824 = vmatprep.subr.mxu0 %v4471
        %4825 = vmatpush1.msra.mxu0 %v4470
        %4826 = vmatprep.subr.mxu0 %v4488
        %4827 = vmatpush1.msra.mxu0 %v4487
        %4828 = vmatprep.subr.mxu0 %v4505
        %4829 = vmatpush1.msra.mxu0 %v4504
        %4830 = vmatprep.subr.mxu0 0.0
        %4831 = vmatpush1.msra.mxu0 0.0
        %4832 = vmatprep.subr.mxu0 0.0
        %4833 = vmatpush1.msra.mxu0 0.0
        %4834 = vmatprep.subr.mxu0 0.0
        %4835 = vmatpush1.msra.mxu0 0.0
        %4836 = vmatprep.subr.mxu0 0.0
        %4837 = vmatpush1.msra.mxu0 0.0
        %4838 = vmatprep.subr.mxu0 0.0
        %4839 = vmatpush1.msra.mxu0 0.0
        %4840 = vmatprep.subr.mxu0 0.0
        %4841 = vmatpush1.msra.mxu0 0.0
        %4842 = vmatprep.subr.mxu0 0.0
        %4843 = vmatpush1.msra.mxu0 0.0
        %4844 = vmatprep.subr.mxu0 0.0
        %4845 = vmatpush1.msra.mxu0 0.0
        %4846 = vmatprep.subr.mxu0 0.0
        %4847 = vmatpush1.msra.mxu0 0.0
        %4848 = vmatprep.subr.mxu0 0.0
        %4849 = vmatpush1.msra.mxu0 0.0
        %4850 = vmatprep.subr.mxu0 0.0
        %4851 = vmatpush1.msra.mxu0 0.0
        %4852 = vmatprep.subr.mxu0 0.0
        %4853 = vmatpush1.msra.mxu0 0.0
        %4854 = vmatprep.subr.mxu0 0.0
        %4855 = vmatpush1.msra.mxu0 0.0
        %4856 = vmatprep.subr.mxu0 0.0
        %4857 = vmatpush1.msra.mxu0 0.0
        %4858 = vmatprep.subr.mxu0 0.0
        %4859 = vmatpush1.msra.mxu0 0.0
        %4860 = vmatprep.subr.mxu0 0.0
        %4861 = vmatpush1.msra.mxu0 0.0
        %4862 = vmatprep.subr.mxu0 0.0
        %4863 = vmatpush1.msra.mxu0 0.0
        %4864 = vmatprep.subr.mxu0 0.0
        %4865 = vmatpush1.msra.mxu0 0.0
        %4866 = vmatprep.subr.mxu0 0.0
        %4867 = vmatpush1.msra.mxu0 0.0
        %4868 = vmatprep.subr.mxu0 0.0
        %4869 = vmatpush1.msra.mxu0 0.0
        %4870 = vmatprep.subr.mxu0 0.0
        %4871 = vmatpush1.msra.mxu0 0.0
        %4872 = vmatprep.subr.mxu0 0.0
        %4873 = vmatpush1.msra.mxu0 0.0
        %4874 = vmatprep.subr.mxu0 0.0
        %4875 = vmatpush1.msra.mxu0 0.0
        %4876 = vmatprep.subr.mxu0 0.0
        %4877 = vmatpush1.msra.mxu0 0.0
        %4878 = vmatprep.subr.mxu0 0.0
        %4879 = vmatpush1.msra.mxu0 0.0
        %4880 = vmatprep.subr.mxu0 0.0
        %4881 = vmatpush1.msra.mxu0 0.0
        %4882 = vmatprep.subr.mxu0 0.0
        %4883 = vmatpush1.msra.mxu0 0.0
        %4884 = vmatprep.subr.mxu0 0.0
        %4885 = vmatpush1.msra.mxu0 0.0
        %4886 = vmatprep.mubr.f32.mxu0 0.0
        %4887 = vmatmul.mubr.f32.gmra.mrb[0].mxu0 %v4607
        %v4888 = vpop.f32.mrb[0].mxu0
        %v4889 = vadd.f32 %v4548, %v4888
        %v4890 = vpop.f32.mrb[0].mxu0
        %v4891 = vadd.f32 %v4552, %v4890
        %4892 = vdwg.mxu0
        %4893 = vmatprep.subr.mxu0 %v4456
        %4894 = vmatpush1.msra.mxu0 %v4455
        %4895 = vmatprep.subr.mxu0 %v4473
        %4896 = vmatpush1.msra.mxu0 %v4472
        %4897 = vmatprep.subr.mxu0 %v4490
        %4898 = vmatpush1.msra.mxu0 %v4489
        %4899 = vmatprep.subr.mxu0 %v4507
        %4900 = vmatpush1.msra.mxu0 %v4506
        %4901 = vmatprep.subr.mxu0 0.0
        %4902 = vmatpush1.msra.mxu0 0.0
        %4903 = vmatprep.subr.mxu0 0.0
        %4904 = vmatpush1.msra.mxu0 0.0
        %4905 = vmatprep.subr.mxu0 0.0
        %4906 = vmatpush1.msra.mxu0 0.0
        %4907 = vmatprep.subr.mxu0 0.0
        %4908 = vmatpush1.msra.mxu0 0.0
        %4909 = vmatprep.subr.mxu0 0.0
        %4910 = vmatpush1.msra.mxu0 0.0
        %4911 = vmatprep.subr.mxu0 0.0
        %4912 = vmatpush1.msra.mxu0 0.0
        %4913 = vmatprep.subr.mxu0 0.0
        %4914 = vmatpush1.msra.mxu0 0.0
        %4915 = vmatprep.subr.mxu0 0.0
        %4916 = vmatpush1.msra.mxu0 0.0
        %4917 = vmatprep.subr.mxu0 0.0
        %4918 = vmatpush1.msra.mxu0 0.0
        %4919 = vmatprep.subr.mxu0 0.0
        %4920 = vmatpush1.msra.mxu0 0.0
        %4921 = vmatprep.subr.mxu0 0.0
        %4922 = vmatpush1.msra.mxu0 0.0
        %4923 = vmatprep.subr.mxu0 0.0
        %4924 = vmatpush1.msra.mxu0 0.0
        %4925 = vmatprep.subr.mxu0 0.0
        %4926 = vmatpush1.msra.mxu0 0.0
        %4927 = vmatprep.subr.mxu0 0.0
        %4928 = vmatpush1.msra.mxu0 0.0
        %4929 = vmatprep.subr.mxu0 0.0
        %4930 = vmatpush1.msra.mxu0 0.0
        %4931 = vmatprep.subr.mxu0 0.0
        %4932 = vmatpush1.msra.mxu0 0.0
        %4933 = vmatprep.subr.mxu0 0.0
        %4934 = vmatpush1.msra.mxu0 0.0
        %4935 = vmatprep.subr.mxu0 0.0
        %4936 = vmatpush1.msra.mxu0 0.0
        %4937 = vmatprep.subr.mxu0 0.0
        %4938 = vmatpush1.msra.mxu0 0.0
        %4939 = vmatprep.subr.mxu0 0.0
        %4940 = vmatpush1.msra.mxu0 0.0
        %4941 = vmatprep.subr.mxu0 0.0
        %4942 = vmatpush1.msra.mxu0 0.0
        %4943 = vmatprep.subr.mxu0 0.0
        %4944 = vmatpush1.msra.mxu0 0.0
        %4945 = vmatprep.subr.mxu0 0.0
        %4946 = vmatpush1.msra.mxu0 0.0
        %4947 = vmatprep.subr.mxu0 0.0
        %4948 = vmatpush1.msra.mxu0 0.0
        %4949 = vmatprep.subr.mxu0 0.0
        %4950 = vmatpush1.msra.mxu0 0.0
        %4951 = vmatprep.subr.mxu0 0.0
        %4952 = vmatpush1.msra.mxu0 0.0
        %4953 = vmatprep.subr.mxu0 0.0
        %4954 = vmatpush1.msra.mxu0 0.0
        %4955 = vmatprep.subr.mxu0 0.0
        %4956 = vmatpush1.msra.mxu0 0.0
        %4957 = vmatprep.mubr.f32.mxu0 0.0
        %4958 = vmatmul.mubr.f32.gmra.mrb[0].mxu0 %v4607
        %v4959 = vpop.f32.mrb[0].mxu0
        %v4960 = vadd.f32 %v4556, %v4959
        %v4961 = vpop.f32.mrb[0].mxu0
        %v4962 = vadd.f32 %v4560, %v4961
        %4963 = vdwg.mxu0
        %4964 = vmatprep.subr.mxu0 %v4458
        %4965 = vmatpush1.msra.mxu0 %v4457
        %4966 = vmatprep.subr.mxu0 %v4475
        %4967 = vmatpush1.msra.mxu0 %v4474
        %4968 = vmatprep.subr.mxu0 %v4492
        %4969 = vmatpush1.msra.mxu0 %v4491
        %4970 = vmatprep.subr.mxu0 %v4509
        %4971 = vmatpush1.msra.mxu0 %v4508
        %4972 = vmatprep.subr.mxu0 0.0
        %4973 = vmatpush1.msra.mxu0 0.0
        %4974 = vmatprep.subr.mxu0 0.0
        %4975 = vmatpush1.msra.mxu0 0.0
        %4976 = vmatprep.subr.mxu0 0.0
        %4977 = vmatpush1.msra.mxu0 0.0
        %4978 = vmatprep.subr.mxu0 0.0
        %4979 = vmatpush1.msra.mxu0 0.0
        %4980 = vmatprep.subr.mxu0 0.0
        %4981 = vmatpush1.msra.mxu0 0.0
        %4982 = vmatprep.subr.mxu0 0.0
        %4983 = vmatpush1.msra.mxu0 0.0
        %4984 = vmatprep.subr.mxu0 0.0
        %4985 = vmatpush1.msra.mxu0 0.0
        %4986 = vmatprep.subr.mxu0 0.0
        %4987 = vmatpush1.msra.mxu0 0.0
        %4988 = vmatprep.subr.mxu0 0.0
        %4989 = vmatpush1.msra.mxu0 0.0
        %4990 = vmatprep.subr.mxu0 0.0
        %4991 = vmatpush1.msra.mxu0 0.0
        %4992 = vmatprep.subr.mxu0 0.0
        %4993 = vmatpush1.msra.mxu0 0.0
        %4994 = vmatprep.subr.mxu0 0.0
        %4995 = vmatpush1.msra.mxu0 0.0
        %4996 = vmatprep.subr.mxu0 0.0
        %4997 = vmatpush1.msra.mxu0 0.0
        %4998 = vmatprep.subr.mxu0 0.0
        %4999 = vmatpush1.msra.mxu0 0.0
        %5000 = vmatprep.subr.mxu0 0.0
        %5001 = vmatpush1.msra.mxu0 0.0
        %5002 = vmatprep.subr.mxu0 0.0
        %5003 = vmatpush1.msra.mxu0 0.0
        %5004 = vmatprep.subr.mxu0 0.0
        %5005 = vmatpush1.msra.mxu0 0.0
        %5006 = vmatprep.subr.mxu0 0.0
        %5007 = vmatpush1.msra.mxu0 0.0
        %5008 = vmatprep.subr.mxu0 0.0
        %5009 = vmatpush1.msra.mxu0 0.0
        %5010 = vmatprep.subr.mxu0 0.0
        %5011 = vmatpush1.msra.mxu0 0.0
        %5012 = vmatprep.subr.mxu0 0.0
        %5013 = vmatpush1.msra.mxu0 0.0
        %5014 = vmatprep.subr.mxu0 0.0
        %5015 = vmatpush1.msra.mxu0 0.0
        %5016 = vmatprep.subr.mxu0 0.0
        %5017 = vmatpush1.msra.mxu0 0.0
        %5018 = vmatprep.subr.mxu0 0.0
        %5019 = vmatpush1.msra.mxu0 0.0
        %5020 = vmatprep.subr.mxu0 0.0
        %5021 = vmatpush1.msra.mxu0 0.0
        %5022 = vmatprep.subr.mxu0 0.0
        %5023 = vmatpush1.msra.mxu0 0.0
        %5024 = vmatprep.subr.mxu0 0.0
        %5025 = vmatpush1.msra.mxu0 0.0
        %5026 = vmatprep.subr.mxu0 0.0
        %5027 = vmatpush1.msra.mxu0 0.0
        %5028 = vmatprep.mubr.f32.mxu0 0.0
        %5029 = vmatmul.mubr.f32.gmra.mrb[0].mxu0 %v4607
        %v5030 = vpop.f32.mrb[0].mxu0
        %v5031 = vadd.f32 %v4564, %v5030
        %v5032 = vpop.f32.mrb[0].mxu0
        %v5033 = vadd.f32 %v4568, %v5032
        %5034 = vdwg.mxu0
        %5035 = vmatprep.subr.mxu0 %v4460
        %5036 = vmatpush1.msra.mxu0 %v4459
        %5037 = vmatprep.subr.mxu0 %v4477
        %5038 = vmatpush1.msra.mxu0 %v4476
        %5039 = vmatprep.subr.mxu0 %v4494
        %5040 = vmatpush1.msra.mxu0 %v4493
        %5041 = vmatprep.subr.mxu0 %v4511
        %5042 = vmatpush1.msra.mxu0 %v4510
        %5043 = vmatprep.subr.mxu0 0.0
        %5044 = vmatpush1.msra.mxu0 0.0
        %5045 = vmatprep.subr.mxu0 0.0
        %5046 = vmatpush1.msra.mxu0 0.0
        %5047 = vmatprep.subr.mxu0 0.0
        %5048 = vmatpush1.msra.mxu0 0.0
        %5049 = vmatprep.subr.mxu0 0.0
        %5050 = vmatpush1.msra.mxu0 0.0
        %5051 = vmatprep.subr.mxu0 0.0
        %5052 = vmatpush1.msra.mxu0 0.0
        %5053 = vmatprep.subr.mxu0 0.0
        %5054 = vmatpush1.msra.mxu0 0.0
        %5055 = vmatprep.subr.mxu0 0.0
        %5056 = vmatpush1.msra.mxu0 0.0
        %5057 = vmatprep.subr.mxu0 0.0
        %5058 = vmatpush1.msra.mxu0 0.0
        %5059 = vmatprep.subr.mxu0 0.0
        %5060 = vmatpush1.msra.mxu0 0.0
        %5061 = vmatprep.subr.mxu0 0.0
        %5062 = vmatpush1.msra.mxu0 0.0
        %5063 = vmatprep.subr.mxu0 0.0
        %5064 = vmatpush1.msra.mxu0 0.0
        %5065 = vmatprep.subr.mxu0 0.0
        %5066 = vmatpush1.msra.mxu0 0.0
        %5067 = vmatprep.subr.mxu0 0.0
        %5068 = vmatpush1.msra.mxu0 0.0
        %5069 = vmatprep.subr.mxu0 0.0
        %5070 = vmatpush1.msra.mxu0 0.0
        %5071 = vmatprep.subr.mxu0 0.0
        %5072 = vmatpush1.msra.mxu0 0.0
        %5073 = vmatprep.subr.mxu0 0.0
        %5074 = vmatpush1.msra.mxu0 0.0
        %5075 = vmatprep.subr.mxu0 0.0
        %5076 = vmatpush1.msra.mxu0 0.0
        %5077 = vmatprep.subr.mxu0 0.0
        %5078 = vmatpush1.msra.mxu0 0.0
        %5079 = vmatprep.subr.mxu0 0.0
        %5080 = vmatpush1.msra.mxu0 0.0
        %5081 = vmatprep.subr.mxu0 0.0
        %5082 = vmatpush1.msra.mxu0 0.0
        %5083 = vmatprep.subr.mxu0 0.0
        %5084 = vmatpush1.msra.mxu0 0.0
        %5085 = vmatprep.subr.mxu0 0.0
        %5086 = vmatpush1.msra.mxu0 0.0
        %5087 = vmatprep.subr.mxu0 0.0
        %5088 = vmatpush1.msra.mxu0 0.0
        %5089 = vmatprep.subr.mxu0 0.0
        %5090 = vmatpush1.msra.mxu0 0.0
        %5091 = vmatprep.subr.mxu0 0.0
        %5092 = vmatpush1.msra.mxu0 0.0
        %5093 = vmatprep.subr.mxu0 0.0
        %5094 = vmatpush1.msra.mxu0 0.0
        %5095 = vmatprep.subr.mxu0 0.0
        %5096 = vmatpush1.msra.mxu0 0.0
        %5097 = vmatprep.subr.mxu0 0.0
        %5098 = vmatpush1.msra.mxu0 0.0
        %5099 = vmatprep.mubr.f32.mxu0 0.0
        %5100 = vmatmul.mubr.f32.gmra.mrb[0].mxu0 %v4607
        %v5101 = vpop.f32.mrb[0].mxu0
        %v5102 = vadd.f32 %v4572, %v5101
        %v5103 = vpop.f32.mrb[0].mxu0
        %v5104 = vadd.f32 %v4576, %v5103
        %5105 = vdwg.mxu0
        %5106 = vmatprep.subr.mxu0 %v4462
        %5107 = vmatpush1.msra.mxu0 %v4461
        %5108 = vmatprep.subr.mxu0 %v4479
        %5109 = vmatpush1.msra.mxu0 %v4478
        %5110 = vmatprep.subr.mxu0 %v4496
        %5111 = vmatpush1.msra.mxu0 %v4495
        %5112 = vmatprep.subr.mxu0 %v4513
        %5113 = vmatpush1.msra.mxu0 %v4512
        %5114 = vmatprep.subr.mxu0 0.0
        %5115 = vmatpush1.msra.mxu0 0.0
        %5116 = vmatprep.subr.mxu0 0.0
        %5117 = vmatpush1.msra.mxu0 0.0
        %5118 = vmatprep.subr.mxu0 0.0
        %5119 = vmatpush1.msra.mxu0 0.0
        %5120 = vmatprep.subr.mxu0 0.0
        %5121 = vmatpush1.msra.mxu0 0.0
        %5122 = vmatprep.subr.mxu0 0.0
        %5123 = vmatpush1.msra.mxu0 0.0
        %5124 = vmatprep.subr.mxu0 0.0
        %5125 = vmatpush1.msra.mxu0 0.0
        %5126 = vmatprep.subr.mxu0 0.0
        %5127 = vmatpush1.msra.mxu0 0.0
        %5128 = vmatprep.subr.mxu0 0.0
        %5129 = vmatpush1.msra.mxu0 0.0
        %5130 = vmatprep.subr.mxu0 0.0
        %5131 = vmatpush1.msra.mxu0 0.0
        %5132 = vmatprep.subr.mxu0 0.0
        %5133 = vmatpush1.msra.mxu0 0.0
        %5134 = vmatprep.subr.mxu0 0.0
        %5135 = vmatpush1.msra.mxu0 0.0
        %5136 = vmatprep.subr.mxu0 0.0
        %5137 = vmatpush1.msra.mxu0 0.0
        %5138 = vmatprep.subr.mxu0 0.0
        %5139 = vmatpush1.msra.mxu0 0.0
        %5140 = vmatprep.subr.mxu0 0.0
        %5141 = vmatpush1.msra.mxu0 0.0
        %5142 = vmatprep.subr.mxu0 0.0
        %5143 = vmatpush1.msra.mxu0 0.0
        %5144 = vmatprep.subr.mxu0 0.0
        %5145 = vmatpush1.msra.mxu0 0.0
        %5146 = vmatprep.subr.mxu0 0.0
        %5147 = vmatpush1.msra.mxu0 0.0
        %5148 = vmatprep.subr.mxu0 0.0
        %5149 = vmatpush1.msra.mxu0 0.0
        %5150 = vmatprep.subr.mxu0 0.0
        %5151 = vmatpush1.msra.mxu0 0.0
        %5152 = vmatprep.subr.mxu0 0.0
        %5153 = vmatpush1.msra.mxu0 0.0
        %5154 = vmatprep.subr.mxu0 0.0
        %5155 = vmatpush1.msra.mxu0 0.0
        %5156 = vmatprep.subr.mxu0 0.0
        %5157 = vmatpush1.msra.mxu0 0.0
        %5158 = vmatprep.subr.mxu0 0.0
        %5159 = vmatpush1.msra.mxu0 0.0
        %5160 = vmatprep.subr.mxu0 0.0
        %5161 = vmatpush1.msra.mxu0 0.0
        %5162 = vmatprep.subr.mxu0 0.0
        %5163 = vmatpush1.msra.mxu0 0.0
        %5164 = vmatprep.subr.mxu0 0.0
        %5165 = vmatpush1.msra.mxu0 0.0
        %5166 = vmatprep.subr.mxu0 0.0
        %5167 = vmatpush1.msra.mxu0 0.0
        %5168 = vmatprep.subr.mxu0 0.0
        %5169 = vmatpush1.msra.mxu0 0.0
        %5170 = vmatprep.mubr.f32.mxu0 0.0
        %5171 = vmatmul.mubr.f32.gmra.mrb[0].mxu0 %v4607
        %v5172 = vpop.f32.mrb[0].mxu0
        %v5173 = vadd.f32 %v4580, %v5172
        %v5174 = vpop.f32.mrb[0].mxu0
        %v5175 = vadd.f32 %v4584, %v5174
        %5176 = vdwg.mxu0
        %5177 = vmatprep.subr.mxu0 0.0
        %5178 = vmatpush1.msra.mxu0 %v4463
        %5179 = vmatprep.subr.mxu0 0.0
        %5180 = vmatpush1.msra.mxu0 %v4480
        %5181 = vmatprep.subr.mxu0 0.0
        %5182 = vmatpush1.msra.mxu0 %v4497
        %5183 = vmatprep.subr.mxu0 0.0
        %5184 = vmatpush1.msra.mxu0 %v4514
        %5185 = vmatprep.subr.mxu0 0.0
        %5186 = vmatpush1.msra.mxu0 0.0
        %5187 = vmatprep.subr.mxu0 0.0
        %5188 = vmatpush1.msra.mxu0 0.0
        %5189 = vmatprep.subr.mxu0 0.0
        %5190 = vmatpush1.msra.mxu0 0.0
        %5191 = vmatprep.subr.mxu0 0.0
        %5192 = vmatpush1.msra.mxu0 0.0
        %5193 = vmatprep.subr.mxu0 0.0
        %5194 = vmatpush1.msra.mxu0 0.0
        %5195 = vmatprep.subr.mxu0 0.0
        %5196 = vmatpush1.msra.mxu0 0.0
        %5197 = vmatprep.subr.mxu0 0.0
        %5198 = vmatpush1.msra.mxu0 0.0
        %5199 = vmatprep.subr.mxu0 0.0
        %5200 = vmatpush1.msra.mxu0 0.0
        %5201 = vmatprep.subr.mxu0 0.0
        %5202 = vmatpush1.msra.mxu0 0.0
        %5203 = vmatprep.subr.mxu0 0.0
        %5204 = vmatpush1.msra.mxu0 0.0
        %5205 = vmatprep.subr.mxu0 0.0
        %5206 = vmatpush1.msra.mxu0 0.0
        %5207 = vmatprep.subr.mxu0 0.0
        %5208 = vmatpush1.msra.mxu0 0.0
        %5209 = vmatprep.subr.mxu0 0.0
        %5210 = vmatpush1.msra.mxu0 0.0
        %5211 = vmatprep.subr.mxu0 0.0
        %5212 = vmatpush1.msra.mxu0 0.0
        %5213 = vmatprep.subr.mxu0 0.0
        %5214 = vmatpush1.msra.mxu0 0.0
        %5215 = vmatprep.subr.mxu0 0.0
        %5216 = vmatpush1.msra.mxu0 0.0
        %5217 = vmatprep.subr.mxu0 0.0
        %5218 = vmatpush1.msra.mxu0 0.0
        %5219 = vmatprep.subr.mxu0 0.0
        %5220 = vmatpush1.msra.mxu0 0.0
        %5221 = vmatprep.subr.mxu0 0.0
        %5222 = vmatpush1.msra.mxu0 0.0
        %5223 = vmatprep.subr.mxu0 0.0
        %5224 = vmatpush1.msra.mxu0 0.0
        %5225 = vmatprep.subr.mxu0 0.0
        %5226 = vmatpush1.msra.mxu0 0.0
        %5227 = vmatprep.subr.mxu0 0.0
        %5228 = vmatpush1.msra.mxu0 0.0
        %5229 = vmatprep.subr.mxu0 0.0
        %5230 = vmatpush1.msra.mxu0 0.0
        %5231 = vmatprep.subr.mxu0 0.0
        %5232 = vmatpush1.msra.mxu0 0.0
        %5233 = vmatprep.subr.mxu0 0.0
        %5234 = vmatpush1.msra.mxu0 0.0
        %5235 = vmatprep.subr.mxu0 0.0
        %5236 = vmatpush1.msra.mxu0 0.0
        %5237 = vmatprep.subr.mxu0 0.0
        %5238 = vmatpush1.msra.mxu0 0.0
        %5239 = vmatprep.subr.mxu0 0.0
        %5240 = vmatpush1.msra.mxu0 0.0
        %5241 = vmatprep.mubr.f32.mxu0 0.0
        %5242 = vmatmul.mubr.f32.gmra.mrb[0].mxu0 %v4607
        %v5243 = vpop.f32.mrb[0].mxu0
        %v5244 = vadd.f32 %v4588, %v5243
        %v5245 = vpop.f32.mrb[0].mxu0
        %5246 = vdwg.mxu0
        %v5247 = vmax.f32 %v4676, 0.0
        %v5248 = vmax.f32 %v4678, 0.0
        %v5249 = vmax.f32 %v4747, 0.0
        %v5250 = vmax.f32 %v4749, 0.0
        %v5251 = vmax.f32 %v4818, 0.0
        %v5252 = vmax.f32 %v4820, 0.0
        %v5253 = vmax.f32 %v4889, 0.0
        %v5254 = vmax.f32 %v4891, 0.0
        %v5255 = vmax.f32 %v4960, 0.0
        %v5256 = vmax.f32 %v4962, 0.0
        %v5257 = vmax.f32 %v5031, 0.0
        %v5258 = vmax.f32 %v5033, 0.0
        %v5259 = vmax.f32 %v5102, 0.0
        %v5260 = vmax.f32 %v5104, 0.0
        %v5261 = vmax.f32 %v5173, 0.0
        %v5262 = vmax.f32 %v5175, 0.0
        %v5263 = vmax.f32 %v5244, 0.0
        %v5264 = vld [vmem:[%s63] sm:$0xff]
        %v5265 = vld [vmem:[%s63 + $0x8] sm:$0xff]
        %v5266 = vld [vmem:[%s63 + $0x10] sm:$0xff]
        %v5267 = vld [vmem:[%s63 + $0x18] sm:$0xff]
        %v5268 = vld [vmem:[%s63 + $0x20] sm:$0xff]
        %v5269 = vld [vmem:[%s63 + $0x28] sm:$0xff]
        %v5270 = vld [vmem:[%s63 + $0x30] sm:$0xff]
        %v5271 = vld [vmem:[%s63 + $0x38] sm:$0xff]
        %v5272 = vld [vmem:[%s63 + $0x40] sm:$0xff]
        %v5273 = vld [vmem:[%s63 + $0x48] sm:$0xff]
        %v5274 = vld [vmem:[%s63 + $0x50] sm:$0xff]
        %v5275 = vld [vmem:[%s63 + $0x58] sm:$0xff]
        %v5276 = vld [vmem:[%s63 + $0x60] sm:$0xff]
        %v5277 = vld [vmem:[%s63 + $0x68] sm:$0xff]
        %v5278 = vld [vmem:[%s63 + $0x70] sm:$0xff]
        %v5279 = vld [vmem:[%s63 + $0x78] sm:$0xff]
        %v5280 = vld [vmem:[%s63 + $0x80] sm:$0xff]
        %v5281 = vld [vmem:[%s63 + $0x88] sm:$0xff]
        %v5282 = vld [vmem:[%s63 + $0x90] sm:$0xff]
        %v5283 = vld [vmem:[%s63 + $0x98] sm:$0xff]
        %v5284 = vld [vmem:[%s63 + $0xa0] sm:$0xff]
        %v5285 = vld [vmem:[%s63 + $0xa8] sm:$0xff]
        %v5286 = vld [vmem:[%s63 + $0xb0] sm:$0xff]
        %v5287 = vld [vmem:[%s63 + $0xb8] sm:$0xff]
        %v5288 = vld [vmem:[%s63 + $0xc0] sm:$0xff]
        %v5289 = vld [vmem:[%s63 + $0xc8] sm:$0xff]
        %v5290 = vld [vmem:[%s63 + $0xd0] sm:$0xff]
        %v5291 = vld [vmem:[%s63 + $0xd8] sm:$0xff]
        %v5292 = vld [vmem:[%s63 + $0xe0] sm:$0xff]
        %v5293 = vld [vmem:[%s63 + $0xe8] sm:$0xff]
        %v5294 = vld [vmem:[%s63 + $0xf0] sm:$0xff]
        %v5295 = vld [vmem:[%s63 + $0xf8] sm:$0xff]
        %v5296 = vld [vmem:[%s63 + $0x100] sm:$0xff]
        %v5297 = vld [vmem:[%s63 + $0x108] sm:$0xff]
        %v5298 = vld [vmem:[%s63 + $0x110] sm:$0xff]
        %v5299 = vld [vmem:[%s63 + $0x118] sm:$0xff]
        %v5300 = vld [vmem:[%s63 + $0x120] sm:$0xff]
        %v5301 = vld [vmem:[%s63 + $0x128] sm:$0xff]
        %v5302 = vld [vmem:[%s63 + $0x130] sm:$0xff]
        %v5303 = vld [vmem:[%s63 + $0x138] sm:$0xff]
        %v5304 = vld [vmem:[%s63 + $0x140] sm:$0xff]
        %v5305 = vld [vmem:[%s63 + $0x148] sm:$0xff]
        %v5306 = vld [vmem:[%s63 + $0x150] sm:$0xff]
        %v5307 = vld [vmem:[%s63 + $0x158] sm:$0xff]
        %v5308 = vld [vmem:[%s63 + $0x160] sm:$0xff]
        %v5309 = vld [vmem:[%s63 + $0x168] sm:$0xff]
        %v5310 = vld [vmem:[%s63 + $0x170] sm:$0xff]
        %v5311 = vld [vmem:[%s63 + $0x178] sm:$0xff]
        %v5312 = vld [vmem:[%s63 + $0x180] sm:$0xff]
        %v5313 = vld [vmem:[%s63 + $0x188] sm:$0xff]
        %v5314 = vld [vmem:[%s63 + $0x190] sm:$0xff]
        %v5315 = vld [vmem:[%s63 + $0x198] sm:$0xff]
        %v5316 = vld [vmem:[%s63 + $0x1a0] sm:$0xff]
        %v5317 = vld [vmem:[%s63 + $0x1a8] sm:$0xff]
        %v5318 = vld [vmem:[%s63 + $0x1b0] sm:$0xff]
        %v5319 = vld [vmem:[%s63 + $0x1b8] sm:$0xff]
        %v5320 = vld [vmem:[%s63 + $0x1c0] sm:$0xff]
        %v5321 = vld [vmem:[%s63 + $0x1c8] sm:$0xff]
        %v5322 = vld [vmem:[%s63 + $0x1d0] sm:$0xff]
        %v5323 = vld [vmem:[%s63 + $0x1d8] sm:$0xff]
        %v5324 = vld [vmem:[%s63 + $0x1e0] sm:$0xff]
        %v5325 = vld [vmem:[%s63 + $0x1e8] sm:$0xff]
        %v5326 = vld [vmem:[%s63 + $0x1f0] sm:$0xff]
        %v5327 = vld [vmem:[%s63 + $0x1f8] sm:$0xff]
        %v5328 = vld [vmem:[%s63 + $0x200] sm:$0xff]
        %v5329 = vld [vmem:[%s63 + $0x208] sm:$0xff]
        %v5330 = vld [vmem:[%s63 + $0x210] sm:$0xff]
        %v5331 = vld [vmem:[%s63 + $0x218] sm:$0xff]
        %v5332 = vld [vmem:[%s63 + $0x220] sm:$0xff]
        %v5333 = vld [vmem:[%s63 + $0x228] sm:$0xff]
        %v5334 = vld [vmem:[%s63 + $0x230] sm:$0xff]
        %v5335 = vld [vmem:[%s63 + $0x238] sm:$0xff]
        %v5336 = vld [vmem:[%s63 + $0x240] sm:$0xff]
        %v5337 = vld [vmem:[%s63 + $0x248] sm:$0xff]
        %v5338 = vld [vmem:[%s63 + $0x250] sm:$0xff]
        %v5339 = vld [vmem:[%s63 + $0x258] sm:$0xff]
        %v5340 = vld [vmem:[%s63 + $0x260] sm:$0xff]
        %v5341 = vld [vmem:[%s63 + $0x268] sm:$0xff]
        %v5342 = vld [vmem:[%s63 + $0x270] sm:$0xff]
        %v5343 = vld [vmem:[%s63 + $0x278] sm:$0xff]
        %v5344 = vld [vmem:[%s63 + $0x280] sm:$0xff]
        %v5345 = vld [vmem:[%s63 + $0x288] sm:$0xff]
        %v5346 = vld [vmem:[%s63 + $0x290] sm:$0xff]
        %v5347 = vld [vmem:[%s63 + $0x298] sm:$0xff]
        %v5348 = vld [vmem:[%s63 + $0x2a0] sm:$0xff]
        %v5349 = vld [vmem:[%s63 + $0x2a8] sm:$0xff]
        %v5350 = vld [vmem:[%s63 + $0x2b0] sm:$0xff]
        %v5351 = vld [vmem:[%s63 + $0x2b8] sm:$0xff]
        %v5352 = vld [vmem:[%s63 + $0x2c0] sm:$0xff]
        %v5353 = vld [vmem:[%s63 + $0x2c8] sm:$0xff]
        %v5354 = vld [vmem:[%s63 + $0x2d0] sm:$0xff]
        %v5355 = vld [vmem:[%s63 + $0x2d8] sm:$0xff]
        %v5356 = vld [vmem:[%s63 + $0x2e0] sm:$0xff]
        %v5357 = vld [vmem:[%s63 + $0x2e8] sm:$0xff]
        %v5358 = vld [vmem:[%s63 + $0x2f0] sm:$0xff]
        %v5359 = vld [vmem:[%s63 + $0x2f8] sm:$0xff]
        %v5360 = vld [vmem:[%s63 + $0x300] sm:$0xff]
        %v5361 = vld [vmem:[%s63 + $0x308] sm:$0xff]
        %v5362 = vld [vmem:[%s63 + $0x310] sm:$0xff]
        %v5363 = vld [vmem:[%s63 + $0x318] sm:$0xff]
        %v5364 = vld [vmem:[%s63 + $0x320] sm:$0xff]
        %v5365 = vld [vmem:[%s63 + $0x328] sm:$0xff]
        %v5366 = vld [vmem:[%s63 + $0x330] sm:$0xff]
        %v5367 = vld [vmem:[%s63 + $0x338] sm:$0xff]
        %v5368 = vld [vmem:[%s63 + $0x340] sm:$0xff]
        %v5369 = vld [vmem:[%s63 + $0x348] sm:$0xff]
        %v5370 = vld [vmem:[%s63 + $0x350] sm:$0xff]
        %v5371 = vld [vmem:[%s63 + $0x358] sm:$0xff]
        %v5372 = vld [vmem:[%s63 + $0x360] sm:$0xff]
        %v5373 = vld [vmem:[%s63 + $0x368] sm:$0xff]
        %v5374 = vld [vmem:[%s63 + $0x370] sm:$0xff]
        %v5375 = vld [vmem:[%s63 + $0x378] sm:$0xff]
        %v5376 = vld [vmem:[%s63 + $0x380] sm:$0xff]
        %v5377 = vld [vmem:[%s63 + $0x388] sm:$0xff]
        %v5378 = vld [vmem:[%s63 + $0x390] sm:$0xff]
        %v5379 = vld [vmem:[%s63 + $0x398] sm:$0xff]
        %v5380 = vld [vmem:[%s63 + $0x3a0] sm:$0xff]
        %v5381 = vld [vmem:[%s63 + $0x3a8] sm:$0xff]
        %v5382 = vld [vmem:[%s63 + $0x3b0] sm:$0xff]
        %v5383 = vld [vmem:[%s63 + $0x3b8] sm:$0xff]
        %v5384 = vld [vmem:[%s63 + $0x3c0] sm:$0xff]
        %v5385 = vld [vmem:[%s63 + $0x3c8] sm:$0xff]
        %v5386 = vld [vmem:[%s63 + $0x3d0] sm:$0xff]
        %v5387 = vld [vmem:[%s63 + $0x3d8] sm:$0xff]
        %v5388 = vld [vmem:[%s63 + $0x3e0] sm:$0xff]
        %v5389 = vld [vmem:[%s63 + $0x3e8] sm:$0xff]
        %v5390 = vld [vmem:[%s63 + $0x3f0] sm:$0xff]
        %v5391 = vld [vmem:[%s63 + $0x3f8] sm:$0xff]
        %v5392 = vld [vmem:[%s63 + $0x400] sm:$0xff]
        %v5393 = vld [vmem:[%s63 + $0x408] sm:$0xff]
        %v5394 = vld [vmem:[%s63 + $0x410] sm:$0xff]
        %v5395 = vld [vmem:[%s63 + $0x418] sm:$0xff]
        %v5396 = vld [vmem:[%s63 + $0x420] sm:$0xff]
        %v5397 = vld [vmem:[%s63 + $0x428] sm:$0xff]
        %v5398 = vld [vmem:[%s63 + $0x430] sm:$0xff]
        %v5399 = vld [vmem:[%s63 + $0x438] sm:$0xff]
        %v5400 = vld [vmem:[%s63 + $0x440] sm:$0xff]
        %v5401 = vld [vmem:[%s63 + $0x448] sm:$0xff]
        %v5402 = vld [vmem:[%s63 + $0x450] sm:$0xff]
        %v5403 = vld [vmem:[%s63 + $0x458] sm:$0xff]
        %v5404 = vld [vmem:[%s63 + $0x460] sm:$0xff]
        %v5405 = vld [vmem:[%s63 + $0x468] sm:$0xff]
        %v5406 = vld [vmem:[%s63 + $0x470] sm:$0xff]
        %v5407 = vld [vmem:[%s63 + $0x478] sm:$0xff]
        %v5408 = vld [vmem:[%s63 + $0x480] sm:$0xff]
        %v5409 = vld [vmem:[%s63 + $0x488] sm:$0xff]
        %v5410 = vld [vmem:[%s63 + $0x490] sm:$0xff]
        %v5411 = vld [vmem:[%s63 + $0x498] sm:$0xff]
        %v5412 = vld [vmem:[%s63 + $0x4a0] sm:$0xff]
        %v5413 = vld [vmem:[%s63 + $0x4a8] sm:$0xff]
        %v5414 = vld [vmem:[%s63 + $0x4b0] sm:$0xff]
        %v5415 = vld [vmem:[%s63 + $0x4b8] sm:$0xff]
        %v5416 = vld [vmem:[%s63 + $0x4c0] sm:$0xff]
        %v5417 = vld [vmem:[%s63 + $0x4c8] sm:$0xff]
        %v5418 = vld [vmem:[%s63 + $0x4d0] sm:$0xff]
        %v5419 = vld [vmem:[%s63 + $0x4d8] sm:$0xff]
        %v5420 = vld [vmem:[%s63 + $0x4e0] sm:$0xff]
        %v5421 = vld [vmem:[%s63 + $0x4e8] sm:$0xff]
        %v5422 = vld [vmem:[%s63 + $0x4f0] sm:$0xff]
        %v5423 = vld [vmem:[%s63 + $0x4f8] sm:$0xff]
        %v5424 = vld [vmem:[%s63 + $0x500] sm:$0xff]
        %v5425 = vld [vmem:[%s63 + $0x508] sm:$0xff]
        %v5426 = vld [vmem:[%s63 + $0x510] sm:$0xff]
        %v5427 = vld [vmem:[%s63 + $0x518] sm:$0xff]
        %v5428 = vld [vmem:[%s63 + $0x520] sm:$0xff]
        %v5429 = vld [vmem:[%s63 + $0x528] sm:$0xff]
        %v5430 = vld [vmem:[%s63 + $0x530] sm:$0xff]
        %v5431 = vld [vmem:[%s63 + $0x538] sm:$0xff]
        %v5432 = vld [vmem:[%s63 + $0x540] sm:$0xff]
        %v5433 = vld [vmem:[%s63 + $0x548] sm:$0xff]
        %v5434 = vld [vmem:[%s63 + $0x550] sm:$0xff]
        %v5435 = vld [vmem:[%s63 + $0x558] sm:$0xff]
        %v5436 = vld [vmem:[%s63 + $0x560] sm:$0xff]
        %v5437 = vld [vmem:[%s63 + $0x568] sm:$0xff]
        %v5438 = vld [vmem:[%s63 + $0x570] sm:$0xff]
        %v5439 = vld [vmem:[%s63 + $0x578] sm:$0xff]
        %v5440 = vld [vmem:[%s63 + $0x580] sm:$0xff]
        %v5441 = vld [vmem:[%s63 + $0x588] sm:$0xff]
        %v5442 = vld [vmem:[%s63 + $0x590] sm:$0xff]
        %v5443 = vld [vmem:[%s63 + $0x598] sm:$0xff]
        %v5444 = vld [vmem:[%s63 + $0x5a0] sm:$0xff]
        %v5445 = vld [vmem:[%s63 + $0x5a8] sm:$0xff]
        %v5446 = vld [vmem:[%s63 + $0x5b0] sm:$0xff]
        %v5447 = vld [vmem:[%s63 + $0x5b8] sm:$0xff]
        %v5448 = vld [vmem:[%s63 + $0x5c0] sm:$0xff]
        %v5449 = vld [vmem:[%s63 + $0x5c8] sm:$0xff]
        %v5450 = vld [vmem:[%s63 + $0x5d0] sm:$0xff]
        %v5451 = vld [vmem:[%s63 + $0x5d8] sm:$0xff]
        %v5452 = vld [vmem:[%s63 + $0x5e0] sm:$0xff]
        %v5453 = vld [vmem:[%s63 + $0x5e8] sm:$0xff]
        %v5454 = vld [vmem:[%s63 + $0x5f0] sm:$0xff]
        %v5455 = vld [vmem:[%s63 + $0x5f8] sm:$0xff]
        %v5456 = vld [vmem:[%s63 + $0x600] sm:$0xff]
        %v5457 = vld [vmem:[%s63 + $0x608] sm:$0xff]
        %v5458 = vld [vmem:[%s63 + $0x610] sm:$0xff]
        %v5459 = vld [vmem:[%s63 + $0x618] sm:$0xff]
        %v5460 = vld [vmem:[%s63 + $0x620] sm:$0xff]
        %v5461 = vld [vmem:[%s63 + $0x628] sm:$0xff]
        %v5462 = vld [vmem:[%s63 + $0x630] sm:$0xff]
        %v5463 = vld [vmem:[%s63 + $0x638] sm:$0xff]
        %v5464 = vld [vmem:[%s63 + $0x640] sm:$0xff]
        %v5465 = vld [vmem:[%s63 + $0x648] sm:$0xff]
        %v5466 = vld [vmem:[%s63 + $0x650] sm:$0xff]
        %v5467 = vld [vmem:[%s63 + $0x658] sm:$0xff]
        %v5468 = vld [vmem:[%s63 + $0x660] sm:$0xff]
        %v5469 = vld [vmem:[%s63 + $0x668] sm:$0xff]
        %v5470 = vld [vmem:[%s63 + $0x670] sm:$0xff]
        %v5471 = vld [vmem:[%s63 + $0x678] sm:$0xff]
        %v5472 = vld [vmem:[%s63 + $0x680] sm:$0xff]
        %v5473 = vld [vmem:[%s63 + $0x688] sm:$0xff]
        %v5474 = vld [vmem:[%s63 + $0x690] sm:$0xff]
        %v5475 = vld [vmem:[%s63 + $0x698] sm:$0xff]
        %v5476 = vld [vmem:[%s63 + $0x6a0] sm:$0xff]
        %v5477 = vld [vmem:[%s63 + $0x6a8] sm:$0xff]
        %v5478 = vld [vmem:[%s63 + $0x6b0] sm:$0xff]
        %v5479 = vld [vmem:[%s63 + $0x6b8] sm:$0xff]
        %v5480 = vld [vmem:[%s63 + $0x6c0] sm:$0xff]
        %v5481 = vld [vmem:[%s63 + $0x6c8] sm:$0xff]
        %v5482 = vld [vmem:[%s63 + $0x6d0] sm:$0xff]
        %v5483 = vld [vmem:[%s63 + $0x6d8] sm:$0xff]
        %v5484 = vld [vmem:[%s63 + $0x6e0] sm:$0xff]
        %v5485 = vld [vmem:[%s63 + $0x6e8] sm:$0xff]
        %v5486 = vld [vmem:[%s63 + $0x6f0] sm:$0xff]
        %v5487 = vld [vmem:[%s63 + $0x6f8] sm:$0xff]
        %v5488 = vld [vmem:[%s63 + $0x700] sm:$0xff]
        %v5489 = vld [vmem:[%s63 + $0x708] sm:$0xff]
        %v5490 = vld [vmem:[%s63 + $0x710] sm:$0xff]
        %v5491 = vld [vmem:[%s63 + $0x718] sm:$0xff]
        %v5492 = vld [vmem:[%s63 + $0x720] sm:$0xff]
        %v5493 = vld [vmem:[%s63 + $0x728] sm:$0xff]
        %v5494 = vld [vmem:[%s63 + $0x730] sm:$0xff]
        %v5495 = vld [vmem:[%s63 + $0x738] sm:$0xff]
        %v5496 = vld [vmem:[%s63 + $0x740] sm:$0xff]
        %v5497 = vld [vmem:[%s63 + $0x748] sm:$0xff]
        %v5498 = vld [vmem:[%s63 + $0x750] sm:$0xff]
        %v5499 = vld [vmem:[%s63 + $0x758] sm:$0xff]
        %v5500 = vld [vmem:[%s63 + $0x760] sm:$0xff]
        %v5501 = vld [vmem:[%s63 + $0x768] sm:$0xff]
        %v5502 = vld [vmem:[%s63 + $0x770] sm:$0xff]
        %v5503 = vld [vmem:[%s63 + $0x778] sm:$0xff]
        %v5504 = vld [vmem:[%s63 + $0x780] sm:$0xff]
        %v5505 = vld [vmem:[%s63 + $0x788] sm:$0xff]
        %v5506 = vld [vmem:[%s63 + $0x790] sm:$0xff]
        %v5507 = vld [vmem:[%s63 + $0x798] sm:$0xff]
        %v5508 = vld [vmem:[%s63 + $0x7a0] sm:$0xff]
        %v5509 = vld [vmem:[%s63 + $0x7a8] sm:$0xff]
        %v5510 = vld [vmem:[%s63 + $0x7b0] sm:$0xff]
        %v5511 = vld [vmem:[%s63 + $0x7b8] sm:$0xff]
        %v5512 = vld [vmem:[%s63 + $0x7c0] sm:$0xff]
        %v5513 = vld [vmem:[%s63 + $0x7c8] sm:$0xff]
        %v5514 = vld [vmem:[%s63 + $0x7d0] sm:$0xff]
        %v5515 = vld [vmem:[%s63 + $0x7d8] sm:$0xff]
        %v5516 = vld [vmem:[%s63 + $0x7e0] sm:$0xff]
        %v5517 = vld [vmem:[%s63 + $0x7e8] sm:$0xff]
        %v5518 = vld [vmem:[%s63 + $0x7f0] sm:$0xff]
        %v5519 = vld [vmem:[%s63 + $0x7f8] sm:$0xff]
        %v5520 = vld [vmem:[%s63 + $0x800] sm:$0xff]
        %v5521 = vld [vmem:[%s63 + $0x808] sm:$0xff]
        %v5522 = vld [vmem:[%s63 + $0x810] sm:$0xff]
        %v5523 = vld [vmem:[%s63 + $0x818] sm:$0xff]
        %v5524 = vld [vmem:[%s63 + $0x820] sm:$0xff]
        %v5525 = vld [vmem:[%s63 + $0x828] sm:$0xff]
        %v5526 = vld [vmem:[%s65] sm:$0x1]
        %v5528 = vlaneseq
        %v5529 = vshrl.u32 %v5528, 7
        %v5530 = vsub.s32 0, %v5529
        %v5531 = vrot.slane %v5526, %v5530
        %v5534 = vsel %vm3021, %v5263, 0
        %5536 = vmatprep.subr.mxu0 0.0
        %5537 = vmatpush1.msra.mxu0 %v5264
        %5538 = vmatprep.subr.mxu0 0.0
        %5539 = vmatpush1.msra.mxu0 %v5265
        %5540 = vmatprep.subr.mxu0 0.0
        %5541 = vmatpush1.msra.mxu0 %v5266
        %5542 = vmatprep.subr.mxu0 0.0
        %5543 = vmatpush1.msra.mxu0 %v5267
        %5544 = vmatprep.subr.mxu0 0.0
        %5545 = vmatpush1.msra.mxu0 %v5268
        %5546 = vmatprep.subr.mxu0 0.0
        %5547 = vmatpush1.msra.mxu0 %v5269
        %5548 = vmatprep.subr.mxu0 0.0
        %5549 = vmatpush1.msra.mxu0 %v5270
        %5550 = vmatprep.subr.mxu0 0.0
        %5551 = vmatpush1.msra.mxu0 %v5271
        %5552 = vmatprep.subr.mxu0 0.0
        %5553 = vmatpush1.msra.mxu0 %v5272
        %5554 = vmatprep.subr.mxu0 0.0
        %5555 = vmatpush1.msra.mxu0 %v5273
        %5556 = vmatprep.subr.mxu0 0.0
        %5557 = vmatpush1.msra.mxu0 %v5274
        %5558 = vmatprep.subr.mxu0 0.0
        %5559 = vmatpush1.msra.mxu0 %v5275
        %5560 = vmatprep.subr.mxu0 0.0
        %5561 = vmatpush1.msra.mxu0 %v5276
        %5562 = vmatprep.subr.mxu0 0.0
        %5563 = vmatpush1.msra.mxu0 %v5277
        %5564 = vmatprep.subr.mxu0 0.0
        %5565 = vmatpush1.msra.mxu0 %v5278
        %5566 = vmatprep.subr.mxu0 0.0
        %5567 = vmatpush1.msra.mxu0 %v5279
        %5568 = vmatprep.subr.mxu0 0.0
        %5569 = vmatpush1.msra.mxu0 %v5280
        %5570 = vmatprep.subr.mxu0 0.0
        %5571 = vmatpush1.msra.mxu0 %v5281
        %5572 = vmatprep.subr.mxu0 0.0
        %5573 = vmatpush1.msra.mxu0 %v5282
        %5574 = vmatprep.subr.mxu0 0.0
        %5575 = vmatpush1.msra.mxu0 %v5283
        %5576 = vmatprep.subr.mxu0 0.0
        %5577 = vmatpush1.msra.mxu0 %v5284
        %5578 = vmatprep.subr.mxu0 0.0
        %5579 = vmatpush1.msra.mxu0 %v5285
        %5580 = vmatprep.subr.mxu0 0.0
        %5581 = vmatpush1.msra.mxu0 %v5286
        %5582 = vmatprep.subr.mxu0 0.0
        %5583 = vmatpush1.msra.mxu0 %v5287
        %5584 = vmatprep.subr.mxu0 0.0
        %5585 = vmatpush1.msra.mxu0 %v5288
        %5586 = vmatprep.subr.mxu0 0.0
        %5587 = vmatpush1.msra.mxu0 %v5289
        %5588 = vmatprep.subr.mxu0 0.0
        %5589 = vmatpush1.msra.mxu0 %v5290
        %5590 = vmatprep.subr.mxu0 0.0
        %5591 = vmatpush1.msra.mxu0 %v5291
        %5592 = vmatprep.subr.mxu0 0.0
        %5593 = vmatpush1.msra.mxu0 %v5292
        %5594 = vmatprep.subr.mxu0 0.0
        %5595 = vmatpush1.msra.mxu0 %v5293
        %5596 = vmatprep.subr.mxu0 0.0
        %5597 = vmatpush1.msra.mxu0 %v5294
        %5598 = vmatprep.subr.mxu0 0.0
        %5599 = vmatpush1.msra.mxu0 %v5295
        %5600 = vmatprep.mubr.f32.mxu0 %v5248
        %5601 = vmatmul.mubr.f32.gmra.mrb[0].mxu0 %v5247
        %v5602 = vpop.f32.mrb[0].mxu0
        %v5603 = vadd.f32 %v5531, %v5602
        %v5604 = vpop.f32.mrb[0].mxu0
        %5605 = vdwg.mxu0
        %5606 = vmatprep.subr.mxu0 0.0
        %5607 = vmatpush1.msra.mxu0 %v5296
        %5608 = vmatprep.subr.mxu0 0.0
        %5609 = vmatpush1.msra.mxu0 %v5297
        %5610 = vmatprep.subr.mxu0 0.0
        %5611 = vmatpush1.msra.mxu0 %v5298
        %5612 = vmatprep.subr.mxu0 0.0
        %5613 = vmatpush1.msra.mxu0 %v5299
        %5614 = vmatprep.subr.mxu0 0.0
        %5615 = vmatpush1.msra.mxu0 %v5300
        %5616 = vmatprep.subr.mxu0 0.0
        %5617 = vmatpush1.msra.mxu0 %v5301
        %5618 = vmatprep.subr.mxu0 0.0
        %5619 = vmatpush1.msra.mxu0 %v5302
        %5620 = vmatprep.subr.mxu0 0.0
        %5621 = vmatpush1.msra.mxu0 %v5303
        %5622 = vmatprep.subr.mxu0 0.0
        %5623 = vmatpush1.msra.mxu0 %v5304
        %5624 = vmatprep.subr.mxu0 0.0
        %5625 = vmatpush1.msra.mxu0 %v5305
        %5626 = vmatprep.subr.mxu0 0.0
        %5627 = vmatpush1.msra.mxu0 %v5306
        %5628 = vmatprep.subr.mxu0 0.0
        %5629 = vmatpush1.msra.mxu0 %v5307
        %5630 = vmatprep.subr.mxu0 0.0
        %5631 = vmatpush1.msra.mxu0 %v5308
        %5632 = vmatprep.subr.mxu0 0.0
        %5633 = vmatpush1.msra.mxu0 %v5309
        %5634 = vmatprep.subr.mxu0 0.0
        %5635 = vmatpush1.msra.mxu0 %v5310
        %5636 = vmatprep.subr.mxu0 0.0
        %5637 = vmatpush1.msra.mxu0 %v5311
        %5638 = vmatprep.subr.mxu0 0.0
        %5639 = vmatpush1.msra.mxu0 %v5312
        %5640 = vmatprep.subr.mxu0 0.0
        %5641 = vmatpush1.msra.mxu0 %v5313
        %5642 = vmatprep.subr.mxu0 0.0
        %5643 = vmatpush1.msra.mxu0 %v5314
        %5644 = vmatprep.subr.mxu0 0.0
        %5645 = vmatpush1.msra.mxu0 %v5315
        %5646 = vmatprep.subr.mxu0 0.0
        %5647 = vmatpush1.msra.mxu0 %v5316
        %5648 = vmatprep.subr.mxu0 0.0
        %5649 = vmatpush1.msra.mxu0 %v5317
        %5650 = vmatprep.subr.mxu0 0.0
        %5651 = vmatpush1.msra.mxu0 %v5318
        %5652 = vmatprep.subr.mxu0 0.0
        %5653 = vmatpush1.msra.mxu0 %v5319
        %5654 = vmatprep.subr.mxu0 0.0
        %5655 = vmatpush1.msra.mxu0 %v5320
        %5656 = vmatprep.subr.mxu0 0.0
        %5657 = vmatpush1.msra.mxu0 %v5321
        %5658 = vmatprep.subr.mxu0 0.0
        %5659 = vmatpush1.msra.mxu0 %v5322
        %5660 = vmatprep.subr.mxu0 0.0
        %5661 = vmatpush1.msra.mxu0 %v5323
        %5662 = vmatprep.subr.mxu0 0.0
        %5663 = vmatpush1.msra.mxu0 %v5324
        %5664 = vmatprep.subr.mxu0 0.0
        %5665 = vmatpush1.msra.mxu0 %v5325
        %5666 = vmatprep.subr.mxu0 0.0
        %5667 = vmatpush1.msra.mxu0 %v5326
        %5668 = vmatprep.subr.mxu0 0.0
        %5669 = vmatpush1.msra.mxu0 %v5327
        %5670 = vmatprep.mubr.f32.mxu0 %v5250
        %5671 = vmatmul.mubr.f32.gmra.mrb[0].mxu0 %v5249
        %v5672 = vpop.f32.mrb[0].mxu0
        %v5673 = vadd.f32 %v5603, %v5672
        %v5674 = vpop.f32.mrb[0].mxu0
        %5675 = vdwg.mxu0
        %5676 = vmatprep.subr.mxu0 0.0
        %5677 = vmatpush1.msra.mxu0 %v5328
        %5678 = vmatprep.subr.mxu0 0.0
        %5679 = vmatpush1.msra.mxu0 %v5329
        %5680 = vmatprep.subr.mxu0 0.0
        %5681 = vmatpush1.msra.mxu0 %v5330
        %5682 = vmatprep.subr.mxu0 0.0
        %5683 = vmatpush1.msra.mxu0 %v5331
        %5684 = vmatprep.subr.mxu0 0.0
        %5685 = vmatpush1.msra.mxu0 %v5332
        %5686 = vmatprep.subr.mxu0 0.0
        %5687 = vmatpush1.msra.mxu0 %v5333
        %5688 = vmatprep.subr.mxu0 0.0
        %5689 = vmatpush1.msra.mxu0 %v5334
        %5690 = vmatprep.subr.mxu0 0.0
        %5691 = vmatpush1.msra.mxu0 %v5335
        %5692 = vmatprep.subr.mxu0 0.0
        %5693 = vmatpush1.msra.mxu0 %v5336
        %5694 = vmatprep.subr.mxu0 0.0
        %5695 = vmatpush1.msra.mxu0 %v5337
        %5696 = vmatprep.subr.mxu0 0.0
        %5697 = vmatpush1.msra.mxu0 %v5338
        %5698 = vmatprep.subr.mxu0 0.0
        %5699 = vmatpush1.msra.mxu0 %v5339
        %5700 = vmatprep.subr.mxu0 0.0
        %5701 = vmatpush1.msra.mxu0 %v5340
        %5702 = vmatprep.subr.mxu0 0.0
        %5703 = vmatpush1.msra.mxu0 %v5341
        %5704 = vmatprep.subr.mxu0 0.0
        %5705 = vmatpush1.msra.mxu0 %v5342
        %5706 = vmatprep.subr.mxu0 0.0
        %5707 = vmatpush1.msra.mxu0 %v5343
        %5708 = vmatprep.subr.mxu0 0.0
        %5709 = vmatpush1.msra.mxu0 %v5344
        %5710 = vmatprep.subr.mxu0 0.0
        %5711 = vmatpush1.msra.mxu0 %v5345
        %5712 = vmatprep.subr.mxu0 0.0
        %5713 = vmatpush1.msra.mxu0 %v5346
        %5714 = vmatprep.subr.mxu0 0.0
        %5715 = vmatpush1.msra.mxu0 %v5347
        %5716 = vmatprep.subr.mxu0 0.0
        %5717 = vmatpush1.msra.mxu0 %v5348
        %5718 = vmatprep.subr.mxu0 0.0
        %5719 = vmatpush1.msra.mxu0 %v5349
        %5720 = vmatprep.subr.mxu0 0.0
        %5721 = vmatpush1.msra.mxu0 %v5350
        %5722 = vmatprep.subr.mxu0 0.0
        %5723 = vmatpush1.msra.mxu0 %v5351
        %5724 = vmatprep.subr.mxu0 0.0
        %5725 = vmatpush1.msra.mxu0 %v5352
        %5726 = vmatprep.subr.mxu0 0.0
        %5727 = vmatpush1.msra.mxu0 %v5353
        %5728 = vmatprep.subr.mxu0 0.0
        %5729 = vmatpush1.msra.mxu0 %v5354
        %5730 = vmatprep.subr.mxu0 0.0
        %5731 = vmatpush1.msra.mxu0 %v5355
        %5732 = vmatprep.subr.mxu0 0.0
        %5733 = vmatpush1.msra.mxu0 %v5356
        %5734 = vmatprep.subr.mxu0 0.0
        %5735 = vmatpush1.msra.mxu0 %v5357
        %5736 = vmatprep.subr.mxu0 0.0
        %5737 = vmatpush1.msra.mxu0 %v5358
        %5738 = vmatprep.subr.mxu0 0.0
        %5739 = vmatpush1.msra.mxu0 %v5359
        %5740 = vmatprep.mubr.f32.mxu0 %v5252
        %5741 = vmatmul.mubr.f32.gmra.mrb[0].mxu0 %v5251
        %v5742 = vpop.f32.mrb[0].mxu0
        %v5743 = vadd.f32 %v5673, %v5742
        %v5744 = vpop.f32.mrb[0].mxu0
        %5745 = vdwg.mxu0
        %5746 = vmatprep.subr.mxu0 0.0
        %5747 = vmatpush1.msra.mxu0 %v5360
        %5748 = vmatprep.subr.mxu0 0.0
        %5749 = vmatpush1.msra.mxu0 %v5361
        %5750 = vmatprep.subr.mxu0 0.0
        %5751 = vmatpush1.msra.mxu0 %v5362
        %5752 = vmatprep.subr.mxu0 0.0
        %5753 = vmatpush1.msra.mxu0 %v5363
        %5754 = vmatprep.subr.mxu0 0.0
        %5755 = vmatpush1.msra.mxu0 %v5364
        %5756 = vmatprep.subr.mxu0 0.0
        %5757 = vmatpush1.msra.mxu0 %v5365
        %5758 = vmatprep.subr.mxu0 0.0
        %5759 = vmatpush1.msra.mxu0 %v5366
        %5760 = vmatprep.subr.mxu0 0.0
        %5761 = vmatpush1.msra.mxu0 %v5367
        %5762 = vmatprep.subr.mxu0 0.0
        %5763 = vmatpush1.msra.mxu0 %v5368
        %5764 = vmatprep.subr.mxu0 0.0
        %5765 = vmatpush1.msra.mxu0 %v5369
        %5766 = vmatprep.subr.mxu0 0.0
        %5767 = vmatpush1.msra.mxu0 %v5370
        %5768 = vmatprep.subr.mxu0 0.0
        %5769 = vmatpush1.msra.mxu0 %v5371
        %5770 = vmatprep.subr.mxu0 0.0
        %5771 = vmatpush1.msra.mxu0 %v5372
        %5772 = vmatprep.subr.mxu0 0.0
        %5773 = vmatpush1.msra.mxu0 %v5373
        %5774 = vmatprep.subr.mxu0 0.0
        %5775 = vmatpush1.msra.mxu0 %v5374
        %5776 = vmatprep.subr.mxu0 0.0
        %5777 = vmatpush1.msra.mxu0 %v5375
        %5778 = vmatprep.subr.mxu0 0.0
        %5779 = vmatpush1.msra.mxu0 %v5376
        %5780 = vmatprep.subr.mxu0 0.0
        %5781 = vmatpush1.msra.mxu0 %v5377
        %5782 = vmatprep.subr.mxu0 0.0
        %5783 = vmatpush1.msra.mxu0 %v5378
        %5784 = vmatprep.subr.mxu0 0.0
        %5785 = vmatpush1.msra.mxu0 %v5379
        %5786 = vmatprep.subr.mxu0 0.0
        %5787 = vmatpush1.msra.mxu0 %v5380
        %5788 = vmatprep.subr.mxu0 0.0
        %5789 = vmatpush1.msra.mxu0 %v5381
        %5790 = vmatprep.subr.mxu0 0.0
        %5791 = vmatpush1.msra.mxu0 %v5382
        %5792 = vmatprep.subr.mxu0 0.0
        %5793 = vmatpush1.msra.mxu0 %v5383
        %5794 = vmatprep.subr.mxu0 0.0
        %5795 = vmatpush1.msra.mxu0 %v5384
        %5796 = vmatprep.subr.mxu0 0.0
        %5797 = vmatpush1.msra.mxu0 %v5385
        %5798 = vmatprep.subr.mxu0 0.0
        %5799 = vmatpush1.msra.mxu0 %v5386
        %5800 = vmatprep.subr.mxu0 0.0
        %5801 = vmatpush1.msra.mxu0 %v5387
        %5802 = vmatprep.subr.mxu0 0.0
        %5803 = vmatpush1.msra.mxu0 %v5388
        %5804 = vmatprep.subr.mxu0 0.0
        %5805 = vmatpush1.msra.mxu0 %v5389
        %5806 = vmatprep.subr.mxu0 0.0
        %5807 = vmatpush1.msra.mxu0 %v5390
        %5808 = vmatprep.subr.mxu0 0.0
        %5809 = vmatpush1.msra.mxu0 %v5391
        %5810 = vmatprep.mubr.f32.mxu0 %v5254
        %5811 = vmatmul.mubr.f32.gmra.mrb[0].mxu0 %v5253
        %v5812 = vpop.f32.mrb[0].mxu0
        %v5813 = vadd.f32 %v5743, %v5812
        %v5814 = vpop.f32.mrb[0].mxu0
        %5815 = vdwg.mxu0
        %5816 = vmatprep.subr.mxu0 0.0
        %5817 = vmatpush1.msra.mxu0 %v5392
        %5818 = vmatprep.subr.mxu0 0.0
        %5819 = vmatpush1.msra.mxu0 %v5393
        %5820 = vmatprep.subr.mxu0 0.0
        %5821 = vmatpush1.msra.mxu0 %v5394
        %5822 = vmatprep.subr.mxu0 0.0
        %5823 = vmatpush1.msra.mxu0 %v5395
        %5824 = vmatprep.subr.mxu0 0.0
        %5825 = vmatpush1.msra.mxu0 %v5396
        %5826 = vmatprep.subr.mxu0 0.0
        %5827 = vmatpush1.msra.mxu0 %v5397
        %5828 = vmatprep.subr.mxu0 0.0
        %5829 = vmatpush1.msra.mxu0 %v5398
        %5830 = vmatprep.subr.mxu0 0.0
        %5831 = vmatpush1.msra.mxu0 %v5399
        %5832 = vmatprep.subr.mxu0 0.0
        %5833 = vmatpush1.msra.mxu0 %v5400
        %5834 = vmatprep.subr.mxu0 0.0
        %5835 = vmatpush1.msra.mxu0 %v5401
        %5836 = vmatprep.subr.mxu0 0.0
        %5837 = vmatpush1.msra.mxu0 %v5402
        %5838 = vmatprep.subr.mxu0 0.0
        %5839 = vmatpush1.msra.mxu0 %v5403
        %5840 = vmatprep.subr.mxu0 0.0
        %5841 = vmatpush1.msra.mxu0 %v5404
        %5842 = vmatprep.subr.mxu0 0.0
        %5843 = vmatpush1.msra.mxu0 %v5405
        %5844 = vmatprep.subr.mxu0 0.0
        %5845 = vmatpush1.msra.mxu0 %v5406
        %5846 = vmatprep.subr.mxu0 0.0
        %5847 = vmatpush1.msra.mxu0 %v5407
        %5848 = vmatprep.subr.mxu0 0.0
        %5849 = vmatpush1.msra.mxu0 %v5408
        %5850 = vmatprep.subr.mxu0 0.0
        %5851 = vmatpush1.msra.mxu0 %v5409
        %5852 = vmatprep.subr.mxu0 0.0
        %5853 = vmatpush1.msra.mxu0 %v5410
        %5854 = vmatprep.subr.mxu0 0.0
        %5855 = vmatpush1.msra.mxu0 %v5411
        %5856 = vmatprep.subr.mxu0 0.0
        %5857 = vmatpush1.msra.mxu0 %v5412
        %5858 = vmatprep.subr.mxu0 0.0
        %5859 = vmatpush1.msra.mxu0 %v5413
        %5860 = vmatprep.subr.mxu0 0.0
        %5861 = vmatpush1.msra.mxu0 %v5414
        %5862 = vmatprep.subr.mxu0 0.0
        %5863 = vmatpush1.msra.mxu0 %v5415
        %5864 = vmatprep.subr.mxu0 0.0
        %5865 = vmatpush1.msra.mxu0 %v5416
        %5866 = vmatprep.subr.mxu0 0.0
        %5867 = vmatpush1.msra.mxu0 %v5417
        %5868 = vmatprep.subr.mxu0 0.0
        %5869 = vmatpush1.msra.mxu0 %v5418
        %5870 = vmatprep.subr.mxu0 0.0
        %5871 = vmatpush1.msra.mxu0 %v5419
        %5872 = vmatprep.subr.mxu0 0.0
        %5873 = vmatpush1.msra.mxu0 %v5420
        %5874 = vmatprep.subr.mxu0 0.0
        %5875 = vmatpush1.msra.mxu0 %v5421
        %5876 = vmatprep.subr.mxu0 0.0
        %5877 = vmatpush1.msra.mxu0 %v5422
        %5878 = vmatprep.subr.mxu0 0.0
        %5879 = vmatpush1.msra.mxu0 %v5423
        %5880 = vmatprep.mubr.f32.mxu0 %v5256
        %5881 = vmatmul.mubr.f32.gmra.mrb[0].mxu0 %v5255
        %v5882 = vpop.f32.mrb[0].mxu0
        %v5883 = vadd.f32 %v5813, %v5882
        %v5884 = vpop.f32.mrb[0].mxu0
        %5885 = vdwg.mxu0
        %5886 = vmatprep.subr.mxu0 0.0
        %5887 = vmatpush1.msra.mxu0 %v5424
        %5888 = vmatprep.subr.mxu0 0.0
        %5889 = vmatpush1.msra.mxu0 %v5425
        %5890 = vmatprep.subr.mxu0 0.0
        %5891 = vmatpush1.msra.mxu0 %v5426
        %5892 = vmatprep.subr.mxu0 0.0
        %5893 = vmatpush1.msra.mxu0 %v5427
        %5894 = vmatprep.subr.mxu0 0.0
        %5895 = vmatpush1.msra.mxu0 %v5428
        %5896 = vmatprep.subr.mxu0 0.0
        %5897 = vmatpush1.msra.mxu0 %v5429
        %5898 = vmatprep.subr.mxu0 0.0
        %5899 = vmatpush1.msra.mxu0 %v5430
        %5900 = vmatprep.subr.mxu0 0.0
        %5901 = vmatpush1.msra.mxu0 %v5431
        %5902 = vmatprep.subr.mxu0 0.0
        %5903 = vmatpush1.msra.mxu0 %v5432
        %5904 = vmatprep.subr.mxu0 0.0
        %5905 = vmatpush1.msra.mxu0 %v5433
        %5906 = vmatprep.subr.mxu0 0.0
        %5907 = vmatpush1.msra.mxu0 %v5434
        %5908 = vmatprep.subr.mxu0 0.0
        %5909 = vmatpush1.msra.mxu0 %v5435
        %5910 = vmatprep.subr.mxu0 0.0
        %5911 = vmatpush1.msra.mxu0 %v5436
        %5912 = vmatprep.subr.mxu0 0.0
        %5913 = vmatpush1.msra.mxu0 %v5437
        %5914 = vmatprep.subr.mxu0 0.0
        %5915 = vmatpush1.msra.mxu0 %v5438
        %5916 = vmatprep.subr.mxu0 0.0
        %5917 = vmatpush1.msra.mxu0 %v5439
        %5918 = vmatprep.subr.mxu0 0.0
        %5919 = vmatpush1.msra.mxu0 %v5440
        %5920 = vmatprep.subr.mxu0 0.0
        %5921 = vmatpush1.msra.mxu0 %v5441
        %5922 = vmatprep.subr.mxu0 0.0
        %5923 = vmatpush1.msra.mxu0 %v5442
        %5924 = vmatprep.subr.mxu0 0.0
        %5925 = vmatpush1.msra.mxu0 %v5443
        %5926 = vmatprep.subr.mxu0 0.0
        %5927 = vmatpush1.msra.mxu0 %v5444
        %5928 = vmatprep.subr.mxu0 0.0
        %5929 = vmatpush1.msra.mxu0 %v5445
        %5930 = vmatprep.subr.mxu0 0.0
        %5931 = vmatpush1.msra.mxu0 %v5446
        %5932 = vmatprep.subr.mxu0 0.0
        %5933 = vmatpush1.msra.mxu0 %v5447
        %5934 = vmatprep.subr.mxu0 0.0
        %5935 = vmatpush1.msra.mxu0 %v5448
        %5936 = vmatprep.subr.mxu0 0.0
        %5937 = vmatpush1.msra.mxu0 %v5449
        %5938 = vmatprep.subr.mxu0 0.0
        %5939 = vmatpush1.msra.mxu0 %v5450
        %5940 = vmatprep.subr.mxu0 0.0
        %5941 = vmatpush1.msra.mxu0 %v5451
        %5942 = vmatprep.subr.mxu0 0.0
        %5943 = vmatpush1.msra.mxu0 %v5452
        %5944 = vmatprep.subr.mxu0 0.0
        %5945 = vmatpush1.msra.mxu0 %v5453
        %5946 = vmatprep.subr.mxu0 0.0
        %5947 = vmatpush1.msra.mxu0 %v5454
        %5948 = vmatprep.subr.mxu0 0.0
        %5949 = vmatpush1.msra.mxu0 %v5455
        %5950 = vmatprep.mubr.f32.mxu0 %v5258
        %5951 = vmatmul.mubr.f32.gmra.mrb[0].mxu0 %v5257
        %v5952 = vpop.f32.mrb[0].mxu0
        %v5953 = vadd.f32 %v5883, %v5952
        %v5954 = vpop.f32.mrb[0].mxu0
        %5955 = vdwg.mxu0
        %5956 = vmatprep.subr.mxu0 0.0
        %5957 = vmatpush1.msra.mxu0 %v5456
        %5958 = vmatprep.subr.mxu0 0.0
        %5959 = vmatpush1.msra.mxu0 %v5457
        %5960 = vmatprep.subr.mxu0 0.0
        %5961 = vmatpush1.msra.mxu0 %v5458
        %5962 = vmatprep.subr.mxu0 0.0
        %5963 = vmatpush1.msra.mxu0 %v5459
        %5964 = vmatprep.subr.mxu0 0.0
        %5965 = vmatpush1.msra.mxu0 %v5460
        %5966 = vmatprep.subr.mxu0 0.0
        %5967 = vmatpush1.msra.mxu0 %v5461
        %5968 = vmatprep.subr.mxu0 0.0
        %5969 = vmatpush1.msra.mxu0 %v5462
        %5970 = vmatprep.subr.mxu0 0.0
        %5971 = vmatpush1.msra.mxu0 %v5463
        %5972 = vmatprep.subr.mxu0 0.0
        %5973 = vmatpush1.msra.mxu0 %v5464
        %5974 = vmatprep.subr.mxu0 0.0
        %5975 = vmatpush1.msra.mxu0 %v5465
        %5976 = vmatprep.subr.mxu0 0.0
        %5977 = vmatpush1.msra.mxu0 %v5466
        %5978 = vmatprep.subr.mxu0 0.0
        %5979 = vmatpush1.msra.mxu0 %v5467
        %5980 = vmatprep.subr.mxu0 0.0
        %5981 = vmatpush1.msra.mxu0 %v5468
        %5982 = vmatprep.subr.mxu0 0.0
        %5983 = vmatpush1.msra.mxu0 %v5469
        %5984 = vmatprep.subr.mxu0 0.0
        %5985 = vmatpush1.msra.mxu0 %v5470
        %5986 = vmatprep.subr.mxu0 0.0
        %5987 = vmatpush1.msra.mxu0 %v5471
        %5988 = vmatprep.subr.mxu0 0.0
        %5989 = vmatpush1.msra.mxu0 %v5472
        %5990 = vmatprep.subr.mxu0 0.0
        %5991 = vmatpush1.msra.mxu0 %v5473
        %5992 = vmatprep.subr.mxu0 0.0
        %5993 = vmatpush1.msra.mxu0 %v5474
        %5994 = vmatprep.subr.mxu0 0.0
        %5995 = vmatpush1.msra.mxu0 %v5475
        %5996 = vmatprep.subr.mxu0 0.0
        %5997 = vmatpush1.msra.mxu0 %v5476
        %5998 = vmatprep.subr.mxu0 0.0
        %5999 = vmatpush1.msra.mxu0 %v5477
        %6000 = vmatprep.subr.mxu0 0.0
        %6001 = vmatpush1.msra.mxu0 %v5478
        %6002 = vmatprep.subr.mxu0 0.0
        %6003 = vmatpush1.msra.mxu0 %v5479
        %6004 = vmatprep.subr.mxu0 0.0
        %6005 = vmatpush1.msra.mxu0 %v5480
        %6006 = vmatprep.subr.mxu0 0.0
        %6007 = vmatpush1.msra.mxu0 %v5481
        %6008 = vmatprep.subr.mxu0 0.0
        %6009 = vmatpush1.msra.mxu0 %v5482
        %6010 = vmatprep.subr.mxu0 0.0
        %6011 = vmatpush1.msra.mxu0 %v5483
        %6012 = vmatprep.subr.mxu0 0.0
        %6013 = vmatpush1.msra.mxu0 %v5484
        %6014 = vmatprep.subr.mxu0 0.0
        %6015 = vmatpush1.msra.mxu0 %v5485
        %6016 = vmatprep.subr.mxu0 0.0
        %6017 = vmatpush1.msra.mxu0 %v5486
        %6018 = vmatprep.subr.mxu0 0.0
        %6019 = vmatpush1.msra.mxu0 %v5487
        %6020 = vmatprep.mubr.f32.mxu0 %v5260
        %6021 = vmatmul.mubr.f32.gmra.mrb[0].mxu0 %v5259
        %v6022 = vpop.f32.mrb[0].mxu0
        %v6023 = vadd.f32 %v5953, %v6022
        %v6024 = vpop.f32.mrb[0].mxu0
        %6025 = vdwg.mxu0
        %6026 = vmatprep.subr.mxu0 0.0
        %6027 = vmatpush1.msra.mxu0 %v5488
        %6028 = vmatprep.subr.mxu0 0.0
        %6029 = vmatpush1.msra.mxu0 %v5489
        %6030 = vmatprep.subr.mxu0 0.0
        %6031 = vmatpush1.msra.mxu0 %v5490
        %6032 = vmatprep.subr.mxu0 0.0
        %6033 = vmatpush1.msra.mxu0 %v5491
        %6034 = vmatprep.subr.mxu0 0.0
        %6035 = vmatpush1.msra.mxu0 %v5492
        %6036 = vmatprep.subr.mxu0 0.0
        %6037 = vmatpush1.msra.mxu0 %v5493
        %6038 = vmatprep.subr.mxu0 0.0
        %6039 = vmatpush1.msra.mxu0 %v5494
        %6040 = vmatprep.subr.mxu0 0.0
        %6041 = vmatpush1.msra.mxu0 %v5495
        %6042 = vmatprep.subr.mxu0 0.0
        %6043 = vmatpush1.msra.mxu0 %v5496
        %6044 = vmatprep.subr.mxu0 0.0
        %6045 = vmatpush1.msra.mxu0 %v5497
        %6046 = vmatprep.subr.mxu0 0.0
        %6047 = vmatpush1.msra.mxu0 %v5498
        %6048 = vmatprep.subr.mxu0 0.0
        %6049 = vmatpush1.msra.mxu0 %v5499
        %6050 = vmatprep.subr.mxu0 0.0
        %6051 = vmatpush1.msra.mxu0 %v5500
        %6052 = vmatprep.subr.mxu0 0.0
        %6053 = vmatpush1.msra.mxu0 %v5501
        %6054 = vmatprep.subr.mxu0 0.0
        %6055 = vmatpush1.msra.mxu0 %v5502
        %6056 = vmatprep.subr.mxu0 0.0
        %6057 = vmatpush1.msra.mxu0 %v5503
        %6058 = vmatprep.subr.mxu0 0.0
        %6059 = vmatpush1.msra.mxu0 %v5504
        %6060 = vmatprep.subr.mxu0 0.0
        %6061 = vmatpush1.msra.mxu0 %v5505
        %6062 = vmatprep.subr.mxu0 0.0
        %6063 = vmatpush1.msra.mxu0 %v5506
        %6064 = vmatprep.subr.mxu0 0.0
        %6065 = vmatpush1.msra.mxu0 %v5507
        %6066 = vmatprep.subr.mxu0 0.0
        %6067 = vmatpush1.msra.mxu0 %v5508
        %6068 = vmatprep.subr.mxu0 0.0
        %6069 = vmatpush1.msra.mxu0 %v5509
        %6070 = vmatprep.subr.mxu0 0.0
        %6071 = vmatpush1.msra.mxu0 %v5510
        %6072 = vmatprep.subr.mxu0 0.0
        %6073 = vmatpush1.msra.mxu0 %v5511
        %6074 = vmatprep.subr.mxu0 0.0
        %6075 = vmatpush1.msra.mxu0 %v5512
        %6076 = vmatprep.subr.mxu0 0.0
        %6077 = vmatpush1.msra.mxu0 %v5513
        %6078 = vmatprep.subr.mxu0 0.0
        %6079 = vmatpush1.msra.mxu0 %v5514
        %6080 = vmatprep.subr.mxu0 0.0
        %6081 = vmatpush1.msra.mxu0 %v5515
        %6082 = vmatprep.subr.mxu0 0.0
        %6083 = vmatpush1.msra.mxu0 %v5516
        %6084 = vmatprep.subr.mxu0 0.0
        %6085 = vmatpush1.msra.mxu0 %v5517
        %6086 = vmatprep.subr.mxu0 0.0
        %6087 = vmatpush1.msra.mxu0 %v5518
        %6088 = vmatprep.subr.mxu0 0.0
        %6089 = vmatpush1.msra.mxu0 %v5519
        %6090 = vmatprep.mubr.f32.mxu0 %v5262
        %6091 = vmatmul.mubr.f32.gmra.mrb[0].mxu0 %v5261
        %v6092 = vpop.f32.mrb[0].mxu0
        %v6093 = vadd.f32 %v6023, %v6092
        %v6094 = vpop.f32.mrb[0].mxu0
        %6095 = vdwg.mxu0
        %6096 = vmatprep.subr.mxu0 0.0
        %6097 = vmatpush1.msra.mxu0 %v5520
        %6098 = vmatprep.subr.mxu0 0.0
        %6099 = vmatpush1.msra.mxu0 %v5521
        %6100 = vmatprep.subr.mxu0 0.0
        %6101 = vmatpush1.msra.mxu0 %v5522
        %6102 = vmatprep.subr.mxu0 0.0
        %6103 = vmatpush1.msra.mxu0 %v5523
        %6104 = vmatprep.subr.mxu0 0.0
        %6105 = vmatpush1.msra.mxu0 %v5524
        %6106 = vmatprep.subr.mxu0 0.0
        %6107 = vmatpush1.msra.mxu0 %v5525
        %6108 = vmatprep.subr.mxu0 0.0
        %6109 = vmatpush1.msra.mxu0 0.0
        %6110 = vmatprep.subr.mxu0 0.0
        %6111 = vmatpush1.msra.mxu0 0.0
        %6112 = vmatprep.subr.mxu0 0.0
        %6113 = vmatpush1.msra.mxu0 0.0
        %6114 = vmatprep.subr.mxu0 0.0
        %6115 = vmatpush1.msra.mxu0 0.0
        %6116 = vmatprep.subr.mxu0 0.0
        %6117 = vmatpush1.msra.mxu0 0.0
        %6118 = vmatprep.subr.mxu0 0.0
        %6119 = vmatpush1.msra.mxu0 0.0
        %6120 = vmatprep.subr.mxu0 0.0
        %6121 = vmatpush1.msra.mxu0 0.0
        %6122 = vmatprep.subr.mxu0 0.0
        %6123 = vmatpush1.msra.mxu0 0.0
        %6124 = vmatprep.subr.mxu0 0.0
        %6125 = vmatpush1.msra.mxu0 0.0
        %6126 = vmatprep.subr.mxu0 0.0
        %6127 = vmatpush1.msra.mxu0 0.0
        %6128 = vmatprep.subr.mxu0 0.0
        %6129 = vmatpush1.msra.mxu0 0.0
        %6130 = vmatprep.subr.mxu0 0.0
        %6131 = vmatpush1.msra.mxu0 0.0
        %6132 = vmatprep.subr.mxu0 0.0
        %6133 = vmatpush1.msra.mxu0 0.0
        %6134 = vmatprep.subr.mxu0 0.0
        %6135 = vmatpush1.msra.mxu0 0.0
        %6136 = vmatprep.subr.mxu0 0.0
        %6137 = vmatpush1.msra.mxu0 0.0
        %6138 = vmatprep.subr.mxu0 0.0
        %6139 = vmatpush1.msra.mxu0 0.0
        %6140 = vmatprep.subr.mxu0 0.0
        %6141 = vmatpush1.msra.mxu0 0.0
        %6142 = vmatprep.subr.mxu0 0.0
        %6143 = vmatpush1.msra.mxu0 0.0
        %6144 = vmatprep.subr.mxu0 0.0
        %6145 = vmatpush1.msra.mxu0 0.0
        %6146 = vmatprep.subr.mxu0 0.0
        %6147 = vmatpush1.msra.mxu0 0.0
        %6148 = vmatprep.subr.mxu0 0.0
        %6149 = vmatpush1.msra.mxu0 0.0
        %6150 = vmatprep.subr.mxu0 0.0
        %6151 = vmatpush1.msra.mxu0 0.0
        %6152 = vmatprep.subr.mxu0 0.0
        %6153 = vmatpush1.msra.mxu0 0.0
        %6154 = vmatprep.subr.mxu0 0.0
        %6155 = vmatpush1.msra.mxu0 0.0
        %6156 = vmatprep.subr.mxu0 0.0
        %6157 = vmatpush1.msra.mxu0 0.0
        %6158 = vmatprep.subr.mxu0 0.0
        %6159 = vmatpush1.msra.mxu0 0.0
        %6160 = vmatprep.mubr.f32.mxu0 0.0
        %6161 = vmatmul.mubr.f32.gmra.mrb[0].mxu0 %v5534
        %v6162 = vpop.f32.mrb[0].mxu0
        %v6163 = vadd.f32 %v6093, %v6162
        %v6164 = vpop.f32.mrb[0].mxu0
        %6165 = vdwg.mxu0
        %v6166 = vadd.f32 %v4417, %v6163
        %6167 = vst.msk [vmem:[%s1128] sm:$0xff] %vm1143, %v6166
        %v6168 = vld [vmem:[%s67] sm:$0x1]
        %v6169 = vld [vmem:[%s69] sm:$0x1]
        %v6170 = vsel %vm1143, %v6166, 0.0
        %6171 = vadd.xlane.f32.xlu0 %v6170
        %v6172 = vpop.xlane.xlu0 %6171
        %v6173 = vmul.f32 %v6172, %v1147
        %v6174 = vsub.f32 %v6166, %v6173
        %v6175 = vmul.f32 %v6174, %v6174
        %v6176 = vsel %vm1143, %v6175, 0.0
        %6177 = vadd.xlane.f32.xlu0 %v6176
        %v6178 = vpop.xlane.xlu0 %6177
        %v6179 = vmul.f32 %v6178, %v1147
        %v6180 = vadd.f32 %v6179, 1e-05
        %v6181 = vrsqrt.pop %v6180
        %v6182 = vmul.f32 %v6174, %v6181
        %v6184 = vlaneseq
        %v6185 = vshrl.u32 %v6184, 7
        %v6186 = vsub.s32 0, %v6185
        %v6187 = vrot.slane %v6168, %v6186
        %v6189 = vmul.f32 %v6182, %v6187
        %v6191 = vlaneseq
        %v6192 = vshrl.u32 %v6191, 7
        %v6193 = vsub.s32 0, %v6192
        %v6194 = vrot.slane %v6169, %v6193
        %v6196 = vadd.f32 %v6189, %v6194
        %6197 = vst.msk [vmem:[%s1135] sm:$0xff] %vm1143, %v6196
        %s6198 = sand.u32 %s841, 1
        %s6199 = scalar_lea.sflag [#allocation3], %s6198
        %s6200 = sand.u32 %s841, 1
        %s6201 = smul.addr %s6200, 8
        %s6202 = scalar_lea.vmem [#allocation2], %s6201
        %s6203 = sand.u32 %s93, 1
        %s6204 = scalar_lea.sflag [#allocation5], %s6203
        %s6205 = sand.u32 %s867, 1
        %s6206 = smul.addr %s6205, 8
        %s6207 = scalar_lea.vmem [#allocation4], %s6206
        %s6208 = sand.u32 %s93, 1
        %s6209 = scalar_lea.sflag [#allocation5], %s6208
        %s6210 = sand.u32 %s893, 1
        %s6211 = smul.addr %s6210, 8
        %s6212 = scalar_lea.vmem [#allocation6], %s6211
        // Predicated region
        $region161: #{tpu_custom_call.1} parent=159 // pred_check
          %p6213 = pneg %p851
        $region162: #{tpu_custom_call.1} parent=159 // pred_check_branch
          %6215 = sbr.rel (%p6213) target = $region164
        $region163: #{tpu_custom_call.1} parent=159 // pred_region
          %s6217 = ssub.s32 128, 128
          %6218 = vsyncadd %s6199, %s6217
          %s6219 = smul.addr %s93, 128
          %s6220 = scalar_lea.hbm %s71, %s6219
          %s6222 = sshll.u32 %s6202, 4
          %s6223 = int_to_ptr.vmem [resolvable:$true] %s6222
          %6225 = dma.vmem_to_hbm [thread:$0]  %s6223, 128, %s6220, %s6199
        $region164: #{tpu_custom_call.1} parent=159 // pred_fallthru
          _
        // Predicated region
        $region165: #{tpu_custom_call.1} parent=159 // pred_check
          %p6226 = pneg %p877
        $region166: #{tpu_custom_call.1} parent=159 // pred_check_branch
          %6228 = sbr.rel (%p6226) target = $region168
        $region167: #{tpu_custom_call.1} parent=159 // pred_region
          %s6230 = ssub.s32 128, 128
          %6231 = vsyncadd %s6204, %s6230
          %s6232 = smul.addr %s93, 128
          %s6233 = scalar_lea.hbm %s73, %s6232
          %s6235 = sshll.u32 %s6207, 4
          %s6236 = int_to_ptr.vmem [resolvable:$true] %s6235
          %6238 = dma.vmem_to_hbm [thread:$0]  %s6236, 128, %s6233, %s6204
        $region168: #{tpu_custom_call.1} parent=159 // pred_fallthru
          _
        // Predicated region
        $region169: #{tpu_custom_call.1} parent=159 // pred_check
          %p6239 = pneg %p903
        $region170: #{tpu_custom_call.1} parent=159 // pred_check_branch
          %6241 = sbr.rel (%p6239) target = $region172
        $region171: #{tpu_custom_call.1} parent=159 // pred_region
          %s6243 = ssub.s32 128, 128
          %6244 = vsyncadd %s6209, %s6243
          %s6245 = smul.addr %s93, 128
          %s6246 = scalar_lea.hbm %s75, %s6245
          %s6248 = sshll.u32 %s6212, 4
          %s6249 = int_to_ptr.vmem [resolvable:$true] %s6248
          %6251 = dma.vmem_to_hbm [thread:$0]  %s6249, 128, %s6246, %s6209
        $region172: #{tpu_custom_call.1} parent=159 // pred_fallthru
          _
      $region160: #{tpu_custom_call.1} parent=5 // pred_fallthru
        _
      %p6252 = scmp.le.s32.totalorder 2, %s88
      // Predicated region
      $region173: #{tpu_custom_call.1} parent=5 // pred_check
        %p6253 = pneg %p6252
      $region174: #{tpu_custom_call.1} parent=5 // pred_check_branch
        %6255 = sbr.rel (%p6253) target = $region176
      $region175: #{tpu_custom_call.1} parent=5 // pred_region
        %s6256 = ssub.s32 %s88, 2
        // Predicated region
        $region177: #{tpu_custom_call.1} parent=175 // pred_check
          %p6257 = pneg %p857
        $region178: #{tpu_custom_call.1} parent=175 // pred_check_branch
          %6259 = sbr.rel (%p6257) target = $region180
        $region179: #{tpu_custom_call.1} parent=175 // pred_region
          %s6260 = sand.u32 %s842, 1
          %s6261 = scalar_lea.sflag [#allocation3], %s6260
          %s6262 = sand.u32 %s842, 1
          %s6263 = smul.addr %s6262, 8
          %s6264 = scalar_lea.vmem [#allocation2], %s6263
          %6265 = dma.done %s6261, 128
        $region180: #{tpu_custom_call.1} parent=175 // pred_fallthru
          _
        // Predicated region
        $region181: #{tpu_custom_call.1} parent=175 // pred_check
          %p6266 = pneg %p883
        $region182: #{tpu_custom_call.1} parent=175 // pred_check_branch
          %6268 = sbr.rel (%p6266) target = $region184
        $region183: #{tpu_custom_call.1} parent=175 // pred_region
          %s6269 = sand.u32 %s94, 1
          %s6270 = scalar_lea.sflag [#allocation5], %s6269
          %s6271 = sand.u32 %s868, 1
          %s6272 = smul.addr %s6271, 8
          %s6273 = scalar_lea.vmem [#allocation4], %s6272
          %6274 = dma.done %s6270, 128
        $region184: #{tpu_custom_call.1} parent=175 // pred_fallthru
          _
        // Predicated region
        $region185: #{tpu_custom_call.1} parent=175 // pred_check
          %p6275 = pneg %p909
        $region186: #{tpu_custom_call.1} parent=175 // pred_check_branch
          %6277 = sbr.rel (%p6275) target = $region188
        $region187: #{tpu_custom_call.1} parent=175 // pred_region
          %s6278 = sand.u32 %s94, 1
          %s6279 = scalar_lea.sflag [#allocation5], %s6278
          %s6280 = sand.u32 %s894, 1
          %s6281 = smul.addr %s6280, 8
          %s6282 = scalar_lea.vmem [#allocation6], %s6281
          %6283 = dma.done %s6279, 128
        $region188: #{tpu_custom_call.1} parent=175 // pred_fallthru
          _
      $region176: #{tpu_custom_call.1} parent=5 // pred_fallthru
        _
    $region6: #{tpu_custom_call.1} parent=1 // loop_footer
      %s92 = sadd.s32 1, %s88
    $region7: #{tpu_custom_call.1} parent=1 // loop_footer_branch
      %87 = sbr.rel target = $region3
    $region8: #{tpu_custom_call.1} parent=1 // loop_exit
      _
    %6284 = vsyncpa [#allocation3], 1
    %s6285 = scalar_lea.sflag [#allocation3], 1
    %6286 = vsyncpa %s6285, 1
    %6287 = vsyncpa [#allocation5], 1
    %s6288 = scalar_lea.sflag [#allocation5], 1
    %6289 = vsyncpa %s6288, 1

</llo_original>
